<compile_context>
chip_gen: v7x
topology: tpu7x:2x2x1
jax: 0.10.0
libtpu: 0.0.40
codegen_flags: <defaults>
</compile_context>

<pallas_src>
import functools

import jax
import jax.numpy as jnp
from jax import lax
from jax.experimental import pallas as pl
from jax.experimental.pallas import tpu as pltpu  # noqa: F401  (TPU backend assumed)


# ---------------------------------------------------------------------------
# Fused conv / deconv block kernel.
#   out[ph, b] = act( BN( sum_taps  x[parity, b, r0:r0+oh, :] @ W[tap]  + bias ) )
# The 3x3 gather along W, the input channels and the conv column-stride are all
# folded into banded (K, N) weight matrices, so each tap is a plain 2D MXU dot.
# ---------------------------------------------------------------------------
def _conv_block_kernel(*refs, taps, n_b, oh, use_bn, act, eps, slope, count):
    if use_bn:
        x_ref, w_ref, bias_ref, g_ref, be_ref, s_ref, st_ref, o_ref = refs
    else:
        x_ref, w_ref, bias_ref, o_ref = refs

    n_phase = len(taps)
    bias = bias_ref[...]                                     # (1, N) f32
    w_slices = [w_ref[i, :, :] for i in range(w_ref.shape[0])]   # bf16 (K, N)

    # ---- conv taps on the MXU (bf16 x bf16 -> f32 accumulate) ----
    lhs_cache = {}
    accs = [[None] * n_b for _ in range(n_phase)]
    for ph in range(n_phase):
        for b in range(n_b):
            acc = None
            for (pin, r0, wi) in taps[ph]:
                key = (pin, b, r0)
                if key not in lhs_cache:
                    lhs_cache[key] = x_ref[pin, b, r0:r0 + oh, :].astype(jnp.bfloat16)
                part = jnp.dot(lhs_cache[key], w_slices[wi],
                               preferred_element_type=jnp.float32)
                acc = part if acc is None else acc + part
            accs[ph][b] = acc + bias

    # ---- training-mode BatchNorm (biased batch stats, f32) ----
    if use_bn:
        s_mat = s_ref[...]          # (N, C) 0/1 selector: slab lanes -> channel
        st_mat = st_ref[...]        # (C, N) its transpose: channel -> slab lanes
        tot = None
        for ph in range(n_phase):
            for b in range(n_b):
                rs = jnp.sum(accs[ph][b], axis=0, keepdims=True)
                tot = rs if tot is None else tot + rs
        mean_c = jnp.dot(tot, s_mat, preferred_element_type=jnp.float32) * (1.0 / count)
        mean_slab = jnp.dot(mean_c, st_mat, preferred_element_type=jnp.float32)
        vtot = None
        for ph in range(n_phase):
            for b in range(n_b):
                xc = accs[ph][b] - mean_slab
                accs[ph][b] = xc
                vs = jnp.sum(xc * xc, axis=0, keepdims=True)
                vtot = vs if vtot is None else vtot + vs
        var_c = jnp.dot(vtot, s_mat, preferred_element_type=jnp.float32) * (1.0 / count)
        scale_slab = jnp.dot(g_ref[...] * lax.rsqrt(var_c + eps), st_mat,
                             preferred_element_type=jnp.float32)
        shift_slab = jnp.dot(be_ref[...], st_mat, preferred_element_type=jnp.float32)
        for ph in range(n_phase):
            for b in range(n_b):
                accs[ph][b] = accs[ph][b] * scale_slab + shift_slab

    # ---- activation + lane-dense store ----
    for ph in range(n_phase):
        for b in range(n_b):
            y = accs[ph][b]
            if act == "lrelu":
                y = jnp.where(y >= 0.0, y, slope * y)
            elif act == "tanh":
                y = jnp.tanh(y)
            o_ref[ph, b, :, :] = y


def conv_block(x, w_folded, bias_slab, taps, oh, bn=None, act="lrelu",
               eps=1e-5, slope=0.01):
    """x: (P_in, B, R, K) f32 slab; w_folded: (3, K, N) bf16; returns (P_out, B, oh, N)."""
    _, nb, _, _ = x.shape
    n = w_folded.shape[-1]
    n_phase = len(taps)
    out_shape = jax.ShapeDtypeStruct((n_phase, nb, oh, n), jnp.float32)
    if bn is not None:
        gamma, beta, s_mat, st_mat, count = bn
        kern = functools.partial(_conv_block_kernel, taps=taps, n_b=nb, oh=oh,
                                 use_bn=True, act=act, eps=eps, slope=slope,
                                 count=count)
        return pl.pallas_call(kern, out_shape=out_shape)(
            x, w_folded, bias_slab, gamma, beta, s_mat, st_mat)
    kern = functools.partial(_conv_block_kernel, taps=taps, n_b=nb, oh=oh,
                             use_bn=False, act=act, eps=eps, slope=slope, count=1.0)
    return pl.pallas_call(kern, out_shape=out_shape)(x, w_folded, bias_slab)


# Tap tables: (input row-parity plane, half-row start, folded-weight index).
# stride-2 3x3 conv: padded input row 2*oh + kh  ->  plane kh&1, half-row oh + (kh>>1).
ENC_TAPS = (((0, 0, 0), (1, 0, 1), (0, 1, 2)),)
# ConvTranspose(k3,s2,p1,op1) sub-pixel phases: even output rows use kh=1;
# odd output rows use kh=2 at row offset 0 and kh=0 at row offset 1.
DEC_TAPS = (((0, 0, 1),), ((0, 0, 2), (0, 1, 0)))
# stride-1 3x3 conv (padding folded into the slab).
S1_TAPS = (((0, 0, 0), (0, 1, 1), (0, 2, 2)),)


# ---------------------------------------------------------------------------
# Fused image-embedding (1x1 conv) + label-embedding (Linear) kernel.
# ---------------------------------------------------------------------------
def _embed_kernel(x_ref, wi_ref, bi_ref, y_ref, wl_ref, bl_ref, img_ref, lab_ref):
    img_ref[...] = (jnp.dot(x_ref[...], wi_ref[...],
                            preferred_element_type=jnp.float32) + bi_ref[...])
    lab_ref[...] = (jnp.dot(y_ref[...], wl_ref[...],
                            preferred_element_type=jnp.float32) + bl_ref[...])


# ---------------------------------------------------------------------------
# Fused latent head: [mu | log_var] matmul, reparameterize, decoder Linear.
# ---------------------------------------------------------------------------
def _latent_head_kernel(f_ref, wml_ref, bml_ref, eps_ref, y_ref, wz_ref, wy_ref,
                        bd_ref, mu_ref, lv_ref, d_ref, *, latent):
    ml = (jnp.dot(f_ref[...], wml_ref[...], preferred_element_type=jnp.float32)
          + bml_ref[...])
    mu = ml[:, :latent]
    lv = ml[:, latent:]
    z = eps_ref[...] * jnp.exp(0.5 * lv) + mu
    d = (jnp.dot(z, wz_ref[...], preferred_element_type=jnp.float32)
         + jnp.dot(y_ref[...], wy_ref[...], preferred_element_type=jnp.float32)
         + bd_ref[...])
    mu_ref[...] = mu
    lv_ref[...] = lv
    d_ref[...] = d


# ------------------------------- XLA glue -----------------------------------
def fold_conv_weight(w_oihw, wp, ow, stride):
    """Torch Conv2d weight (OC, IC, 3, 3) -> (3, wp*IC, ow*OC) banded matrices
    (one per kernel row kh), folding kw, the column stride and input channels."""
    oc, ic, _, _ = w_oihw.shape
    wt = jnp.transpose(w_oihw, (2, 3, 1, 0))                    # (3, 3, IC, OC)
    kwi = jnp.arange(3)[:, None, None]
    wini = jnp.arange(wp)[None, :, None]
    owi = jnp.arange(ow)[None, None, :]
    sel = (wini == stride * owi + kwi).astype(jnp.float32)      # (3, wp, ow)
    m = jnp.einsum("xwv,hxco->hwcvo", sel, wt)                  # (3, wp, IC, ow, OC)
    return m.reshape(3, wp * ic, ow * oc).astype(jnp.bfloat16)


def fold_deconv_weight(w_iohw, win):
    """Torch ConvTranspose2d weight (IC, OC, 3, 3) -> (3, win*IC, 2*win*OC)."""
    ic, oc, _, _ = w_iohw.shape
    wt = jnp.transpose(w_iohw, (2, 3, 0, 1))                    # (3, 3, IC, OC)
    kwi = jnp.arange(3)[:, None, None]
    wini = jnp.arange(win)[None, :, None]
    ci = jnp.arange(2 * win)[None, None, :]
    sel = (ci == 2 * wini + kwi - 1).astype(jnp.float32)        # (3, win, 2*win)
    m = jnp.einsum("xwc,hxio->hwico", sel, wt)                  # (3, win, IC, 2win, OC)
    return m.reshape(3, win * ic, 2 * win * oc).astype(jnp.bfloat16)


def bn_aux(gamma, beta, reps):
    c = gamma.shape[0]
    s = jnp.tile(jnp.eye(c, dtype=jnp.float32), (reps, 1))      # (reps*C, C)
    return gamma.reshape(1, c), beta.reshape(1, c), s, jnp.transpose(s)


def to_parity_slab(x_nhwc):
    """(B,H,W,C) -> (2, B, (H+2)//2, (W+2)*C): pad 1, split rows by parity."""
    b, h, w, c = x_nhwc.shape
    xp = jnp.pad(x_nhwc, ((0, 0), (1, 1), (1, 1), (0, 0)))
    xp = xp.reshape(b, (h + 2) // 2, 2, (w + 2) * c)
    return jnp.transpose(xp, (2, 0, 1, 3))


def to_slab_pad1(x_nhwc):
    """(B,H,W,C) -> (1, B, H+2, (W+2)*C) stride-1 conv input slab."""
    b, h, w, c = x_nhwc.shape
    xp = jnp.pad(x_nhwc, ((0, 0), (1, 1), (1, 1), (0, 0)))
    return xp.reshape(1, b, h + 2, (w + 2) * c)


def to_deconv_slab(x_nhwc):
    """(B,H,W,C) -> (1, B, H+1, W*C): one zero row appended for the +1 row taps."""
    b, h, w, c = x_nhwc.shape
    xp = jnp.pad(x_nhwc, ((0, 0), (0, 1), (0, 0), (0, 0)))
    return xp.reshape(1, b, h + 1, w * c)


def interleave_phases(o, cout):
    """(2, B, H, 2W*C) phase-major deconv output -> (B, 2H, 2W, C)."""
    _, b, h, wc = o.shape
    w2 = wc // cout
    o = o.reshape(2, b, h, w2, cout)
    o = jnp.transpose(o, (1, 2, 0, 3, 4))
    return o.reshape(b, 2 * h, w2, cout)


# -------------------------- parameters & forward ----------------------------
def init_params(key, in_channels, image_H, image_W, hidden, latent, num_classes):
    keys = iter(jax.random.split(key, 64))

    def nrm(shape, scale=0.05):
        return (scale * jax.random.normal(next(keys), shape)).astype(jnp.float32)

    p = {}
    p["img_w"] = nrm((in_channels, in_channels, 1, 1))      # Conv2d 1x1 (OC, IC, 1, 1)
    p["img_b"] = nrm((in_channels,))
    p["lab_w"] = nrm((image_H * image_W, num_classes))      # Linear (out, in)
    p["lab_b"] = nrm((image_H * image_W,))

    enc, last = [], in_channels + 1
    for c in hidden:
        enc.append(dict(w=nrm((c, last, 3, 3)), b=nrm((c,)),
                        gamma=jnp.ones((c,), jnp.float32),
                        beta=jnp.zeros((c,), jnp.float32)))
        last = c
    p["enc"] = enc

    zipped = 2 ** len(hidden)
    flat = hidden[-1] * (image_H // zipped) * (image_W // zipped)
    p["mu_w"], p["mu_b"] = nrm((latent, flat)), nrm((latent,))
    p["lv_w"], p["lv_b"] = nrm((latent, flat)), nrm((latent,))
    p["dec_lin_w"], p["dec_lin_b"] = nrm((flat, latent + num_classes)), nrm((flat,))

    dec, last = [], hidden[-1]
    for i in range(len(hidden) - 1, 0, -1):
        prev = hidden[i - 1]
        dec.append(dict(w=nrm((last, prev, 3, 3)), b=nrm((prev,)),      # (IC, OC, 3, 3)
                        gamma=jnp.ones((prev,), jnp.float32),
                        beta=jnp.zeros((prev,), jnp.float32)))
        last = prev
    p["dec"] = dec

    p["final_deconv"] = dict(w=nrm((last, last, 3, 3)), b=nrm((last,)),
                             gamma=jnp.ones((last,), jnp.float32),
                             beta=jnp.zeros((last,), jnp.float32))
    p["final_conv_w"] = nrm((in_channels, last, 3, 3))
    p["final_conv_b"] = nrm((in_channels,))
    return p


def cvae_forward(params, x_nchw, y, eps_noise, hidden, image_H, image_W,
                 latent, num_classes):
    B, C, H, W = x_nchw.shape

    # ---- image (1x1 conv) + label (Linear) embeddings: one fused kernel ----
    x2d = jnp.transpose(x_nchw, (0, 2, 3, 1)).reshape(B * H * W, C).astype(jnp.float32)
    img_w = jnp.transpose(params["img_w"][:, :, 0, 0])                  # (IC, OC)
    img2d, lab = pl.pallas_call(
        _embed_kernel,
        out_shape=(jax.ShapeDtypeStruct((B * H * W, C), jnp.float32),
                   jax.ShapeDtypeStruct((B, H * W), jnp.float32)),
    )(x2d, img_w, params["img_b"].reshape(1, C),
      y, jnp.transpose(params["lab_w"]), params["lab_b"].reshape(1, H * W))

    h = jnp.concatenate([img2d.reshape(B, H, W, C),
                         lab.reshape(B, H, W, 1)], axis=-1)             # (B,H,W,C+1)

    # ---- encoder: fused Conv(k3,s2,p1) + BN + LeakyReLU per layer ----
    for layer in params["enc"]:
        _, hh, ww, cin = h.shape
        cout = layer["w"].shape[0]
        ohh, oww = hh // 2, ww // 2
        xin = to_parity_slab(h)
        wf = fold_conv_weight(layer["w"], ww + 2, oww, 2)
        bias_slab = jnp.tile(layer["b"], oww).reshape(1, oww * cout)
        g, be, s_mat, st_mat = bn_aux(layer["gamma"], layer["beta"], oww)
        out = conv_block(xin, wf, bias_slab, ENC_TAPS, ohh,
                         bn=(g, be, s_mat, st_mat, float(B * ohh * oww)))
        h = out[0].reshape(B, ohh, oww, cout)

    # ---- flatten in torch (c, h, w) order ----
    zipped = 2 ** len(hidden)
    fH, fW = image_H // zipped, image_W // zipped
    c_last = hidden[-1]
    flat = jnp.transpose(h, (0, 3, 1, 2)).reshape(B, c_last * fH * fW)

    # ---- fused latent head: mu, log_var, reparameterize, decoder Linear ----
    # TODO(synk): torch.randn_like has no in-kernel equivalent; eps_noise is an input.
    w_ml = jnp.concatenate([jnp.transpose(params["mu_w"]),
                            jnp.transpose(params["lv_w"])], axis=1)     # (F, 2L)
    b_ml = jnp.concatenate([params["mu_b"], params["lv_b"]]).reshape(1, 2 * latent)
    wdec = jnp.transpose(params["dec_lin_w"])                           # (L+cls, Fd)
    mu, log_var, d = pl.pallas_call(
        functools.partial(_latent_head_kernel, latent=latent),
        out_shape=(jax.ShapeDtypeStruct((B, latent), jnp.float32),
                   jax.ShapeDtypeStruct((B, latent), jnp.float32),
                   jax.ShapeDtypeStruct((B, c_last * fH * fW), jnp.float32)),
    )(flat, w_ml, b_ml, eps_noise, y, wdec[:latent], wdec[latent:],
      params["dec_lin_b"].reshape(1, c_last * fH * fW))

    # ---- decoder: 'b (c h w) -> b c h w', then fused sub-pixel deconv blocks ----
    h = jnp.transpose(d.reshape(B, c_last, fH, fW), (0, 2, 3, 1))
    for layer in params["dec"] + [params["final_deconv"]]:
        _, hh, ww, cin = h.shape
        cout = layer["w"].shape[1]                   # ConvTranspose2d (IC, OC, 3, 3)
        xin = to_deconv_slab(h)
        wf = fold_deconv_weight(layer["w"], ww)
        bias_slab = jnp.tile(layer["b"], 2 * ww).reshape(1, 2 * ww * cout)
        g, be, s_mat, st_mat = bn_aux(layer["gamma"], layer["beta"], 2 * ww)
        out = conv_block(xin, wf, bias_slab, DEC_TAPS, hh,
                         bn=(g, be, s_mat, st_mat, float(B * 2 * hh * 2 * ww)))
        h = interleave_phases(out, cout)

    # ---- final Conv(k3,s1,p1) + Tanh (fused, no BN) ----
    _, hh, ww, cin = h.shape
    cout = params["final_conv_w"].shape[0]
    xin = to_slab_pad1(h)
    wf = fold_conv_weight(params["final_conv_w"], ww + 2, ww, 1)
    bias_slab = jnp.tile(params["final_conv_b"], ww).reshape(1, ww * cout)
    out = conv_block(xin, wf, bias_slab, S1_TAPS, hh, bn=None, act="tanh")
    recon = jnp.transpose(out[0].reshape(B, hh, ww, cout), (0, 3, 1, 2))   # NCHW

    return recon, x_nchw, mu, log_var


# ---------------------------------- main -------------------------------------
if __name__ == "__main__":
    B, IC, HS = 2, 4, 16
    hidden = [8, 16, 32]          # zipped_size = 8, 16 % 8 == 0
    latent = 16
    num_classes = 8

    root = jax.random.PRNGKey(0)
    k_x, k_y, k_eps, k_par = jax.random.split(root, 4)
    x = jax.random.normal(k_x, (B, IC, HS, HS), dtype=jnp.float32)
    labels = jax.nn.one_hot(jax.random.randint(k_y, (B,), 0, num_classes),
                            num_classes, dtype=jnp.float32)
    eps_noise = jax.random.normal(k_eps, (B, latent), dtype=jnp.float32)
    params = init_params(k_par, IC, HS, HS, hidden, latent, num_classes)

    fwd = jax.jit(lambda p, xi, yi, ei: cvae_forward(
        p, xi, yi, ei, hidden, HS, HS, latent, num_classes))
    recon, x_out, mu, log_var = fwd(params, x, labels, eps_noise)
    jax.block_until_ready((recon, x_out, mu, log_var))

    assert recon.shape == (B, IC, HS, HS)
    assert x_out.shape == (B, IC, HS, HS)
    assert mu.shape == (B, latent) and log_var.shape == (B, latent)
    assert bool(jnp.all(jnp.isfinite(recon)))
    assert bool(jnp.all(jnp.abs(recon) <= 1.0))   # tanh range
    print("KERNEL_OK")
</pallas_src>

<mosaic_0001>
module attributes {stable_mosaic.version = 11 : i64} {
  func.func @_embed_kernel(%arg0: memref<512x4xf32, #tpu.memory_space<vmem>>, %arg1: memref<4x4xf32, #tpu.memory_space<vmem>>, %arg2: memref<1x4xf32, #tpu.memory_space<vmem>>, %arg3: memref<2x8xf32, #tpu.memory_space<vmem>>, %arg4: memref<8x256xf32, #tpu.memory_space<vmem>>, %arg5: memref<1x256xf32, #tpu.memory_space<vmem>>, %arg6: memref<512x4xf32, #tpu.memory_space<vmem>>, %arg7: memref<2x256xf32, #tpu.memory_space<vmem>>) attributes {dimension_semantics = [], scalar_prefetch = 0 : i64, scratch_operands = 0 : i64, tpu.core_type = #tpu.core_type<tc>} {
    %c0 = arith.constant 0 : index
    %c0_0 = arith.constant 0 : index
    %0 = vector.load %arg0[%c0, %c0_0] : memref<512x4xf32, #tpu.memory_space<vmem>>, vector<512x4xf32>
    %c0_1 = arith.constant 0 : index
    %c0_2 = arith.constant 0 : index
    %1 = vector.load %arg1[%c0_1, %c0_2] : memref<4x4xf32, #tpu.memory_space<vmem>>, vector<4x4xf32>
    %cst = arith.constant dense<0.000000e+00> : vector<512x4xf32>
    %2 = tpu.matmul %0, %1, %cst {dimension_numbers = #tpu.dot_dimension_numbers<[1], [0], [0], [1], [0, 0, 1, 1], [], []>} : vector<512x4xf32>, vector<4x4xf32>, vector<512x4xf32> -> vector<512x4xf32>
    %c0_3 = arith.constant 0 : index
    %c0_4 = arith.constant 0 : index
    %3 = vector.load %arg2[%c0_3, %c0_4] : memref<1x4xf32, #tpu.memory_space<vmem>>, vector<1x4xf32>
    %4 = vector.broadcast %3 : vector<1x4xf32> to vector<512x4xf32>
    %5 = arith.addf %2, %4 : vector<512x4xf32>
    %c0_5 = arith.constant 0 : index
    %c0_6 = arith.constant 0 : index
    %6 = vector.load %arg6[%c0_5, %c0_6] : memref<512x4xf32, #tpu.memory_space<vmem>>, vector<512x4xf32>
    tpu.vector_store %arg6[%c0_5, %c0_6], %5 {strides = array<i32>} : memref<512x4xf32, #tpu.memory_space<vmem>>, vector<512x4xf32>,
    %c0_7 = arith.constant 0 : index
    %c0_8 = arith.constant 0 : index
    %7 = vector.load %arg3[%c0_7, %c0_8] : memref<2x8xf32, #tpu.memory_space<vmem>>, vector<2x8xf32>
    %c0_9 = arith.constant 0 : index
    %c0_10 = arith.constant 0 : index
    %8 = vector.load %arg4[%c0_9, %c0_10] : memref<8x256xf32, #tpu.memory_space<vmem>>, vector<8x256xf32>
    %cst_11 = arith.constant dense<0.000000e+00> : vector<2x256xf32>
    %9 = tpu.matmul %7, %8, %cst_11 {dimension_numbers = #tpu.dot_dimension_numbers<[1], [0], [0], [1], [0, 0, 1, 1], [], []>} : vector<2x8xf32>, vector<8x256xf32>, vector<2x256xf32> -> vector<2x256xf32>
    %c0_12 = arith.constant 0 : index
    %c0_13 = arith.constant 0 : index
    %10 = vector.load %arg5[%c0_12, %c0_13] : memref<1x256xf32, #tpu.memory_space<vmem>>, vector<1x256xf32>
    %11 = vector.broadcast %10 : vector<1x256xf32> to vector<2x256xf32>
    %12 = arith.addf %9, %11 : vector<2x256xf32>
    %c0_14 = arith.constant 0 : index
    %c0_15 = arith.constant 0 : index
    %13 = vector.load %arg7[%c0_14, %c0_15] : memref<2x256xf32, #tpu.memory_space<vmem>>, vector<2x256xf32>
    tpu.vector_store %arg7[%c0_14, %c0_15], %12 {strides = array<i32>} : memref<2x256xf32, #tpu.memory_space<vmem>>, vector<2x256xf32>,
    return
  }
}

module attributes {stable_mosaic.version = 11 : i64} {
  func.func @_conv_block_kernel(%arg0: memref<2x2x9x90xf32, #tpu.memory_space<vmem>>, %arg1: memref<3x90x64xbf16, #tpu.memory_space<vmem>>, %arg2: memref<1x64xf32, #tpu.memory_space<vmem>>, %arg3: memref<1x8xf32, #tpu.memory_space<vmem>>, %arg4: memref<1x8xf32, #tpu.memory_space<vmem>>, %arg5: memref<64x8xf32, #tpu.memory_space<vmem>>, %arg6: memref<8x64xf32, #tpu.memory_space<vmem>>, %arg7: memref<1x2x8x64xf32, #tpu.memory_space<vmem>>) attributes {dimension_semantics = [], scalar_prefetch = 0 : i64, scratch_operands = 0 : i64, tpu.core_type = #tpu.core_type<tc>} {
    %c0 = arith.constant 0 : index
    %c0_0 = arith.constant 0 : index
    %0 = vector.load %arg2[%c0, %c0_0] : memref<1x64xf32, #tpu.memory_space<vmem>>, vector<1x64xf32>
    %c0_1 = arith.constant 0 : index
    %c0_2 = arith.constant 0 : index
    %c0_3 = arith.constant 0 : index
    %1 = vector.load %arg1[%c0_1, %c0_2, %c0_3] : memref<3x90x64xbf16, #tpu.memory_space<vmem>>, vector<1x90x64xbf16>
    %2 = vector.shape_cast %1 : vector<1x90x64xbf16> to vector<90x64xbf16>
    %c1 = arith.constant 1 : index
    %c0_4 = arith.constant 0 : index
    %c0_5 = arith.constant 0 : index
    %3 = vector.load %arg1[%c1, %c0_4, %c0_5] : memref<3x90x64xbf16, #tpu.memory_space<vmem>>, vector<1x90x64xbf16>
    %4 = vector.shape_cast %3 : vector<1x90x64xbf16> to vector<90x64xbf16>
    %c2 = arith.constant 2 : index
    %c0_6 = arith.constant 0 : index
    %c0_7 = arith.constant 0 : index
    %5 = vector.load %arg1[%c2, %c0_6, %c0_7] : memref<3x90x64xbf16, #tpu.memory_space<vmem>>, vector<1x90x64xbf16>
    %6 = vector.shape_cast %5 : vector<1x90x64xbf16> to vector<90x64xbf16>
    %c0_8 = arith.constant 0 : index
    %c0_9 = arith.constant 0 : index
    %c0_10 = arith.constant 0 : index
    %c0_11 = arith.constant 0 : index
    %7 = vector.load %arg0[%c0_8, %c0_9, %c0_10, %c0_11] : memref<2x2x9x90xf32, #tpu.memory_space<vmem>>, vector<1x1x8x90xf32>
    %8 = vector.shape_cast %7 : vector<1x1x8x90xf32> to vector<8x90xf32>
    %9 = arith.truncf %8 : vector<8x90xf32> to vector<8x90xbf16>
    %cst = arith.constant dense<0.000000e+00> : vector<8x64xf32>
    %10 = tpu.matmul %9, %2, %cst {dimension_numbers = #tpu.dot_dimension_numbers<[1], [0], [0], [1], [0, 0, 1, 1], [], []>} : vector<8x90xbf16>, vector<90x64xbf16>, vector<8x64xf32> -> vector<8x64xf32>
    %c1_12 = arith.constant 1 : index
    %c0_13 = arith.constant 0 : index
    %c0_14 = arith.constant 0 : index
    %c0_15 = arith.constant 0 : index
    %11 = vector.load %arg0[%c1_12, %c0_13, %c0_14, %c0_15] : memref<2x2x9x90xf32, #tpu.memory_space<vmem>>, vector<1x1x8x90xf32>
    %12 = vector.shape_cast %11 : vector<1x1x8x90xf32> to vector<8x90xf32>
    %13 = arith.truncf %12 : vector<8x90xf32> to vector<8x90xbf16>
    %cst_16 = arith.constant dense<0.000000e+00> : vector<8x64xf32>
    %14 = tpu.matmul %13, %4, %cst_16 {dimension_numbers = #tpu.dot_dimension_numbers<[1], [0], [0], [1], [0, 0, 1, 1], [], []>} : vector<8x90xbf16>, vector<90x64xbf16>, vector<8x64xf32> -> vector<8x64xf32>
    %15 = arith.addf %10, %14 : vector<8x64xf32>
    %c0_17 = arith.constant 0 : index
    %c0_18 = arith.constant 0 : index
    %c1_19 = arith.constant 1 : index
    %c0_20 = arith.constant 0 : index
    %16 = vector.load %arg0[%c0_17, %c0_18, %c1_19, %c0_20] : memref<2x2x9x90xf32, #tpu.memory_space<vmem>>, vector<1x1x8x90xf32>
    %17 = vector.shape_cast %16 : vector<1x1x8x90xf32> to vector<8x90xf32>
    %18 = arith.truncf %17 : vector<8x90xf32> to vector<8x90xbf16>
    %cst_21 = arith.constant dense<0.000000e+00> : vector<8x64xf32>
    %19 = tpu.matmul %18, %6, %cst_21 {dimension_numbers = #tpu.dot_dimension_numbers<[1], [0], [0], [1], [0, 0, 1, 1], [], []>} : vector<8x90xbf16>, vector<90x64xbf16>, vector<8x64xf32> -> vector<8x64xf32>
    %20 = arith.addf %15, %19 : vector<8x64xf32>
    %21 = vector.broadcast %0 : vector<1x64xf32> to vector<8x64xf32>
    %22 = arith.addf %20, %21 : vector<8x64xf32>
    %c0_22 = arith.constant 0 : index
    %c1_23 = arith.constant 1 : index
    %c0_24 = arith.constant 0 : index
    %c0_25 = arith.constant 0 : index
    %23 = vector.load %arg0[%c0_22, %c1_23, %c0_24, %c0_25] : memref<2x2x9x90xf32, #tpu.memory_space<vmem>>, vector<1x1x8x90xf32>
    %24 = vector.shape_cast %23 : vector<1x1x8x90xf32> to vector<8x90xf32>
    %25 = arith.truncf %24 : vector<8x90xf32> to vector<8x90xbf16>
    %cst_26 = arith.constant dense<0.000000e+00> : vector<8x64xf32>
    %26 = tpu.matmul %25, %2, %cst_26 {dimension_numbers = #tpu.dot_dimension_numbers<[1], [0], [0], [1], [0, 0, 1, 1], [], []>} : vector<8x90xbf16>, vector<90x64xbf16>, vector<8x64xf32> -> vector<8x64xf32>
    %c1_27 = arith.constant 1 : index
    %c1_28 = arith.constant 1 : index
    %c0_29 = arith.constant 0 : index
    %c0_30 = arith.constant 0 : index
    %27 = vector.load %arg0[%c1_27, %c1_28, %c0_29, %c0_30] : memref<2x2x9x90xf32, #tpu.memory_space<vmem>>, vector<1x1x8x90xf32>
    %28 = vector.shape_cast %27 : vector<1x1x8x90xf32> to vector<8x90xf32>
    %29 = arith.truncf %28 : vector<8x90xf32> to vector<8x90xbf16>
    %cst_31 = arith.constant dense<0.000000e+00> : vector<8x64xf32>
    %30 = tpu.matmul %29, %4, %cst_31 {dimension_numbers = #tpu.dot_dimension_numbers<[1], [0], [0], [1], [0, 0, 1, 1], [], []>} : vector<8x90xbf16>, vector<90x64xbf16>, vector<8x64xf32> -> vector<8x64xf32>
    %31 = arith.addf %26, %30 : vector<8x64xf32>
    %c0_32 = arith.constant 0 : index
    %c1_33 = arith.constant 1 : index
    %c1_34 = arith.constant 1 : index
    %c0_35 = arith.constant 0 : index
    %32 = vector.load %arg0[%c0_32, %c1_33, %c1_34, %c0_35] : memref<2x2x9x90xf32, #tpu.memory_space<vmem>>, vector<1x1x8x90xf32>
    %33 = vector.shape_cast %32 : vector<1x1x8x90xf32> to vector<8x90xf32>
    %34 = arith.truncf %33 : vector<8x90xf32> to vector<8x90xbf16>
    %cst_36 = arith.constant dense<0.000000e+00> : vector<8x64xf32>
    %35 = tpu.matmul %34, %6, %cst_36 {dimension_numbers = #tpu.dot_dimension_numbers<[1], [0], [0], [1], [0, 0, 1, 1], [], []>} : vector<8x90xbf16>, vector<90x64xbf16>, vector<8x64xf32> -> vector<8x64xf32>
    %36 = arith.addf %31, %35 : vector<8x64xf32>
    %37 = vector.broadcast %0 : vector<1x64xf32> to vector<8x64xf32>
    %38 = arith.addf %36, %37 : vector<8x64xf32>
    %c0_37 = arith.constant 0 : index
    %c0_38 = arith.constant 0 : index
    %39 = vector.load %arg5[%c0_37, %c0_38] : memref<64x8xf32, #tpu.memory_space<vmem>>, vector<64x8xf32>
    %c0_39 = arith.constant 0 : index
    %c0_40 = arith.constant 0 : index
    %40 = vector.load %arg6[%c0_39, %c0_40] : memref<8x64xf32, #tpu.memory_space<vmem>>, vector<8x64xf32>
    %cst_41 = arith.constant dense<0.000000e+00> : vector<64xf32>
    %41 = vector.multi_reduction <add>, %22, %cst_41 [0] : vector<8x64xf32> to vector<64xf32>
    %42 = vector.shape_cast %41 : vector<64xf32> to vector<1x64xf32>
    %cst_42 = arith.constant dense<0.000000e+00> : vector<64xf32>
    %43 = vector.multi_reduction <add>, %38, %cst_42 [0] : vector<8x64xf32> to vector<64xf32>
    %44 = vector.shape_cast %43 : vector<64xf32> to vector<1x64xf32>
    %45 = arith.addf %42, %44 : vector<1x64xf32>
    %cst_43 = arith.constant dense<0.000000e+00> : vector<1x8xf32>
    %46 = tpu.matmul %45, %39, %cst_43 {dimension_numbers = #tpu.dot_dimension_numbers<[1], [0], [0], [1], [0, 0, 1, 1], [], []>} : vector<1x64xf32>, vector<64x8xf32>, vector<1x8xf32> -> vector<1x8xf32>
    %cst_44 = arith.constant 7.812500e-03 : f32
    %47 = vector.broadcast %cst_44 : f32 to vector<1x8xf32>
    %48 = arith.mulf %46, %47 : vector<1x8xf32>
    %cst_45 = arith.constant dense<0.000000e+00> : vector<1x64xf32>
    %49 = tpu.matmul %48, %40, %cst_45 {dimension_numbers = #tpu.dot_dimension_numbers<[1], [0], [0], [1], [0, 0, 1, 1], [], []>} : vector<1x8xf32>, vector<8x64xf32>, vector<1x64xf32> -> vector<1x64xf32>
    %50 = vector.broadcast %49 : vector<1x64xf32> to vector<8x64xf32>
    %51 = arith.subf %22, %50 : vector<8x64xf32>
    %52 = arith.mulf %51, %51 : vector<8x64xf32>
    %cst_46 = arith.constant dense<0.000000e+00> : vector<64xf32>
    %53 = vector.multi_reduction <add>, %52, %cst_46 [0] : vector<8x64xf32> to vector<64xf32>
    %54 = vector.shape_cast %53 : vector<64xf32> to vector<1x64xf32>
    %55 = vector.broadcast %49 : vector<1x64xf32> to vector<8x64xf32>
    %56 = arith.subf %38, %55 : vector<8x64xf32>
    %57 = arith.mulf %56, %56 : vector<8x64xf32>
    %cst_47 = arith.constant dense<0.000000e+00> : vector<64xf32>
    %58 = vector.multi_reduction <add>, %57, %cst_47 [0] : vector<8x64xf32> to vector<64xf32>
    %59 = vector.shape_cast %58 : vector<64xf32> to vector<1x64xf32>
    %60 = arith.addf %54, %59 : vector<1x64xf32>
    %cst_48 = arith.constant dense<0.000000e+00> : vector<1x8xf32>
    %61 = tpu.matmul %60, %39, %cst_48 {dimension_numbers = #tpu.dot_dimension_numbers<[1], [0], [0], [1], [0, 0, 1, 1], [], []>} : vector<1x64xf32>, vector<64x8xf32>, vector<1x8xf32> -> vector<1x8xf32>
    %cst_49 = arith.constant 7.812500e-03 : f32
    %62 = vector.broadcast %cst_49 : f32 to vector<1x8xf32>
    %63 = arith.mulf %61, %62 : vector<1x8xf32>
    %c0_50 = arith.constant 0 : index
    %c0_51 = arith.constant 0 : index
    %64 = vector.load %arg3[%c0_50, %c0_51] : memref<1x8xf32, #tpu.memory_space<vmem>>, vector<1x8xf32>
    %cst_52 = arith.constant 9.99999974E-6 : f32
    %65 = vector.broadcast %cst_52 : f32 to vector<1x8xf32>
    %66 = arith.addf %63, %65 : vector<1x8xf32>
    %67 = math.rsqrt %66 : vector<1x8xf32>
    %68 = arith.mulf %64, %67 : vector<1x8xf32>
    %cst_53 = arith.constant dense<0.000000e+00> : vector<1x64xf32>
    %69 = tpu.matmul %68, %40, %cst_53 {dimension_numbers = #tpu.dot_dimension_numbers<[1], [0], [0], [1], [0, 0, 1, 1], [], []>} : vector<1x8xf32>, vector<8x64xf32>, vector<1x64xf32> -> vector<1x64xf32>
    %c0_54 = arith.constant 0 : index
    %c0_55 = arith.constant 0 : index
    %70 = vector.load %arg4[%c0_54, %c0_55] : memref<1x8xf32, #tpu.memory_space<vmem>>, vector<1x8xf32>
    %cst_56 = arith.constant dense<0.000000e+00> : vector<1x64xf32>
    %71 = tpu.matmul %70, %40, %cst_56 {dimension_numbers = #tpu.dot_dimension_numbers<[1], [0], [0], [1], [0, 0, 1, 1], [], []>} : vector<1x8xf32>, vector<8x64xf32>, vector<1x64xf32> -> vector<1x64xf32>
    %72 = vector.broadcast %69 : vector<1x64xf32> to vector<8x64xf32>
    %73 = arith.mulf %51, %72 : vector<8x64xf32>
    %74 = vector.broadcast %71 : vector<1x64xf32> to vector<8x64xf32>
    %75 = arith.addf %73, %74 : vector<8x64xf32>
    %76 = vector.broadcast %69 : vector<1x64xf32> to vector<8x64xf32>
    %77 = arith.mulf %56, %76 : vector<8x64xf32>
    %78 = vector.broadcast %71 : vector<1x64xf32> to vector<8x64xf32>
    %79 = arith.addf %77, %78 : vector<8x64xf32>
    %cst_57 = arith.constant 0.000000e+00 : f32
    %80 = vector.broadcast %cst_57 : f32 to vector<8x64xf32>
    %81 = arith.cmpf oge, %75, %80 : vector<8x64xf32>
    %cst_58 = arith.constant 0.00999999977 : f32
    %82 = vector.broadcast %cst_58 : f32 to vector<8x64xf32>
    %83 = arith.mulf %82, %75 : vector<8x64xf32>
    %84 = arith.select %81, %75, %83 : vector<8x64xi1>, vector<8x64xf32>
    %c0_59 = arith.constant 0 : index
    %c0_60 = arith.constant 0 : index
    %c0_61 = arith.constant 0 : index
    %c0_62 = arith.constant 0 : index
    %85 = vector.load %arg7[%c0_59, %c0_60, %c0_61, %c0_62] : memref<1x2x8x64xf32, #tpu.memory_space<vmem>>, vector<1x1x8x64xf32>
    %86 = vector.shape_cast %85 : vector<1x1x8x64xf32> to vector<8x64xf32>
    %87 = vector.shape_cast %84 : vector<8x64xf32> to vector<1x1x8x64xf32>
    tpu.vector_store %arg7[%c0_59, %c0_60, %c0_61, %c0_62], %87 {strides = array<i32>} : memref<1x2x8x64xf32, #tpu.memory_space<vmem>>, vector<1x1x8x64xf32>,
    %cst_63 = arith.constant 0.000000e+00 : f32
    %88 = vector.broadcast %cst_63 : f32 to vector<8x64xf32>
    %89 = arith.cmpf oge, %79, %88 : vector<8x64xf32>
    %cst_64 = arith.constant 0.00999999977 : f32
    %90 = vector.broadcast %cst_64 : f32 to vector<8x64xf32>
    %91 = arith.mulf %90, %79 : vector<8x64xf32>
    %92 = arith.select %89, %79, %91 : vector<8x64xi1>, vector<8x64xf32>
    %c0_65 = arith.constant 0 : index
    %c1_66 = arith.constant 1 : index
    %c0_67 = arith.constant 0 : index
    %c0_68 = arith.constant 0 : index
    %93 = vector.load %arg7[%c0_65, %c1_66, %c0_67, %c0_68] : memref<1x2x8x64xf32, #tpu.memory_space<vmem>>, vector<1x1x8x64xf32>
    %94 = vector.shape_cast %93 : vector<1x1x8x64xf32> to vector<8x64xf32>
    %95 = vector.shape_cast %92 : vector<8x64xf32> to vector<1x1x8x64xf32>
    tpu.vector_store %arg7[%c0_65, %c1_66, %c0_67, %c0_68], %95 {strides = array<i32>} : memref<1x2x8x64xf32, #tpu.memory_space<vmem>>, vector<1x1x8x64xf32>,
    return
  }
}

module attributes {stable_mosaic.version = 11 : i64} {
  func.func @_conv_block_kernel(%arg0: memref<2x2x5x80xf32, #tpu.memory_space<vmem>>, %arg1: memref<3x80x64xbf16, #tpu.memory_space<vmem>>, %arg2: memref<1x64xf32, #tpu.memory_space<vmem>>, %arg3: memref<1x16xf32, #tpu.memory_space<vmem>>, %arg4: memref<1x16xf32, #tpu.memory_space<vmem>>, %arg5: memref<64x16xf32, #tpu.memory_space<vmem>>, %arg6: memref<16x64xf32, #tpu.memory_space<vmem>>, %arg7: memref<1x2x4x64xf32, #tpu.memory_space<vmem>>) attributes {dimension_semantics = [], scalar_prefetch = 0 : i64, scratch_operands = 0 : i64, tpu.core_type = #tpu.core_type<tc>} {
    %c0 = arith.constant 0 : index
    %c0_0 = arith.constant 0 : index
    %0 = vector.load %arg2[%c0, %c0_0] : memref<1x64xf32, #tpu.memory_space<vmem>>, vector<1x64xf32>
    %c0_1 = arith.constant 0 : index
    %c0_2 = arith.constant 0 : index
    %c0_3 = arith.constant 0 : index
    %1 = vector.load %arg1[%c0_1, %c0_2, %c0_3] : memref<3x80x64xbf16, #tpu.memory_space<vmem>>, vector<1x80x64xbf16>
    %2 = vector.shape_cast %1 : vector<1x80x64xbf16> to vector<80x64xbf16>
    %c1 = arith.constant 1 : index
    %c0_4 = arith.constant 0 : index
    %c0_5 = arith.constant 0 : index
    %3 = vector.load %arg1[%c1, %c0_4, %c0_5] : memref<3x80x64xbf16, #tpu.memory_space<vmem>>, vector<1x80x64xbf16>
    %4 = vector.shape_cast %3 : vector<1x80x64xbf16> to vector<80x64xbf16>
    %c2 = arith.constant 2 : index
    %c0_6 = arith.constant 0 : index
    %c0_7 = arith.constant 0 : index
    %5 = vector.load %arg1[%c2, %c0_6, %c0_7] : memref<3x80x64xbf16, #tpu.memory_space<vmem>>, vector<1x80x64xbf16>
    %6 = vector.shape_cast %5 : vector<1x80x64xbf16> to vector<80x64xbf16>
    %c0_8 = arith.constant 0 : index
    %c0_9 = arith.constant 0 : index
    %c0_10 = arith.constant 0 : index
    %c0_11 = arith.constant 0 : index
    %7 = vector.load %arg0[%c0_8, %c0_9, %c0_10, %c0_11] : memref<2x2x5x80xf32, #tpu.memory_space<vmem>>, vector<1x1x4x80xf32>
    %8 = vector.shape_cast %7 : vector<1x1x4x80xf32> to vector<4x80xf32>
    %9 = arith.truncf %8 : vector<4x80xf32> to vector<4x80xbf16>
    %cst = arith.constant dense<0.000000e+00> : vector<4x64xf32>
    %10 = tpu.matmul %9, %2, %cst {dimension_numbers = #tpu.dot_dimension_numbers<[1], [0], [0], [1], [0, 0, 1, 1], [], []>} : vector<4x80xbf16>, vector<80x64xbf16>, vector<4x64xf32> -> vector<4x64xf32>
    %c1_12 = arith.constant 1 : index
    %c0_13 = arith.constant 0 : index
    %c0_14 = arith.constant 0 : index
    %c0_15 = arith.constant 0 : index
    %11 = vector.load %arg0[%c1_12, %c0_13, %c0_14, %c0_15] : memref<2x2x5x80xf32, #tpu.memory_space<vmem>>, vector<1x1x4x80xf32>
    %12 = vector.shape_cast %11 : vector<1x1x4x80xf32> to vector<4x80xf32>
    %13 = arith.truncf %12 : vector<4x80xf32> to vector<4x80xbf16>
    %cst_16 = arith.constant dense<0.000000e+00> : vector<4x64xf32>
    %14 = tpu.matmul %13, %4, %cst_16 {dimension_numbers = #tpu.dot_dimension_numbers<[1], [0], [0], [1], [0, 0, 1, 1], [], []>} : vector<4x80xbf16>, vector<80x64xbf16>, vector<4x64xf32> -> vector<4x64xf32>
    %15 = arith.addf %10, %14 : vector<4x64xf32>
    %c0_17 = arith.constant 0 : index
    %c0_18 = arith.constant 0 : index
    %c1_19 = arith.constant 1 : index
    %c0_20 = arith.constant 0 : index
    %16 = vector.load %arg0[%c0_17, %c0_18, %c1_19, %c0_20] : memref<2x2x5x80xf32, #tpu.memory_space<vmem>>, vector<1x1x4x80xf32>
    %17 = vector.shape_cast %16 : vector<1x1x4x80xf32> to vector<4x80xf32>
    %18 = arith.truncf %17 : vector<4x80xf32> to vector<4x80xbf16>
    %cst_21 = arith.constant dense<0.000000e+00> : vector<4x64xf32>
    %19 = tpu.matmul %18, %6, %cst_21 {dimension_numbers = #tpu.dot_dimension_numbers<[1], [0], [0], [1], [0, 0, 1, 1], [], []>} : vector<4x80xbf16>, vector<80x64xbf16>, vector<4x64xf32> -> vector<4x64xf32>
    %20 = arith.addf %15, %19 : vector<4x64xf32>
    %21 = vector.broadcast %0 : vector<1x64xf32> to vector<4x64xf32>
    %22 = arith.addf %20, %21 : vector<4x64xf32>
    %c0_22 = arith.constant 0 : index
    %c1_23 = arith.constant 1 : index
    %c0_24 = arith.constant 0 : index
    %c0_25 = arith.constant 0 : index
    %23 = vector.load %arg0[%c0_22, %c1_23, %c0_24, %c0_25] : memref<2x2x5x80xf32, #tpu.memory_space<vmem>>, vector<1x1x4x80xf32>
    %24 = vector.shape_cast %23 : vector<1x1x4x80xf32> to vector<4x80xf32>
    %25 = arith.truncf %24 : vector<4x80xf32> to vector<4x80xbf16>
    %cst_26 = arith.constant dense<0.000000e+00> : vector<4x64xf32>
    %26 = tpu.matmul %25, %2, %cst_26 {dimension_numbers = #tpu.dot_dimension_numbers<[1], [0], [0], [1], [0, 0, 1, 1], [], []>} : vector<4x80xbf16>, vector<80x64xbf16>, vector<4x64xf32> -> vector<4x64xf32>
    %c1_27 = arith.constant 1 : index
    %c1_28 = arith.constant 1 : index
    %c0_29 = arith.constant 0 : index
    %c0_30 = arith.constant 0 : index
    %27 = vector.load %arg0[%c1_27, %c1_28, %c0_29, %c0_30] : memref<2x2x5x80xf32, #tpu.memory_space<vmem>>, vector<1x1x4x80xf32>
    %28 = vector.shape_cast %27 : vector<1x1x4x80xf32> to vector<4x80xf32>
    %29 = arith.truncf %28 : vector<4x80xf32> to vector<4x80xbf16>
    %cst_31 = arith.constant dense<0.000000e+00> : vector<4x64xf32>
    %30 = tpu.matmul %29, %4, %cst_31 {dimension_numbers = #tpu.dot_dimension_numbers<[1], [0], [0], [1], [0, 0, 1, 1], [], []>} : vector<4x80xbf16>, vector<80x64xbf16>, vector<4x64xf32> -> vector<4x64xf32>
    %31 = arith.addf %26, %30 : vector<4x64xf32>
    %c0_32 = arith.constant 0 : index
    %c1_33 = arith.constant 1 : index
    %c1_34 = arith.constant 1 : index
    %c0_35 = arith.constant 0 : index
    %32 = vector.load %arg0[%c0_32, %c1_33, %c1_34, %c0_35] : memref<2x2x5x80xf32, #tpu.memory_space<vmem>>, vector<1x1x4x80xf32>
    %33 = vector.shape_cast %32 : vector<1x1x4x80xf32> to vector<4x80xf32>
    %34 = arith.truncf %33 : vector<4x80xf32> to vector<4x80xbf16>
    %cst_36 = arith.constant dense<0.000000e+00> : vector<4x64xf32>
    %35 = tpu.matmul %34, %6, %cst_36 {dimension_numbers = #tpu.dot_dimension_numbers<[1], [0], [0], [1], [0, 0, 1, 1], [], []>} : vector<4x80xbf16>, vector<80x64xbf16>, vector<4x64xf32> -> vector<4x64xf32>
    %36 = arith.addf %31, %35 : vector<4x64xf32>
    %37 = vector.broadcast %0 : vector<1x64xf32> to vector<4x64xf32>
    %38 = arith.addf %36, %37 : vector<4x64xf32>
    %c0_37 = arith.constant 0 : index
    %c0_38 = arith.constant 0 : index
    %39 = vector.load %arg5[%c0_37, %c0_38] : memref<64x16xf32, #tpu.memory_space<vmem>>, vector<64x16xf32>
    %c0_39 = arith.constant 0 : index
    %c0_40 = arith.constant 0 : index
    %40 = vector.load %arg6[%c0_39, %c0_40] : memref<16x64xf32, #tpu.memory_space<vmem>>, vector<16x64xf32>
    %cst_41 = arith.constant dense<0.000000e+00> : vector<64xf32>
    %41 = vector.multi_reduction <add>, %22, %cst_41 [0] : vector<4x64xf32> to vector<64xf32>
    %42 = vector.shape_cast %41 : vector<64xf32> to vector<1x64xf32>
    %cst_42 = arith.constant dense<0.000000e+00> : vector<64xf32>
    %43 = vector.multi_reduction <add>, %38, %cst_42 [0] : vector<4x64xf32> to vector<64xf32>
    %44 = vector.shape_cast %43 : vector<64xf32> to vector<1x64xf32>
    %45 = arith.addf %42, %44 : vector<1x64xf32>
    %cst_43 = arith.constant dense<0.000000e+00> : vector<1x16xf32>
    %46 = tpu.matmul %45, %39, %cst_43 {dimension_numbers = #tpu.dot_dimension_numbers<[1], [0], [0], [1], [0, 0, 1, 1], [], []>} : vector<1x64xf32>, vector<64x16xf32>, vector<1x16xf32> -> vector<1x16xf32>
    %cst_44 = arith.constant 3.125000e-02 : f32
    %47 = vector.broadcast %cst_44 : f32 to vector<1x16xf32>
    %48 = arith.mulf %46, %47 : vector<1x16xf32>
    %cst_45 = arith.constant dense<0.000000e+00> : vector<1x64xf32>
    %49 = tpu.matmul %48, %40, %cst_45 {dimension_numbers = #tpu.dot_dimension_numbers<[1], [0], [0], [1], [0, 0, 1, 1], [], []>} : vector<1x16xf32>, vector<16x64xf32>, vector<1x64xf32> -> vector<1x64xf32>
    %50 = vector.broadcast %49 : vector<1x64xf32> to vector<4x64xf32>
    %51 = arith.subf %22, %50 : vector<4x64xf32>
    %52 = arith.mulf %51, %51 : vector<4x64xf32>
    %cst_46 = arith.constant dense<0.000000e+00> : vector<64xf32>
    %53 = vector.multi_reduction <add>, %52, %cst_46 [0] : vector<4x64xf32> to vector<64xf32>
    %54 = vector.shape_cast %53 : vector<64xf32> to vector<1x64xf32>
    %55 = vector.broadcast %49 : vector<1x64xf32> to vector<4x64xf32>
    %56 = arith.subf %38, %55 : vector<4x64xf32>
    %57 = arith.mulf %56, %56 : vector<4x64xf32>
    %cst_47 = arith.constant dense<0.000000e+00> : vector<64xf32>
    %58 = vector.multi_reduction <add>, %57, %cst_47 [0] : vector<4x64xf32> to vector<64xf32>
    %59 = vector.shape_cast %58 : vector<64xf32> to vector<1x64xf32>
    %60 = arith.addf %54, %59 : vector<1x64xf32>
    %cst_48 = arith.constant dense<0.000000e+00> : vector<1x16xf32>
    %61 = tpu.matmul %60, %39, %cst_48 {dimension_numbers = #tpu.dot_dimension_numbers<[1], [0], [0], [1], [0, 0, 1, 1], [], []>} : vector<1x64xf32>, vector<64x16xf32>, vector<1x16xf32> -> vector<1x16xf32>
    %cst_49 = arith.constant 3.125000e-02 : f32
    %62 = vector.broadcast %cst_49 : f32 to vector<1x16xf32>
    %63 = arith.mulf %61, %62 : vector<1x16xf32>
    %c0_50 = arith.constant 0 : index
    %c0_51 = arith.constant 0 : index
    %64 = vector.load %arg3[%c0_50, %c0_51] : memref<1x16xf32, #tpu.memory_space<vmem>>, vector<1x16xf32>
    %cst_52 = arith.constant 9.99999974E-6 : f32
    %65 = vector.broadcast %cst_52 : f32 to vector<1x16xf32>
    %66 = arith.addf %63, %65 : vector<1x16xf32>
    %67 = math.rsqrt %66 : vector<1x16xf32>
    %68 = arith.mulf %64, %67 : vector<1x16xf32>
    %cst_53 = arith.constant dense<0.000000e+00> : vector<1x64xf32>
    %69 = tpu.matmul %68, %40, %cst_53 {dimension_numbers = #tpu.dot_dimension_numbers<[1], [0], [0], [1], [0, 0, 1, 1], [], []>} : vector<1x16xf32>, vector<16x64xf32>, vector<1x64xf32> -> vector<1x64xf32>
    %c0_54 = arith.constant 0 : index
    %c0_55 = arith.constant 0 : index
    %70 = vector.load %arg4[%c0_54, %c0_55] : memref<1x16xf32, #tpu.memory_space<vmem>>, vector<1x16xf32>
    %cst_56 = arith.constant dense<0.000000e+00> : vector<1x64xf32>
    %71 = tpu.matmul %70, %40, %cst_56 {dimension_numbers = #tpu.dot_dimension_numbers<[1], [0], [0], [1], [0, 0, 1, 1], [], []>} : vector<1x16xf32>, vector<16x64xf32>, vector<1x64xf32> -> vector<1x64xf32>
    %72 = vector.broadcast %69 : vector<1x64xf32> to vector<4x64xf32>
    %73 = arith.mulf %51, %72 : vector<4x64xf32>
    %74 = vector.broadcast %71 : vector<1x64xf32> to vector<4x64xf32>
    %75 = arith.addf %73, %74 : vector<4x64xf32>
    %76 = vector.broadcast %69 : vector<1x64xf32> to vector<4x64xf32>
    %77 = arith.mulf %56, %76 : vector<4x64xf32>
    %78 = vector.broadcast %71 : vector<1x64xf32> to vector<4x64xf32>
    %79 = arith.addf %77, %78 : vector<4x64xf32>
    %cst_57 = arith.constant 0.000000e+00 : f32
    %80 = vector.broadcast %cst_57 : f32 to vector<4x64xf32>
    %81 = arith.cmpf oge, %75, %80 : vector<4x64xf32>
    %cst_58 = arith.constant 0.00999999977 : f32
    %82 = vector.broadcast %cst_58 : f32 to vector<4x64xf32>
    %83 = arith.mulf %82, %75 : vector<4x64xf32>
    %84 = arith.select %81, %75, %83 : vector<4x64xi1>, vector<4x64xf32>
    %c0_59 = arith.constant 0 : index
    %c0_60 = arith.constant 0 : index
    %c0_61 = arith.constant 0 : index
    %c0_62 = arith.constant 0 : index
    %85 = vector.load %arg7[%c0_59, %c0_60, %c0_61, %c0_62] : memref<1x2x4x64xf32, #tpu.memory_space<vmem>>, vector<1x1x4x64xf32>
    %86 = vector.shape_cast %85 : vector<1x1x4x64xf32> to vector<4x64xf32>
    %87 = vector.shape_cast %84 : vector<4x64xf32> to vector<1x1x4x64xf32>
    tpu.vector_store %arg7[%c0_59, %c0_60, %c0_61, %c0_62], %87 {strides = array<i32>} : memref<1x2x4x64xf32, #tpu.memory_space<vmem>>, vector<1x1x4x64xf32>,
    %cst_63 = arith.constant 0.000000e+00 : f32
    %88 = vector.broadcast %cst_63 : f32 to vector<4x64xf32>
    %89 = arith.cmpf oge, %79, %88 : vector<4x64xf32>
    %cst_64 = arith.constant 0.00999999977 : f32
    %90 = vector.broadcast %cst_64 : f32 to vector<4x64xf32>
    %91 = arith.mulf %90, %79 : vector<4x64xf32>
    %92 = arith.select %89, %79, %91 : vector<4x64xi1>, vector<4x64xf32>
    %c0_65 = arith.constant 0 : index
    %c1_66 = arith.constant 1 : index
    %c0_67 = arith.constant 0 : index
    %c0_68 = arith.constant 0 : index
    %93 = vector.load %arg7[%c0_65, %c1_66, %c0_67, %c0_68] : memref<1x2x4x64xf32, #tpu.memory_space<vmem>>, vector<1x1x4x64xf32>
    %94 = vector.shape_cast %93 : vector<1x1x4x64xf32> to vector<4x64xf32>
    %95 = vector.shape_cast %92 : vector<4x64xf32> to vector<1x1x4x64xf32>
    tpu.vector_store %arg7[%c0_65, %c1_66, %c0_67, %c0_68], %95 {strides = array<i32>} : memref<1x2x4x64xf32, #tpu.memory_space<vmem>>, vector<1x1x4x64xf32>,
    return
  }
}

module attributes {stable_mosaic.version = 11 : i64} {
  func.func @_conv_block_kernel(%arg0: memref<2x2x3x96xf32, #tpu.memory_space<vmem>>, %arg1: memref<3x96x64xbf16, #tpu.memory_space<vmem>>, %arg2: memref<1x64xf32, #tpu.memory_space<vmem>>, %arg3: memref<1x32xf32, #tpu.memory_space<vmem>>, %arg4: memref<1x32xf32, #tpu.memory_space<vmem>>, %arg5: memref<64x32xf32, #tpu.memory_space<vmem>>, %arg6: memref<32x64xf32, #tpu.memory_space<vmem>>, %arg7: memref<1x2x2x64xf32, #tpu.memory_space<vmem>>) attributes {dimension_semantics = [], scalar_prefetch = 0 : i64, scratch_operands = 0 : i64, tpu.core_type = #tpu.core_type<tc>} {
    %c0 = arith.constant 0 : index
    %c0_0 = arith.constant 0 : index
    %0 = vector.load %arg2[%c0, %c0_0] : memref<1x64xf32, #tpu.memory_space<vmem>>, vector<1x64xf32>
    %c0_1 = arith.constant 0 : index
    %c0_2 = arith.constant 0 : index
    %c0_3 = arith.constant 0 : index
    %1 = vector.load %arg1[%c0_1, %c0_2, %c0_3] : memref<3x96x64xbf16, #tpu.memory_space<vmem>>, vector<1x96x64xbf16>
    %2 = vector.shape_cast %1 : vector<1x96x64xbf16> to vector<96x64xbf16>
    %c1 = arith.constant 1 : index
    %c0_4 = arith.constant 0 : index
    %c0_5 = arith.constant 0 : index
    %3 = vector.load %arg1[%c1, %c0_4, %c0_5] : memref<3x96x64xbf16, #tpu.memory_space<vmem>>, vector<1x96x64xbf16>
    %4 = vector.shape_cast %3 : vector<1x96x64xbf16> to vector<96x64xbf16>
    %c2 = arith.constant 2 : index
    %c0_6 = arith.constant 0 : index
    %c0_7 = arith.constant 0 : index
    %5 = vector.load %arg1[%c2, %c0_6, %c0_7] : memref<3x96x64xbf16, #tpu.memory_space<vmem>>, vector<1x96x64xbf16>
    %6 = vector.shape_cast %5 : vector<1x96x64xbf16> to vector<96x64xbf16>
    %c0_8 = arith.constant 0 : index
    %c0_9 = arith.constant 0 : index
    %c0_10 = arith.constant 0 : index
    %c0_11 = arith.constant 0 : index
    %7 = vector.load %arg0[%c0_8, %c0_9, %c0_10, %c0_11] : memref<2x2x3x96xf32, #tpu.memory_space<vmem>>, vector<1x1x2x96xf32>
    %8 = vector.shape_cast %7 : vector<1x1x2x96xf32> to vector<2x96xf32>
    %9 = arith.truncf %8 : vector<2x96xf32> to vector<2x96xbf16>
    %cst = arith.constant dense<0.000000e+00> : vector<2x64xf32>
    %10 = tpu.matmul %9, %2, %cst {dimension_numbers = #tpu.dot_dimension_numbers<[1], [0], [0], [1], [0, 0, 1, 1], [], []>} : vector<2x96xbf16>, vector<96x64xbf16>, vector<2x64xf32> -> vector<2x64xf32>
    %c1_12 = arith.constant 1 : index
    %c0_13 = arith.constant 0 : index
    %c0_14 = arith.constant 0 : index
    %c0_15 = arith.constant 0 : index
    %11 = vector.load %arg0[%c1_12, %c0_13, %c0_14, %c0_15] : memref<2x2x3x96xf32, #tpu.memory_space<vmem>>, vector<1x1x2x96xf32>
    %12 = vector.shape_cast %11 : vector<1x1x2x96xf32> to vector<2x96xf32>
    %13 = arith.truncf %12 : vector<2x96xf32> to vector<2x96xbf16>
    %cst_16 = arith.constant dense<0.000000e+00> : vector<2x64xf32>
    %14 = tpu.matmul %13, %4, %cst_16 {dimension_numbers = #tpu.dot_dimension_numbers<[1], [0], [0], [1], [0, 0, 1, 1], [], []>} : vector<2x96xbf16>, vector<96x64xbf16>, vector<2x64xf32> -> vector<2x64xf32>
    %15 = arith.addf %10, %14 : vector<2x64xf32>
    %c0_17 = arith.constant 0 : index
    %c0_18 = arith.constant 0 : index
    %c1_19 = arith.constant 1 : index
    %c0_20 = arith.constant 0 : index
    %16 = vector.load %arg0[%c0_17, %c0_18, %c1_19, %c0_20] : memref<2x2x3x96xf32, #tpu.memory_space<vmem>>, vector<1x1x2x96xf32>
    %17 = vector.shape_cast %16 : vector<1x1x2x96xf32> to vector<2x96xf32>
    %18 = arith.truncf %17 : vector<2x96xf32> to vector<2x96xbf16>
    %cst_21 = arith.constant dense<0.000000e+00> : vector<2x64xf32>
    %19 = tpu.matmul %18, %6, %cst_21 {dimension_numbers = #tpu.dot_dimension_numbers<[1], [0], [0], [1], [0, 0, 1, 1], [], []>} : vector<2x96xbf16>, vector<96x64xbf16>, vector<2x64xf32> -> vector<2x64xf32>
    %20 = arith.addf %15, %19 : vector<2x64xf32>
    %21 = vector.broadcast %0 : vector<1x64xf32> to vector<2x64xf32>
    %22 = arith.addf %20, %21 : vector<2x64xf32>
    %c0_22 = arith.constant 0 : index
    %c1_23 = arith.constant 1 : index
    %c0_24 = arith.constant 0 : index
    %c0_25 = arith.constant 0 : index
    %23 = vector.load %arg0[%c0_22, %c1_23, %c0_24, %c0_25] : memref<2x2x3x96xf32, #tpu.memory_space<vmem>>, vector<1x1x2x96xf32>
    %24 = vector.shape_cast %23 : vector<1x1x2x96xf32> to vector<2x96xf32>
    %25 = arith.truncf %24 : vector<2x96xf32> to vector<2x96xbf16>
    %cst_26 = arith.constant dense<0.000000e+00> : vector<2x64xf32>
    %26 = tpu.matmul %25, %2, %cst_26 {dimension_numbers = #tpu.dot_dimension_numbers<[1], [0], [0], [1], [0, 0, 1, 1], [], []>} : vector<2x96xbf16>, vector<96x64xbf16>, vector<2x64xf32> -> vector<2x64xf32>
    %c1_27 = arith.constant 1 : index
    %c1_28 = arith.constant 1 : index
    %c0_29 = arith.constant 0 : index
    %c0_30 = arith.constant 0 : index
    %27 = vector.load %arg0[%c1_27, %c1_28, %c0_29, %c0_30] : memref<2x2x3x96xf32, #tpu.memory_space<vmem>>, vector<1x1x2x96xf32>
    %28 = vector.shape_cast %27 : vector<1x1x2x96xf32> to vector<2x96xf32>
    %29 = arith.truncf %28 : vector<2x96xf32> to vector<2x96xbf16>
    %cst_31 = arith.constant dense<0.000000e+00> : vector<2x64xf32>
    %30 = tpu.matmul %29, %4, %cst_31 {dimension_numbers = #tpu.dot_dimension_numbers<[1], [0], [0], [1], [0, 0, 1, 1], [], []>} : vector<2x96xbf16>, vector<96x64xbf16>, vector<2x64xf32> -> vector<2x64xf32>
    %31 = arith.addf %26, %30 : vector<2x64xf32>
    %c0_32 = arith.constant 0 : index
    %c1_33 = arith.constant 1 : index
    %c1_34 = arith.constant 1 : index
    %c0_35 = arith.constant 0 : index
    %32 = vector.load %arg0[%c0_32, %c1_33, %c1_34, %c0_35] : memref<2x2x3x96xf32, #tpu.memory_space<vmem>>, vector<1x1x2x96xf32>
    %33 = vector.shape_cast %32 : vector<1x1x2x96xf32> to vector<2x96xf32>
    %34 = arith.truncf %33 : vector<2x96xf32> to vector<2x96xbf16>
    %cst_36 = arith.constant dense<0.000000e+00> : vector<2x64xf32>
    %35 = tpu.matmul %34, %6, %cst_36 {dimension_numbers = #tpu.dot_dimension_numbers<[1], [0], [0], [1], [0, 0, 1, 1], [], []>} : vector<2x96xbf16>, vector<96x64xbf16>, vector<2x64xf32> -> vector<2x64xf32>
    %36 = arith.addf %31, %35 : vector<2x64xf32>
    %37 = vector.broadcast %0 : vector<1x64xf32> to vector<2x64xf32>
    %38 = arith.addf %36, %37 : vector<2x64xf32>
    %c0_37 = arith.constant 0 : index
    %c0_38 = arith.constant 0 : index
    %39 = vector.load %arg5[%c0_37, %c0_38] : memref<64x32xf32, #tpu.memory_space<vmem>>, vector<64x32xf32>
    %c0_39 = arith.constant 0 : index
    %c0_40 = arith.constant 0 : index
    %40 = vector.load %arg6[%c0_39, %c0_40] : memref<32x64xf32, #tpu.memory_space<vmem>>, vector<32x64xf32>
    %cst_41 = arith.constant dense<0.000000e+00> : vector<64xf32>
    %41 = vector.multi_reduction <add>, %22, %cst_41 [0] : vector<2x64xf32> to vector<64xf32>
    %42 = vector.shape_cast %41 : vector<64xf32> to vector<1x64xf32>
    %cst_42 = arith.constant dense<0.000000e+00> : vector<64xf32>
    %43 = vector.multi_reduction <add>, %38, %cst_42 [0] : vector<2x64xf32> to vector<64xf32>
    %44 = vector.shape_cast %43 : vector<64xf32> to vector<1x64xf32>
    %45 = arith.addf %42, %44 : vector<1x64xf32>
    %cst_43 = arith.constant dense<0.000000e+00> : vector<1x32xf32>
    %46 = tpu.matmul %45, %39, %cst_43 {dimension_numbers = #tpu.dot_dimension_numbers<[1], [0], [0], [1], [0, 0, 1, 1], [], []>} : vector<1x64xf32>, vector<64x32xf32>, vector<1x32xf32> -> vector<1x32xf32>
    %cst_44 = arith.constant 1.250000e-01 : f32
    %47 = vector.broadcast %cst_44 : f32 to vector<1x32xf32>
    %48 = arith.mulf %46, %47 : vector<1x32xf32>
    %cst_45 = arith.constant dense<0.000000e+00> : vector<1x64xf32>
    %49 = tpu.matmul %48, %40, %cst_45 {dimension_numbers = #tpu.dot_dimension_numbers<[1], [0], [0], [1], [0, 0, 1, 1], [], []>} : vector<1x32xf32>, vector<32x64xf32>, vector<1x64xf32> -> vector<1x64xf32>
    %50 = vector.broadcast %49 : vector<1x64xf32> to vector<2x64xf32>
    %51 = arith.subf %22, %50 : vector<2x64xf32>
    %52 = arith.mulf %51, %51 : vector<2x64xf32>
    %cst_46 = arith.constant dense<0.000000e+00> : vector<64xf32>
    %53 = vector.multi_reduction <add>, %52, %cst_46 [0] : vector<2x64xf32> to vector<64xf32>
    %54 = vector.shape_cast %53 : vector<64xf32> to vector<1x64xf32>
    %55 = vector.broadcast %49 : vector<1x64xf32> to vector<2x64xf32>
    %56 = arith.subf %38, %55 : vector<2x64xf32>
    %57 = arith.mulf %56, %56 : vector<2x64xf32>
    %cst_47 = arith.constant dense<0.000000e+00> : vector<64xf32>
    %58 = vector.multi_reduction <add>, %57, %cst_47 [0] : vector<2x64xf32> to vector<64xf32>
    %59 = vector.shape_cast %58 : vector<64xf32> to vector<1x64xf32>
    %60 = arith.addf %54, %59 : vector<1x64xf32>
    %cst_48 = arith.constant dense<0.000000e+00> : vector<1x32xf32>
    %61 = tpu.matmul %60, %39, %cst_48 {dimension_numbers = #tpu.dot_dimension_numbers<[1], [0], [0], [1], [0, 0, 1, 1], [], []>} : vector<1x64xf32>, vector<64x32xf32>, vector<1x32xf32> -> vector<1x32xf32>
    %cst_49 = arith.constant 1.250000e-01 : f32
    %62 = vector.broadcast %cst_49 : f32 to vector<1x32xf32>
    %63 = arith.mulf %61, %62 : vector<1x32xf32>
    %c0_50 = arith.constant 0 : index
    %c0_51 = arith.constant 0 : index
    %64 = vector.load %arg3[%c0_50, %c0_51] : memref<1x32xf32, #tpu.memory_space<vmem>>, vector<1x32xf32>
    %cst_52 = arith.constant 9.99999974E-6 : f32
    %65 = vector.broadcast %cst_52 : f32 to vector<1x32xf32>
    %66 = arith.addf %63, %65 : vector<1x32xf32>
    %67 = math.rsqrt %66 : vector<1x32xf32>
    %68 = arith.mulf %64, %67 : vector<1x32xf32>
    %cst_53 = arith.constant dense<0.000000e+00> : vector<1x64xf32>
    %69 = tpu.matmul %68, %40, %cst_53 {dimension_numbers = #tpu.dot_dimension_numbers<[1], [0], [0], [1], [0, 0, 1, 1], [], []>} : vector<1x32xf32>, vector<32x64xf32>, vector<1x64xf32> -> vector<1x64xf32>
    %c0_54 = arith.constant 0 : index
    %c0_55 = arith.constant 0 : index
    %70 = vector.load %arg4[%c0_54, %c0_55] : memref<1x32xf32, #tpu.memory_space<vmem>>, vector<1x32xf32>
    %cst_56 = arith.constant dense<0.000000e+00> : vector<1x64xf32>
    %71 = tpu.matmul %70, %40, %cst_56 {dimension_numbers = #tpu.dot_dimension_numbers<[1], [0], [0], [1], [0, 0, 1, 1], [], []>} : vector<1x32xf32>, vector<32x64xf32>, vector<1x64xf32> -> vector<1x64xf32>
    %72 = vector.broadcast %69 : vector<1x64xf32> to vector<2x64xf32>
    %73 = arith.mulf %51, %72 : vector<2x64xf32>
    %74 = vector.broadcast %71 : vector<1x64xf32> to vector<2x64xf32>
    %75 = arith.addf %73, %74 : vector<2x64xf32>
    %76 = vector.broadcast %69 : vector<1x64xf32> to vector<2x64xf32>
    %77 = arith.mulf %56, %76 : vector<2x64xf32>
    %78 = vector.broadcast %71 : vector<1x64xf32> to vector<2x64xf32>
    %79 = arith.addf %77, %78 : vector<2x64xf32>
    %cst_57 = arith.constant 0.000000e+00 : f32
    %80 = vector.broadcast %cst_57 : f32 to vector<2x64xf32>
    %81 = arith.cmpf oge, %75, %80 : vector<2x64xf32>
    %cst_58 = arith.constant 0.00999999977 : f32
    %82 = vector.broadcast %cst_58 : f32 to vector<2x64xf32>
    %83 = arith.mulf %82, %75 : vector<2x64xf32>
    %84 = arith.select %81, %75, %83 : vector<2x64xi1>, vector<2x64xf32>
    %c0_59 = arith.constant 0 : index
    %c0_60 = arith.constant 0 : index
    %c0_61 = arith.constant 0 : index
    %c0_62 = arith.constant 0 : index
    %85 = vector.load %arg7[%c0_59, %c0_60, %c0_61, %c0_62] : memref<1x2x2x64xf32, #tpu.memory_space<vmem>>, vector<1x1x2x64xf32>
    %86 = vector.shape_cast %85 : vector<1x1x2x64xf32> to vector<2x64xf32>
    %87 = vector.shape_cast %84 : vector<2x64xf32> to vector<1x1x2x64xf32>
    tpu.vector_store %arg7[%c0_59, %c0_60, %c0_61, %c0_62], %87 {strides = array<i32>} : memref<1x2x2x64xf32, #tpu.memory_space<vmem>>, vector<1x1x2x64xf32>,
    %cst_63 = arith.constant 0.000000e+00 : f32
    %88 = vector.broadcast %cst_63 : f32 to vector<2x64xf32>
    %89 = arith.cmpf oge, %79, %88 : vector<2x64xf32>
    %cst_64 = arith.constant 0.00999999977 : f32
    %90 = vector.broadcast %cst_64 : f32 to vector<2x64xf32>
    %91 = arith.mulf %90, %79 : vector<2x64xf32>
    %92 = arith.select %89, %79, %91 : vector<2x64xi1>, vector<2x64xf32>
    %c0_65 = arith.constant 0 : index
    %c1_66 = arith.constant 1 : index
    %c0_67 = arith.constant 0 : index
    %c0_68 = arith.constant 0 : index
    %93 = vector.load %arg7[%c0_65, %c1_66, %c0_67, %c0_68] : memref<1x2x2x64xf32, #tpu.memory_space<vmem>>, vector<1x1x2x64xf32>
    %94 = vector.shape_cast %93 : vector<1x1x2x64xf32> to vector<2x64xf32>
    %95 = vector.shape_cast %92 : vector<2x64xf32> to vector<1x1x2x64xf32>
    tpu.vector_store %arg7[%c0_65, %c1_66, %c0_67, %c0_68], %95 {strides = array<i32>} : memref<1x2x2x64xf32, #tpu.memory_space<vmem>>, vector<1x1x2x64xf32>,
    return
  }
}

module attributes {stable_mosaic.version = 11 : i64} {
  func.func @_latent_head_kernel(%arg0: memref<2x128xf32, #tpu.memory_space<vmem>>, %arg1: memref<128x32xf32, #tpu.memory_space<vmem>>, %arg2: memref<1x32xf32, #tpu.memory_space<vmem>>, %arg3: memref<2x16xf32, #tpu.memory_space<vmem>>, %arg4: memref<2x8xf32, #tpu.memory_space<vmem>>, %arg5: memref<16x128xf32, #tpu.memory_space<vmem>>, %arg6: memref<8x128xf32, #tpu.memory_space<vmem>>, %arg7: memref<1x128xf32, #tpu.memory_space<vmem>>, %arg8: memref<2x16xf32, #tpu.memory_space<vmem>>, %arg9: memref<2x16xf32, #tpu.memory_space<vmem>>, %arg10: memref<2x128xf32, #tpu.memory_space<vmem>>) attributes {dimension_semantics = [], scalar_prefetch = 0 : i64, scratch_operands = 0 : i64, tpu.core_type = #tpu.core_type<tc>} {
    %c0 = arith.constant 0 : index
    %c0_0 = arith.constant 0 : index
    %0 = vector.load %arg0[%c0, %c0_0] : memref<2x128xf32, #tpu.memory_space<vmem>>, vector<2x128xf32>
    %c0_1 = arith.constant 0 : index
    %c0_2 = arith.constant 0 : index
    %1 = vector.load %arg1[%c0_1, %c0_2] : memref<128x32xf32, #tpu.memory_space<vmem>>, vector<128x32xf32>
    %cst = arith.constant dense<0.000000e+00> : vector<2x32xf32>
    %2 = tpu.matmul %0, %1, %cst {dimension_numbers = #tpu.dot_dimension_numbers<[1], [0], [0], [1], [0, 0, 1, 1], [], []>} : vector<2x128xf32>, vector<128x32xf32>, vector<2x32xf32> -> vector<2x32xf32>
    %c0_3 = arith.constant 0 : index
    %c0_4 = arith.constant 0 : index
    %3 = vector.load %arg2[%c0_3, %c0_4] : memref<1x32xf32, #tpu.memory_space<vmem>>, vector<1x32xf32>
    %4 = vector.broadcast %3 : vector<1x32xf32> to vector<2x32xf32>
    %5 = arith.addf %2, %4 : vector<2x32xf32>
    %6 = vector.extract_strided_slice %5 {offsets = [0, 0], sizes = [2, 16], strides = [1, 1]} : vector<2x32xf32> to vector<2x16xf32>
    %7 = vector.extract_strided_slice %5 {offsets = [0, 16], sizes = [2, 16], strides = [1, 1]} : vector<2x32xf32> to vector<2x16xf32>
    %c0_5 = arith.constant 0 : index
    %c0_6 = arith.constant 0 : index
    %8 = vector.load %arg3[%c0_5, %c0_6] : memref<2x16xf32, #tpu.memory_space<vmem>>, vector<2x16xf32>
    %cst_7 = arith.constant 5.000000e-01 : f32
    %9 = vector.broadcast %cst_7 : f32 to vector<2x16xf32>
    %10 = arith.mulf %9, %7 : vector<2x16xf32>
    %11 = math.exp %10 : vector<2x16xf32>
    %12 = arith.mulf %8, %11 : vector<2x16xf32>
    %13 = arith.addf %12, %6 : vector<2x16xf32>
    %c0_8 = arith.constant 0 : index
    %c0_9 = arith.constant 0 : index
    %14 = vector.load %arg5[%c0_8, %c0_9] : memref<16x128xf32, #tpu.memory_space<vmem>>, vector<16x128xf32>
    %cst_10 = arith.constant dense<0.000000e+00> : vector<2x128xf32>
    %15 = tpu.matmul %13, %14, %cst_10 {dimension_numbers = #tpu.dot_dimension_numbers<[1], [0], [0], [1], [0, 0, 1, 1], [], []>} : vector<2x16xf32>, vector<16x128xf32>, vector<2x128xf32> -> vector<2x128xf32>
    %c0_11 = arith.constant 0 : index
    %c0_12 = arith.constant 0 : index
    %16 = vector.load %arg4[%c0_11, %c0_12] : memref<2x8xf32, #tpu.memory_space<vmem>>, vector<2x8xf32>
    %c0_13 = arith.constant 0 : index
    %c0_14 = arith.constant 0 : index
    %17 = vector.load %arg6[%c0_13, %c0_14] : memref<8x128xf32, #tpu.memory_space<vmem>>, vector<8x128xf32>
    %cst_15 = arith.constant dense<0.000000e+00> : vector<2x128xf32>
    %18 = tpu.matmul %16, %17, %cst_15 {dimension_numbers = #tpu.dot_dimension_numbers<[1], [0], [0], [1], [0, 0, 1, 1], [], []>} : vector<2x8xf32>, vector<8x128xf32>, vector<2x128xf32> -> vector<2x128xf32>
    %19 = arith.addf %15, %18 : vector<2x128xf32>
    %c0_16 = arith.constant 0 : index
    %c0_17 = arith.constant 0 : index
    %20 = vector.load %arg7[%c0_16, %c0_17] : memref<1x128xf32, #tpu.memory_space<vmem>>, vector<1x128xf32>
    %21 = vector.broadcast %20 : vector<1x128xf32> to vector<2x128xf32>
    %22 = arith.addf %19, %21 : vector<2x128xf32>
    %c0_18 = arith.constant 0 : index
    %c0_19 = arith.constant 0 : index
    %23 = vector.load %arg8[%c0_18, %c0_19] : memref<2x16xf32, #tpu.memory_space<vmem>>, vector<2x16xf32>
    tpu.vector_store %arg8[%c0_18, %c0_19], %6 {strides = array<i32>} : memref<2x16xf32, #tpu.memory_space<vmem>>, vector<2x16xf32>,
    %c0_20 = arith.constant 0 : index
    %c0_21 = arith.constant 0 : index
    %24 = vector.load %arg9[%c0_20, %c0_21] : memref<2x16xf32, #tpu.memory_space<vmem>>, vector<2x16xf32>
    tpu.vector_store %arg9[%c0_20, %c0_21], %7 {strides = array<i32>} : memref<2x16xf32, #tpu.memory_space<vmem>>, vector<2x16xf32>,
    %c0_22 = arith.constant 0 : index
    %c0_23 = arith.constant 0 : index
    %25 = vector.load %arg10[%c0_22, %c0_23] : memref<2x128xf32, #tpu.memory_space<vmem>>, vector<2x128xf32>
    tpu.vector_store %arg10[%c0_22, %c0_23], %22 {strides = array<i32>} : memref<2x128xf32, #tpu.memory_space<vmem>>, vector<2x128xf32>,
    return
  }
}

module attributes {stable_mosaic.version = 11 : i64} {
  func.func @_conv_block_kernel(%arg0: memref<1x2x3x64xf32, #tpu.memory_space<vmem>>, %arg1: memref<3x64x64xbf16, #tpu.memory_space<vmem>>, %arg2: memref<1x64xf32, #tpu.memory_space<vmem>>, %arg3: memref<1x16xf32, #tpu.memory_space<vmem>>, %arg4: memref<1x16xf32, #tpu.memory_space<vmem>>, %arg5: memref<64x16xf32, #tpu.memory_space<vmem>>, %arg6: memref<16x64xf32, #tpu.memory_space<vmem>>, %arg7: memref<2x2x2x64xf32, #tpu.memory_space<vmem>>) attributes {dimension_semantics = [], scalar_prefetch = 0 : i64, scratch_operands = 0 : i64, tpu.core_type = #tpu.core_type<tc>} {
    %c0 = arith.constant 0 : index
    %c0_0 = arith.constant 0 : index
    %0 = vector.load %arg2[%c0, %c0_0] : memref<1x64xf32, #tpu.memory_space<vmem>>, vector<1x64xf32>
    %c0_1 = arith.constant 0 : index
    %c0_2 = arith.constant 0 : index
    %c0_3 = arith.constant 0 : index
    %1 = vector.load %arg1[%c0_1, %c0_2, %c0_3] : memref<3x64x64xbf16, #tpu.memory_space<vmem>>, vector<1x64x64xbf16>
    %2 = vector.shape_cast %1 : vector<1x64x64xbf16> to vector<64x64xbf16>
    %c1 = arith.constant 1 : index
    %c0_4 = arith.constant 0 : index
    %c0_5 = arith.constant 0 : index
    %3 = vector.load %arg1[%c1, %c0_4, %c0_5] : memref<3x64x64xbf16, #tpu.memory_space<vmem>>, vector<1x64x64xbf16>
    %4 = vector.shape_cast %3 : vector<1x64x64xbf16> to vector<64x64xbf16>
    %c2 = arith.constant 2 : index
    %c0_6 = arith.constant 0 : index
    %c0_7 = arith.constant 0 : index
    %5 = vector.load %arg1[%c2, %c0_6, %c0_7] : memref<3x64x64xbf16, #tpu.memory_space<vmem>>, vector<1x64x64xbf16>
    %6 = vector.shape_cast %5 : vector<1x64x64xbf16> to vector<64x64xbf16>
    %c0_8 = arith.constant 0 : index
    %c0_9 = arith.constant 0 : index
    %c0_10 = arith.constant 0 : index
    %c0_11 = arith.constant 0 : index
    %7 = vector.load %arg0[%c0_8, %c0_9, %c0_10, %c0_11] : memref<1x2x3x64xf32, #tpu.memory_space<vmem>>, vector<1x1x2x64xf32>
    %8 = vector.shape_cast %7 : vector<1x1x2x64xf32> to vector<2x64xf32>
    %9 = arith.truncf %8 : vector<2x64xf32> to vector<2x64xbf16>
    %cst = arith.constant dense<0.000000e+00> : vector<2x64xf32>
    %10 = tpu.matmul %9, %4, %cst {dimension_numbers = #tpu.dot_dimension_numbers<[1], [0], [0], [1], [0, 0, 1, 1], [], []>} : vector<2x64xbf16>, vector<64x64xbf16>, vector<2x64xf32> -> vector<2x64xf32>
    %11 = vector.broadcast %0 : vector<1x64xf32> to vector<2x64xf32>
    %12 = arith.addf %10, %11 : vector<2x64xf32>
    %c0_12 = arith.constant 0 : index
    %c1_13 = arith.constant 1 : index
    %c0_14 = arith.constant 0 : index
    %c0_15 = arith.constant 0 : index
    %13 = vector.load %arg0[%c0_12, %c1_13, %c0_14, %c0_15] : memref<1x2x3x64xf32, #tpu.memory_space<vmem>>, vector<1x1x2x64xf32>
    %14 = vector.shape_cast %13 : vector<1x1x2x64xf32> to vector<2x64xf32>
    %15 = arith.truncf %14 : vector<2x64xf32> to vector<2x64xbf16>
    %cst_16 = arith.constant dense<0.000000e+00> : vector<2x64xf32>
    %16 = tpu.matmul %15, %4, %cst_16 {dimension_numbers = #tpu.dot_dimension_numbers<[1], [0], [0], [1], [0, 0, 1, 1], [], []>} : vector<2x64xbf16>, vector<64x64xbf16>, vector<2x64xf32> -> vector<2x64xf32>
    %17 = vector.broadcast %0 : vector<1x64xf32> to vector<2x64xf32>
    %18 = arith.addf %16, %17 : vector<2x64xf32>
    %cst_17 = arith.constant dense<0.000000e+00> : vector<2x64xf32>
    %19 = tpu.matmul %9, %6, %cst_17 {dimension_numbers = #tpu.dot_dimension_numbers<[1], [0], [0], [1], [0, 0, 1, 1], [], []>} : vector<2x64xbf16>, vector<64x64xbf16>, vector<2x64xf32> -> vector<2x64xf32>
    %c0_18 = arith.constant 0 : index
    %c0_19 = arith.constant 0 : index
    %c1_20 = arith.constant 1 : index
    %c0_21 = arith.constant 0 : index
    %20 = vector.load %arg0[%c0_18, %c0_19, %c1_20, %c0_21] : memref<1x2x3x64xf32, #tpu.memory_space<vmem>>, vector<1x1x2x64xf32>
    %21 = vector.shape_cast %20 : vector<1x1x2x64xf32> to vector<2x64xf32>
    %22 = arith.truncf %21 : vector<2x64xf32> to vector<2x64xbf16>
    %cst_22 = arith.constant dense<0.000000e+00> : vector<2x64xf32>
    %23 = tpu.matmul %22, %2, %cst_22 {dimension_numbers = #tpu.dot_dimension_numbers<[1], [0], [0], [1], [0, 0, 1, 1], [], []>} : vector<2x64xbf16>, vector<64x64xbf16>, vector<2x64xf32> -> vector<2x64xf32>
    %24 = arith.addf %19, %23 : vector<2x64xf32>
    %25 = vector.broadcast %0 : vector<1x64xf32> to vector<2x64xf32>
    %26 = arith.addf %24, %25 : vector<2x64xf32>
    %cst_23 = arith.constant dense<0.000000e+00> : vector<2x64xf32>
    %27 = tpu.matmul %15, %6, %cst_23 {dimension_numbers = #tpu.dot_dimension_numbers<[1], [0], [0], [1], [0, 0, 1, 1], [], []>} : vector<2x64xbf16>, vector<64x64xbf16>, vector<2x64xf32> -> vector<2x64xf32>
    %c0_24 = arith.constant 0 : index
    %c1_25 = arith.constant 1 : index
    %c1_26 = arith.constant 1 : index
    %c0_27 = arith.constant 0 : index
    %28 = vector.load %arg0[%c0_24, %c1_25, %c1_26, %c0_27] : memref<1x2x3x64xf32, #tpu.memory_space<vmem>>, vector<1x1x2x64xf32>
    %29 = vector.shape_cast %28 : vector<1x1x2x64xf32> to vector<2x64xf32>
    %30 = arith.truncf %29 : vector<2x64xf32> to vector<2x64xbf16>
    %cst_28 = arith.constant dense<0.000000e+00> : vector<2x64xf32>
    %31 = tpu.matmul %30, %2, %cst_28 {dimension_numbers = #tpu.dot_dimension_numbers<[1], [0], [0], [1], [0, 0, 1, 1], [], []>} : vector<2x64xbf16>, vector<64x64xbf16>, vector<2x64xf32> -> vector<2x64xf32>
    %32 = arith.addf %27, %31 : vector<2x64xf32>
    %33 = vector.broadcast %0 : vector<1x64xf32> to vector<2x64xf32>
    %34 = arith.addf %32, %33 : vector<2x64xf32>
    %c0_29 = arith.constant 0 : index
    %c0_30 = arith.constant 0 : index
    %35 = vector.load %arg5[%c0_29, %c0_30] : memref<64x16xf32, #tpu.memory_space<vmem>>, vector<64x16xf32>
    %c0_31 = arith.constant 0 : index
    %c0_32 = arith.constant 0 : index
    %36 = vector.load %arg6[%c0_31, %c0_32] : memref<16x64xf32, #tpu.memory_space<vmem>>, vector<16x64xf32>
    %cst_33 = arith.constant dense<0.000000e+00> : vector<64xf32>
    %37 = vector.multi_reduction <add>, %12, %cst_33 [0] : vector<2x64xf32> to vector<64xf32>
    %38 = vector.shape_cast %37 : vector<64xf32> to vector<1x64xf32>
    %cst_34 = arith.constant dense<0.000000e+00> : vector<64xf32>
    %39 = vector.multi_reduction <add>, %18, %cst_34 [0] : vector<2x64xf32> to vector<64xf32>
    %40 = vector.shape_cast %39 : vector<64xf32> to vector<1x64xf32>
    %41 = arith.addf %38, %40 : vector<1x64xf32>
    %cst_35 = arith.constant dense<0.000000e+00> : vector<64xf32>
    %42 = vector.multi_reduction <add>, %26, %cst_35 [0] : vector<2x64xf32> to vector<64xf32>
    %43 = vector.shape_cast %42 : vector<64xf32> to vector<1x64xf32>
    %44 = arith.addf %41, %43 : vector<1x64xf32>
    %cst_36 = arith.constant dense<0.000000e+00> : vector<64xf32>
    %45 = vector.multi_reduction <add>, %34, %cst_36 [0] : vector<2x64xf32> to vector<64xf32>
    %46 = vector.shape_cast %45 : vector<64xf32> to vector<1x64xf32>
    %47 = arith.addf %44, %46 : vector<1x64xf32>
    %cst_37 = arith.constant dense<0.000000e+00> : vector<1x16xf32>
    %48 = tpu.matmul %47, %35, %cst_37 {dimension_numbers = #tpu.dot_dimension_numbers<[1], [0], [0], [1], [0, 0, 1, 1], [], []>} : vector<1x64xf32>, vector<64x16xf32>, vector<1x16xf32> -> vector<1x16xf32>
    %cst_38 = arith.constant 3.125000e-02 : f32
    %49 = vector.broadcast %cst_38 : f32 to vector<1x16xf32>
    %50 = arith.mulf %48, %49 : vector<1x16xf32>
    %cst_39 = arith.constant dense<0.000000e+00> : vector<1x64xf32>
    %51 = tpu.matmul %50, %36, %cst_39 {dimension_numbers = #tpu.dot_dimension_numbers<[1], [0], [0], [1], [0, 0, 1, 1], [], []>} : vector<1x16xf32>, vector<16x64xf32>, vector<1x64xf32> -> vector<1x64xf32>
    %52 = vector.broadcast %51 : vector<1x64xf32> to vector<2x64xf32>
    %53 = arith.subf %12, %52 : vector<2x64xf32>
    %54 = arith.mulf %53, %53 : vector<2x64xf32>
    %cst_40 = arith.constant dense<0.000000e+00> : vector<64xf32>
    %55 = vector.multi_reduction <add>, %54, %cst_40 [0] : vector<2x64xf32> to vector<64xf32>
    %56 = vector.shape_cast %55 : vector<64xf32> to vector<1x64xf32>
    %57 = vector.broadcast %51 : vector<1x64xf32> to vector<2x64xf32>
    %58 = arith.subf %18, %57 : vector<2x64xf32>
    %59 = arith.mulf %58, %58 : vector<2x64xf32>
    %cst_41 = arith.constant dense<0.000000e+00> : vector<64xf32>
    %60 = vector.multi_reduction <add>, %59, %cst_41 [0] : vector<2x64xf32> to vector<64xf32>
    %61 = vector.shape_cast %60 : vector<64xf32> to vector<1x64xf32>
    %62 = arith.addf %56, %61 : vector<1x64xf32>
    %63 = vector.broadcast %51 : vector<1x64xf32> to vector<2x64xf32>
    %64 = arith.subf %26, %63 : vector<2x64xf32>
    %65 = arith.mulf %64, %64 : vector<2x64xf32>
    %cst_42 = arith.constant dense<0.000000e+00> : vector<64xf32>
    %66 = vector.multi_reduction <add>, %65, %cst_42 [0] : vector<2x64xf32> to vector<64xf32>
    %67 = vector.shape_cast %66 : vector<64xf32> to vector<1x64xf32>
    %68 = arith.addf %62, %67 : vector<1x64xf32>
    %69 = vector.broadcast %51 : vector<1x64xf32> to vector<2x64xf32>
    %70 = arith.subf %34, %69 : vector<2x64xf32>
    %71 = arith.mulf %70, %70 : vector<2x64xf32>
    %cst_43 = arith.constant dense<0.000000e+00> : vector<64xf32>
    %72 = vector.multi_reduction <add>, %71, %cst_43 [0] : vector<2x64xf32> to vector<64xf32>
    %73 = vector.shape_cast %72 : vector<64xf32> to vector<1x64xf32>
    %74 = arith.addf %68, %73 : vector<1x64xf32>
    %cst_44 = arith.constant dense<0.000000e+00> : vector<1x16xf32>
    %75 = tpu.matmul %74, %35, %cst_44 {dimension_numbers = #tpu.dot_dimension_numbers<[1], [0], [0], [1], [0, 0, 1, 1], [], []>} : vector<1x64xf32>, vector<64x16xf32>, vector<1x16xf32> -> vector<1x16xf32>
    %cst_45 = arith.constant 3.125000e-02 : f32
    %76 = vector.broadcast %cst_45 : f32 to vector<1x16xf32>
    %77 = arith.mulf %75, %76 : vector<1x16xf32>
    %c0_46 = arith.constant 0 : index
    %c0_47 = arith.constant 0 : index
    %78 = vector.load %arg3[%c0_46, %c0_47] : memref<1x16xf32, #tpu.memory_space<vmem>>, vector<1x16xf32>
    %cst_48 = arith.constant 9.99999974E-6 : f32
    %79 = vector.broadcast %cst_48 : f32 to vector<1x16xf32>
    %80 = arith.addf %77, %79 : vector<1x16xf32>
    %81 = math.rsqrt %80 : vector<1x16xf32>
    %82 = arith.mulf %78, %81 : vector<1x16xf32>
    %cst_49 = arith.constant dense<0.000000e+00> : vector<1x64xf32>
    %83 = tpu.matmul %82, %36, %cst_49 {dimension_numbers = #tpu.dot_dimension_numbers<[1], [0], [0], [1], [0, 0, 1, 1], [], []>} : vector<1x16xf32>, vector<16x64xf32>, vector<1x64xf32> -> vector<1x64xf32>
    %c0_50 = arith.constant 0 : index
    %c0_51 = arith.constant 0 : index
    %84 = vector.load %arg4[%c0_50, %c0_51] : memref<1x16xf32, #tpu.memory_space<vmem>>, vector<1x16xf32>
    %cst_52 = arith.constant dense<0.000000e+00> : vector<1x64xf32>
    %85 = tpu.matmul %84, %36, %cst_52 {dimension_numbers = #tpu.dot_dimension_numbers<[1], [0], [0], [1], [0, 0, 1, 1], [], []>} : vector<1x16xf32>, vector<16x64xf32>, vector<1x64xf32> -> vector<1x64xf32>
    %86 = vector.broadcast %83 : vector<1x64xf32> to vector<2x64xf32>
    %87 = arith.mulf %53, %86 : vector<2x64xf32>
    %88 = vector.broadcast %85 : vector<1x64xf32> to vector<2x64xf32>
    %89 = arith.addf %87, %88 : vector<2x64xf32>
    %90 = vector.broadcast %83 : vector<1x64xf32> to vector<2x64xf32>
    %91 = arith.mulf %58, %90 : vector<2x64xf32>
    %92 = vector.broadcast %85 : vector<1x64xf32> to vector<2x64xf32>
    %93 = arith.addf %91, %92 : vector<2x64xf32>
    %94 = vector.broadcast %83 : vector<1x64xf32> to vector<2x64xf32>
    %95 = arith.mulf %64, %94 : vector<2x64xf32>
    %96 = vector.broadcast %85 : vector<1x64xf32> to vector<2x64xf32>
    %97 = arith.addf %95, %96 : vector<2x64xf32>
    %98 = vector.broadcast %83 : vector<1x64xf32> to vector<2x64xf32>
    %99 = arith.mulf %70, %98 : vector<2x64xf32>
    %100 = vector.broadcast %85 : vector<1x64xf32> to vector<2x64xf32>
    %101 = arith.addf %99, %100 : vector<2x64xf32>
    %cst_53 = arith.constant 0.000000e+00 : f32
    %102 = vector.broadcast %cst_53 : f32 to vector<2x64xf32>
    %103 = arith.cmpf oge, %89, %102 : vector<2x64xf32>
    %cst_54 = arith.constant 0.00999999977 : f32
    %104 = vector.broadcast %cst_54 : f32 to vector<2x64xf32>
    %105 = arith.mulf %104, %89 : vector<2x64xf32>
    %106 = arith.select %103, %89, %105 : vector<2x64xi1>, vector<2x64xf32>
    %c0_55 = arith.constant 0 : index
    %c0_56 = arith.constant 0 : index
    %c0_57 = arith.constant 0 : index
    %c0_58 = arith.constant 0 : index
    %107 = vector.load %arg7[%c0_55, %c0_56, %c0_57, %c0_58] : memref<2x2x2x64xf32, #tpu.memory_space<vmem>>, vector<1x1x2x64xf32>
    %108 = vector.shape_cast %107 : vector<1x1x2x64xf32> to vector<2x64xf32>
    %109 = vector.shape_cast %106 : vector<2x64xf32> to vector<1x1x2x64xf32>
    tpu.vector_store %arg7[%c0_55, %c0_56, %c0_57, %c0_58], %109 {strides = array<i32>} : memref<2x2x2x64xf32, #tpu.memory_space<vmem>>, vector<1x1x2x64xf32>,
    %cst_59 = arith.constant 0.000000e+00 : f32
    %110 = vector.broadcast %cst_59 : f32 to vector<2x64xf32>
    %111 = arith.cmpf oge, %93, %110 : vector<2x64xf32>
    %cst_60 = arith.constant 0.00999999977 : f32
    %112 = vector.broadcast %cst_60 : f32 to vector<2x64xf32>
    %113 = arith.mulf %112, %93 : vector<2x64xf32>
    %114 = arith.select %111, %93, %113 : vector<2x64xi1>, vector<2x64xf32>
    %c0_61 = arith.constant 0 : index
    %c1_62 = arith.constant 1 : index
    %c0_63 = arith.constant 0 : index
    %c0_64 = arith.constant 0 : index
    %115 = vector.load %arg7[%c0_61, %c1_62, %c0_63, %c0_64] : memref<2x2x2x64xf32, #tpu.memory_space<vmem>>, vector<1x1x2x64xf32>
    %116 = vector.shape_cast %115 : vector<1x1x2x64xf32> to vector<2x64xf32>
    %117 = vector.shape_cast %114 : vector<2x64xf32> to vector<1x1x2x64xf32>
    tpu.vector_store %arg7[%c0_61, %c1_62, %c0_63, %c0_64], %117 {strides = array<i32>} : memref<2x2x2x64xf32, #tpu.memory_space<vmem>>, vector<1x1x2x64xf32>,
    %cst_65 = arith.constant 0.000000e+00 : f32
    %118 = vector.broadcast %cst_65 : f32 to vector<2x64xf32>
    %119 = arith.cmpf oge, %97, %118 : vector<2x64xf32>
    %cst_66 = arith.constant 0.00999999977 : f32
    %120 = vector.broadcast %cst_66 : f32 to vector<2x64xf32>
    %121 = arith.mulf %120, %97 : vector<2x64xf32>
    %122 = arith.select %119, %97, %121 : vector<2x64xi1>, vector<2x64xf32>
    %c1_67 = arith.constant 1 : index
    %c0_68 = arith.constant 0 : index
    %c0_69 = arith.constant 0 : index
    %c0_70 = arith.constant 0 : index
    %123 = vector.load %arg7[%c1_67, %c0_68, %c0_69, %c0_70] : memref<2x2x2x64xf32, #tpu.memory_space<vmem>>, vector<1x1x2x64xf32>
    %124 = vector.shape_cast %123 : vector<1x1x2x64xf32> to vector<2x64xf32>
    %125 = vector.shape_cast %122 : vector<2x64xf32> to vector<1x1x2x64xf32>
    tpu.vector_store %arg7[%c1_67, %c0_68, %c0_69, %c0_70], %125 {strides = array<i32>} : memref<2x2x2x64xf32, #tpu.memory_space<vmem>>, vector<1x1x2x64xf32>,
    %cst_71 = arith.constant 0.000000e+00 : f32
    %126 = vector.broadcast %cst_71 : f32 to vector<2x64xf32>
    %127 = arith.cmpf oge, %101, %126 : vector<2x64xf32>
    %cst_72 = arith.constant 0.00999999977 : f32
    %128 = vector.broadcast %cst_72 : f32 to vector<2x64xf32>
    %129 = arith.mulf %128, %101 : vector<2x64xf32>
    %130 = arith.select %127, %101, %129 : vector<2x64xi1>, vector<2x64xf32>
    %c1_73 = arith.constant 1 : index
    %c1_74 = arith.constant 1 : index
    %c0_75 = arith.constant 0 : index
    %c0_76 = arith.constant 0 : index
    %131 = vector.load %arg7[%c1_73, %c1_74, %c0_75, %c0_76] : memref<2x2x2x64xf32, #tpu.memory_space<vmem>>, vector<1x1x2x64xf32>
    %132 = vector.shape_cast %131 : vector<1x1x2x64xf32> to vector<2x64xf32>
    %133 = vector.shape_cast %130 : vector<2x64xf32> to vector<1x1x2x64xf32>
    tpu.vector_store %arg7[%c1_73, %c1_74, %c0_75, %c0_76], %133 {strides = array<i32>} : memref<2x2x2x64xf32, #tpu.memory_space<vmem>>, vector<1x1x2x64xf32>,
    return
  }
}

module attributes {stable_mosaic.version = 11 : i64} {
  func.func @_conv_block_kernel(%arg0: memref<1x2x5x64xf32, #tpu.memory_space<vmem>>, %arg1: memref<3x64x64xbf16, #tpu.memory_space<vmem>>, %arg2: memref<1x64xf32, #tpu.memory_space<vmem>>, %arg3: memref<1x8xf32, #tpu.memory_space<vmem>>, %arg4: memref<1x8xf32, #tpu.memory_space<vmem>>, %arg5: memref<64x8xf32, #tpu.memory_space<vmem>>, %arg6: memref<8x64xf32, #tpu.memory_space<vmem>>, %arg7: memref<2x2x4x64xf32, #tpu.memory_space<vmem>>) attributes {dimension_semantics = [], scalar_prefetch = 0 : i64, scratch_operands = 0 : i64, tpu.core_type = #tpu.core_type<tc>} {
    %c0 = arith.constant 0 : index
    %c0_0 = arith.constant 0 : index
    %0 = vector.load %arg2[%c0, %c0_0] : memref<1x64xf32, #tpu.memory_space<vmem>>, vector<1x64xf32>
    %c0_1 = arith.constant 0 : index
    %c0_2 = arith.constant 0 : index
    %c0_3 = arith.constant 0 : index
    %1 = vector.load %arg1[%c0_1, %c0_2, %c0_3] : memref<3x64x64xbf16, #tpu.memory_space<vmem>>, vector<1x64x64xbf16>
    %2 = vector.shape_cast %1 : vector<1x64x64xbf16> to vector<64x64xbf16>
    %c1 = arith.constant 1 : index
    %c0_4 = arith.constant 0 : index
    %c0_5 = arith.constant 0 : index
    %3 = vector.load %arg1[%c1, %c0_4, %c0_5] : memref<3x64x64xbf16, #tpu.memory_space<vmem>>, vector<1x64x64xbf16>
    %4 = vector.shape_cast %3 : vector<1x64x64xbf16> to vector<64x64xbf16>
    %c2 = arith.constant 2 : index
    %c0_6 = arith.constant 0 : index
    %c0_7 = arith.constant 0 : index
    %5 = vector.load %arg1[%c2, %c0_6, %c0_7] : memref<3x64x64xbf16, #tpu.memory_space<vmem>>, vector<1x64x64xbf16>
    %6 = vector.shape_cast %5 : vector<1x64x64xbf16> to vector<64x64xbf16>
    %c0_8 = arith.constant 0 : index
    %c0_9 = arith.constant 0 : index
    %c0_10 = arith.constant 0 : index
    %c0_11 = arith.constant 0 : index
    %7 = vector.load %arg0[%c0_8, %c0_9, %c0_10, %c0_11] : memref<1x2x5x64xf32, #tpu.memory_space<vmem>>, vector<1x1x4x64xf32>
    %8 = vector.shape_cast %7 : vector<1x1x4x64xf32> to vector<4x64xf32>
    %9 = arith.truncf %8 : vector<4x64xf32> to vector<4x64xbf16>
    %cst = arith.constant dense<0.000000e+00> : vector<4x64xf32>
    %10 = tpu.matmul %9, %4, %cst {dimension_numbers = #tpu.dot_dimension_numbers<[1], [0], [0], [1], [0, 0, 1, 1], [], []>} : vector<4x64xbf16>, vector<64x64xbf16>, vector<4x64xf32> -> vector<4x64xf32>
    %11 = vector.broadcast %0 : vector<1x64xf32> to vector<4x64xf32>
    %12 = arith.addf %10, %11 : vector<4x64xf32>
    %c0_12 = arith.constant 0 : index
    %c1_13 = arith.constant 1 : index
    %c0_14 = arith.constant 0 : index
    %c0_15 = arith.constant 0 : index
    %13 = vector.load %arg0[%c0_12, %c1_13, %c0_14, %c0_15] : memref<1x2x5x64xf32, #tpu.memory_space<vmem>>, vector<1x1x4x64xf32>
    %14 = vector.shape_cast %13 : vector<1x1x4x64xf32> to vector<4x64xf32>
    %15 = arith.truncf %14 : vector<4x64xf32> to vector<4x64xbf16>
    %cst_16 = arith.constant dense<0.000000e+00> : vector<4x64xf32>
    %16 = tpu.matmul %15, %4, %cst_16 {dimension_numbers = #tpu.dot_dimension_numbers<[1], [0], [0], [1], [0, 0, 1, 1], [], []>} : vector<4x64xbf16>, vector<64x64xbf16>, vector<4x64xf32> -> vector<4x64xf32>
    %17 = vector.broadcast %0 : vector<1x64xf32> to vector<4x64xf32>
    %18 = arith.addf %16, %17 : vector<4x64xf32>
    %cst_17 = arith.constant dense<0.000000e+00> : vector<4x64xf32>
    %19 = tpu.matmul %9, %6, %cst_17 {dimension_numbers = #tpu.dot_dimension_numbers<[1], [0], [0], [1], [0, 0, 1, 1], [], []>} : vector<4x64xbf16>, vector<64x64xbf16>, vector<4x64xf32> -> vector<4x64xf32>
    %c0_18 = arith.constant 0 : index
    %c0_19 = arith.constant 0 : index
    %c1_20 = arith.constant 1 : index
    %c0_21 = arith.constant 0 : index
    %20 = vector.load %arg0[%c0_18, %c0_19, %c1_20, %c0_21] : memref<1x2x5x64xf32, #tpu.memory_space<vmem>>, vector<1x1x4x64xf32>
    %21 = vector.shape_cast %20 : vector<1x1x4x64xf32> to vector<4x64xf32>
    %22 = arith.truncf %21 : vector<4x64xf32> to vector<4x64xbf16>
    %cst_22 = arith.constant dense<0.000000e+00> : vector<4x64xf32>
    %23 = tpu.matmul %22, %2, %cst_22 {dimension_numbers = #tpu.dot_dimension_numbers<[1], [0], [0], [1], [0, 0, 1, 1], [], []>} : vector<4x64xbf16>, vector<64x64xbf16>, vector<4x64xf32> -> vector<4x64xf32>
    %24 = arith.addf %19, %23 : vector<4x64xf32>
    %25 = vector.broadcast %0 : vector<1x64xf32> to vector<4x64xf32>
    %26 = arith.addf %24, %25 : vector<4x64xf32>
    %cst_23 = arith.constant dense<0.000000e+00> : vector<4x64xf32>
    %27 = tpu.matmul %15, %6, %cst_23 {dimension_numbers = #tpu.dot_dimension_numbers<[1], [0], [0], [1], [0, 0, 1, 1], [], []>} : vector<4x64xbf16>, vector<64x64xbf16>, vector<4x64xf32> -> vector<4x64xf32>
    %c0_24 = arith.constant 0 : index
    %c1_25 = arith.constant 1 : index
    %c1_26 = arith.constant 1 : index
    %c0_27 = arith.constant 0 : index
    %28 = vector.load %arg0[%c0_24, %c1_25, %c1_26, %c0_27] : memref<1x2x5x64xf32, #tpu.memory_space<vmem>>, vector<1x1x4x64xf32>
    %29 = vector.shape_cast %28 : vector<1x1x4x64xf32> to vector<4x64xf32>
    %30 = arith.truncf %29 : vector<4x64xf32> to vector<4x64xbf16>
    %cst_28 = arith.constant dense<0.000000e+00> : vector<4x64xf32>
    %31 = tpu.matmul %30, %2, %cst_28 {dimension_numbers = #tpu.dot_dimension_numbers<[1], [0], [0], [1], [0, 0, 1, 1], [], []>} : vector<4x64xbf16>, vector<64x64xbf16>, vector<4x64xf32> -> vector<4x64xf32>
    %32 = arith.addf %27, %31 : vector<4x64xf32>
    %33 = vector.broadcast %0 : vector<1x64xf32> to vector<4x64xf32>
    %34 = arith.addf %32, %33 : vector<4x64xf32>
    %c0_29 = arith.constant 0 : index
    %c0_30 = arith.constant 0 : index
    %35 = vector.load %arg5[%c0_29, %c0_30] : memref<64x8xf32, #tpu.memory_space<vmem>>, vector<64x8xf32>
    %c0_31 = arith.constant 0 : index
    %c0_32 = arith.constant 0 : index
    %36 = vector.load %arg6[%c0_31, %c0_32] : memref<8x64xf32, #tpu.memory_space<vmem>>, vector<8x64xf32>
    %cst_33 = arith.constant dense<0.000000e+00> : vector<64xf32>
    %37 = vector.multi_reduction <add>, %12, %cst_33 [0] : vector<4x64xf32> to vector<64xf32>
    %38 = vector.shape_cast %37 : vector<64xf32> to vector<1x64xf32>
    %cst_34 = arith.constant dense<0.000000e+00> : vector<64xf32>
    %39 = vector.multi_reduction <add>, %18, %cst_34 [0] : vector<4x64xf32> to vector<64xf32>
    %40 = vector.shape_cast %39 : vector<64xf32> to vector<1x64xf32>
    %41 = arith.addf %38, %40 : vector<1x64xf32>
    %cst_35 = arith.constant dense<0.000000e+00> : vector<64xf32>
    %42 = vector.multi_reduction <add>, %26, %cst_35 [0] : vector<4x64xf32> to vector<64xf32>
    %43 = vector.shape_cast %42 : vector<64xf32> to vector<1x64xf32>
    %44 = arith.addf %41, %43 : vector<1x64xf32>
    %cst_36 = arith.constant dense<0.000000e+00> : vector<64xf32>
    %45 = vector.multi_reduction <add>, %34, %cst_36 [0] : vector<4x64xf32> to vector<64xf32>
    %46 = vector.shape_cast %45 : vector<64xf32> to vector<1x64xf32>
    %47 = arith.addf %44, %46 : vector<1x64xf32>
    %cst_37 = arith.constant dense<0.000000e+00> : vector<1x8xf32>
    %48 = tpu.matmul %47, %35, %cst_37 {dimension_numbers = #tpu.dot_dimension_numbers<[1], [0], [0], [1], [0, 0, 1, 1], [], []>} : vector<1x64xf32>, vector<64x8xf32>, vector<1x8xf32> -> vector<1x8xf32>
    %cst_38 = arith.constant 7.812500e-03 : f32
    %49 = vector.broadcast %cst_38 : f32 to vector<1x8xf32>
    %50 = arith.mulf %48, %49 : vector<1x8xf32>
    %cst_39 = arith.constant dense<0.000000e+00> : vector<1x64xf32>
    %51 = tpu.matmul %50, %36, %cst_39 {dimension_numbers = #tpu.dot_dimension_numbers<[1], [0], [0], [1], [0, 0, 1, 1], [], []>} : vector<1x8xf32>, vector<8x64xf32>, vector<1x64xf32> -> vector<1x64xf32>
    %52 = vector.broadcast %51 : vector<1x64xf32> to vector<4x64xf32>
    %53 = arith.subf %12, %52 : vector<4x64xf32>
    %54 = arith.mulf %53, %53 : vector<4x64xf32>
    %cst_40 = arith.constant dense<0.000000e+00> : vector<64xf32>
    %55 = vector.multi_reduction <add>, %54, %cst_40 [0] : vector<4x64xf32> to vector<64xf32>
    %56 = vector.shape_cast %55 : vector<64xf32> to vector<1x64xf32>
    %57 = vector.broadcast %51 : vector<1x64xf32> to vector<4x64xf32>
    %58 = arith.subf %18, %57 : vector<4x64xf32>
    %59 = arith.mulf %58, %58 : vector<4x64xf32>
    %cst_41 = arith.constant dense<0.000000e+00> : vector<64xf32>
    %60 = vector.multi_reduction <add>, %59, %cst_41 [0] : vector<4x64xf32> to vector<64xf32>
    %61 = vector.shape_cast %60 : vector<64xf32> to vector<1x64xf32>
    %62 = arith.addf %56, %61 : vector<1x64xf32>
    %63 = vector.broadcast %51 : vector<1x64xf32> to vector<4x64xf32>
    %64 = arith.subf %26, %63 : vector<4x64xf32>
    %65 = arith.mulf %64, %64 : vector<4x64xf32>
    %cst_42 = arith.constant dense<0.000000e+00> : vector<64xf32>
    %66 = vector.multi_reduction <add>, %65, %cst_42 [0] : vector<4x64xf32> to vector<64xf32>
    %67 = vector.shape_cast %66 : vector<64xf32> to vector<1x64xf32>
    %68 = arith.addf %62, %67 : vector<1x64xf32>
    %69 = vector.broadcast %51 : vector<1x64xf32> to vector<4x64xf32>
    %70 = arith.subf %34, %69 : vector<4x64xf32>
    %71 = arith.mulf %70, %70 : vector<4x64xf32>
    %cst_43 = arith.constant dense<0.000000e+00> : vector<64xf32>
    %72 = vector.multi_reduction <add>, %71, %cst_43 [0] : vector<4x64xf32> to vector<64xf32>
    %73 = vector.shape_cast %72 : vector<64xf32> to vector<1x64xf32>
    %74 = arith.addf %68, %73 : vector<1x64xf32>
    %cst_44 = arith.constant dense<0.000000e+00> : vector<1x8xf32>
    %75 = tpu.matmul %74, %35, %cst_44 {dimension_numbers = #tpu.dot_dimension_numbers<[1], [0], [0], [1], [0, 0, 1, 1], [], []>} : vector<1x64xf32>, vector<64x8xf32>, vector<1x8xf32> -> vector<1x8xf32>
    %cst_45 = arith.constant 7.812500e-03 : f32
    %76 = vector.broadcast %cst_45 : f32 to vector<1x8xf32>
    %77 = arith.mulf %75, %76 : vector<1x8xf32>
    %c0_46 = arith.constant 0 : index
    %c0_47 = arith.constant 0 : index
    %78 = vector.load %arg3[%c0_46, %c0_47] : memref<1x8xf32, #tpu.memory_space<vmem>>, vector<1x8xf32>
    %cst_48 = arith.constant 9.99999974E-6 : f32
    %79 = vector.broadcast %cst_48 : f32 to vector<1x8xf32>
    %80 = arith.addf %77, %79 : vector<1x8xf32>
    %81 = math.rsqrt %80 : vector<1x8xf32>
    %82 = arith.mulf %78, %81 : vector<1x8xf32>
    %cst_49 = arith.constant dense<0.000000e+00> : vector<1x64xf32>
    %83 = tpu.matmul %82, %36, %cst_49 {dimension_numbers = #tpu.dot_dimension_numbers<[1], [0], [0], [1], [0, 0, 1, 1], [], []>} : vector<1x8xf32>, vector<8x64xf32>, vector<1x64xf32> -> vector<1x64xf32>
    %c0_50 = arith.constant 0 : index
    %c0_51 = arith.constant 0 : index
    %84 = vector.load %arg4[%c0_50, %c0_51] : memref<1x8xf32, #tpu.memory_space<vmem>>, vector<1x8xf32>
    %cst_52 = arith.constant dense<0.000000e+00> : vector<1x64xf32>
    %85 = tpu.matmul %84, %36, %cst_52 {dimension_numbers = #tpu.dot_dimension_numbers<[1], [0], [0], [1], [0, 0, 1, 1], [], []>} : vector<1x8xf32>, vector<8x64xf32>, vector<1x64xf32> -> vector<1x64xf32>
    %86 = vector.broadcast %83 : vector<1x64xf32> to vector<4x64xf32>
    %87 = arith.mulf %53, %86 : vector<4x64xf32>
    %88 = vector.broadcast %85 : vector<1x64xf32> to vector<4x64xf32>
    %89 = arith.addf %87, %88 : vector<4x64xf32>
    %90 = vector.broadcast %83 : vector<1x64xf32> to vector<4x64xf32>
    %91 = arith.mulf %58, %90 : vector<4x64xf32>
    %92 = vector.broadcast %85 : vector<1x64xf32> to vector<4x64xf32>
    %93 = arith.addf %91, %92 : vector<4x64xf32>
    %94 = vector.broadcast %83 : vector<1x64xf32> to vector<4x64xf32>
    %95 = arith.mulf %64, %94 : vector<4x64xf32>
    %96 = vector.broadcast %85 : vector<1x64xf32> to vector<4x64xf32>
    %97 = arith.addf %95, %96 : vector<4x64xf32>
    %98 = vector.broadcast %83 : vector<1x64xf32> to vector<4x64xf32>
    %99 = arith.mulf %70, %98 : vector<4x64xf32>
    %100 = vector.broadcast %85 : vector<1x64xf32> to vector<4x64xf32>
    %101 = arith.addf %99, %100 : vector<4x64xf32>
    %cst_53 = arith.constant 0.000000e+00 : f32
    %102 = vector.broadcast %cst_53 : f32 to vector<4x64xf32>
    %103 = arith.cmpf oge, %89, %102 : vector<4x64xf32>
    %cst_54 = arith.constant 0.00999999977 : f32
    %104 = vector.broadcast %cst_54 : f32 to vector<4x64xf32>
    %105 = arith.mulf %104, %89 : vector<4x64xf32>
    %106 = arith.select %103, %89, %105 : vector<4x64xi1>, vector<4x64xf32>
    %c0_55 = arith.constant 0 : index
    %c0_56 = arith.constant 0 : index
    %c0_57 = arith.constant 0 : index
    %c0_58 = arith.constant 0 : index
    %107 = vector.load %arg7[%c0_55, %c0_56, %c0_57, %c0_58] : memref<2x2x4x64xf32, #tpu.memory_space<vmem>>, vector<1x1x4x64xf32>
    %108 = vector.shape_cast %107 : vector<1x1x4x64xf32> to vector<4x64xf32>
    %109 = vector.shape_cast %106 : vector<4x64xf32> to vector<1x1x4x64xf32>
    tpu.vector_store %arg7[%c0_55, %c0_56, %c0_57, %c0_58], %109 {strides = array<i32>} : memref<2x2x4x64xf32, #tpu.memory_space<vmem>>, vector<1x1x4x64xf32>,
    %cst_59 = arith.constant 0.000000e+00 : f32
    %110 = vector.broadcast %cst_59 : f32 to vector<4x64xf32>
    %111 = arith.cmpf oge, %93, %110 : vector<4x64xf32>
    %cst_60 = arith.constant 0.00999999977 : f32
    %112 = vector.broadcast %cst_60 : f32 to vector<4x64xf32>
    %113 = arith.mulf %112, %93 : vector<4x64xf32>
    %114 = arith.select %111, %93, %113 : vector<4x64xi1>, vector<4x64xf32>
    %c0_61 = arith.constant 0 : index
    %c1_62 = arith.constant 1 : index
    %c0_63 = arith.constant 0 : index
    %c0_64 = arith.constant 0 : index
    %115 = vector.load %arg7[%c0_61, %c1_62, %c0_63, %c0_64] : memref<2x2x4x64xf32, #tpu.memory_space<vmem>>, vector<1x1x4x64xf32>
    %116 = vector.shape_cast %115 : vector<1x1x4x64xf32> to vector<4x64xf32>
    %117 = vector.shape_cast %114 : vector<4x64xf32> to vector<1x1x4x64xf32>
    tpu.vector_store %arg7[%c0_61, %c1_62, %c0_63, %c0_64], %117 {strides = array<i32>} : memref<2x2x4x64xf32, #tpu.memory_space<vmem>>, vector<1x1x4x64xf32>,
    %cst_65 = arith.constant 0.000000e+00 : f32
    %118 = vector.broadcast %cst_65 : f32 to vector<4x64xf32>
    %119 = arith.cmpf oge, %97, %118 : vector<4x64xf32>
    %cst_66 = arith.constant 0.00999999977 : f32
    %120 = vector.broadcast %cst_66 : f32 to vector<4x64xf32>
    %121 = arith.mulf %120, %97 : vector<4x64xf32>
    %122 = arith.select %119, %97, %121 : vector<4x64xi1>, vector<4x64xf32>
    %c1_67 = arith.constant 1 : index
    %c0_68 = arith.constant 0 : index
    %c0_69 = arith.constant 0 : index
    %c0_70 = arith.constant 0 : index
    %123 = vector.load %arg7[%c1_67, %c0_68, %c0_69, %c0_70] : memref<2x2x4x64xf32, #tpu.memory_space<vmem>>, vector<1x1x4x64xf32>
    %124 = vector.shape_cast %123 : vector<1x1x4x64xf32> to vector<4x64xf32>
    %125 = vector.shape_cast %122 : vector<4x64xf32> to vector<1x1x4x64xf32>
    tpu.vector_store %arg7[%c1_67, %c0_68, %c0_69, %c0_70], %125 {strides = array<i32>} : memref<2x2x4x64xf32, #tpu.memory_space<vmem>>, vector<1x1x4x64xf32>,
    %cst_71 = arith.constant 0.000000e+00 : f32
    %126 = vector.broadcast %cst_71 : f32 to vector<4x64xf32>
    %127 = arith.cmpf oge, %101, %126 : vector<4x64xf32>
    %cst_72 = arith.constant 0.00999999977 : f32
    %128 = vector.broadcast %cst_72 : f32 to vector<4x64xf32>
    %129 = arith.mulf %128, %101 : vector<4x64xf32>
    %130 = arith.select %127, %101, %129 : vector<4x64xi1>, vector<4x64xf32>
    %c1_73 = arith.constant 1 : index
    %c1_74 = arith.constant 1 : index
    %c0_75 = arith.constant 0 : index
    %c0_76 = arith.constant 0 : index
    %131 = vector.load %arg7[%c1_73, %c1_74, %c0_75, %c0_76] : memref<2x2x4x64xf32, #tpu.memory_space<vmem>>, vector<1x1x4x64xf32>
    %132 = vector.shape_cast %131 : vector<1x1x4x64xf32> to vector<4x64xf32>
    %133 = vector.shape_cast %130 : vector<4x64xf32> to vector<1x1x4x64xf32>
    tpu.vector_store %arg7[%c1_73, %c1_74, %c0_75, %c0_76], %133 {strides = array<i32>} : memref<2x2x4x64xf32, #tpu.memory_space<vmem>>, vector<1x1x4x64xf32>,
    return
  }
}

module attributes {stable_mosaic.version = 11 : i64} {
  func.func @_conv_block_kernel(%arg0: memref<1x2x9x64xf32, #tpu.memory_space<vmem>>, %arg1: memref<3x64x128xbf16, #tpu.memory_space<vmem>>, %arg2: memref<1x128xf32, #tpu.memory_space<vmem>>, %arg3: memref<1x8xf32, #tpu.memory_space<vmem>>, %arg4: memref<1x8xf32, #tpu.memory_space<vmem>>, %arg5: memref<128x8xf32, #tpu.memory_space<vmem>>, %arg6: memref<8x128xf32, #tpu.memory_space<vmem>>, %arg7: memref<2x2x8x128xf32, #tpu.memory_space<vmem>>) attributes {dimension_semantics = [], scalar_prefetch = 0 : i64, scratch_operands = 0 : i64, tpu.core_type = #tpu.core_type<tc>} {
    %c0 = arith.constant 0 : index
    %c0_0 = arith.constant 0 : index
    %0 = vector.load %arg2[%c0, %c0_0] : memref<1x128xf32, #tpu.memory_space<vmem>>, vector<1x128xf32>
    %c0_1 = arith.constant 0 : index
    %c0_2 = arith.constant 0 : index
    %c0_3 = arith.constant 0 : index
    %1 = vector.load %arg1[%c0_1, %c0_2, %c0_3] : memref<3x64x128xbf16, #tpu.memory_space<vmem>>, vector<1x64x128xbf16>
    %2 = vector.shape_cast %1 : vector<1x64x128xbf16> to vector<64x128xbf16>
    %c1 = arith.constant 1 : index
    %c0_4 = arith.constant 0 : index
    %c0_5 = arith.constant 0 : index
    %3 = vector.load %arg1[%c1, %c0_4, %c0_5] : memref<3x64x128xbf16, #tpu.memory_space<vmem>>, vector<1x64x128xbf16>
    %4 = vector.shape_cast %3 : vector<1x64x128xbf16> to vector<64x128xbf16>
    %c2 = arith.constant 2 : index
    %c0_6 = arith.constant 0 : index
    %c0_7 = arith.constant 0 : index
    %5 = vector.load %arg1[%c2, %c0_6, %c0_7] : memref<3x64x128xbf16, #tpu.memory_space<vmem>>, vector<1x64x128xbf16>
    %6 = vector.shape_cast %5 : vector<1x64x128xbf16> to vector<64x128xbf16>
    %c0_8 = arith.constant 0 : index
    %c0_9 = arith.constant 0 : index
    %c0_10 = arith.constant 0 : index
    %c0_11 = arith.constant 0 : index
    %7 = vector.load %arg0[%c0_8, %c0_9, %c0_10, %c0_11] : memref<1x2x9x64xf32, #tpu.memory_space<vmem>>, vector<1x1x8x64xf32>
    %8 = vector.shape_cast %7 : vector<1x1x8x64xf32> to vector<8x64xf32>
    %9 = arith.truncf %8 : vector<8x64xf32> to vector<8x64xbf16>
    %cst = arith.constant dense<0.000000e+00> : vector<8x128xf32>
    %10 = tpu.matmul %9, %4, %cst {dimension_numbers = #tpu.dot_dimension_numbers<[1], [0], [0], [1], [0, 0, 1, 1], [], []>} : vector<8x64xbf16>, vector<64x128xbf16>, vector<8x128xf32> -> vector<8x128xf32>
    %11 = vector.broadcast %0 : vector<1x128xf32> to vector<8x128xf32>
    %12 = arith.addf %10, %11 : vector<8x128xf32>
    %c0_12 = arith.constant 0 : index
    %c1_13 = arith.constant 1 : index
    %c0_14 = arith.constant 0 : index
    %c0_15 = arith.constant 0 : index
    %13 = vector.load %arg0[%c0_12, %c1_13, %c0_14, %c0_15] : memref<1x2x9x64xf32, #tpu.memory_space<vmem>>, vector<1x1x8x64xf32>
    %14 = vector.shape_cast %13 : vector<1x1x8x64xf32> to vector<8x64xf32>
    %15 = arith.truncf %14 : vector<8x64xf32> to vector<8x64xbf16>
    %cst_16 = arith.constant dense<0.000000e+00> : vector<8x128xf32>
    %16 = tpu.matmul %15, %4, %cst_16 {dimension_numbers = #tpu.dot_dimension_numbers<[1], [0], [0], [1], [0, 0, 1, 1], [], []>} : vector<8x64xbf16>, vector<64x128xbf16>, vector<8x128xf32> -> vector<8x128xf32>
    %17 = vector.broadcast %0 : vector<1x128xf32> to vector<8x128xf32>
    %18 = arith.addf %16, %17 : vector<8x128xf32>
    %cst_17 = arith.constant dense<0.000000e+00> : vector<8x128xf32>
    %19 = tpu.matmul %9, %6, %cst_17 {dimension_numbers = #tpu.dot_dimension_numbers<[1], [0], [0], [1], [0, 0, 1, 1], [], []>} : vector<8x64xbf16>, vector<64x128xbf16>, vector<8x128xf32> -> vector<8x128xf32>
    %c0_18 = arith.constant 0 : index
    %c0_19 = arith.constant 0 : index
    %c1_20 = arith.constant 1 : index
    %c0_21 = arith.constant 0 : index
    %20 = vector.load %arg0[%c0_18, %c0_19, %c1_20, %c0_21] : memref<1x2x9x64xf32, #tpu.memory_space<vmem>>, vector<1x1x8x64xf32>
    %21 = vector.shape_cast %20 : vector<1x1x8x64xf32> to vector<8x64xf32>
    %22 = arith.truncf %21 : vector<8x64xf32> to vector<8x64xbf16>
    %cst_22 = arith.constant dense<0.000000e+00> : vector<8x128xf32>
    %23 = tpu.matmul %22, %2, %cst_22 {dimension_numbers = #tpu.dot_dimension_numbers<[1], [0], [0], [1], [0, 0, 1, 1], [], []>} : vector<8x64xbf16>, vector<64x128xbf16>, vector<8x128xf32> -> vector<8x128xf32>
    %24 = arith.addf %19, %23 : vector<8x128xf32>
    %25 = vector.broadcast %0 : vector<1x128xf32> to vector<8x128xf32>
    %26 = arith.addf %24, %25 : vector<8x128xf32>
    %cst_23 = arith.constant dense<0.000000e+00> : vector<8x128xf32>
    %27 = tpu.matmul %15, %6, %cst_23 {dimension_numbers = #tpu.dot_dimension_numbers<[1], [0], [0], [1], [0, 0, 1, 1], [], []>} : vector<8x64xbf16>, vector<64x128xbf16>, vector<8x128xf32> -> vector<8x128xf32>
    %c0_24 = arith.constant 0 : index
    %c1_25 = arith.constant 1 : index
    %c1_26 = arith.constant 1 : index
    %c0_27 = arith.constant 0 : index
    %28 = vector.load %arg0[%c0_24, %c1_25, %c1_26, %c0_27] : memref<1x2x9x64xf32, #tpu.memory_space<vmem>>, vector<1x1x8x64xf32>
    %29 = vector.shape_cast %28 : vector<1x1x8x64xf32> to vector<8x64xf32>
    %30 = arith.truncf %29 : vector<8x64xf32> to vector<8x64xbf16>
    %cst_28 = arith.constant dense<0.000000e+00> : vector<8x128xf32>
    %31 = tpu.matmul %30, %2, %cst_28 {dimension_numbers = #tpu.dot_dimension_numbers<[1], [0], [0], [1], [0, 0, 1, 1], [], []>} : vector<8x64xbf16>, vector<64x128xbf16>, vector<8x128xf32> -> vector<8x128xf32>
    %32 = arith.addf %27, %31 : vector<8x128xf32>
    %33 = vector.broadcast %0 : vector<1x128xf32> to vector<8x128xf32>
    %34 = arith.addf %32, %33 : vector<8x128xf32>
    %c0_29 = arith.constant 0 : index
    %c0_30 = arith.constant 0 : index
    %35 = vector.load %arg5[%c0_29, %c0_30] : memref<128x8xf32, #tpu.memory_space<vmem>>, vector<128x8xf32>
    %c0_31 = arith.constant 0 : index
    %c0_32 = arith.constant 0 : index
    %36 = vector.load %arg6[%c0_31, %c0_32] : memref<8x128xf32, #tpu.memory_space<vmem>>, vector<8x128xf32>
    %cst_33 = arith.constant dense<0.000000e+00> : vector<128xf32>
    %37 = vector.multi_reduction <add>, %12, %cst_33 [0] : vector<8x128xf32> to vector<128xf32>
    %38 = vector.shape_cast %37 : vector<128xf32> to vector<1x128xf32>
    %cst_34 = arith.constant dense<0.000000e+00> : vector<128xf32>
    %39 = vector.multi_reduction <add>, %18, %cst_34 [0] : vector<8x128xf32> to vector<128xf32>
    %40 = vector.shape_cast %39 : vector<128xf32> to vector<1x128xf32>
    %41 = arith.addf %38, %40 : vector<1x128xf32>
    %cst_35 = arith.constant dense<0.000000e+00> : vector<128xf32>
    %42 = vector.multi_reduction <add>, %26, %cst_35 [0] : vector<8x128xf32> to vector<128xf32>
    %43 = vector.shape_cast %42 : vector<128xf32> to vector<1x128xf32>
    %44 = arith.addf %41, %43 : vector<1x128xf32>
    %cst_36 = arith.constant dense<0.000000e+00> : vector<128xf32>
    %45 = vector.multi_reduction <add>, %34, %cst_36 [0] : vector<8x128xf32> to vector<128xf32>
    %46 = vector.shape_cast %45 : vector<128xf32> to vector<1x128xf32>
    %47 = arith.addf %44, %46 : vector<1x128xf32>
    %cst_37 = arith.constant dense<0.000000e+00> : vector<1x8xf32>
    %48 = tpu.matmul %47, %35, %cst_37 {dimension_numbers = #tpu.dot_dimension_numbers<[1], [0], [0], [1], [0, 0, 1, 1], [], []>} : vector<1x128xf32>, vector<128x8xf32>, vector<1x8xf32> -> vector<1x8xf32>
    %cst_38 = arith.constant 0.001953125 : f32
    %49 = vector.broadcast %cst_38 : f32 to vector<1x8xf32>
    %50 = arith.mulf %48, %49 : vector<1x8xf32>
    %cst_39 = arith.constant dense<0.000000e+00> : vector<1x128xf32>
    %51 = tpu.matmul %50, %36, %cst_39 {dimension_numbers = #tpu.dot_dimension_numbers<[1], [0], [0], [1], [0, 0, 1, 1], [], []>} : vector<1x8xf32>, vector<8x128xf32>, vector<1x128xf32> -> vector<1x128xf32>
    %52 = vector.broadcast %51 : vector<1x128xf32> to vector<8x128xf32>
    %53 = arith.subf %12, %52 : vector<8x128xf32>
    %54 = arith.mulf %53, %53 : vector<8x128xf32>
    %cst_40 = arith.constant dense<0.000000e+00> : vector<128xf32>
    %55 = vector.multi_reduction <add>, %54, %cst_40 [0] : vector<8x128xf32> to vector<128xf32>
    %56 = vector.shape_cast %55 : vector<128xf32> to vector<1x128xf32>
    %57 = vector.broadcast %51 : vector<1x128xf32> to vector<8x128xf32>
    %58 = arith.subf %18, %57 : vector<8x128xf32>
    %59 = arith.mulf %58, %58 : vector<8x128xf32>
    %cst_41 = arith.constant dense<0.000000e+00> : vector<128xf32>
    %60 = vector.multi_reduction <add>, %59, %cst_41 [0] : vector<8x128xf32> to vector<128xf32>
    %61 = vector.shape_cast %60 : vector<128xf32> to vector<1x128xf32>
    %62 = arith.addf %56, %61 : vector<1x128xf32>
    %63 = vector.broadcast %51 : vector<1x128xf32> to vector<8x128xf32>
    %64 = arith.subf %26, %63 : vector<8x128xf32>
    %65 = arith.mulf %64, %64 : vector<8x128xf32>
    %cst_42 = arith.constant dense<0.000000e+00> : vector<128xf32>
    %66 = vector.multi_reduction <add>, %65, %cst_42 [0] : vector<8x128xf32> to vector<128xf32>
    %67 = vector.shape_cast %66 : vector<128xf32> to vector<1x128xf32>
    %68 = arith.addf %62, %67 : vector<1x128xf32>
    %69 = vector.broadcast %51 : vector<1x128xf32> to vector<8x128xf32>
    %70 = arith.subf %34, %69 : vector<8x128xf32>
    %71 = arith.mulf %70, %70 : vector<8x128xf32>
    %cst_43 = arith.constant dense<0.000000e+00> : vector<128xf32>
    %72 = vector.multi_reduction <add>, %71, %cst_43 [0] : vector<8x128xf32> to vector<128xf32>
    %73 = vector.shape_cast %72 : vector<128xf32> to vector<1x128xf32>
    %74 = arith.addf %68, %73 : vector<1x128xf32>
    %cst_44 = arith.constant dense<0.000000e+00> : vector<1x8xf32>
    %75 = tpu.matmul %74, %35, %cst_44 {dimension_numbers = #tpu.dot_dimension_numbers<[1], [0], [0], [1], [0, 0, 1, 1], [], []>} : vector<1x128xf32>, vector<128x8xf32>, vector<1x8xf32> -> vector<1x8xf32>
    %cst_45 = arith.constant 0.001953125 : f32
    %76 = vector.broadcast %cst_45 : f32 to vector<1x8xf32>
    %77 = arith.mulf %75, %76 : vector<1x8xf32>
    %c0_46 = arith.constant 0 : index
    %c0_47 = arith.constant 0 : index
    %78 = vector.load %arg3[%c0_46, %c0_47] : memref<1x8xf32, #tpu.memory_space<vmem>>, vector<1x8xf32>
    %cst_48 = arith.constant 9.99999974E-6 : f32
    %79 = vector.broadcast %cst_48 : f32 to vector<1x8xf32>
    %80 = arith.addf %77, %79 : vector<1x8xf32>
    %81 = math.rsqrt %80 : vector<1x8xf32>
    %82 = arith.mulf %78, %81 : vector<1x8xf32>
    %cst_49 = arith.constant dense<0.000000e+00> : vector<1x128xf32>
    %83 = tpu.matmul %82, %36, %cst_49 {dimension_numbers = #tpu.dot_dimension_numbers<[1], [0], [0], [1], [0, 0, 1, 1], [], []>} : vector<1x8xf32>, vector<8x128xf32>, vector<1x128xf32> -> vector<1x128xf32>
    %c0_50 = arith.constant 0 : index
    %c0_51 = arith.constant 0 : index
    %84 = vector.load %arg4[%c0_50, %c0_51] : memref<1x8xf32, #tpu.memory_space<vmem>>, vector<1x8xf32>
    %cst_52 = arith.constant dense<0.000000e+00> : vector<1x128xf32>
    %85 = tpu.matmul %84, %36, %cst_52 {dimension_numbers = #tpu.dot_dimension_numbers<[1], [0], [0], [1], [0, 0, 1, 1], [], []>} : vector<1x8xf32>, vector<8x128xf32>, vector<1x128xf32> -> vector<1x128xf32>
    %86 = vector.broadcast %83 : vector<1x128xf32> to vector<8x128xf32>
    %87 = arith.mulf %53, %86 : vector<8x128xf32>
    %88 = vector.broadcast %85 : vector<1x128xf32> to vector<8x128xf32>
    %89 = arith.addf %87, %88 : vector<8x128xf32>
    %90 = vector.broadcast %83 : vector<1x128xf32> to vector<8x128xf32>
    %91 = arith.mulf %58, %90 : vector<8x128xf32>
    %92 = vector.broadcast %85 : vector<1x128xf32> to vector<8x128xf32>
    %93 = arith.addf %91, %92 : vector<8x128xf32>
    %94 = vector.broadcast %83 : vector<1x128xf32> to vector<8x128xf32>
    %95 = arith.mulf %64, %94 : vector<8x128xf32>
    %96 = vector.broadcast %85 : vector<1x128xf32> to vector<8x128xf32>
    %97 = arith.addf %95, %96 : vector<8x128xf32>
    %98 = vector.broadcast %83 : vector<1x128xf32> to vector<8x128xf32>
    %99 = arith.mulf %70, %98 : vector<8x128xf32>
    %100 = vector.broadcast %85 : vector<1x128xf32> to vector<8x128xf32>
    %101 = arith.addf %99, %100 : vector<8x128xf32>
    %cst_53 = arith.constant 0.000000e+00 : f32
    %102 = vector.broadcast %cst_53 : f32 to vector<8x128xf32>
    %103 = arith.cmpf oge, %89, %102 : vector<8x128xf32>
    %cst_54 = arith.constant 0.00999999977 : f32
    %104 = vector.broadcast %cst_54 : f32 to vector<8x128xf32>
    %105 = arith.mulf %104, %89 : vector<8x128xf32>
    %106 = arith.select %103, %89, %105 : vector<8x128xi1>, vector<8x128xf32>
    %c0_55 = arith.constant 0 : index
    %c0_56 = arith.constant 0 : index
    %c0_57 = arith.constant 0 : index
    %c0_58 = arith.constant 0 : index
    %107 = vector.load %arg7[%c0_55, %c0_56, %c0_57, %c0_58] : memref<2x2x8x128xf32, #tpu.memory_space<vmem>>, vector<1x1x8x128xf32>
    %108 = vector.shape_cast %107 : vector<1x1x8x128xf32> to vector<8x128xf32>
    %109 = vector.shape_cast %106 : vector<8x128xf32> to vector<1x1x8x128xf32>
    tpu.vector_store %arg7[%c0_55, %c0_56, %c0_57, %c0_58], %109 {strides = array<i32>} : memref<2x2x8x128xf32, #tpu.memory_space<vmem>>, vector<1x1x8x128xf32>,
    %cst_59 = arith.constant 0.000000e+00 : f32
    %110 = vector.broadcast %cst_59 : f32 to vector<8x128xf32>
    %111 = arith.cmpf oge, %93, %110 : vector<8x128xf32>
    %cst_60 = arith.constant 0.00999999977 : f32
    %112 = vector.broadcast %cst_60 : f32 to vector<8x128xf32>
    %113 = arith.mulf %112, %93 : vector<8x128xf32>
    %114 = arith.select %111, %93, %113 : vector<8x128xi1>, vector<8x128xf32>
    %c0_61 = arith.constant 0 : index
    %c1_62 = arith.constant 1 : index
    %c0_63 = arith.constant 0 : index
    %c0_64 = arith.constant 0 : index
    %115 = vector.load %arg7[%c0_61, %c1_62, %c0_63, %c0_64] : memref<2x2x8x128xf32, #tpu.memory_space<vmem>>, vector<1x1x8x128xf32>
    %116 = vector.shape_cast %115 : vector<1x1x8x128xf32> to vector<8x128xf32>
    %117 = vector.shape_cast %114 : vector<8x128xf32> to vector<1x1x8x128xf32>
    tpu.vector_store %arg7[%c0_61, %c1_62, %c0_63, %c0_64], %117 {strides = array<i32>} : memref<2x2x8x128xf32, #tpu.memory_space<vmem>>, vector<1x1x8x128xf32>,
    %cst_65 = arith.constant 0.000000e+00 : f32
    %118 = vector.broadcast %cst_65 : f32 to vector<8x128xf32>
    %119 = arith.cmpf oge, %97, %118 : vector<8x128xf32>
    %cst_66 = arith.constant 0.00999999977 : f32
    %120 = vector.broadcast %cst_66 : f32 to vector<8x128xf32>
    %121 = arith.mulf %120, %97 : vector<8x128xf32>
    %122 = arith.select %119, %97, %121 : vector<8x128xi1>, vector<8x128xf32>
    %c1_67 = arith.constant 1 : index
    %c0_68 = arith.constant 0 : index
    %c0_69 = arith.constant 0 : index
    %c0_70 = arith.constant 0 : index
    %123 = vector.load %arg7[%c1_67, %c0_68, %c0_69, %c0_70] : memref<2x2x8x128xf32, #tpu.memory_space<vmem>>, vector<1x1x8x128xf32>
    %124 = vector.shape_cast %123 : vector<1x1x8x128xf32> to vector<8x128xf32>
    %125 = vector.shape_cast %122 : vector<8x128xf32> to vector<1x1x8x128xf32>
    tpu.vector_store %arg7[%c1_67, %c0_68, %c0_69, %c0_70], %125 {strides = array<i32>} : memref<2x2x8x128xf32, #tpu.memory_space<vmem>>, vector<1x1x8x128xf32>,
    %cst_71 = arith.constant 0.000000e+00 : f32
    %126 = vector.broadcast %cst_71 : f32 to vector<8x128xf32>
    %127 = arith.cmpf oge, %101, %126 : vector<8x128xf32>
    %cst_72 = arith.constant 0.00999999977 : f32
    %128 = vector.broadcast %cst_72 : f32 to vector<8x128xf32>
    %129 = arith.mulf %128, %101 : vector<8x128xf32>
    %130 = arith.select %127, %101, %129 : vector<8x128xi1>, vector<8x128xf32>
    %c1_73 = arith.constant 1 : index
    %c1_74 = arith.constant 1 : index
    %c0_75 = arith.constant 0 : index
    %c0_76 = arith.constant 0 : index
    %131 = vector.load %arg7[%c1_73, %c1_74, %c0_75, %c0_76] : memref<2x2x8x128xf32, #tpu.memory_space<vmem>>, vector<1x1x8x128xf32>
    %132 = vector.shape_cast %131 : vector<1x1x8x128xf32> to vector<8x128xf32>
    %133 = vector.shape_cast %130 : vector<8x128xf32> to vector<1x1x8x128xf32>
    tpu.vector_store %arg7[%c1_73, %c1_74, %c0_75, %c0_76], %133 {strides = array<i32>} : memref<2x2x8x128xf32, #tpu.memory_space<vmem>>, vector<1x1x8x128xf32>,
    return
  }
}

module attributes {stable_mosaic.version = 11 : i64} {
  func.func @_conv_block_kernel(%arg0: memref<1x2x18x144xf32, #tpu.memory_space<vmem>>, %arg1: memref<3x144x64xbf16, #tpu.memory_space<vmem>>, %arg2: memref<1x64xf32, #tpu.memory_space<vmem>>, %arg3: memref<1x2x16x64xf32, #tpu.memory_space<vmem>>) attributes {dimension_semantics = [], scalar_prefetch = 0 : i64, scratch_operands = 0 : i64, tpu.core_type = #tpu.core_type<tc>} {
    %c0 = arith.constant 0 : index
    %c0_0 = arith.constant 0 : index
    %0 = vector.load %arg2[%c0, %c0_0] : memref<1x64xf32, #tpu.memory_space<vmem>>, vector<1x64xf32>
    %c0_1 = arith.constant 0 : index
    %c0_2 = arith.constant 0 : index
    %c0_3 = arith.constant 0 : index
    %1 = vector.load %arg1[%c0_1, %c0_2, %c0_3] : memref<3x144x64xbf16, #tpu.memory_space<vmem>>, vector<1x144x64xbf16>
    %2 = vector.shape_cast %1 : vector<1x144x64xbf16> to vector<144x64xbf16>
    %c1 = arith.constant 1 : index
    %c0_4 = arith.constant 0 : index
    %c0_5 = arith.constant 0 : index
    %3 = vector.load %arg1[%c1, %c0_4, %c0_5] : memref<3x144x64xbf16, #tpu.memory_space<vmem>>, vector<1x144x64xbf16>
    %4 = vector.shape_cast %3 : vector<1x144x64xbf16> to vector<144x64xbf16>
    %c2 = arith.constant 2 : index
    %c0_6 = arith.constant 0 : index
    %c0_7 = arith.constant 0 : index
    %5 = vector.load %arg1[%c2, %c0_6, %c0_7] : memref<3x144x64xbf16, #tpu.memory_space<vmem>>, vector<1x144x64xbf16>
    %6 = vector.shape_cast %5 : vector<1x144x64xbf16> to vector<144x64xbf16>
    %c0_8 = arith.constant 0 : index
    %c0_9 = arith.constant 0 : index
    %c0_10 = arith.constant 0 : index
    %c0_11 = arith.constant 0 : index
    %7 = vector.load %arg0[%c0_8, %c0_9, %c0_10, %c0_11] : memref<1x2x18x144xf32, #tpu.memory_space<vmem>>, vector<1x1x16x144xf32>
    %8 = vector.shape_cast %7 : vector<1x1x16x144xf32> to vector<16x144xf32>
    %9 = arith.truncf %8 : vector<16x144xf32> to vector<16x144xbf16>
    %cst = arith.constant dense<0.000000e+00> : vector<16x64xf32>
    %10 = tpu.matmul %9, %2, %cst {dimension_numbers = #tpu.dot_dimension_numbers<[1], [0], [0], [1], [0, 0, 1, 1], [], []>} : vector<16x144xbf16>, vector<144x64xbf16>, vector<16x64xf32> -> vector<16x64xf32>
    %c0_12 = arith.constant 0 : index
    %c0_13 = arith.constant 0 : index
    %c1_14 = arith.constant 1 : index
    %c0_15 = arith.constant 0 : index
    %11 = vector.load %arg0[%c0_12, %c0_13, %c1_14, %c0_15] : memref<1x2x18x144xf32, #tpu.memory_space<vmem>>, vector<1x1x16x144xf32>
    %12 = vector.shape_cast %11 : vector<1x1x16x144xf32> to vector<16x144xf32>
    %13 = arith.truncf %12 : vector<16x144xf32> to vector<16x144xbf16>
    %cst_16 = arith.constant dense<0.000000e+00> : vector<16x64xf32>
    %14 = tpu.matmul %13, %4, %cst_16 {dimension_numbers = #tpu.dot_dimension_numbers<[1], [0], [0], [1], [0, 0, 1, 1], [], []>} : vector<16x144xbf16>, vector<144x64xbf16>, vector<16x64xf32> -> vector<16x64xf32>
    %15 = arith.addf %10, %14 : vector<16x64xf32>
    %c0_17 = arith.constant 0 : index
    %c0_18 = arith.constant 0 : index
    %c2_19 = arith.constant 2 : index
    %c0_20 = arith.constant 0 : index
    %16 = vector.load %arg0[%c0_17, %c0_18, %c2_19, %c0_20] : memref<1x2x18x144xf32, #tpu.memory_space<vmem>>, vector<1x1x16x144xf32>
    %17 = vector.shape_cast %16 : vector<1x1x16x144xf32> to vector<16x144xf32>
    %18 = arith.truncf %17 : vector<16x144xf32> to vector<16x144xbf16>
    %cst_21 = arith.constant dense<0.000000e+00> : vector<16x64xf32>
    %19 = tpu.matmul %18, %6, %cst_21 {dimension_numbers = #tpu.dot_dimension_numbers<[1], [0], [0], [1], [0, 0, 1, 1], [], []>} : vector<16x144xbf16>, vector<144x64xbf16>, vector<16x64xf32> -> vector<16x64xf32>
    %20 = arith.addf %15, %19 : vector<16x64xf32>
    %21 = vector.broadcast %0 : vector<1x64xf32> to vector<16x64xf32>
    %22 = arith.addf %20, %21 : vector<16x64xf32>
    %c0_22 = arith.constant 0 : index
    %c1_23 = arith.constant 1 : index
    %c0_24 = arith.constant 0 : index
    %c0_25 = arith.constant 0 : index
    %23 = vector.load %arg0[%c0_22, %c1_23, %c0_24, %c0_25] : memref<1x2x18x144xf32, #tpu.memory_space<vmem>>, vector<1x1x16x144xf32>
    %24 = vector.shape_cast %23 : vector<1x1x16x144xf32> to vector<16x144xf32>
    %25 = arith.truncf %24 : vector<16x144xf32> to vector<16x144xbf16>
    %cst_26 = arith.constant dense<0.000000e+00> : vector<16x64xf32>
    %26 = tpu.matmul %25, %2, %cst_26 {dimension_numbers = #tpu.dot_dimension_numbers<[1], [0], [0], [1], [0, 0, 1, 1], [], []>} : vector<16x144xbf16>, vector<144x64xbf16>, vector<16x64xf32> -> vector<16x64xf32>
    %c0_27 = arith.constant 0 : index
    %c1_28 = arith.constant 1 : index
    %c1_29 = arith.constant 1 : index
    %c0_30 = arith.constant 0 : index
    %27 = vector.load %arg0[%c0_27, %c1_28, %c1_29, %c0_30] : memref<1x2x18x144xf32, #tpu.memory_space<vmem>>, vector<1x1x16x144xf32>
    %28 = vector.shape_cast %27 : vector<1x1x16x144xf32> to vector<16x144xf32>
    %29 = arith.truncf %28 : vector<16x144xf32> to vector<16x144xbf16>
    %cst_31 = arith.constant dense<0.000000e+00> : vector<16x64xf32>
    %30 = tpu.matmul %29, %4, %cst_31 {dimension_numbers = #tpu.dot_dimension_numbers<[1], [0], [0], [1], [0, 0, 1, 1], [], []>} : vector<16x144xbf16>, vector<144x64xbf16>, vector<16x64xf32> -> vector<16x64xf32>
    %31 = arith.addf %26, %30 : vector<16x64xf32>
    %c0_32 = arith.constant 0 : index
    %c1_33 = arith.constant 1 : index
    %c2_34 = arith.constant 2 : index
    %c0_35 = arith.constant 0 : index
    %32 = vector.load %arg0[%c0_32, %c1_33, %c2_34, %c0_35] : memref<1x2x18x144xf32, #tpu.memory_space<vmem>>, vector<1x1x16x144xf32>
    %33 = vector.shape_cast %32 : vector<1x1x16x144xf32> to vector<16x144xf32>
    %34 = arith.truncf %33 : vector<16x144xf32> to vector<16x144xbf16>
    %cst_36 = arith.constant dense<0.000000e+00> : vector<16x64xf32>
    %35 = tpu.matmul %34, %6, %cst_36 {dimension_numbers = #tpu.dot_dimension_numbers<[1], [0], [0], [1], [0, 0, 1, 1], [], []>} : vector<16x144xbf16>, vector<144x64xbf16>, vector<16x64xf32> -> vector<16x64xf32>
    %36 = arith.addf %31, %35 : vector<16x64xf32>
    %37 = vector.broadcast %0 : vector<1x64xf32> to vector<16x64xf32>
    %38 = arith.addf %36, %37 : vector<16x64xf32>
    %39 = math.tanh %22 : vector<16x64xf32>
    %c0_37 = arith.constant 0 : index
    %c0_38 = arith.constant 0 : index
    %c0_39 = arith.constant 0 : index
    %c0_40 = arith.constant 0 : index
    %40 = vector.load %arg3[%c0_37, %c0_38, %c0_39, %c0_40] : memref<1x2x16x64xf32, #tpu.memory_space<vmem>>, vector<1x1x16x64xf32>
    %41 = vector.shape_cast %40 : vector<1x1x16x64xf32> to vector<16x64xf32>
    %42 = vector.shape_cast %39 : vector<16x64xf32> to vector<1x1x16x64xf32>
    tpu.vector_store %arg3[%c0_37, %c0_38, %c0_39, %c0_40], %42 {strides = array<i32>} : memref<1x2x16x64xf32, #tpu.memory_space<vmem>>, vector<1x1x16x64xf32>,
    %43 = math.tanh %38 : vector<16x64xf32>
    %c0_41 = arith.constant 0 : index
    %c1_42 = arith.constant 1 : index
    %c0_43 = arith.constant 0 : index
    %c0_44 = arith.constant 0 : index
    %44 = vector.load %arg3[%c0_41, %c1_42, %c0_43, %c0_44] : memref<1x2x16x64xf32, #tpu.memory_space<vmem>>, vector<1x1x16x64xf32>
    %45 = vector.shape_cast %44 : vector<1x1x16x64xf32> to vector<16x64xf32>
    %46 = vector.shape_cast %43 : vector<16x64xf32> to vector<1x1x16x64xf32>
    tpu.vector_store %arg3[%c0_41, %c1_42, %c0_43, %c0_44], %46 {strides = array<i32>} : memref<1x2x16x64xf32, #tpu.memory_space<vmem>>, vector<1x1x16x64xf32>,
    return
  }
}

</mosaic_0001>

<llo_original>
// kernel: tile.74
$region0: #{tile.74}
  %s0 = inlined_call_operand.vmem [shape: f32[8,8,8], index: 0, kind: input, shape index: {}]
  %s1 = inlined_call_operand.vmem [shape: f32[64,8], index: 1, kind: output, shape index: {}]
  %v2 = vld [vmem:[%s0] ss:$8 sm:$0xf]
  %v3 = vld [vmem:[%s0] ss:$8 sm:$0xf0]
  %vm4 = vcmask 1047556
  %v5 = vsel %vm4, %v3, %v2
  %vm6 = vcmask 64512
  %7 = vst.msk [vmem:[%s1] sm:$0xff] %vm6, %v5
  %s8 = scalar_lea.vmem %s0, 7
  %v9 = vld [vmem:[%s8] ss:$8 sm:$0xf]
  %s10 = scalar_lea.vmem %s0, 7
  %v11 = vld [vmem:[%s10] ss:$8 sm:$0xf0]
  %vm12 = vcmask 1047556
  %v13 = vsel %vm12, %v11, %v9
  %14 = vrot.lane.b32.xlu0 %v13, 56
  %v15 = vpop.permute.xlu0 %14
  %vm16 = vcmask 523712
  %17 = vst.msk [vmem:[%s1] sm:$0xff] %vm16, %v15
  %s18 = scalar_lea.vmem %s0, 6
  %v19 = vld [vmem:[%s18] ss:$8 sm:$0xf]
  %s20 = scalar_lea.vmem %s0, 6
  %v21 = vld [vmem:[%s20] ss:$8 sm:$0xf0]
  %vm22 = vcmask 1047556
  %v23 = vsel %vm22, %v21, %v19
  %24 = vrot.lane.b32.xlu0 %v23, 48
  %v25 = vpop.permute.xlu0 %24
  %vm26 = vcmask 458112
  %27 = vst.msk [vmem:[%s1] sm:$0xff] %vm26, %v25
  %s28 = scalar_lea.vmem %s0, 5
  %v29 = vld [vmem:[%s28] ss:$8 sm:$0xf]
  %s30 = scalar_lea.vmem %s0, 5
  %v31 = vld [vmem:[%s30] ss:$8 sm:$0xf0]
  %vm32 = vcmask 1047556
  %v33 = vsel %vm32, %v31, %v29
  %34 = vrot.lane.b32.xlu0 %v33, 40
  %v35 = vpop.permute.xlu0 %34
  %vm36 = vcmask 392512
  %37 = vst.msk [vmem:[%s1] sm:$0xff] %vm36, %v35
  %s38 = scalar_lea.vmem %s0, 4
  %v39 = vld [vmem:[%s38] ss:$8 sm:$0xf]
  %s40 = scalar_lea.vmem %s0, 4
  %v41 = vld [vmem:[%s40] ss:$8 sm:$0xf0]
  %vm42 = vcmask 1047556
  %v43 = vsel %vm42, %v41, %v39
  %44 = vrot.lane.b32.xlu0 %v43, 32
  %v45 = vpop.permute.xlu0 %44
  %vm46 = vcmask 326912
  %47 = vst.msk [vmem:[%s1] sm:$0xff] %vm46, %v45
  %s48 = scalar_lea.vmem %s0, 3
  %v49 = vld [vmem:[%s48] ss:$8 sm:$0xf]
  %s50 = scalar_lea.vmem %s0, 3
  %v51 = vld [vmem:[%s50] ss:$8 sm:$0xf0]
  %vm52 = vcmask 1047556
  %v53 = vsel %vm52, %v51, %v49
  %54 = vrot.lane.b32.xlu0 %v53, 24
  %v55 = vpop.permute.xlu0 %54
  %vm56 = vcmask 261312
  %57 = vst.msk [vmem:[%s1] sm:$0xff] %vm56, %v55
  %s58 = scalar_lea.vmem %s0, 2
  %v59 = vld [vmem:[%s58] ss:$8 sm:$0xf]
  %s60 = scalar_lea.vmem %s0, 2
  %v61 = vld [vmem:[%s60] ss:$8 sm:$0xf0]
  %vm62 = vcmask 1047556
  %v63 = vsel %vm62, %v61, %v59
  %64 = vrot.lane.b32.xlu0 %v63, 16
  %v65 = vpop.permute.xlu0 %64
  %vm66 = vcmask 195712
  %67 = vst.msk [vmem:[%s1] sm:$0xff] %vm66, %v65
  %s68 = scalar_lea.vmem %s0, 1
  %v69 = vld [vmem:[%s68] ss:$8 sm:$0xf]
  %s70 = scalar_lea.vmem %s0, 1
  %v71 = vld [vmem:[%s70] ss:$8 sm:$0xf0]
  %vm72 = vcmask 1047556
  %v73 = vsel %vm72, %v71, %v69
  %74 = vrot.lane.b32.xlu0 %v73, 8
  %v75 = vpop.permute.xlu0 %74
  %vm76 = vcmask 130112
  %77 = vst.msk [vmem:[%s1] sm:$0xff] %vm76, %v75

// kernel: _lambda_.9
$region0: #{_lambda_.9}
  #allocation0 [shape = 'u32[]', space=smem, size = 0x4, offset = 0x4, fixed_abs, tag = 'smem constant byte address 0x4 - core index']
  #allocation1 [shape = 'u32[144,128]{1,0:T(1,128)}', space=vmem, size = 0x12000, scoped, tag = 'internal scratch']
  %s0 = inlined_call_operand.vmem [shape: f32[512,4], index: 0, kind: input, shape index: {}]
  %s1 = inlined_call_operand.vmem [shape: f32[4,4], index: 1, kind: input, shape index: {}]
  %s2 = inlined_call_operand.hbm [shape: f32[1,4], index: 2, kind: input, shape index: {}]
  %s3 = inlined_call_operand.hbm [shape: f32[2,8], index: 3, kind: input, shape index: {}]
  %s4 = inlined_call_operand.hbm [shape: f32[8,256], index: 4, kind: input, shape index: {}]
  %s5 = inlined_call_operand.hbm [shape: f32[1,256], index: 5, kind: input, shape index: {}]
  %s6 = inlined_call_operand.vmem [shape: f32[512,4], index: 6, kind: output, shape index: {0}]
  %s7 = inlined_call_operand.vmem [shape: f32[2,256], index: 7, kind: output, shape index: {1}]
  %8 = xla_tuple %s6, %s7
  %s9 = sld [smem:[#allocation0]]
  $region58: #{_lambda_.9} parent=0
    _
  %s11 = ssub.s32 1, %s9
  %s12 = scalar_select 0, %s11, %s9
  $region1: #{_lambda_.9} parent=0
    #allocation2 [shape = 'u8[512]{0}', space=vmem, size = 0x400, scoped, tag = 'input window, operand 2, single buffered']
    #allocation3 [shape = 's32[1]{0}', space=sflag, size = 0x4, scoped, tag = 'scoped memory for _lambda_.9']
    #allocation4 [shape = 'u8[1024]{0}', space=vmem, size = 0x400, scoped, tag = 'input window, operand 3, single buffered']
    #allocation5 [shape = 's32[1]{0}', space=sflag, size = 0x4, scoped, tag = 'scoped memory for _lambda_.9']
    #allocation6 [shape = 'u8[8192]{0}', space=vmem, size = 0x2000, scoped, tag = 'input window, operand 4, single buffered']
    #allocation7 [shape = 'u8[1024]{0}', space=vmem, size = 0x400, scoped, tag = 'input window, operand 5, single buffered']
    #allocation8 [shape = 's32[1]{0}', space=sflag, size = 0x4, scoped, tag = 'scoped memory for _lambda_.9']
    %13 = vsyncpa [#allocation3], 0
    %14 = vsyncpa [#allocation5], 0
    %15 = vsyncpa [#allocation8], 0
    // Predicated region
    $region2: #{_lambda_.9} parent=1 // pred_check
      _
    $region3: #{_lambda_.9} parent=1 // pred_check_branch
      %17 = sbr.rel (0) target = $region5
    $region4: #{_lambda_.9} parent=1 // pred_region
      _
    $region5: #{_lambda_.9} parent=1 // pred_fallthru
      _
    // Predicated region
    $region6: #{_lambda_.9} parent=1 // pred_check
      _
    $region7: #{_lambda_.9} parent=1 // pred_check_branch
      %19 = sbr.rel (0) target = $region9
    $region8: #{_lambda_.9} parent=1 // pred_region
      _
    $region9: #{_lambda_.9} parent=1 // pred_fallthru
      _
    // Predicated region
    $region10: #{_lambda_.9} parent=1 // pred_check
      _
    $region11: #{_lambda_.9} parent=1 // pred_check_branch
      %21 = sbr.rel (0) target = $region13
    $region12: #{_lambda_.9} parent=1 // pred_region
      %s23 = ssub.s32 16, 16
      %24 = vsyncadd [#allocation3], %s23
      %s26 = sshll.u32 [#allocation2], 4
      %s27 = int_to_ptr.vmem [resolvable:$true] %s26
      %29 = dma.hbm_to_vmem [thread:$0]  %s2, 16, %s27, [#allocation3]
    $region13: #{_lambda_.9} parent=1 // pred_fallthru
      _
    // Predicated region
    $region14: #{_lambda_.9} parent=1 // pred_check
      _
    $region15: #{_lambda_.9} parent=1 // pred_check_branch
      %31 = sbr.rel (0) target = $region17
    $region16: #{_lambda_.9} parent=1 // pred_region
      %s33 = ssub.s32 32, 32
      %34 = vsyncadd [#allocation5], %s33
      %s36 = sshll.u32 [#allocation4], 4
      %s37 = int_to_ptr.vmem [resolvable:$true] %s36
      %39 = dma.hbm_to_vmem [thread:$0]  %s3, 32, %s37, [#allocation5]
    $region17: #{_lambda_.9} parent=1 // pred_fallthru
      _
    // Predicated region
    $region18: #{_lambda_.9} parent=1 // pred_check
      _
    $region19: #{_lambda_.9} parent=1 // pred_check_branch
      %41 = sbr.rel (0) target = $region21
    $region20: #{_lambda_.9} parent=1 // pred_region
      %s43 = ssub.s32 256, 256
      %44 = vsyncadd [#allocation5], %s43
      %s46 = sshll.u32 [#allocation6], 4
      %s47 = int_to_ptr.vmem [resolvable:$true] %s46
      %49 = dma.hbm_to_vmem [thread:$0]  %s4, 256, %s47, [#allocation5]
    $region21: #{_lambda_.9} parent=1 // pred_fallthru
      _
    // Predicated region
    $region22: #{_lambda_.9} parent=1 // pred_check
      _
    $region23: #{_lambda_.9} parent=1 // pred_check_branch
      %51 = sbr.rel (0) target = $region25
    $region24: #{_lambda_.9} parent=1 // pred_region
      %s53 = ssub.s32 32, 32
      %54 = vsyncadd [#allocation8], %s53
      %s56 = sshll.u32 [#allocation7], 4
      %s57 = int_to_ptr.vmem [resolvable:$true] %s56
      %59 = dma.hbm_to_vmem [thread:$0]  %s5, 32, %s57, [#allocation8]
    $region25: #{_lambda_.9} parent=1 // pred_fallthru
      _
    // Predicated region
    $region26: #{_lambda_.9} parent=1 // pred_check
      _
    $region27: #{_lambda_.9} parent=1 // pred_check_branch
      %61 = sbr.rel (0) target = $region29
    $region28: #{_lambda_.9} parent=1 // pred_region
      %62 = dma.done [#allocation3], 16
    $region29: #{_lambda_.9} parent=1 // pred_fallthru
      _
    // Predicated region
    $region30: #{_lambda_.9} parent=1 // pred_check
      _
    $region31: #{_lambda_.9} parent=1 // pred_check_branch
      %64 = sbr.rel (0) target = $region33
    $region32: #{_lambda_.9} parent=1 // pred_region
      %65 = dma.done [#allocation5], 32
    $region33: #{_lambda_.9} parent=1 // pred_fallthru
      _
    // Predicated region
    $region34: #{_lambda_.9} parent=1 // pred_check
      _
    $region35: #{_lambda_.9} parent=1 // pred_check_branch
      %67 = sbr.rel (0) target = $region37
    $region36: #{_lambda_.9} parent=1 // pred_region
      %68 = dma.done [#allocation5], 256
    $region37: #{_lambda_.9} parent=1 // pred_fallthru
      _
    // Predicated region
    $region38: #{_lambda_.9} parent=1 // pred_check
      _
    $region39: #{_lambda_.9} parent=1 // pred_check_branch
      %70 = sbr.rel (0) target = $region41
    $region40: #{_lambda_.9} parent=1 // pred_region
      %71 = dma.done [#allocation8], 32
    $region41: #{_lambda_.9} parent=1 // pred_fallthru
      _
    %v72 = vld [vmem:[%s0] sm:$0xff]
    %v73 = vld [vmem:[%s0 + $0x8] sm:$0xff]
    %v74 = vld [vmem:[%s0 + $0x10] sm:$0xff]
    %v75 = vld [vmem:[%s0 + $0x18] sm:$0xff]
    %v76 = vld [vmem:[%s0 + $0x20] sm:$0xff]
    %v77 = vld [vmem:[%s0 + $0x28] sm:$0xff]
    %v78 = vld [vmem:[%s0 + $0x30] sm:$0xff]
    %v79 = vld [vmem:[%s0 + $0x38] sm:$0xff]
    %v80 = vld [vmem:[%s0 + $0x40] sm:$0xff]
    %v81 = vld [vmem:[%s0 + $0x48] sm:$0xff]
    %v82 = vld [vmem:[%s0 + $0x50] sm:$0xff]
    %v83 = vld [vmem:[%s0 + $0x58] sm:$0xff]
    %v84 = vld [vmem:[%s0 + $0x60] sm:$0xff]
    %v85 = vld [vmem:[%s0 + $0x68] sm:$0xff]
    %v86 = vld [vmem:[%s0 + $0x70] sm:$0xff]
    %v87 = vld [vmem:[%s0 + $0x78] sm:$0xff]
    %v88 = vld [vmem:[%s0 + $0x80] sm:$0xff]
    %v89 = vld [vmem:[%s0 + $0x88] sm:$0xff]
    %v90 = vld [vmem:[%s0 + $0x90] sm:$0xff]
    %v91 = vld [vmem:[%s0 + $0x98] sm:$0xff]
    %v92 = vld [vmem:[%s0 + $0xa0] sm:$0xff]
    %v93 = vld [vmem:[%s0 + $0xa8] sm:$0xff]
    %v94 = vld [vmem:[%s0 + $0xb0] sm:$0xff]
    %v95 = vld [vmem:[%s0 + $0xb8] sm:$0xff]
    %v96 = vld [vmem:[%s0 + $0xc0] sm:$0xff]
    %v97 = vld [vmem:[%s0 + $0xc8] sm:$0xff]
    %v98 = vld [vmem:[%s0 + $0xd0] sm:$0xff]
    %v99 = vld [vmem:[%s0 + $0xd8] sm:$0xff]
    %v100 = vld [vmem:[%s0 + $0xe0] sm:$0xff]
    %v101 = vld [vmem:[%s0 + $0xe8] sm:$0xff]
    %v102 = vld [vmem:[%s0 + $0xf0] sm:$0xff]
    %v103 = vld [vmem:[%s0 + $0xf8] sm:$0xff]
    %v104 = vld [vmem:[%s0 + $0x100] sm:$0xff]
    %v105 = vld [vmem:[%s0 + $0x108] sm:$0xff]
    %v106 = vld [vmem:[%s0 + $0x110] sm:$0xff]
    %v107 = vld [vmem:[%s0 + $0x118] sm:$0xff]
    %v108 = vld [vmem:[%s0 + $0x120] sm:$0xff]
    %v109 = vld [vmem:[%s0 + $0x128] sm:$0xff]
    %v110 = vld [vmem:[%s0 + $0x130] sm:$0xff]
    %v111 = vld [vmem:[%s0 + $0x138] sm:$0xff]
    %v112 = vld [vmem:[%s0 + $0x140] sm:$0xff]
    %v113 = vld [vmem:[%s0 + $0x148] sm:$0xff]
    %v114 = vld [vmem:[%s0 + $0x150] sm:$0xff]
    %v115 = vld [vmem:[%s0 + $0x158] sm:$0xff]
    %v116 = vld [vmem:[%s0 + $0x160] sm:$0xff]
    %v117 = vld [vmem:[%s0 + $0x168] sm:$0xff]
    %v118 = vld [vmem:[%s0 + $0x170] sm:$0xff]
    %v119 = vld [vmem:[%s0 + $0x178] sm:$0xff]
    %v120 = vld [vmem:[%s0 + $0x180] sm:$0xff]
    %v121 = vld [vmem:[%s0 + $0x188] sm:$0xff]
    %v122 = vld [vmem:[%s0 + $0x190] sm:$0xff]
    %v123 = vld [vmem:[%s0 + $0x198] sm:$0xff]
    %v124 = vld [vmem:[%s0 + $0x1a0] sm:$0xff]
    %v125 = vld [vmem:[%s0 + $0x1a8] sm:$0xff]
    %v126 = vld [vmem:[%s0 + $0x1b0] sm:$0xff]
    %v127 = vld [vmem:[%s0 + $0x1b8] sm:$0xff]
    %v128 = vld [vmem:[%s0 + $0x1c0] sm:$0xff]
    %v129 = vld [vmem:[%s0 + $0x1c8] sm:$0xff]
    %v130 = vld [vmem:[%s0 + $0x1d0] sm:$0xff]
    %v131 = vld [vmem:[%s0 + $0x1d8] sm:$0xff]
    %v132 = vld [vmem:[%s0 + $0x1e0] sm:$0xff]
    %v133 = vld [vmem:[%s0 + $0x1e8] sm:$0xff]
    %v134 = vld [vmem:[%s0 + $0x1f0] sm:$0xff]
    %v135 = vld [vmem:[%s0 + $0x1f8] sm:$0xff]
    %v136 = vld [vmem:[%s1] sm:$0xf]
    %v137 = vld [vmem:[#allocation2] sm:$0x1]
    %v139 = vlaneseq
    %v140 = vshrl.u32 %v139, 7
    %v141 = vsub.s32 0, %v140
    %v142 = vrot.slane %v137, %v141
    %vm144 = vcmask 31744
    %v146 = vsel %vm144, %v72, 0
    %v149 = vsel %vm144, %v73, 0
    %v152 = vsel %vm144, %v74, 0
    %v155 = vsel %vm144, %v75, 0
    %v158 = vsel %vm144, %v76, 0
    %v161 = vsel %vm144, %v77, 0
    %v164 = vsel %vm144, %v78, 0
    %v167 = vsel %vm144, %v79, 0
    %v170 = vsel %vm144, %v80, 0
    %v173 = vsel %vm144, %v81, 0
    %v176 = vsel %vm144, %v82, 0
    %v179 = vsel %vm144, %v83, 0
    %v182 = vsel %vm144, %v84, 0
    %v185 = vsel %vm144, %v85, 0
    %v188 = vsel %vm144, %v86, 0
    %v191 = vsel %vm144, %v87, 0
    %v194 = vsel %vm144, %v88, 0
    %v197 = vsel %vm144, %v89, 0
    %v200 = vsel %vm144, %v90, 0
    %v203 = vsel %vm144, %v91, 0
    %v206 = vsel %vm144, %v92, 0
    %v209 = vsel %vm144, %v93, 0
    %v212 = vsel %vm144, %v94, 0
    %v215 = vsel %vm144, %v95, 0
    %v218 = vsel %vm144, %v96, 0
    %v221 = vsel %vm144, %v97, 0
    %v224 = vsel %vm144, %v98, 0
    %v227 = vsel %vm144, %v99, 0
    %v230 = vsel %vm144, %v100, 0
    %v233 = vsel %vm144, %v101, 0
    %v236 = vsel %vm144, %v102, 0
    %v239 = vsel %vm144, %v103, 0
    %v242 = vsel %vm144, %v104, 0
    %v245 = vsel %vm144, %v105, 0
    %v248 = vsel %vm144, %v106, 0
    %v251 = vsel %vm144, %v107, 0
    %v254 = vsel %vm144, %v108, 0
    %v257 = vsel %vm144, %v109, 0
    %v260 = vsel %vm144, %v110, 0
    %v263 = vsel %vm144, %v111, 0
    %v266 = vsel %vm144, %v112, 0
    %v269 = vsel %vm144, %v113, 0
    %v272 = vsel %vm144, %v114, 0
    %v275 = vsel %vm144, %v115, 0
    %v278 = vsel %vm144, %v116, 0
    %v281 = vsel %vm144, %v117, 0
    %v284 = vsel %vm144, %v118, 0
    %v287 = vsel %vm144, %v119, 0
    %v290 = vsel %vm144, %v120, 0
    %v293 = vsel %vm144, %v121, 0
    %v296 = vsel %vm144, %v122, 0
    %v299 = vsel %vm144, %v123, 0
    %v302 = vsel %vm144, %v124, 0
    %v305 = vsel %vm144, %v125, 0
    %v308 = vsel %vm144, %v126, 0
    %v311 = vsel %vm144, %v127, 0
    %v314 = vsel %vm144, %v128, 0
    %v317 = vsel %vm144, %v129, 0
    %v320 = vsel %vm144, %v130, 0
    %v323 = vsel %vm144, %v131, 0
    %v326 = vsel %vm144, %v132, 0
    %v329 = vsel %vm144, %v133, 0
    %v332 = vsel %vm144, %v134, 0
    %v335 = vsel %vm144, %v135, 0
    %vm337 = vcmask 1043456
    %v339 = vsel %vm337, %v136, 0
    %341 = vmatprep.subr.mxu0 0.0
    %342 = vmatpush1.msra.mxu0 %v339
    %343 = vmatprep.subr.mxu0 0.0
    %344 = vmatpush1.msra.mxu0 0.0
    %345 = vmatprep.subr.mxu0 0.0
    %346 = vmatpush1.msra.mxu0 0.0
    %347 = vmatprep.subr.mxu0 0.0
    %348 = vmatpush1.msra.mxu0 0.0
    %349 = vmatprep.subr.mxu0 0.0
    %350 = vmatpush1.msra.mxu0 0.0
    %351 = vmatprep.subr.mxu0 0.0
    %352 = vmatpush1.msra.mxu0 0.0
    %353 = vmatprep.subr.mxu0 0.0
    %354 = vmatpush1.msra.mxu0 0.0
    %355 = vmatprep.subr.mxu0 0.0
    %356 = vmatpush1.msra.mxu0 0.0
    %357 = vmatprep.subr.mxu0 0.0
    %358 = vmatpush1.msra.mxu0 0.0
    %359 = vmatprep.subr.mxu0 0.0
    %360 = vmatpush1.msra.mxu0 0.0
    %361 = vmatprep.subr.mxu0 0.0
    %362 = vmatpush1.msra.mxu0 0.0
    %363 = vmatprep.subr.mxu0 0.0
    %364 = vmatpush1.msra.mxu0 0.0
    %365 = vmatprep.subr.mxu0 0.0
    %366 = vmatpush1.msra.mxu0 0.0
    %367 = vmatprep.subr.mxu0 0.0
    %368 = vmatpush1.msra.mxu0 0.0
    %369 = vmatprep.subr.mxu0 0.0
    %370 = vmatpush1.msra.mxu0 0.0
    %371 = vmatprep.subr.mxu0 0.0
    %372 = vmatpush1.msra.mxu0 0.0
    %373 = vmatprep.subr.mxu0 0.0
    %374 = vmatpush1.msra.mxu0 0.0
    %375 = vmatprep.subr.mxu0 0.0
    %376 = vmatpush1.msra.mxu0 0.0
    %377 = vmatprep.subr.mxu0 0.0
    %378 = vmatpush1.msra.mxu0 0.0
    %379 = vmatprep.subr.mxu0 0.0
    %380 = vmatpush1.msra.mxu0 0.0
    %381 = vmatprep.subr.mxu0 0.0
    %382 = vmatpush1.msra.mxu0 0.0
    %383 = vmatprep.subr.mxu0 0.0
    %384 = vmatpush1.msra.mxu0 0.0
    %385 = vmatprep.subr.mxu0 0.0
    %386 = vmatpush1.msra.mxu0 0.0
    %387 = vmatprep.subr.mxu0 0.0
    %388 = vmatpush1.msra.mxu0 0.0
    %389 = vmatprep.subr.mxu0 0.0
    %390 = vmatpush1.msra.mxu0 0.0
    %391 = vmatprep.subr.mxu0 0.0
    %392 = vmatpush1.msra.mxu0 0.0
    %393 = vmatprep.subr.mxu0 0.0
    %394 = vmatpush1.msra.mxu0 0.0
    %395 = vmatprep.subr.mxu0 0.0
    %396 = vmatpush1.msra.mxu0 0.0
    %397 = vmatprep.subr.mxu0 0.0
    %398 = vmatpush1.msra.mxu0 0.0
    %399 = vmatprep.subr.mxu0 0.0
    %400 = vmatpush1.msra.mxu0 0.0
    %401 = vmatprep.subr.mxu0 0.0
    %402 = vmatpush1.msra.mxu0 0.0
    %403 = vmatprep.subr.mxu0 0.0
    %404 = vmatpush1.msra.mxu0 0.0
    %405 = vmatprep.mubr.f32.mxu0 0.0
    %406 = vmatmul.mubr.f32.gmra.mrb[0].mxu0 %v146
    %v407 = vpop.f32.mrb[0].mxu0
    %v408 = vadd.f32 %v142, %v407
    %v409 = vpop.f32.mrb[0].mxu0
    %410 = vmatprep.mubr.f32.mxu0 0.0
    %411 = vmatmul.mubr.f32.gmra.mrb[0].mxu0 %v149
    %v412 = vpop.f32.mrb[0].mxu0
    %v413 = vadd.f32 %v142, %v412
    %v414 = vpop.f32.mrb[0].mxu0
    %415 = vmatprep.mubr.f32.mxu0 0.0
    %416 = vmatmul.mubr.f32.gmra.mrb[0].mxu0 %v152
    %v417 = vpop.f32.mrb[0].mxu0
    %v418 = vadd.f32 %v142, %v417
    %v419 = vpop.f32.mrb[0].mxu0
    %420 = vmatprep.mubr.f32.mxu0 0.0
    %421 = vmatmul.mubr.f32.gmra.mrb[0].mxu0 %v155
    %v422 = vpop.f32.mrb[0].mxu0
    %v423 = vadd.f32 %v142, %v422
    %v424 = vpop.f32.mrb[0].mxu0
    %425 = vmatprep.mubr.f32.mxu0 0.0
    %426 = vmatmul.mubr.f32.gmra.mrb[0].mxu0 %v158
    %v427 = vpop.f32.mrb[0].mxu0
    %v428 = vadd.f32 %v142, %v427
    %v429 = vpop.f32.mrb[0].mxu0
    %430 = vmatprep.mubr.f32.mxu0 0.0
    %431 = vmatmul.mubr.f32.gmra.mrb[0].mxu0 %v161
    %v432 = vpop.f32.mrb[0].mxu0
    %v433 = vadd.f32 %v142, %v432
    %v434 = vpop.f32.mrb[0].mxu0
    %435 = vmatprep.mubr.f32.mxu0 0.0
    %436 = vmatmul.mubr.f32.gmra.mrb[0].mxu0 %v164
    %v437 = vpop.f32.mrb[0].mxu0
    %v438 = vadd.f32 %v142, %v437
    %v439 = vpop.f32.mrb[0].mxu0
    %440 = vmatprep.mubr.f32.mxu0 0.0
    %441 = vmatmul.mubr.f32.gmra.mrb[0].mxu0 %v167
    %v442 = vpop.f32.mrb[0].mxu0
    %v443 = vadd.f32 %v142, %v442
    %v444 = vpop.f32.mrb[0].mxu0
    %445 = vmatprep.mubr.f32.mxu0 0.0
    %446 = vmatmul.mubr.f32.gmra.mrb[0].mxu0 %v170
    %v447 = vpop.f32.mrb[0].mxu0
    %v448 = vadd.f32 %v142, %v447
    %v449 = vpop.f32.mrb[0].mxu0
    %450 = vmatprep.mubr.f32.mxu0 0.0
    %451 = vmatmul.mubr.f32.gmra.mrb[0].mxu0 %v173
    %v452 = vpop.f32.mrb[0].mxu0
    %v453 = vadd.f32 %v142, %v452
    %v454 = vpop.f32.mrb[0].mxu0
    %455 = vmatprep.mubr.f32.mxu0 0.0
    %456 = vmatmul.mubr.f32.gmra.mrb[0].mxu0 %v176
    %v457 = vpop.f32.mrb[0].mxu0
    %v458 = vadd.f32 %v142, %v457
    %v459 = vpop.f32.mrb[0].mxu0
    %460 = vmatprep.mubr.f32.mxu0 0.0
    %461 = vmatmul.mubr.f32.gmra.mrb[0].mxu0 %v179
    %v462 = vpop.f32.mrb[0].mxu0
    %v463 = vadd.f32 %v142, %v462
    %v464 = vpop.f32.mrb[0].mxu0
    %465 = vmatprep.mubr.f32.mxu0 0.0
    %466 = vmatmul.mubr.f32.gmra.mrb[0].mxu0 %v182
    %v467 = vpop.f32.mrb[0].mxu0
    %v468 = vadd.f32 %v142, %v467
    %v469 = vpop.f32.mrb[0].mxu0
    %470 = vmatprep.mubr.f32.mxu0 0.0
    %471 = vmatmul.mubr.f32.gmra.mrb[0].mxu0 %v185
    %v472 = vpop.f32.mrb[0].mxu0
    %v473 = vadd.f32 %v142, %v472
    %v474 = vpop.f32.mrb[0].mxu0
    %475 = vmatprep.mubr.f32.mxu0 0.0
    %476 = vmatmul.mubr.f32.gmra.mrb[0].mxu0 %v188
    %v477 = vpop.f32.mrb[0].mxu0
    %v478 = vadd.f32 %v142, %v477
    %v479 = vpop.f32.mrb[0].mxu0
    %480 = vmatprep.mubr.f32.mxu0 0.0
    %481 = vmatmul.mubr.f32.gmra.mrb[0].mxu0 %v191
    %v482 = vpop.f32.mrb[0].mxu0
    %v483 = vadd.f32 %v142, %v482
    %v484 = vpop.f32.mrb[0].mxu0
    %485 = vmatprep.mubr.f32.mxu0 0.0
    %486 = vmatmul.mubr.f32.gmra.mrb[0].mxu0 %v194
    %v487 = vpop.f32.mrb[0].mxu0
    %v488 = vadd.f32 %v142, %v487
    %v489 = vpop.f32.mrb[0].mxu0
    %490 = vmatprep.mubr.f32.mxu0 0.0
    %491 = vmatmul.mubr.f32.gmra.mrb[0].mxu0 %v197
    %v492 = vpop.f32.mrb[0].mxu0
    %v493 = vadd.f32 %v142, %v492
    %v494 = vpop.f32.mrb[0].mxu0
    %495 = vmatprep.mubr.f32.mxu0 0.0
    %496 = vmatmul.mubr.f32.gmra.mrb[0].mxu0 %v200
    %v497 = vpop.f32.mrb[0].mxu0
    %v498 = vadd.f32 %v142, %v497
    %v499 = vpop.f32.mrb[0].mxu0
    %500 = vmatprep.mubr.f32.mxu0 0.0
    %501 = vmatmul.mubr.f32.gmra.mrb[0].mxu0 %v203
    %v502 = vpop.f32.mrb[0].mxu0
    %v503 = vadd.f32 %v142, %v502
    %v504 = vpop.f32.mrb[0].mxu0
    %505 = vmatprep.mubr.f32.mxu0 0.0
    %506 = vmatmul.mubr.f32.gmra.mrb[0].mxu0 %v206
    %v507 = vpop.f32.mrb[0].mxu0
    %v508 = vadd.f32 %v142, %v507
    %v509 = vpop.f32.mrb[0].mxu0
    %510 = vmatprep.mubr.f32.mxu0 0.0
    %511 = vmatmul.mubr.f32.gmra.mrb[0].mxu0 %v209
    %v512 = vpop.f32.mrb[0].mxu0
    %v513 = vadd.f32 %v142, %v512
    %v514 = vpop.f32.mrb[0].mxu0
    %515 = vmatprep.mubr.f32.mxu0 0.0
    %516 = vmatmul.mubr.f32.gmra.mrb[0].mxu0 %v212
    %v517 = vpop.f32.mrb[0].mxu0
    %v518 = vadd.f32 %v142, %v517
    %v519 = vpop.f32.mrb[0].mxu0
    %520 = vmatprep.mubr.f32.mxu0 0.0
    %521 = vmatmul.mubr.f32.gmra.mrb[0].mxu0 %v215
    %v522 = vpop.f32.mrb[0].mxu0
    %v523 = vadd.f32 %v142, %v522
    %v524 = vpop.f32.mrb[0].mxu0
    %525 = vmatprep.mubr.f32.mxu0 0.0
    %526 = vmatmul.mubr.f32.gmra.mrb[0].mxu0 %v218
    %v527 = vpop.f32.mrb[0].mxu0
    %v528 = vadd.f32 %v142, %v527
    %v529 = vpop.f32.mrb[0].mxu0
    %530 = vmatprep.mubr.f32.mxu0 0.0
    %531 = vmatmul.mubr.f32.gmra.mrb[0].mxu0 %v221
    %v532 = vpop.f32.mrb[0].mxu0
    %v533 = vadd.f32 %v142, %v532
    %v534 = vpop.f32.mrb[0].mxu0
    %535 = vmatprep.mubr.f32.mxu0 0.0
    %536 = vmatmul.mubr.f32.gmra.mrb[0].mxu0 %v224
    %v537 = vpop.f32.mrb[0].mxu0
    %v538 = vadd.f32 %v142, %v537
    %v539 = vpop.f32.mrb[0].mxu0
    %540 = vmatprep.mubr.f32.mxu0 0.0
    %541 = vmatmul.mubr.f32.gmra.mrb[0].mxu0 %v227
    %v542 = vpop.f32.mrb[0].mxu0
    %v543 = vadd.f32 %v142, %v542
    %v544 = vpop.f32.mrb[0].mxu0
    %545 = vmatprep.mubr.f32.mxu0 0.0
    %546 = vmatmul.mubr.f32.gmra.mrb[0].mxu0 %v230
    %v547 = vpop.f32.mrb[0].mxu0
    %v548 = vadd.f32 %v142, %v547
    %v549 = vpop.f32.mrb[0].mxu0
    %550 = vmatprep.mubr.f32.mxu0 0.0
    %551 = vmatmul.mubr.f32.gmra.mrb[0].mxu0 %v233
    %v552 = vpop.f32.mrb[0].mxu0
    %v553 = vadd.f32 %v142, %v552
    %v554 = vpop.f32.mrb[0].mxu0
    %555 = vmatprep.mubr.f32.mxu0 0.0
    %556 = vmatmul.mubr.f32.gmra.mrb[0].mxu0 %v236
    %v557 = vpop.f32.mrb[0].mxu0
    %v558 = vadd.f32 %v142, %v557
    %v559 = vpop.f32.mrb[0].mxu0
    %560 = vmatprep.mubr.f32.mxu0 0.0
    %561 = vmatmul.mubr.f32.gmra.mrb[0].mxu0 %v239
    %v562 = vpop.f32.mrb[0].mxu0
    %v563 = vadd.f32 %v142, %v562
    %v564 = vpop.f32.mrb[0].mxu0
    %565 = vmatprep.mubr.f32.mxu0 0.0
    %566 = vmatmul.mubr.f32.gmra.mrb[0].mxu0 %v242
    %v567 = vpop.f32.mrb[0].mxu0
    %v568 = vadd.f32 %v142, %v567
    %v569 = vpop.f32.mrb[0].mxu0
    %570 = vmatprep.mubr.f32.mxu0 0.0
    %571 = vmatmul.mubr.f32.gmra.mrb[0].mxu0 %v245
    %v572 = vpop.f32.mrb[0].mxu0
    %v573 = vadd.f32 %v142, %v572
    %v574 = vpop.f32.mrb[0].mxu0
    %575 = vmatprep.mubr.f32.mxu0 0.0
    %576 = vmatmul.mubr.f32.gmra.mrb[0].mxu0 %v248
    %v577 = vpop.f32.mrb[0].mxu0
    %v578 = vadd.f32 %v142, %v577
    %v579 = vpop.f32.mrb[0].mxu0
    %580 = vmatprep.mubr.f32.mxu0 0.0
    %581 = vmatmul.mubr.f32.gmra.mrb[0].mxu0 %v251
    %v582 = vpop.f32.mrb[0].mxu0
    %v583 = vadd.f32 %v142, %v582
    %v584 = vpop.f32.mrb[0].mxu0
    %585 = vmatprep.mubr.f32.mxu0 0.0
    %586 = vmatmul.mubr.f32.gmra.mrb[0].mxu0 %v254
    %v587 = vpop.f32.mrb[0].mxu0
    %v588 = vadd.f32 %v142, %v587
    %v589 = vpop.f32.mrb[0].mxu0
    %590 = vmatprep.mubr.f32.mxu0 0.0
    %591 = vmatmul.mubr.f32.gmra.mrb[0].mxu0 %v257
    %v592 = vpop.f32.mrb[0].mxu0
    %v593 = vadd.f32 %v142, %v592
    %v594 = vpop.f32.mrb[0].mxu0
    %595 = vmatprep.mubr.f32.mxu0 0.0
    %596 = vmatmul.mubr.f32.gmra.mrb[0].mxu0 %v260
    %v597 = vpop.f32.mrb[0].mxu0
    %v598 = vadd.f32 %v142, %v597
    %v599 = vpop.f32.mrb[0].mxu0
    %600 = vmatprep.mubr.f32.mxu0 0.0
    %601 = vmatmul.mubr.f32.gmra.mrb[0].mxu0 %v263
    %v602 = vpop.f32.mrb[0].mxu0
    %v603 = vadd.f32 %v142, %v602
    %v604 = vpop.f32.mrb[0].mxu0
    %605 = vmatprep.mubr.f32.mxu0 0.0
    %606 = vmatmul.mubr.f32.gmra.mrb[0].mxu0 %v266
    %v607 = vpop.f32.mrb[0].mxu0
    %v608 = vadd.f32 %v142, %v607
    %v609 = vpop.f32.mrb[0].mxu0
    %610 = vmatprep.mubr.f32.mxu0 0.0
    %611 = vmatmul.mubr.f32.gmra.mrb[0].mxu0 %v269
    %v612 = vpop.f32.mrb[0].mxu0
    %v613 = vadd.f32 %v142, %v612
    %v614 = vpop.f32.mrb[0].mxu0
    %615 = vmatprep.mubr.f32.mxu0 0.0
    %616 = vmatmul.mubr.f32.gmra.mrb[0].mxu0 %v272
    %v617 = vpop.f32.mrb[0].mxu0
    %v618 = vadd.f32 %v142, %v617
    %v619 = vpop.f32.mrb[0].mxu0
    %620 = vmatprep.mubr.f32.mxu0 0.0
    %621 = vmatmul.mubr.f32.gmra.mrb[0].mxu0 %v275
    %v622 = vpop.f32.mrb[0].mxu0
    %v623 = vadd.f32 %v142, %v622
    %v624 = vpop.f32.mrb[0].mxu0
    %625 = vmatprep.mubr.f32.mxu0 0.0
    %626 = vmatmul.mubr.f32.gmra.mrb[0].mxu0 %v278
    %v627 = vpop.f32.mrb[0].mxu0
    %v628 = vadd.f32 %v142, %v627
    %v629 = vpop.f32.mrb[0].mxu0
    %630 = vmatprep.mubr.f32.mxu0 0.0
    %631 = vmatmul.mubr.f32.gmra.mrb[0].mxu0 %v281
    %v632 = vpop.f32.mrb[0].mxu0
    %v633 = vadd.f32 %v142, %v632
    %v634 = vpop.f32.mrb[0].mxu0
    %635 = vmatprep.mubr.f32.mxu0 0.0
    %636 = vmatmul.mubr.f32.gmra.mrb[0].mxu0 %v284
    %v637 = vpop.f32.mrb[0].mxu0
    %v638 = vadd.f32 %v142, %v637
    %v639 = vpop.f32.mrb[0].mxu0
    %640 = vmatprep.mubr.f32.mxu0 0.0
    %641 = vmatmul.mubr.f32.gmra.mrb[0].mxu0 %v287
    %v642 = vpop.f32.mrb[0].mxu0
    %v643 = vadd.f32 %v142, %v642
    %v644 = vpop.f32.mrb[0].mxu0
    %645 = vmatprep.mubr.f32.mxu0 0.0
    %646 = vmatmul.mubr.f32.gmra.mrb[0].mxu0 %v290
    %v647 = vpop.f32.mrb[0].mxu0
    %v648 = vadd.f32 %v142, %v647
    %v649 = vpop.f32.mrb[0].mxu0
    %650 = vmatprep.mubr.f32.mxu0 0.0
    %651 = vmatmul.mubr.f32.gmra.mrb[0].mxu0 %v293
    %v652 = vpop.f32.mrb[0].mxu0
    %v653 = vadd.f32 %v142, %v652
    %v654 = vpop.f32.mrb[0].mxu0
    %655 = vmatprep.mubr.f32.mxu0 0.0
    %656 = vmatmul.mubr.f32.gmra.mrb[0].mxu0 %v296
    %v657 = vpop.f32.mrb[0].mxu0
    %v658 = vadd.f32 %v142, %v657
    %v659 = vpop.f32.mrb[0].mxu0
    %660 = vmatprep.mubr.f32.mxu0 0.0
    %661 = vmatmul.mubr.f32.gmra.mrb[0].mxu0 %v299
    %v662 = vpop.f32.mrb[0].mxu0
    %v663 = vadd.f32 %v142, %v662
    %v664 = vpop.f32.mrb[0].mxu0
    %665 = vmatprep.mubr.f32.mxu0 0.0
    %666 = vmatmul.mubr.f32.gmra.mrb[0].mxu0 %v302
    %v667 = vpop.f32.mrb[0].mxu0
    %v668 = vadd.f32 %v142, %v667
    %v669 = vpop.f32.mrb[0].mxu0
    %670 = vmatprep.mubr.f32.mxu0 0.0
    %671 = vmatmul.mubr.f32.gmra.mrb[0].mxu0 %v305
    %v672 = vpop.f32.mrb[0].mxu0
    %v673 = vadd.f32 %v142, %v672
    %v674 = vpop.f32.mrb[0].mxu0
    %675 = vmatprep.mubr.f32.mxu0 0.0
    %676 = vmatmul.mubr.f32.gmra.mrb[0].mxu0 %v308
    %v677 = vpop.f32.mrb[0].mxu0
    %v678 = vadd.f32 %v142, %v677
    %v679 = vpop.f32.mrb[0].mxu0
    %680 = vmatprep.mubr.f32.mxu0 0.0
    %681 = vmatmul.mubr.f32.gmra.mrb[0].mxu0 %v311
    %v682 = vpop.f32.mrb[0].mxu0
    %v683 = vadd.f32 %v142, %v682
    %v684 = vpop.f32.mrb[0].mxu0
    %685 = vmatprep.mubr.f32.mxu0 0.0
    %686 = vmatmul.mubr.f32.gmra.mrb[0].mxu0 %v314
    %v687 = vpop.f32.mrb[0].mxu0
    %v688 = vadd.f32 %v142, %v687
    %v689 = vpop.f32.mrb[0].mxu0
    %690 = vmatprep.mubr.f32.mxu0 0.0
    %691 = vmatmul.mubr.f32.gmra.mrb[0].mxu0 %v317
    %v692 = vpop.f32.mrb[0].mxu0
    %v693 = vadd.f32 %v142, %v692
    %v694 = vpop.f32.mrb[0].mxu0
    %695 = vmatprep.mubr.f32.mxu0 0.0
    %696 = vmatmul.mubr.f32.gmra.mrb[0].mxu0 %v320
    %v697 = vpop.f32.mrb[0].mxu0
    %v698 = vadd.f32 %v142, %v697
    %v699 = vpop.f32.mrb[0].mxu0
    %700 = vmatprep.mubr.f32.mxu0 0.0
    %701 = vmatmul.mubr.f32.gmra.mrb[0].mxu0 %v323
    %v702 = vpop.f32.mrb[0].mxu0
    %v703 = vadd.f32 %v142, %v702
    %v704 = vpop.f32.mrb[0].mxu0
    %705 = vmatprep.mubr.f32.mxu0 0.0
    %706 = vmatmul.mubr.f32.gmra.mrb[0].mxu0 %v326
    %v707 = vpop.f32.mrb[0].mxu0
    %v708 = vadd.f32 %v142, %v707
    %v709 = vpop.f32.mrb[0].mxu0
    %710 = vmatprep.mubr.f32.mxu0 0.0
    %711 = vmatmul.mubr.f32.gmra.mrb[0].mxu0 %v329
    %v712 = vpop.f32.mrb[0].mxu0
    %v713 = vadd.f32 %v142, %v712
    %v714 = vpop.f32.mrb[0].mxu0
    %715 = vmatprep.mubr.f32.mxu0 0.0
    %716 = vmatmul.mubr.f32.gmra.mrb[0].mxu0 %v332
    %v717 = vpop.f32.mrb[0].mxu0
    %v718 = vadd.f32 %v142, %v717
    %v719 = vpop.f32.mrb[0].mxu0
    %720 = vmatprep.mubr.f32.mxu0 0.0
    %721 = vmatmul.mubr.f32.gmra.mrb[0].mxu0 %v335
    %v722 = vpop.f32.mrb[0].mxu0
    %v723 = vadd.f32 %v142, %v722
    %v724 = vpop.f32.mrb[0].mxu0
    %725 = vdwg.mxu0
    %726 = vst.msk [vmem:[%s6] sm:$0xff] %vm144, %v408
    %727 = vst.msk [vmem:[%s6 + $0x8] sm:$0xff] %vm144, %v413
    %728 = vst.msk [vmem:[%s6 + $0x10] sm:$0xff] %vm144, %v418
    %729 = vst.msk [vmem:[%s6 + $0x18] sm:$0xff] %vm144, %v423
    %730 = vst.msk [vmem:[%s6 + $0x20] sm:$0xff] %vm144, %v428
    %731 = vst.msk [vmem:[%s6 + $0x28] sm:$0xff] %vm144, %v433
    %732 = vst.msk [vmem:[%s6 + $0x30] sm:$0xff] %vm144, %v438
    %733 = vst.msk [vmem:[%s6 + $0x38] sm:$0xff] %vm144, %v443
    %734 = vst.msk [vmem:[%s6 + $0x40] sm:$0xff] %vm144, %v448
    %735 = vst.msk [vmem:[%s6 + $0x48] sm:$0xff] %vm144, %v453
    %736 = vst.msk [vmem:[%s6 + $0x50] sm:$0xff] %vm144, %v458
    %737 = vst.msk [vmem:[%s6 + $0x58] sm:$0xff] %vm144, %v463
    %738 = vst.msk [vmem:[%s6 + $0x60] sm:$0xff] %vm144, %v468
    %739 = vst.msk [vmem:[%s6 + $0x68] sm:$0xff] %vm144, %v473
    %740 = vst.msk [vmem:[%s6 + $0x70] sm:$0xff] %vm144, %v478
    %741 = vst.msk [vmem:[%s6 + $0x78] sm:$0xff] %vm144, %v483
    %742 = vst.msk [vmem:[%s6 + $0x80] sm:$0xff] %vm144, %v488
    %743 = vst.msk [vmem:[%s6 + $0x88] sm:$0xff] %vm144, %v493
    %744 = vst.msk [vmem:[%s6 + $0x90] sm:$0xff] %vm144, %v498
    %745 = vst.msk [vmem:[%s6 + $0x98] sm:$0xff] %vm144, %v503
    %746 = vst.msk [vmem:[%s6 + $0xa0] sm:$0xff] %vm144, %v508
    %747 = vst.msk [vmem:[%s6 + $0xa8] sm:$0xff] %vm144, %v513
    %748 = vst.msk [vmem:[%s6 + $0xb0] sm:$0xff] %vm144, %v518
    %749 = vst.msk [vmem:[%s6 + $0xb8] sm:$0xff] %vm144, %v523
    %750 = vst.msk [vmem:[%s6 + $0xc0] sm:$0xff] %vm144, %v528
    %751 = vst.msk [vmem:[%s6 + $0xc8] sm:$0xff] %vm144, %v533
    %752 = vst.msk [vmem:[%s6 + $0xd0] sm:$0xff] %vm144, %v538
    %753 = vst.msk [vmem:[%s6 + $0xd8] sm:$0xff] %vm144, %v543
    %754 = vst.msk [vmem:[%s6 + $0xe0] sm:$0xff] %vm144, %v548
    %755 = vst.msk [vmem:[%s6 + $0xe8] sm:$0xff] %vm144, %v553
    %756 = vst.msk [vmem:[%s6 + $0xf0] sm:$0xff] %vm144, %v558
    %757 = vst.msk [vmem:[%s6 + $0xf8] sm:$0xff] %vm144, %v563
    %758 = vst.msk [vmem:[%s6 + $0x100] sm:$0xff] %vm144, %v568
    %759 = vst.msk [vmem:[%s6 + $0x108] sm:$0xff] %vm144, %v573
    %760 = vst.msk [vmem:[%s6 + $0x110] sm:$0xff] %vm144, %v578
    %761 = vst.msk [vmem:[%s6 + $0x118] sm:$0xff] %vm144, %v583
    %762 = vst.msk [vmem:[%s6 + $0x120] sm:$0xff] %vm144, %v588
    %763 = vst.msk [vmem:[%s6 + $0x128] sm:$0xff] %vm144, %v593
    %764 = vst.msk [vmem:[%s6 + $0x130] sm:$0xff] %vm144, %v598
    %765 = vst.msk [vmem:[%s6 + $0x138] sm:$0xff] %vm144, %v603
    %766 = vst.msk [vmem:[%s6 + $0x140] sm:$0xff] %vm144, %v608
    %767 = vst.msk [vmem:[%s6 + $0x148] sm:$0xff] %vm144, %v613
    %768 = vst.msk [vmem:[%s6 + $0x150] sm:$0xff] %vm144, %v618
    %769 = vst.msk [vmem:[%s6 + $0x158] sm:$0xff] %vm144, %v623
    %770 = vst.msk [vmem:[%s6 + $0x160] sm:$0xff] %vm144, %v628
    %771 = vst.msk [vmem:[%s6 + $0x168] sm:$0xff] %vm144, %v633
    %772 = vst.msk [vmem:[%s6 + $0x170] sm:$0xff] %vm144, %v638
    %773 = vst.msk [vmem:[%s6 + $0x178] sm:$0xff] %vm144, %v643
    %774 = vst.msk [vmem:[%s6 + $0x180] sm:$0xff] %vm144, %v648
    %775 = vst.msk [vmem:[%s6 + $0x188] sm:$0xff] %vm144, %v653
    %776 = vst.msk [vmem:[%s6 + $0x190] sm:$0xff] %vm144, %v658
    %777 = vst.msk [vmem:[%s6 + $0x198] sm:$0xff] %vm144, %v663
    %778 = vst.msk [vmem:[%s6 + $0x1a0] sm:$0xff] %vm144, %v668
    %779 = vst.msk [vmem:[%s6 + $0x1a8] sm:$0xff] %vm144, %v673
    %780 = vst.msk [vmem:[%s6 + $0x1b0] sm:$0xff] %vm144, %v678
    %781 = vst.msk [vmem:[%s6 + $0x1b8] sm:$0xff] %vm144, %v683
    %782 = vst.msk [vmem:[%s6 + $0x1c0] sm:$0xff] %vm144, %v688
    %783 = vst.msk [vmem:[%s6 + $0x1c8] sm:$0xff] %vm144, %v693
    %784 = vst.msk [vmem:[%s6 + $0x1d0] sm:$0xff] %vm144, %v698
    %785 = vst.msk [vmem:[%s6 + $0x1d8] sm:$0xff] %vm144, %v703
    %786 = vst.msk [vmem:[%s6 + $0x1e0] sm:$0xff] %vm144, %v708
    %787 = vst.msk [vmem:[%s6 + $0x1e8] sm:$0xff] %vm144, %v713
    %788 = vst.msk [vmem:[%s6 + $0x1f0] sm:$0xff] %vm144, %v718
    %789 = vst.msk [vmem:[%s6 + $0x1f8] sm:$0xff] %vm144, %v723
    %v790 = vld [vmem:[#allocation4] sm:$0x3]
    %v791 = vld [vmem:[#allocation6] sm:$0xff]
    %v792 = vld [vmem:[#allocation6 + $0x8] sm:$0xff]
    %v793 = vld [vmem:[#allocation7] sm:$0x3]
    %v795 = vlaneseq
    %v796 = vshrl.u32 %v795, 7
    %v797 = vsub.s32 0, %v796
    %v798 = vrot.slane %v793, %v797
    %v799 = vlaneseq
    %v800 = vshrl.u32 %v799, 7
    %v801 = vsub.s32 1, %v800
    %v802 = vrot.slane %v793, %v801
    %vm805 = vcmask 64512
    %v807 = vsel %vm805, %v790, 0
    %809 = vmatprep.subr.mxu0 %v792
    %810 = vmatpush1.msra.mxu0 %v791
    %811 = vmatprep.subr.mxu0 0.0
    %812 = vmatpush1.msra.mxu0 0.0
    %813 = vmatprep.subr.mxu0 0.0
    %814 = vmatpush1.msra.mxu0 0.0
    %815 = vmatprep.subr.mxu0 0.0
    %816 = vmatpush1.msra.mxu0 0.0
    %817 = vmatprep.subr.mxu0 0.0
    %818 = vmatpush1.msra.mxu0 0.0
    %819 = vmatprep.subr.mxu0 0.0
    %820 = vmatpush1.msra.mxu0 0.0
    %821 = vmatprep.subr.mxu0 0.0
    %822 = vmatpush1.msra.mxu0 0.0
    %823 = vmatprep.subr.mxu0 0.0
    %824 = vmatpush1.msra.mxu0 0.0
    %825 = vmatprep.subr.mxu0 0.0
    %826 = vmatpush1.msra.mxu0 0.0
    %827 = vmatprep.subr.mxu0 0.0
    %828 = vmatpush1.msra.mxu0 0.0
    %829 = vmatprep.subr.mxu0 0.0
    %830 = vmatpush1.msra.mxu0 0.0
    %831 = vmatprep.subr.mxu0 0.0
    %832 = vmatpush1.msra.mxu0 0.0
    %833 = vmatprep.subr.mxu0 0.0
    %834 = vmatpush1.msra.mxu0 0.0
    %835 = vmatprep.subr.mxu0 0.0
    %836 = vmatpush1.msra.mxu0 0.0
    %837 = vmatprep.subr.mxu0 0.0
    %838 = vmatpush1.msra.mxu0 0.0
    %839 = vmatprep.subr.mxu0 0.0
    %840 = vmatpush1.msra.mxu0 0.0
    %841 = vmatprep.subr.mxu0 0.0
    %842 = vmatpush1.msra.mxu0 0.0
    %843 = vmatprep.subr.mxu0 0.0
    %844 = vmatpush1.msra.mxu0 0.0
    %845 = vmatprep.subr.mxu0 0.0
    %846 = vmatpush1.msra.mxu0 0.0
    %847 = vmatprep.subr.mxu0 0.0
    %848 = vmatpush1.msra.mxu0 0.0
    %849 = vmatprep.subr.mxu0 0.0
    %850 = vmatpush1.msra.mxu0 0.0
    %851 = vmatprep.subr.mxu0 0.0
    %852 = vmatpush1.msra.mxu0 0.0
    %853 = vmatprep.subr.mxu0 0.0
    %854 = vmatpush1.msra.mxu0 0.0
    %855 = vmatprep.subr.mxu0 0.0
    %856 = vmatpush1.msra.mxu0 0.0
    %857 = vmatprep.subr.mxu0 0.0
    %858 = vmatpush1.msra.mxu0 0.0
    %859 = vmatprep.subr.mxu0 0.0
    %860 = vmatpush1.msra.mxu0 0.0
    %861 = vmatprep.subr.mxu0 0.0
    %862 = vmatpush1.msra.mxu0 0.0
    %863 = vmatprep.subr.mxu0 0.0
    %864 = vmatpush1.msra.mxu0 0.0
    %865 = vmatprep.subr.mxu0 0.0
    %866 = vmatpush1.msra.mxu0 0.0
    %867 = vmatprep.subr.mxu0 0.0
    %868 = vmatpush1.msra.mxu0 0.0
    %869 = vmatprep.subr.mxu0 0.0
    %870 = vmatpush1.msra.mxu0 0.0
    %871 = vmatprep.subr.mxu0 0.0
    %872 = vmatpush1.msra.mxu0 0.0
    %873 = vmatprep.mubr.f32.mxu0 0.0
    %874 = vmatmul.mubr.f32.gmra.mrb[0].mxu0 %v807
    %v875 = vpop.f32.mrb[0].mxu0
    %v876 = vadd.f32 %v798, %v875
    %v877 = vpop.f32.mrb[0].mxu0
    %v878 = vadd.f32 %v802, %v877
    %879 = vdwg.mxu0
    %v882 = vcombine.low %v876, %v878
    %v884 = vunpack.c.l.s4 1983009808
    %v885 = vunpack.c.0.s8 %v884
    %v886 = vlaneseq
    %v887 = vshrl.u32 %v886, 7
    %v888 = vsub.s32 %v885, %v887
    %v889 = vrot.slane %v882, %v888
    %891 = vst [vmem:[%s7] sm:$0xf] %v889
    // Predicated region
    $region42: #{_lambda_.9} parent=1 // pred_check
      _
    $region43: #{_lambda_.9} parent=1 // pred_check_branch
      %893 = sbr.rel (0) target = $region45
    $region44: #{_lambda_.9} parent=1 // pred_region
      _
    $region45: #{_lambda_.9} parent=1 // pred_fallthru
      _
    // Predicated region
    $region46: #{_lambda_.9} parent=1 // pred_check
      _
    $region47: #{_lambda_.9} parent=1 // pred_check_branch
      %895 = sbr.rel (0) target = $region49
    $region48: #{_lambda_.9} parent=1 // pred_region
      _
    $region49: #{_lambda_.9} parent=1 // pred_fallthru
      _
    // Predicated region
    $region50: #{_lambda_.9} parent=1 // pred_check
      _
    $region51: #{_lambda_.9} parent=1 // pred_check_branch
      %897 = sbr.rel (0) target = $region53
    $region52: #{_lambda_.9} parent=1 // pred_region
      _
    $region53: #{_lambda_.9} parent=1 // pred_fallthru
      _
    // Predicated region
    $region54: #{_lambda_.9} parent=1 // pred_check
      _
    $region55: #{_lambda_.9} parent=1 // pred_check_branch
      %899 = sbr.rel (0) target = $region57
    $region56: #{_lambda_.9} parent=1 // pred_region
      _
    $region57: #{_lambda_.9} parent=1 // pred_fallthru
      _
    %900 = vsyncpa [#allocation3], 1
    %901 = vsyncpa [#allocation5], 1
    %902 = vsyncpa [#allocation8], 1

// kernel: tile.68
$region0: #{tile.68}
  #allocation0 [shape = 's32[1]{0}', space=sflag, size = 0x4, scoped, tag = 'scoped memory for tile.68']
  %s0 = inlined_call_operand.vmem [shape: f32[8], index: 0, kind: input, shape index: {}]
  %s1 = inlined_call_operand.vmem [shape: f32[8,8], index: 1, kind: output, shape index: {}]
  // Predicated region
  $region2: #{tile.68} parent=0 // pred_check
    _
  $region3: #{tile.68} parent=0 // pred_check_branch
    %3 = sbr.rel (0) target = $region5
  $region4: #{tile.68} parent=0 // pred_region
    _
  $region5: #{tile.68} parent=0 // pred_fallthru
    _
  %v4 = vld [vmem:[%s0] ss:$0 sm:$0xff]
  %5 = vst [vmem:[%s1] sm:$0xff] %v4

// kernel: tile.69
$region0: #{tile.69}
  %s0 = inlined_call_operand.vmem [shape: f32[8,8], index: 0, kind: input, shape index: {}]
  %s1 = inlined_call_operand.vmem [shape: f32[1,64], index: 1, kind: output, shape index: {}]
  $region1: #{tile.69} parent=0
    #allocation0 [shape = 'u8[4096]{0}', space=vmem, size = 0x1000, scoped, tag = 'scoped mem for output reshape']
    %v2 = vld [vmem:[%s0] sm:$0x1]
    %vm3 = vcmask 64512
    %4 = vst.msk [vmem:[#allocation0] sm:$0x1] %vm3, %v2
    %s5 = scalar_lea.vmem %s0, 7
    %v6 = vld [vmem:[%s5] sm:$0x1]
    %7 = vrot.lane.b32.xlu0 %v6, 56
    %v8 = vpop.permute.xlu0 %7
    %vm9 = vcmask 523712
    %10 = vst.msk [vmem:[#allocation0] sm:$0x1] %vm9, %v8
    %s11 = scalar_lea.vmem %s0, 6
    %v12 = vld [vmem:[%s11] sm:$0x1]
    %13 = vrot.lane.b32.xlu0 %v12, 48
    %v14 = vpop.permute.xlu0 %13
    %vm15 = vcmask 458112
    %16 = vst.msk [vmem:[#allocation0] sm:$0x1] %vm15, %v14
    %s17 = scalar_lea.vmem %s0, 5
    %v18 = vld [vmem:[%s17] sm:$0x1]
    %19 = vrot.lane.b32.xlu0 %v18, 40
    %v20 = vpop.permute.xlu0 %19
    %vm21 = vcmask 392512
    %22 = vst.msk [vmem:[#allocation0] sm:$0x1] %vm21, %v20
    %s23 = scalar_lea.vmem %s0, 4
    %v24 = vld [vmem:[%s23] sm:$0x1]
    %25 = vrot.lane.b32.xlu0 %v24, 32
    %v26 = vpop.permute.xlu0 %25
    %vm27 = vcmask 326912
    %28 = vst.msk [vmem:[#allocation0] sm:$0x1] %vm27, %v26
    %s29 = scalar_lea.vmem %s0, 3
    %v30 = vld [vmem:[%s29] sm:$0x1]
    %31 = vrot.lane.b32.xlu0 %v30, 24
    %v32 = vpop.permute.xlu0 %31
    %vm33 = vcmask 261312
    %34 = vst.msk [vmem:[#allocation0] sm:$0x1] %vm33, %v32
    %s35 = scalar_lea.vmem %s0, 2
    %v36 = vld [vmem:[%s35] sm:$0x1]
    %37 = vrot.lane.b32.xlu0 %v36, 16
    %v38 = vpop.permute.xlu0 %37
    %vm39 = vcmask 195712
    %40 = vst.msk [vmem:[#allocation0] sm:$0x1] %vm39, %v38
    %s41 = scalar_lea.vmem %s0, 1
    %v42 = vld [vmem:[%s41] sm:$0x1]
    %43 = vrot.lane.b32.xlu0 %v42, 8
    %v44 = vpop.permute.xlu0 %43
    %vm45 = vcmask 130112
    %46 = vst.msk [vmem:[#allocation0] sm:$0x1] %vm45, %v44
    %s48 = sshllo.u32 0, 1
    %v50 = vld [vmem:[#allocation0] sm:%s48]
    %s51 = sshllo.u32 0, 1
    %52 = vst [vmem:[%s1] sm:%s51] %v50

// kernel: squeeze.6
$region0: #{squeeze.6}
  %s0 = inlined_call_operand.vmem [shape: f32[1,2,8,64], index: 0, kind: input, shape index: {}]
  %s1 = inlined_call_operand.vmem [shape: f32[2,8,8,8], index: 1, kind: output, shape index: {}]
  %v2 = vld [vmem:[%s0] sm:$0xff]
  %vm3 = vcmask 64512
  %4 = vst.msk [vmem:[%s1] ss:$8 sm:$0xf] %vm3, %v2
  %5 = vst.msk [vmem:[%s1] ss:$8 sm:$0xf0] %vm3, %v2
  %s6 = scalar_lea.vmem %s0, 8
  %v7 = vld [vmem:[%s6] sm:$0xff]
  %vm8 = vcmask 64512
  %s9 = scalar_lea.vmem %s1, 64
  %10 = vst.msk [vmem:[%s9] ss:$8 sm:$0xf] %vm8, %v7
  %s11 = scalar_lea.vmem %s1, 64
  %12 = vst.msk [vmem:[%s11] ss:$8 sm:$0xf0] %vm8, %v7
  %v13 = vld [vmem:[%s0] sm:$0xff]
  %14 = vrot.lane.b32.xlu0 %v13, 120
  %v15 = vpop.permute.xlu0 %14
  %vm16 = vcmask 64512
  %s17 = scalar_lea.vmem %s1, 1
  %18 = vst.msk [vmem:[%s17] ss:$8 sm:$0xf] %vm16, %v15
  %s19 = scalar_lea.vmem %s1, 1
  %20 = vst.msk [vmem:[%s19] ss:$8 sm:$0xf0] %vm16, %v15
  %s21 = scalar_lea.vmem %s0, 8
  %v22 = vld [vmem:[%s21] sm:$0xff]
  %23 = vrot.lane.b32.xlu0 %v22, 120
  %v24 = vpop.permute.xlu0 %23
  %vm25 = vcmask 64512
  %s26 = scalar_lea.vmem %s1, 65
  %27 = vst.msk [vmem:[%s26] ss:$8 sm:$0xf] %vm25, %v24
  %s28 = scalar_lea.vmem %s1, 65
  %29 = vst.msk [vmem:[%s28] ss:$8 sm:$0xf0] %vm25, %v24
  %v30 = vld [vmem:[%s0] sm:$0xff]
  %31 = vrot.lane.b32.xlu0 %v30, 112
  %v32 = vpop.permute.xlu0 %31
  %vm33 = vcmask 64512
  %s34 = scalar_lea.vmem %s1, 2
  %35 = vst.msk [vmem:[%s34] ss:$8 sm:$0xf] %vm33, %v32
  %s36 = scalar_lea.vmem %s1, 2
  %37 = vst.msk [vmem:[%s36] ss:$8 sm:$0xf0] %vm33, %v32
  %s38 = scalar_lea.vmem %s0, 8
  %v39 = vld [vmem:[%s38] sm:$0xff]
  %40 = vrot.lane.b32.xlu0 %v39, 112
  %v41 = vpop.permute.xlu0 %40
  %vm42 = vcmask 64512
  %s43 = scalar_lea.vmem %s1, 66
  %44 = vst.msk [vmem:[%s43] ss:$8 sm:$0xf] %vm42, %v41
  %s45 = scalar_lea.vmem %s1, 66
  %46 = vst.msk [vmem:[%s45] ss:$8 sm:$0xf0] %vm42, %v41
  %v47 = vld [vmem:[%s0] sm:$0xff]
  %48 = vrot.lane.b32.xlu0 %v47, 104
  %v49 = vpop.permute.xlu0 %48
  %vm50 = vcmask 64512
  %s51 = scalar_lea.vmem %s1, 3
  %52 = vst.msk [vmem:[%s51] ss:$8 sm:$0xf] %vm50, %v49
  %s53 = scalar_lea.vmem %s1, 3
  %54 = vst.msk [vmem:[%s53] ss:$8 sm:$0xf0] %vm50, %v49
  %s55 = scalar_lea.vmem %s0, 8
  %v56 = vld [vmem:[%s55] sm:$0xff]
  %57 = vrot.lane.b32.xlu0 %v56, 104
  %v58 = vpop.permute.xlu0 %57
  %vm59 = vcmask 64512
  %s60 = scalar_lea.vmem %s1, 67
  %61 = vst.msk [vmem:[%s60] ss:$8 sm:$0xf] %vm59, %v58
  %s62 = scalar_lea.vmem %s1, 67
  %63 = vst.msk [vmem:[%s62] ss:$8 sm:$0xf0] %vm59, %v58
  %v64 = vld [vmem:[%s0] sm:$0xff]
  %65 = vrot.lane.b32.xlu0 %v64, 96
  %v66 = vpop.permute.xlu0 %65
  %vm67 = vcmask 64512
  %s68 = scalar_lea.vmem %s1, 4
  %69 = vst.msk [vmem:[%s68] ss:$8 sm:$0xf] %vm67, %v66
  %s70 = scalar_lea.vmem %s1, 4
  %71 = vst.msk [vmem:[%s70] ss:$8 sm:$0xf0] %vm67, %v66
  %s72 = scalar_lea.vmem %s0, 8
  %v73 = vld [vmem:[%s72] sm:$0xff]
  %74 = vrot.lane.b32.xlu0 %v73, 96
  %v75 = vpop.permute.xlu0 %74
  %vm76 = vcmask 64512
  %s77 = scalar_lea.vmem %s1, 68
  %78 = vst.msk [vmem:[%s77] ss:$8 sm:$0xf] %vm76, %v75
  %s79 = scalar_lea.vmem %s1, 68
  %80 = vst.msk [vmem:[%s79] ss:$8 sm:$0xf0] %vm76, %v75
  %v81 = vld [vmem:[%s0] sm:$0xff]
  %82 = vrot.lane.b32.xlu0 %v81, 88
  %v83 = vpop.permute.xlu0 %82
  %vm84 = vcmask 64512
  %s85 = scalar_lea.vmem %s1, 5
  %86 = vst.msk [vmem:[%s85] ss:$8 sm:$0xf] %vm84, %v83
  %s87 = scalar_lea.vmem %s1, 5
  %88 = vst.msk [vmem:[%s87] ss:$8 sm:$0xf0] %vm84, %v83
  %s89 = scalar_lea.vmem %s0, 8
  %v90 = vld [vmem:[%s89] sm:$0xff]
  %91 = vrot.lane.b32.xlu0 %v90, 88
  %v92 = vpop.permute.xlu0 %91
  %vm93 = vcmask 64512
  %s94 = scalar_lea.vmem %s1, 69
  %95 = vst.msk [vmem:[%s94] ss:$8 sm:$0xf] %vm93, %v92
  %s96 = scalar_lea.vmem %s1, 69
  %97 = vst.msk [vmem:[%s96] ss:$8 sm:$0xf0] %vm93, %v92
  %v98 = vld [vmem:[%s0] sm:$0xff]
  %99 = vrot.lane.b32.xlu0 %v98, 80
  %v100 = vpop.permute.xlu0 %99
  %vm101 = vcmask 64512
  %s102 = scalar_lea.vmem %s1, 6
  %103 = vst.msk [vmem:[%s102] ss:$8 sm:$0xf] %vm101, %v100
  %s104 = scalar_lea.vmem %s1, 6
  %105 = vst.msk [vmem:[%s104] ss:$8 sm:$0xf0] %vm101, %v100
  %s106 = scalar_lea.vmem %s0, 8
  %v107 = vld [vmem:[%s106] sm:$0xff]
  %108 = vrot.lane.b32.xlu0 %v107, 80
  %v109 = vpop.permute.xlu0 %108
  %vm110 = vcmask 64512
  %s111 = scalar_lea.vmem %s1, 70
  %112 = vst.msk [vmem:[%s111] ss:$8 sm:$0xf] %vm110, %v109
  %s113 = scalar_lea.vmem %s1, 70
  %114 = vst.msk [vmem:[%s113] ss:$8 sm:$0xf0] %vm110, %v109
  %v115 = vld [vmem:[%s0] sm:$0xff]
  %116 = vrot.lane.b32.xlu0 %v115, 72
  %v117 = vpop.permute.xlu0 %116
  %vm118 = vcmask 64512
  %s119 = scalar_lea.vmem %s1, 7
  %120 = vst.msk [vmem:[%s119] ss:$8 sm:$0xf] %vm118, %v117
  %s121 = scalar_lea.vmem %s1, 7
  %122 = vst.msk [vmem:[%s121] ss:$8 sm:$0xf0] %vm118, %v117
  %s123 = scalar_lea.vmem %s0, 8
  %v124 = vld [vmem:[%s123] sm:$0xff]
  %125 = vrot.lane.b32.xlu0 %v124, 72
  %v126 = vpop.permute.xlu0 %125
  %vm127 = vcmask 64512
  %s128 = scalar_lea.vmem %s1, 71
  %129 = vst.msk [vmem:[%s128] ss:$8 sm:$0xf] %vm127, %v126
  %s130 = scalar_lea.vmem %s1, 71
  %131 = vst.msk [vmem:[%s130] ss:$8 sm:$0xf0] %vm127, %v126

// kernel: _lambda_.10
$region0: #{_lambda_.10}
  #allocation0 [shape = 'u32[]', space=smem, size = 0x4, offset = 0x4, fixed_abs, tag = 'smem constant byte address 0x4 - core index']
  #allocation1 [shape = 'u32[144,128]{1,0:T(1,128)}', space=vmem, size = 0x12000, scoped, tag = 'internal scratch']
  %s0 = inlined_call_operand.vmem [shape: f32[2,2,9,90], index: 0, kind: input, shape index: {}]
  %s1 = inlined_call_operand.vmem [shape: bf16[3,90,64], index: 1, kind: input, shape index: {}]
  %s2 = inlined_call_operand.vmem [shape: f32[1,64], index: 2, kind: input, shape index: {}]
  %s3 = inlined_call_operand.vmem [shape: f32[1,8], index: 3, kind: input, shape index: {}]
  %s4 = inlined_call_operand.vmem [shape: f32[1,8], index: 4, kind: input, shape index: {}]
  %s5 = inlined_call_operand.vmem [shape: f32[64,8], index: 5, kind: input, shape index: {}]
  %s6 = inlined_call_operand.vmem [shape: f32[8,64], index: 6, kind: input, shape index: {}]
  %s7 = inlined_call_operand.vmem [shape: f32[1,2,8,64], index: 7, kind: output, shape index: {}]
  %s8 = sld [smem:[#allocation0]]
  $region38: #{_lambda_.10} parent=0
    _
  %s10 = ssub.s32 1, %s8
  %s11 = scalar_select 0, %s10, %s8
  // Predicated region
  $region2: #{_lambda_.10} parent=0 // pred_check
    _
  $region3: #{_lambda_.10} parent=0 // pred_check_branch
    %13 = sbr.rel (0) target = $region5
  $region4: #{_lambda_.10} parent=0 // pred_region
    _
  $region5: #{_lambda_.10} parent=0 // pred_fallthru
    _
  // Predicated region
  $region6: #{_lambda_.10} parent=0 // pred_check
    _
  $region7: #{_lambda_.10} parent=0 // pred_check_branch
    %15 = sbr.rel (0) target = $region9
  $region8: #{_lambda_.10} parent=0 // pred_region
    _
  $region9: #{_lambda_.10} parent=0 // pred_fallthru
    _
  // Predicated region
  $region10: #{_lambda_.10} parent=0 // pred_check
    _
  $region11: #{_lambda_.10} parent=0 // pred_check_branch
    %17 = sbr.rel (0) target = $region13
  $region12: #{_lambda_.10} parent=0 // pred_region
    _
  $region13: #{_lambda_.10} parent=0 // pred_fallthru
    _
  // Predicated region
  $region14: #{_lambda_.10} parent=0 // pred_check
    _
  $region15: #{_lambda_.10} parent=0 // pred_check_branch
    %19 = sbr.rel (0) target = $region17
  $region16: #{_lambda_.10} parent=0 // pred_region
    _
  $region17: #{_lambda_.10} parent=0 // pred_fallthru
    _
  // Predicated region
  $region18: #{_lambda_.10} parent=0 // pred_check
    _
  $region19: #{_lambda_.10} parent=0 // pred_check_branch
    %21 = sbr.rel (0) target = $region21
  $region20: #{_lambda_.10} parent=0 // pred_region
    _
  $region21: #{_lambda_.10} parent=0 // pred_fallthru
    _
  // Predicated region
  $region22: #{_lambda_.10} parent=0 // pred_check
    _
  $region23: #{_lambda_.10} parent=0 // pred_check_branch
    %23 = sbr.rel (0) target = $region25
  $region24: #{_lambda_.10} parent=0 // pred_region
    _
  $region25: #{_lambda_.10} parent=0 // pred_fallthru
    _
  // Predicated region
  $region26: #{_lambda_.10} parent=0 // pred_check
    _
  $region27: #{_lambda_.10} parent=0 // pred_check_branch
    %25 = sbr.rel (0) target = $region29
  $region28: #{_lambda_.10} parent=0 // pred_region
    _
  $region29: #{_lambda_.10} parent=0 // pred_fallthru
    _
  %v27 = vld [vmem:[%s2] sm:$0x1]
  %v28 = vld [vmem:[%s1] sm:$0xf]
  %v29 = vld [vmem:[%s1 + $0x4] sm:$0xf]
  %v30 = vld [vmem:[%s1 + $0x8] sm:$0xf]
  %v31 = vld [vmem:[%s1 + $0xc] sm:$0xf]
  %v32 = vld [vmem:[%s1 + $0x10] sm:$0xf]
  %v33 = vld [vmem:[%s1 + $0x14] sm:$0xf]
  %v34 = vld [vmem:[%s1 + $0x18] sm:$0xf]
  %v35 = vld [vmem:[%s1 + $0x1c] sm:$0xf]
  %v36 = vld [vmem:[%s1 + $0x20] sm:$0xf]
  %v37 = vld [vmem:[%s1 + $0x24] sm:$0xf]
  %v38 = vld [vmem:[%s1 + $0x28] sm:$0xf]
  %v39 = vld [vmem:[%s1 + $0x2c] sm:$0x1]
  %s40 = scalar_lea.vmem %s1, 48
  %v41 = vld [vmem:[%s40] sm:$0xf]
  %v42 = vld [vmem:[%s40 + $0x4] sm:$0xf]
  %v43 = vld [vmem:[%s40 + $0x8] sm:$0xf]
  %v44 = vld [vmem:[%s40 + $0xc] sm:$0xf]
  %v45 = vld [vmem:[%s40 + $0x10] sm:$0xf]
  %v46 = vld [vmem:[%s40 + $0x14] sm:$0xf]
  %v47 = vld [vmem:[%s40 + $0x18] sm:$0xf]
  %v48 = vld [vmem:[%s40 + $0x1c] sm:$0xf]
  %v49 = vld [vmem:[%s40 + $0x20] sm:$0xf]
  %v50 = vld [vmem:[%s40 + $0x24] sm:$0xf]
  %v51 = vld [vmem:[%s40 + $0x28] sm:$0xf]
  %v52 = vld [vmem:[%s40 + $0x2c] sm:$0x1]
  %s53 = scalar_lea.vmem %s1, 96
  %v54 = vld [vmem:[%s53] sm:$0xf]
  %v55 = vld [vmem:[%s53 + $0x4] sm:$0xf]
  %v56 = vld [vmem:[%s53 + $0x8] sm:$0xf]
  %v57 = vld [vmem:[%s53 + $0xc] sm:$0xf]
  %v58 = vld [vmem:[%s53 + $0x10] sm:$0xf]
  %v59 = vld [vmem:[%s53 + $0x14] sm:$0xf]
  %v60 = vld [vmem:[%s53 + $0x18] sm:$0xf]
  %v61 = vld [vmem:[%s53 + $0x1c] sm:$0xf]
  %v62 = vld [vmem:[%s53 + $0x20] sm:$0xf]
  %v63 = vld [vmem:[%s53 + $0x24] sm:$0xf]
  %v64 = vld [vmem:[%s53 + $0x28] sm:$0xf]
  %v65 = vld [vmem:[%s53 + $0x2c] sm:$0x1]
  %v66 = vld [vmem:[%s0] sm:$0xff]
  %v67 = vpack.c.bf16 %v66, %v66
  %s68 = scalar_lea.vmem %s0, 32
  %v69 = vld [vmem:[%s68] sm:$0xff]
  %v70 = vpack.c.bf16 %v69, %v69
  %v83 = vunpack.c.l.b16 %v41
  %v84 = vunpack.c.l.b16 %v42
  %v85 = vunpack.c.l.b16 %v43
  %v86 = vunpack.c.l.b16 %v44
  %v87 = vunpack.c.l.b16 %v45
  %v88 = vunpack.c.l.b16 %v46
  %v89 = vunpack.c.l.b16 %v47
  %v90 = vunpack.c.l.b16 %v48
  %v91 = vunpack.c.l.b16 %v49
  %v92 = vunpack.c.l.b16 %v50
  %v93 = vunpack.c.l.b16 %v51
  %v94 = vunpack.c.l.b16 %v52
  %v95 = vpack.c.b16 %v84, %v83
  %v96 = vpack.c.b16 %v86, %v85
  %v97 = vpack.c.b16 %v88, %v87
  %v98 = vpack.c.b16 %v90, %v89
  %v99 = vpack.c.b16 %v92, %v91
  %v100 = vpack.c.b16 %v94, %v93
  %vm106 = vcmask 736256
  %v108 = vsel %vm106, %v70, 0
  %vm110 = vcmask 1044480
  %v112 = vsel %vm110, %v100, 0
  %114 = vmatprep.subr.bf16.mxu0 0
  %115 = vmatpush1.bf16.msra.mxu0 %v95
  %116 = vmatprep.subr.bf16.mxu0 0
  %117 = vmatpush1.bf16.msra.mxu0 %v96
  %118 = vmatprep.subr.bf16.mxu0 0
  %119 = vmatpush1.bf16.msra.mxu0 %v97
  %120 = vmatprep.subr.bf16.mxu0 0
  %121 = vmatpush1.bf16.msra.mxu0 %v98
  %122 = vmatprep.subr.bf16.mxu0 0
  %123 = vmatpush1.bf16.msra.mxu0 %v99
  %124 = vmatprep.subr.bf16.mxu0 0
  %125 = vmatpush1.bf16.msra.mxu0 %v112
  %126 = vmatprep.subr.bf16.mxu0 0
  %127 = vmatpush1.bf16.msra.mxu0 0
  %128 = vmatprep.subr.bf16.mxu0 0
  %129 = vmatpush1.bf16.msra.mxu0 0
  %130 = vmatprep.subr.bf16.mxu0 0
  %131 = vmatpush1.bf16.msra.mxu0 0
  %132 = vmatprep.subr.bf16.mxu0 0
  %133 = vmatpush1.bf16.msra.mxu0 0
  %134 = vmatprep.subr.bf16.mxu0 0
  %135 = vmatpush1.bf16.msra.mxu0 0
  %136 = vmatprep.subr.bf16.mxu0 0
  %137 = vmatpush1.bf16.msra.mxu0 0
  %138 = vmatprep.subr.bf16.mxu0 0
  %139 = vmatpush1.bf16.msra.mxu0 0
  %140 = vmatprep.subr.bf16.mxu0 0
  %141 = vmatpush1.bf16.msra.mxu0 0
  %142 = vmatprep.subr.bf16.mxu0 0
  %143 = vmatpush1.bf16.msra.mxu0 0
  %144 = vmatprep.subr.bf16.mxu0 0
  %145 = vmatpush1.bf16.msra.mxu0 0
  %146 = vmatprep.mubr.bf16.mxu0 0
  %147 = vmatmul.mubr.bf16.gmra.mrb[0].mxu0 %v108
  %v148 = vpop.f32.mrb[0].mxu0
  %v149 = vadd.f32 0.0, %v148
  %v150 = vpop.f32.mrb[0].mxu0
  %v151 = vpop.f32.mrb[0].mxu0
  %v152 = vpop.f32.mrb[0].mxu0
  %153 = vdwg.mxu0
  %v166 = vunpack.c.l.b16 %v28
  %v167 = vunpack.c.l.b16 %v29
  %v168 = vunpack.c.l.b16 %v30
  %v169 = vunpack.c.l.b16 %v31
  %v170 = vunpack.c.l.b16 %v32
  %v171 = vunpack.c.l.b16 %v33
  %v172 = vunpack.c.l.b16 %v34
  %v173 = vunpack.c.l.b16 %v35
  %v174 = vunpack.c.l.b16 %v36
  %v175 = vunpack.c.l.b16 %v37
  %v176 = vunpack.c.l.b16 %v38
  %v177 = vunpack.c.l.b16 %v39
  %v178 = vpack.c.b16 %v167, %v166
  %v179 = vpack.c.b16 %v169, %v168
  %v180 = vpack.c.b16 %v171, %v170
  %v181 = vpack.c.b16 %v173, %v172
  %v182 = vpack.c.b16 %v175, %v174
  %v183 = vpack.c.b16 %v177, %v176
  %v190 = vsel %vm106, %v67, 0
  %v193 = vsel %vm110, %v183, 0
  %195 = vmatprep.subr.bf16.mxu0 0
  %196 = vmatpush1.bf16.msra.mxu0 %v178
  %197 = vmatprep.subr.bf16.mxu0 0
  %198 = vmatpush1.bf16.msra.mxu0 %v179
  %199 = vmatprep.subr.bf16.mxu0 0
  %200 = vmatpush1.bf16.msra.mxu0 %v180
  %201 = vmatprep.subr.bf16.mxu0 0
  %202 = vmatpush1.bf16.msra.mxu0 %v181
  %203 = vmatprep.subr.bf16.mxu0 0
  %204 = vmatpush1.bf16.msra.mxu0 %v182
  %205 = vmatprep.subr.bf16.mxu0 0
  %206 = vmatpush1.bf16.msra.mxu0 %v193
  %207 = vmatprep.subr.bf16.mxu0 0
  %208 = vmatpush1.bf16.msra.mxu0 0
  %209 = vmatprep.subr.bf16.mxu0 0
  %210 = vmatpush1.bf16.msra.mxu0 0
  %211 = vmatprep.subr.bf16.mxu0 0
  %212 = vmatpush1.bf16.msra.mxu0 0
  %213 = vmatprep.subr.bf16.mxu0 0
  %214 = vmatpush1.bf16.msra.mxu0 0
  %215 = vmatprep.subr.bf16.mxu0 0
  %216 = vmatpush1.bf16.msra.mxu0 0
  %217 = vmatprep.subr.bf16.mxu0 0
  %218 = vmatpush1.bf16.msra.mxu0 0
  %219 = vmatprep.subr.bf16.mxu0 0
  %220 = vmatpush1.bf16.msra.mxu0 0
  %221 = vmatprep.subr.bf16.mxu0 0
  %222 = vmatpush1.bf16.msra.mxu0 0
  %223 = vmatprep.subr.bf16.mxu0 0
  %224 = vmatpush1.bf16.msra.mxu0 0
  %225 = vmatprep.subr.bf16.mxu0 0
  %226 = vmatpush1.bf16.msra.mxu0 0
  %227 = vmatprep.mubr.bf16.mxu0 0
  %228 = vmatmul.mubr.bf16.gmra.mrb[0].mxu0 %v190
  %v229 = vpop.f32.mrb[0].mxu0
  %v230 = vadd.f32 %v149, %v229
  %v231 = vpop.f32.mrb[0].mxu0
  %v232 = vpop.f32.mrb[0].mxu0
  %v233 = vpop.f32.mrb[0].mxu0
  %234 = vdwg.mxu0
  %v235 = vld [vmem:[%s0 + $0x1] sm:$0xff]
  %v236 = vpack.c.bf16 %v235, %v235
  %v249 = vunpack.c.l.b16 %v54
  %v250 = vunpack.c.l.b16 %v55
  %v251 = vunpack.c.l.b16 %v56
  %v252 = vunpack.c.l.b16 %v57
  %v253 = vunpack.c.l.b16 %v58
  %v254 = vunpack.c.l.b16 %v59
  %v255 = vunpack.c.l.b16 %v60
  %v256 = vunpack.c.l.b16 %v61
  %v257 = vunpack.c.l.b16 %v62
  %v258 = vunpack.c.l.b16 %v63
  %v259 = vunpack.c.l.b16 %v64
  %v260 = vunpack.c.l.b16 %v65
  %v261 = vpack.c.b16 %v250, %v249
  %v262 = vpack.c.b16 %v252, %v251
  %v263 = vpack.c.b16 %v254, %v253
  %v264 = vpack.c.b16 %v256, %v255
  %v265 = vpack.c.b16 %v258, %v257
  %v266 = vpack.c.b16 %v260, %v259
  %v273 = vsel %vm106, %v236, 0
  %v276 = vsel %vm110, %v266, 0
  %278 = vmatprep.subr.bf16.mxu0 0
  %279 = vmatpush1.bf16.msra.mxu0 %v261
  %280 = vmatprep.subr.bf16.mxu0 0
  %281 = vmatpush1.bf16.msra.mxu0 %v262
  %282 = vmatprep.subr.bf16.mxu0 0
  %283 = vmatpush1.bf16.msra.mxu0 %v263
  %284 = vmatprep.subr.bf16.mxu0 0
  %285 = vmatpush1.bf16.msra.mxu0 %v264
  %286 = vmatprep.subr.bf16.mxu0 0
  %287 = vmatpush1.bf16.msra.mxu0 %v265
  %288 = vmatprep.subr.bf16.mxu0 0
  %289 = vmatpush1.bf16.msra.mxu0 %v276
  %290 = vmatprep.subr.bf16.mxu0 0
  %291 = vmatpush1.bf16.msra.mxu0 0
  %292 = vmatprep.subr.bf16.mxu0 0
  %293 = vmatpush1.bf16.msra.mxu0 0
  %294 = vmatprep.subr.bf16.mxu0 0
  %295 = vmatpush1.bf16.msra.mxu0 0
  %296 = vmatprep.subr.bf16.mxu0 0
  %297 = vmatpush1.bf16.msra.mxu0 0
  %298 = vmatprep.subr.bf16.mxu0 0
  %299 = vmatpush1.bf16.msra.mxu0 0
  %300 = vmatprep.subr.bf16.mxu0 0
  %301 = vmatpush1.bf16.msra.mxu0 0
  %302 = vmatprep.subr.bf16.mxu0 0
  %303 = vmatpush1.bf16.msra.mxu0 0
  %304 = vmatprep.subr.bf16.mxu0 0
  %305 = vmatpush1.bf16.msra.mxu0 0
  %306 = vmatprep.subr.bf16.mxu0 0
  %307 = vmatpush1.bf16.msra.mxu0 0
  %308 = vmatprep.subr.bf16.mxu0 0
  %309 = vmatpush1.bf16.msra.mxu0 0
  %310 = vmatprep.mubr.bf16.mxu0 0
  %311 = vmatmul.mubr.bf16.gmra.mrb[0].mxu0 %v273
  %v312 = vpop.f32.mrb[0].mxu0
  %v313 = vadd.f32 0.0, %v312
  %v314 = vpop.f32.mrb[0].mxu0
  %v315 = vpop.f32.mrb[0].mxu0
  %v316 = vpop.f32.mrb[0].mxu0
  %317 = vdwg.mxu0
  %v318 = vadd.f32 %v230, %v313
  %v320 = vlaneseq
  %v321 = vshrl.u32 %v320, 7
  %v322 = vsub.s32 0, %v321
  %v323 = vrot.slane %v27, %v322
  %v325 = vadd.f32 %v318, %v323
  %s326 = scalar_lea.vmem %s0, 16
  %v327 = vld [vmem:[%s326] sm:$0xff]
  %v328 = vpack.c.bf16 %v327, %v327
  %s329 = scalar_lea.vmem %s0, 48
  %v330 = vld [vmem:[%s329] sm:$0xff]
  %v331 = vpack.c.bf16 %v330, %v330
  %v333 = vsel %vm106, %v331, 0
  %335 = vmatprep.subr.bf16.mxu0 0
  %336 = vmatpush1.bf16.msra.mxu0 %v95
  %337 = vmatprep.subr.bf16.mxu0 0
  %338 = vmatpush1.bf16.msra.mxu0 %v96
  %339 = vmatprep.subr.bf16.mxu0 0
  %340 = vmatpush1.bf16.msra.mxu0 %v97
  %341 = vmatprep.subr.bf16.mxu0 0
  %342 = vmatpush1.bf16.msra.mxu0 %v98
  %343 = vmatprep.subr.bf16.mxu0 0
  %344 = vmatpush1.bf16.msra.mxu0 %v99
  %345 = vmatprep.subr.bf16.mxu0 0
  %346 = vmatpush1.bf16.msra.mxu0 %v112
  %347 = vmatprep.subr.bf16.mxu0 0
  %348 = vmatpush1.bf16.msra.mxu0 0
  %349 = vmatprep.subr.bf16.mxu0 0
  %350 = vmatpush1.bf16.msra.mxu0 0
  %351 = vmatprep.subr.bf16.mxu0 0
  %352 = vmatpush1.bf16.msra.mxu0 0
  %353 = vmatprep.subr.bf16.mxu0 0
  %354 = vmatpush1.bf16.msra.mxu0 0
  %355 = vmatprep.subr.bf16.mxu0 0
  %356 = vmatpush1.bf16.msra.mxu0 0
  %357 = vmatprep.subr.bf16.mxu0 0
  %358 = vmatpush1.bf16.msra.mxu0 0
  %359 = vmatprep.subr.bf16.mxu0 0
  %360 = vmatpush1.bf16.msra.mxu0 0
  %361 = vmatprep.subr.bf16.mxu0 0
  %362 = vmatpush1.bf16.msra.mxu0 0
  %363 = vmatprep.subr.bf16.mxu0 0
  %364 = vmatpush1.bf16.msra.mxu0 0
  %365 = vmatprep.subr.bf16.mxu0 0
  %366 = vmatpush1.bf16.msra.mxu0 0
  %367 = vmatprep.mubr.bf16.mxu0 0
  %368 = vmatmul.mubr.bf16.gmra.mrb[0].mxu0 %v333
  %v369 = vpop.f32.mrb[0].mxu0
  %v370 = vadd.f32 0.0, %v369
  %v371 = vpop.f32.mrb[0].mxu0
  %v372 = vpop.f32.mrb[0].mxu0
  %v373 = vpop.f32.mrb[0].mxu0
  %374 = vdwg.mxu0
  %v376 = vsel %vm106, %v328, 0
  %378 = vmatprep.subr.bf16.mxu0 0
  %379 = vmatpush1.bf16.msra.mxu0 %v178
  %380 = vmatprep.subr.bf16.mxu0 0
  %381 = vmatpush1.bf16.msra.mxu0 %v179
  %382 = vmatprep.subr.bf16.mxu0 0
  %383 = vmatpush1.bf16.msra.mxu0 %v180
  %384 = vmatprep.subr.bf16.mxu0 0
  %385 = vmatpush1.bf16.msra.mxu0 %v181
  %386 = vmatprep.subr.bf16.mxu0 0
  %387 = vmatpush1.bf16.msra.mxu0 %v182
  %388 = vmatprep.subr.bf16.mxu0 0
  %389 = vmatpush1.bf16.msra.mxu0 %v193
  %390 = vmatprep.subr.bf16.mxu0 0
  %391 = vmatpush1.bf16.msra.mxu0 0
  %392 = vmatprep.subr.bf16.mxu0 0
  %393 = vmatpush1.bf16.msra.mxu0 0
  %394 = vmatprep.subr.bf16.mxu0 0
  %395 = vmatpush1.bf16.msra.mxu0 0
  %396 = vmatprep.subr.bf16.mxu0 0
  %397 = vmatpush1.bf16.msra.mxu0 0
  %398 = vmatprep.subr.bf16.mxu0 0
  %399 = vmatpush1.bf16.msra.mxu0 0
  %400 = vmatprep.subr.bf16.mxu0 0
  %401 = vmatpush1.bf16.msra.mxu0 0
  %402 = vmatprep.subr.bf16.mxu0 0
  %403 = vmatpush1.bf16.msra.mxu0 0
  %404 = vmatprep.subr.bf16.mxu0 0
  %405 = vmatpush1.bf16.msra.mxu0 0
  %406 = vmatprep.subr.bf16.mxu0 0
  %407 = vmatpush1.bf16.msra.mxu0 0
  %408 = vmatprep.subr.bf16.mxu0 0
  %409 = vmatpush1.bf16.msra.mxu0 0
  %410 = vmatprep.mubr.bf16.mxu0 0
  %411 = vmatmul.mubr.bf16.gmra.mrb[0].mxu0 %v376
  %v412 = vpop.f32.mrb[0].mxu0
  %v413 = vadd.f32 %v370, %v412
  %v414 = vpop.f32.mrb[0].mxu0
  %v415 = vpop.f32.mrb[0].mxu0
  %v416 = vpop.f32.mrb[0].mxu0
  %417 = vdwg.mxu0
  %v418 = vld [vmem:[%s326 + $0x1] sm:$0xff]
  %v419 = vpack.c.bf16 %v418, %v418
  %v421 = vsel %vm106, %v419, 0
  %423 = vmatprep.subr.bf16.mxu0 0
  %424 = vmatpush1.bf16.msra.mxu0 %v261
  %425 = vmatprep.subr.bf16.mxu0 0
  %426 = vmatpush1.bf16.msra.mxu0 %v262
  %427 = vmatprep.subr.bf16.mxu0 0
  %428 = vmatpush1.bf16.msra.mxu0 %v263
  %429 = vmatprep.subr.bf16.mxu0 0
  %430 = vmatpush1.bf16.msra.mxu0 %v264
  %431 = vmatprep.subr.bf16.mxu0 0
  %432 = vmatpush1.bf16.msra.mxu0 %v265
  %433 = vmatprep.subr.bf16.mxu0 0
  %434 = vmatpush1.bf16.msra.mxu0 %v276
  %435 = vmatprep.subr.bf16.mxu0 0
  %436 = vmatpush1.bf16.msra.mxu0 0
  %437 = vmatprep.subr.bf16.mxu0 0
  %438 = vmatpush1.bf16.msra.mxu0 0
  %439 = vmatprep.subr.bf16.mxu0 0
  %440 = vmatpush1.bf16.msra.mxu0 0
  %441 = vmatprep.subr.bf16.mxu0 0
  %442 = vmatpush1.bf16.msra.mxu0 0
  %443 = vmatprep.subr.bf16.mxu0 0
  %444 = vmatpush1.bf16.msra.mxu0 0
  %445 = vmatprep.subr.bf16.mxu0 0
  %446 = vmatpush1.bf16.msra.mxu0 0
  %447 = vmatprep.subr.bf16.mxu0 0
  %448 = vmatpush1.bf16.msra.mxu0 0
  %449 = vmatprep.subr.bf16.mxu0 0
  %450 = vmatpush1.bf16.msra.mxu0 0
  %451 = vmatprep.subr.bf16.mxu0 0
  %452 = vmatpush1.bf16.msra.mxu0 0
  %453 = vmatprep.subr.bf16.mxu0 0
  %454 = vmatpush1.bf16.msra.mxu0 0
  %455 = vmatprep.mubr.bf16.mxu0 0
  %456 = vmatmul.mubr.bf16.gmra.mrb[0].mxu0 %v421
  %v457 = vpop.f32.mrb[0].mxu0
  %v458 = vadd.f32 0.0, %v457
  %v459 = vpop.f32.mrb[0].mxu0
  %v460 = vpop.f32.mrb[0].mxu0
  %v461 = vpop.f32.mrb[0].mxu0
  %462 = vdwg.mxu0
  %v463 = vadd.f32 %v413, %v458
  %v464 = vadd.f32 %v463, %v323
  %v465 = vld [vmem:[%s5] sm:$0xff]
  %v466 = vld [vmem:[%s5 + $0x8] sm:$0xff]
  %v467 = vld [vmem:[%s5 + $0x10] sm:$0xff]
  %v468 = vld [vmem:[%s5 + $0x18] sm:$0xff]
  %v469 = vld [vmem:[%s5 + $0x20] sm:$0xff]
  %v470 = vld [vmem:[%s5 + $0x28] sm:$0xff]
  %v471 = vld [vmem:[%s5 + $0x30] sm:$0xff]
  %v472 = vld [vmem:[%s5 + $0x38] sm:$0xff]
  %v473 = vld [vmem:[%s6] sm:$0xff]
  %vm474 = vcmask 523264
  %v475 = vsel %vm474, %v325, 0.0
  %v476 = vrot.slane %v475, 4
  %v477 = vadd.f32 %v475, %v476
  %v478 = vrot.slane %v477, 2
  %v479 = vadd.f32 %v477, %v478
  %v480 = vrot.slane %v479, 1
  %v481 = vadd.f32 %v479, %v480
  %v482 = vsel %vm474, %v464, 0.0
  %v483 = vrot.slane %v482, 4
  %v484 = vadd.f32 %v482, %v483
  %v485 = vrot.slane %v484, 2
  %v486 = vadd.f32 %v484, %v485
  %v487 = vrot.slane %v486, 1
  %v488 = vadd.f32 %v486, %v487
  %v489 = vadd.f32 %v481, %v488
  %v491 = vsel %vm474, %v489, 0
  %493 = vmatprep.subr.mxu0 0.0
  %494 = vmatpush1.msra.mxu0 %v465
  %495 = vmatprep.subr.mxu0 0.0
  %496 = vmatpush1.msra.mxu0 %v466
  %497 = vmatprep.subr.mxu0 0.0
  %498 = vmatpush1.msra.mxu0 %v467
  %499 = vmatprep.subr.mxu0 0.0
  %500 = vmatpush1.msra.mxu0 %v468
  %501 = vmatprep.subr.mxu0 0.0
  %502 = vmatpush1.msra.mxu0 %v469
  %503 = vmatprep.subr.mxu0 0.0
  %504 = vmatpush1.msra.mxu0 %v470
  %505 = vmatprep.subr.mxu0 0.0
  %506 = vmatpush1.msra.mxu0 %v471
  %507 = vmatprep.subr.mxu0 0.0
  %508 = vmatpush1.msra.mxu0 %v472
  %509 = vmatprep.subr.mxu0 0.0
  %510 = vmatpush1.msra.mxu0 0.0
  %511 = vmatprep.subr.mxu0 0.0
  %512 = vmatpush1.msra.mxu0 0.0
  %513 = vmatprep.subr.mxu0 0.0
  %514 = vmatpush1.msra.mxu0 0.0
  %515 = vmatprep.subr.mxu0 0.0
  %516 = vmatpush1.msra.mxu0 0.0
  %517 = vmatprep.subr.mxu0 0.0
  %518 = vmatpush1.msra.mxu0 0.0
  %519 = vmatprep.subr.mxu0 0.0
  %520 = vmatpush1.msra.mxu0 0.0
  %521 = vmatprep.subr.mxu0 0.0
  %522 = vmatpush1.msra.mxu0 0.0
  %523 = vmatprep.subr.mxu0 0.0
  %524 = vmatpush1.msra.mxu0 0.0
  %525 = vmatprep.subr.mxu0 0.0
  %526 = vmatpush1.msra.mxu0 0.0
  %527 = vmatprep.subr.mxu0 0.0
  %528 = vmatpush1.msra.mxu0 0.0
  %529 = vmatprep.subr.mxu0 0.0
  %530 = vmatpush1.msra.mxu0 0.0
  %531 = vmatprep.subr.mxu0 0.0
  %532 = vmatpush1.msra.mxu0 0.0
  %533 = vmatprep.subr.mxu0 0.0
  %534 = vmatpush1.msra.mxu0 0.0
  %535 = vmatprep.subr.mxu0 0.0
  %536 = vmatpush1.msra.mxu0 0.0
  %537 = vmatprep.subr.mxu0 0.0
  %538 = vmatpush1.msra.mxu0 0.0
  %539 = vmatprep.subr.mxu0 0.0
  %540 = vmatpush1.msra.mxu0 0.0
  %541 = vmatprep.subr.mxu0 0.0
  %542 = vmatpush1.msra.mxu0 0.0
  %543 = vmatprep.subr.mxu0 0.0
  %544 = vmatpush1.msra.mxu0 0.0
  %545 = vmatprep.subr.mxu0 0.0
  %546 = vmatpush1.msra.mxu0 0.0
  %547 = vmatprep.subr.mxu0 0.0
  %548 = vmatpush1.msra.mxu0 0.0
  %549 = vmatprep.subr.mxu0 0.0
  %550 = vmatpush1.msra.mxu0 0.0
  %551 = vmatprep.subr.mxu0 0.0
  %552 = vmatpush1.msra.mxu0 0.0
  %553 = vmatprep.subr.mxu0 0.0
  %554 = vmatpush1.msra.mxu0 0.0
  %555 = vmatprep.subr.mxu0 0.0
  %556 = vmatpush1.msra.mxu0 0.0
  %557 = vmatprep.mubr.f32.mxu0 0.0
  %558 = vmatmul.mubr.f32.gmra.mrb[0].mxu0 %v491
  %v559 = vpop.f32.mrb[0].mxu0
  %v560 = vadd.f32 0.0, %v559
  %v561 = vpop.f32.mrb[0].mxu0
  %562 = vdwg.mxu0
  %v563 = vmul.f32 %v560, 0.0078125
  %vm564 = vcmask 64512
  %v566 = vsel %vm564, %v563, 0
  %568 = vmatprep.subr.mxu0 0.0
  %569 = vmatpush1.msra.mxu0 %v473
  %570 = vmatprep.subr.mxu0 0.0
  %571 = vmatpush1.msra.mxu0 0.0
  %572 = vmatprep.subr.mxu0 0.0
  %573 = vmatpush1.msra.mxu0 0.0
  %574 = vmatprep.subr.mxu0 0.0
  %575 = vmatpush1.msra.mxu0 0.0
  %576 = vmatprep.subr.mxu0 0.0
  %577 = vmatpush1.msra.mxu0 0.0
  %578 = vmatprep.subr.mxu0 0.0
  %579 = vmatpush1.msra.mxu0 0.0
  %580 = vmatprep.subr.mxu0 0.0
  %581 = vmatpush1.msra.mxu0 0.0
  %582 = vmatprep.subr.mxu0 0.0
  %583 = vmatpush1.msra.mxu0 0.0
  %584 = vmatprep.subr.mxu0 0.0
  %585 = vmatpush1.msra.mxu0 0.0
  %586 = vmatprep.subr.mxu0 0.0
  %587 = vmatpush1.msra.mxu0 0.0
  %588 = vmatprep.subr.mxu0 0.0
  %589 = vmatpush1.msra.mxu0 0.0
  %590 = vmatprep.subr.mxu0 0.0
  %591 = vmatpush1.msra.mxu0 0.0
  %592 = vmatprep.subr.mxu0 0.0
  %593 = vmatpush1.msra.mxu0 0.0
  %594 = vmatprep.subr.mxu0 0.0
  %595 = vmatpush1.msra.mxu0 0.0
  %596 = vmatprep.subr.mxu0 0.0
  %597 = vmatpush1.msra.mxu0 0.0
  %598 = vmatprep.subr.mxu0 0.0
  %599 = vmatpush1.msra.mxu0 0.0
  %600 = vmatprep.subr.mxu0 0.0
  %601 = vmatpush1.msra.mxu0 0.0
  %602 = vmatprep.subr.mxu0 0.0
  %603 = vmatpush1.msra.mxu0 0.0
  %604 = vmatprep.subr.mxu0 0.0
  %605 = vmatpush1.msra.mxu0 0.0
  %606 = vmatprep.subr.mxu0 0.0
  %607 = vmatpush1.msra.mxu0 0.0
  %608 = vmatprep.subr.mxu0 0.0
  %609 = vmatpush1.msra.mxu0 0.0
  %610 = vmatprep.subr.mxu0 0.0
  %611 = vmatpush1.msra.mxu0 0.0
  %612 = vmatprep.subr.mxu0 0.0
  %613 = vmatpush1.msra.mxu0 0.0
  %614 = vmatprep.subr.mxu0 0.0
  %615 = vmatpush1.msra.mxu0 0.0
  %616 = vmatprep.subr.mxu0 0.0
  %617 = vmatpush1.msra.mxu0 0.0
  %618 = vmatprep.subr.mxu0 0.0
  %619 = vmatpush1.msra.mxu0 0.0
  %620 = vmatprep.subr.mxu0 0.0
  %621 = vmatpush1.msra.mxu0 0.0
  %622 = vmatprep.subr.mxu0 0.0
  %623 = vmatpush1.msra.mxu0 0.0
  %624 = vmatprep.subr.mxu0 0.0
  %625 = vmatpush1.msra.mxu0 0.0
  %626 = vmatprep.subr.mxu0 0.0
  %627 = vmatpush1.msra.mxu0 0.0
  %628 = vmatprep.subr.mxu0 0.0
  %629 = vmatpush1.msra.mxu0 0.0
  %630 = vmatprep.subr.mxu0 0.0
  %631 = vmatpush1.msra.mxu0 0.0
  %632 = vmatprep.mubr.f32.mxu0 0.0
  %633 = vmatmul.mubr.f32.gmra.mrb[0].mxu0 %v566
  %v634 = vpop.f32.mrb[0].mxu0
  %v635 = vadd.f32 0.0, %v634
  %v636 = vpop.f32.mrb[0].mxu0
  %637 = vdwg.mxu0
  %v638 = vlaneseq
  %v639 = vshrl.u32 %v638, 7
  %v640 = vsub.s32 0, %v639
  %v641 = vrot.slane %v635, %v640
  %v642 = vsub.f32 %v325, %v641
  %v643 = vmul.f32 %v642, %v642
  %v644 = vsel %vm474, %v643, 0.0
  %v645 = vrot.slane %v644, 4
  %v646 = vadd.f32 %v644, %v645
  %v647 = vrot.slane %v646, 2
  %v648 = vadd.f32 %v646, %v647
  %v649 = vrot.slane %v648, 1
  %v650 = vadd.f32 %v648, %v649
  %v651 = vsub.f32 %v464, %v641
  %v652 = vmul.f32 %v651, %v651
  %v653 = vsel %vm474, %v652, 0.0
  %v654 = vrot.slane %v653, 4
  %v655 = vadd.f32 %v653, %v654
  %v656 = vrot.slane %v655, 2
  %v657 = vadd.f32 %v655, %v656
  %v658 = vrot.slane %v657, 1
  %v659 = vadd.f32 %v657, %v658
  %v660 = vadd.f32 %v650, %v659
  %v662 = vsel %vm474, %v660, 0
  %664 = vmatprep.subr.mxu0 0.0
  %665 = vmatpush1.msra.mxu0 %v465
  %666 = vmatprep.subr.mxu0 0.0
  %667 = vmatpush1.msra.mxu0 %v466
  %668 = vmatprep.subr.mxu0 0.0
  %669 = vmatpush1.msra.mxu0 %v467
  %670 = vmatprep.subr.mxu0 0.0
  %671 = vmatpush1.msra.mxu0 %v468
  %672 = vmatprep.subr.mxu0 0.0
  %673 = vmatpush1.msra.mxu0 %v469
  %674 = vmatprep.subr.mxu0 0.0
  %675 = vmatpush1.msra.mxu0 %v470
  %676 = vmatprep.subr.mxu0 0.0
  %677 = vmatpush1.msra.mxu0 %v471
  %678 = vmatprep.subr.mxu0 0.0
  %679 = vmatpush1.msra.mxu0 %v472
  %680 = vmatprep.subr.mxu0 0.0
  %681 = vmatpush1.msra.mxu0 0.0
  %682 = vmatprep.subr.mxu0 0.0
  %683 = vmatpush1.msra.mxu0 0.0
  %684 = vmatprep.subr.mxu0 0.0
  %685 = vmatpush1.msra.mxu0 0.0
  %686 = vmatprep.subr.mxu0 0.0
  %687 = vmatpush1.msra.mxu0 0.0
  %688 = vmatprep.subr.mxu0 0.0
  %689 = vmatpush1.msra.mxu0 0.0
  %690 = vmatprep.subr.mxu0 0.0
  %691 = vmatpush1.msra.mxu0 0.0
  %692 = vmatprep.subr.mxu0 0.0
  %693 = vmatpush1.msra.mxu0 0.0
  %694 = vmatprep.subr.mxu0 0.0
  %695 = vmatpush1.msra.mxu0 0.0
  %696 = vmatprep.subr.mxu0 0.0
  %697 = vmatpush1.msra.mxu0 0.0
  %698 = vmatprep.subr.mxu0 0.0
  %699 = vmatpush1.msra.mxu0 0.0
  %700 = vmatprep.subr.mxu0 0.0
  %701 = vmatpush1.msra.mxu0 0.0
  %702 = vmatprep.subr.mxu0 0.0
  %703 = vmatpush1.msra.mxu0 0.0
  %704 = vmatprep.subr.mxu0 0.0
  %705 = vmatpush1.msra.mxu0 0.0
  %706 = vmatprep.subr.mxu0 0.0
  %707 = vmatpush1.msra.mxu0 0.0
  %708 = vmatprep.subr.mxu0 0.0
  %709 = vmatpush1.msra.mxu0 0.0
  %710 = vmatprep.subr.mxu0 0.0
  %711 = vmatpush1.msra.mxu0 0.0
  %712 = vmatprep.subr.mxu0 0.0
  %713 = vmatpush1.msra.mxu0 0.0
  %714 = vmatprep.subr.mxu0 0.0
  %715 = vmatpush1.msra.mxu0 0.0
  %716 = vmatprep.subr.mxu0 0.0
  %717 = vmatpush1.msra.mxu0 0.0
  %718 = vmatprep.subr.mxu0 0.0
  %719 = vmatpush1.msra.mxu0 0.0
  %720 = vmatprep.subr.mxu0 0.0
  %721 = vmatpush1.msra.mxu0 0.0
  %722 = vmatprep.subr.mxu0 0.0
  %723 = vmatpush1.msra.mxu0 0.0
  %724 = vmatprep.subr.mxu0 0.0
  %725 = vmatpush1.msra.mxu0 0.0
  %726 = vmatprep.subr.mxu0 0.0
  %727 = vmatpush1.msra.mxu0 0.0
  %728 = vmatprep.mubr.f32.mxu0 0.0
  %729 = vmatmul.mubr.f32.gmra.mrb[0].mxu0 %v662
  %v730 = vpop.f32.mrb[0].mxu0
  %v731 = vadd.f32 0.0, %v730
  %v732 = vpop.f32.mrb[0].mxu0
  %733 = vdwg.mxu0
  %v734 = vmul.f32 %v731, 0.0078125
  %v735 = vld [vmem:[%s3] sm:$0x1]
  %v736 = vadd.f32 %v734, 1e-05
  %v737 = vrsqrt.pop %v736
  %v738 = vmul.f32 %v735, %v737
  %v740 = vsel %vm564, %v738, 0
  %742 = vmatprep.subr.mxu0 0.0
  %743 = vmatpush1.msra.mxu0 %v473
  %744 = vmatprep.subr.mxu0 0.0
  %745 = vmatpush1.msra.mxu0 0.0
  %746 = vmatprep.subr.mxu0 0.0
  %747 = vmatpush1.msra.mxu0 0.0
  %748 = vmatprep.subr.mxu0 0.0
  %749 = vmatpush1.msra.mxu0 0.0
  %750 = vmatprep.subr.mxu0 0.0
  %751 = vmatpush1.msra.mxu0 0.0
  %752 = vmatprep.subr.mxu0 0.0
  %753 = vmatpush1.msra.mxu0 0.0
  %754 = vmatprep.subr.mxu0 0.0
  %755 = vmatpush1.msra.mxu0 0.0
  %756 = vmatprep.subr.mxu0 0.0
  %757 = vmatpush1.msra.mxu0 0.0
  %758 = vmatprep.subr.mxu0 0.0
  %759 = vmatpush1.msra.mxu0 0.0
  %760 = vmatprep.subr.mxu0 0.0
  %761 = vmatpush1.msra.mxu0 0.0
  %762 = vmatprep.subr.mxu0 0.0
  %763 = vmatpush1.msra.mxu0 0.0
  %764 = vmatprep.subr.mxu0 0.0
  %765 = vmatpush1.msra.mxu0 0.0
  %766 = vmatprep.subr.mxu0 0.0
  %767 = vmatpush1.msra.mxu0 0.0
  %768 = vmatprep.subr.mxu0 0.0
  %769 = vmatpush1.msra.mxu0 0.0
  %770 = vmatprep.subr.mxu0 0.0
  %771 = vmatpush1.msra.mxu0 0.0
  %772 = vmatprep.subr.mxu0 0.0
  %773 = vmatpush1.msra.mxu0 0.0
  %774 = vmatprep.subr.mxu0 0.0
  %775 = vmatpush1.msra.mxu0 0.0
  %776 = vmatprep.subr.mxu0 0.0
  %777 = vmatpush1.msra.mxu0 0.0
  %778 = vmatprep.subr.mxu0 0.0
  %779 = vmatpush1.msra.mxu0 0.0
  %780 = vmatprep.subr.mxu0 0.0
  %781 = vmatpush1.msra.mxu0 0.0
  %782 = vmatprep.subr.mxu0 0.0
  %783 = vmatpush1.msra.mxu0 0.0
  %784 = vmatprep.subr.mxu0 0.0
  %785 = vmatpush1.msra.mxu0 0.0
  %786 = vmatprep.subr.mxu0 0.0
  %787 = vmatpush1.msra.mxu0 0.0
  %788 = vmatprep.subr.mxu0 0.0
  %789 = vmatpush1.msra.mxu0 0.0
  %790 = vmatprep.subr.mxu0 0.0
  %791 = vmatpush1.msra.mxu0 0.0
  %792 = vmatprep.subr.mxu0 0.0
  %793 = vmatpush1.msra.mxu0 0.0
  %794 = vmatprep.subr.mxu0 0.0
  %795 = vmatpush1.msra.mxu0 0.0
  %796 = vmatprep.subr.mxu0 0.0
  %797 = vmatpush1.msra.mxu0 0.0
  %798 = vmatprep.subr.mxu0 0.0
  %799 = vmatpush1.msra.mxu0 0.0
  %800 = vmatprep.subr.mxu0 0.0
  %801 = vmatpush1.msra.mxu0 0.0
  %802 = vmatprep.subr.mxu0 0.0
  %803 = vmatpush1.msra.mxu0 0.0
  %804 = vmatprep.subr.mxu0 0.0
  %805 = vmatpush1.msra.mxu0 0.0
  %806 = vmatprep.mubr.f32.mxu0 0.0
  %807 = vmatmul.mubr.f32.gmra.mrb[0].mxu0 %v740
  %v808 = vpop.f32.mrb[0].mxu0
  %v809 = vadd.f32 0.0, %v808
  %v810 = vpop.f32.mrb[0].mxu0
  %811 = vdwg.mxu0
  %v812 = vld [vmem:[%s4] sm:$0x1]
  %v814 = vsel %vm564, %v812, 0
  %816 = vmatprep.subr.mxu0 0.0
  %817 = vmatpush1.msra.mxu0 %v473
  %818 = vmatprep.subr.mxu0 0.0
  %819 = vmatpush1.msra.mxu0 0.0
  %820 = vmatprep.subr.mxu0 0.0
  %821 = vmatpush1.msra.mxu0 0.0
  %822 = vmatprep.subr.mxu0 0.0
  %823 = vmatpush1.msra.mxu0 0.0
  %824 = vmatprep.subr.mxu0 0.0
  %825 = vmatpush1.msra.mxu0 0.0
  %826 = vmatprep.subr.mxu0 0.0
  %827 = vmatpush1.msra.mxu0 0.0
  %828 = vmatprep.subr.mxu0 0.0
  %829 = vmatpush1.msra.mxu0 0.0
  %830 = vmatprep.subr.mxu0 0.0
  %831 = vmatpush1.msra.mxu0 0.0
  %832 = vmatprep.subr.mxu0 0.0
  %833 = vmatpush1.msra.mxu0 0.0
  %834 = vmatprep.subr.mxu0 0.0
  %835 = vmatpush1.msra.mxu0 0.0
  %836 = vmatprep.subr.mxu0 0.0
  %837 = vmatpush1.msra.mxu0 0.0
  %838 = vmatprep.subr.mxu0 0.0
  %839 = vmatpush1.msra.mxu0 0.0
  %840 = vmatprep.subr.mxu0 0.0
  %841 = vmatpush1.msra.mxu0 0.0
  %842 = vmatprep.subr.mxu0 0.0
  %843 = vmatpush1.msra.mxu0 0.0
  %844 = vmatprep.subr.mxu0 0.0
  %845 = vmatpush1.msra.mxu0 0.0
  %846 = vmatprep.subr.mxu0 0.0
  %847 = vmatpush1.msra.mxu0 0.0
  %848 = vmatprep.subr.mxu0 0.0
  %849 = vmatpush1.msra.mxu0 0.0
  %850 = vmatprep.subr.mxu0 0.0
  %851 = vmatpush1.msra.mxu0 0.0
  %852 = vmatprep.subr.mxu0 0.0
  %853 = vmatpush1.msra.mxu0 0.0
  %854 = vmatprep.subr.mxu0 0.0
  %855 = vmatpush1.msra.mxu0 0.0
  %856 = vmatprep.subr.mxu0 0.0
  %857 = vmatpush1.msra.mxu0 0.0
  %858 = vmatprep.subr.mxu0 0.0
  %859 = vmatpush1.msra.mxu0 0.0
  %860 = vmatprep.subr.mxu0 0.0
  %861 = vmatpush1.msra.mxu0 0.0
  %862 = vmatprep.subr.mxu0 0.0
  %863 = vmatpush1.msra.mxu0 0.0
  %864 = vmatprep.subr.mxu0 0.0
  %865 = vmatpush1.msra.mxu0 0.0
  %866 = vmatprep.subr.mxu0 0.0
  %867 = vmatpush1.msra.mxu0 0.0
  %868 = vmatprep.subr.mxu0 0.0
  %869 = vmatpush1.msra.mxu0 0.0
  %870 = vmatprep.subr.mxu0 0.0
  %871 = vmatpush1.msra.mxu0 0.0
  %872 = vmatprep.subr.mxu0 0.0
  %873 = vmatpush1.msra.mxu0 0.0
  %874 = vmatprep.subr.mxu0 0.0
  %875 = vmatpush1.msra.mxu0 0.0
  %876 = vmatprep.subr.mxu0 0.0
  %877 = vmatpush1.msra.mxu0 0.0
  %878 = vmatprep.subr.mxu0 0.0
  %879 = vmatpush1.msra.mxu0 0.0
  %880 = vmatprep.mubr.f32.mxu0 0.0
  %881 = vmatmul.mubr.f32.gmra.mrb[0].mxu0 %v814
  %v882 = vpop.f32.mrb[0].mxu0
  %v883 = vadd.f32 0.0, %v882
  %v884 = vpop.f32.mrb[0].mxu0
  %885 = vdwg.mxu0
  %v886 = vlaneseq
  %v887 = vshrl.u32 %v886, 7
  %v888 = vsub.s32 0, %v887
  %v889 = vrot.slane %v809, %v888
  %v890 = vmul.f32 %v642, %v889
  %v891 = vlaneseq
  %v892 = vshrl.u32 %v891, 7
  %v893 = vsub.s32 0, %v892
  %v894 = vrot.slane %v883, %v893
  %v895 = vadd.f32 %v890, %v894
  %v896 = vmul.f32 %v651, %v889
  %v897 = vadd.f32 %v896, %v894
  %vm898 = vcmp.ge.f32.partialorder %v895, 0.0
  %v899 = vmul.f32 %v895, 0.01
  %v900 = vsel %vm898, %v895, %v899
  %901 = vst.msk [vmem:[%s7] sm:$0xff] %vm474, %v900
  %vm902 = vcmp.ge.f32.partialorder %v897, 0.0
  %v903 = vmul.f32 %v897, 0.01
  %v904 = vsel %vm902, %v897, %v903
  %s905 = scalar_lea.vmem %s7, 8
  %906 = vst.msk [vmem:[%s905] sm:$0xff] %vm474, %v904
  // Predicated region
  $region30: #{_lambda_.10} parent=0 // pred_check
    _
  $region31: #{_lambda_.10} parent=0 // pred_check_branch
    %908 = sbr.rel (0) target = $region33
  $region32: #{_lambda_.10} parent=0 // pred_region
    _
  $region33: #{_lambda_.10} parent=0 // pred_fallthru
    _
  // Predicated region
  $region34: #{_lambda_.10} parent=0 // pred_check
    _
  $region35: #{_lambda_.10} parent=0 // pred_check_branch
    %910 = sbr.rel (0) target = $region37
  $region36: #{_lambda_.10} parent=0 // pred_region
    _
  $region37: #{_lambda_.10} parent=0 // pred_fallthru
    _

// kernel: tile.84
$region0: #{tile.84}
  %s0 = inlined_call_operand.vmem [shape: f32[4,16,16], index: 0, kind: input, shape index: {}]
  %s1 = inlined_call_operand.vmem [shape: f32[64,16], index: 1, kind: output, shape index: {}]
  $region1: #{tile.84} parent=0
    #allocation0 [shape = 'u8[65536]{0}', space=vmem, size = 0x10000, scoped, tag = 'scoped mem for input reshape']
    %s3 = sshllo.u32 0, 4
    %s4 = smul.addr 4, 15
    %s5 = scalar_lea.vmem %s0, %s4
    %v6 = vld [vmem:[%s5] sm:%s3]
    %s7 = scalar_lea.vmem [#allocation0], 120
    %8 = vst [vmem:[%s7] sm:%s3] %v6
    %s9 = smul.addr 4, 14
    %s10 = scalar_lea.vmem %s0, %s9
    %v11 = vld [vmem:[%s10] sm:%s3]
    %s12 = scalar_lea.vmem [#allocation0], 112
    %13 = vst [vmem:[%s12] sm:%s3] %v11
    %s14 = smul.addr 4, 13
    %s15 = scalar_lea.vmem %s0, %s14
    %v16 = vld [vmem:[%s15] sm:%s3]
    %s17 = scalar_lea.vmem [#allocation0], 104
    %18 = vst [vmem:[%s17] sm:%s3] %v16
    %s19 = smul.addr 4, 12
    %s20 = scalar_lea.vmem %s0, %s19
    %v21 = vld [vmem:[%s20] sm:%s3]
    %s22 = scalar_lea.vmem [#allocation0], 96
    %23 = vst [vmem:[%s22] sm:%s3] %v21
    %s24 = smul.addr 4, 11
    %s25 = scalar_lea.vmem %s0, %s24
    %v26 = vld [vmem:[%s25] sm:%s3]
    %s27 = scalar_lea.vmem [#allocation0], 88
    %28 = vst [vmem:[%s27] sm:%s3] %v26
    %s29 = smul.addr 4, 10
    %s30 = scalar_lea.vmem %s0, %s29
    %v31 = vld [vmem:[%s30] sm:%s3]
    %s32 = scalar_lea.vmem [#allocation0], 80
    %33 = vst [vmem:[%s32] sm:%s3] %v31
    %s34 = smul.addr 4, 9
    %s35 = scalar_lea.vmem %s0, %s34
    %v36 = vld [vmem:[%s35] sm:%s3]
    %s37 = scalar_lea.vmem [#allocation0], 72
    %38 = vst [vmem:[%s37] sm:%s3] %v36
    %s39 = smul.addr 4, 8
    %s40 = scalar_lea.vmem %s0, %s39
    %v41 = vld [vmem:[%s40] sm:%s3]
    %s42 = scalar_lea.vmem [#allocation0], 64
    %43 = vst [vmem:[%s42] sm:%s3] %v41
    %s44 = smul.addr 4, 7
    %s45 = scalar_lea.vmem %s0, %s44
    %v46 = vld [vmem:[%s45] sm:%s3]
    %s47 = scalar_lea.vmem [#allocation0], 56
    %48 = vst [vmem:[%s47] sm:%s3] %v46
    %s49 = smul.addr 4, 6
    %s50 = scalar_lea.vmem %s0, %s49
    %v51 = vld [vmem:[%s50] sm:%s3]
    %s52 = scalar_lea.vmem [#allocation0], 48
    %53 = vst [vmem:[%s52] sm:%s3] %v51
    %s54 = smul.addr 4, 5
    %s55 = scalar_lea.vmem %s0, %s54
    %v56 = vld [vmem:[%s55] sm:%s3]
    %s57 = scalar_lea.vmem [#allocation0], 40
    %58 = vst [vmem:[%s57] sm:%s3] %v56
    %s59 = smul.addr 4, 4
    %s60 = scalar_lea.vmem %s0, %s59
    %v61 = vld [vmem:[%s60] sm:%s3]
    %s62 = scalar_lea.vmem [#allocation0], 32
    %63 = vst [vmem:[%s62] sm:%s3] %v61
    %s64 = smul.addr 4, 3
    %s65 = scalar_lea.vmem %s0, %s64
    %v66 = vld [vmem:[%s65] sm:%s3]
    %s67 = scalar_lea.vmem [#allocation0], 24
    %68 = vst [vmem:[%s67] sm:%s3] %v66
    %s69 = smul.addr 4, 2
    %s70 = scalar_lea.vmem %s0, %s69
    %v71 = vld [vmem:[%s70] sm:%s3]
    %s72 = scalar_lea.vmem [#allocation0], 16
    %73 = vst [vmem:[%s72] sm:%s3] %v71
    %s74 = scalar_lea.vmem %s0, 4
    %v75 = vld [vmem:[%s74] sm:%s3]
    %s76 = scalar_lea.vmem [#allocation0], 8
    %77 = vst [vmem:[%s76] sm:%s3] %v75
    %v78 = vld [vmem:[%s0] sm:%s3]
    %79 = vst [vmem:[#allocation0] sm:%s3] %v78
    %v80 = vld [vmem:[#allocation0] ss:$8 sm:$0xf]
    %v81 = vld [vmem:[#allocation0] ss:$8 sm:$0xf0]
    %vm82 = vcmask 1047556
    %v83 = vsel %vm82, %v81, %v80
    %vm84 = vcmask 130048
    %85 = vst.msk [vmem:[%s1] sm:$0xff] %vm84, %v83
    %s86 = scalar_lea.vmem [#allocation0], 64
    %v87 = vld [vmem:[%s86] ss:$8 sm:$0xf]
    %s88 = scalar_lea.vmem [#allocation0], 64
    %v89 = vld [vmem:[%s88] ss:$8 sm:$0xf0]
    %vm90 = vcmask 1047556
    %v91 = vsel %vm90, %v89, %v87
    %vm92 = vcmask 130048
    %s93 = scalar_lea.vmem %s1, 8
    %94 = vst.msk [vmem:[%s93] sm:$0xff] %vm92, %v91
    %s95 = scalar_lea.vmem [#allocation0], 3
    %v96 = vld [vmem:[%s95] ss:$8 sm:$0xf]
    %s97 = scalar_lea.vmem [#allocation0], 3
    %v98 = vld [vmem:[%s97] ss:$8 sm:$0xf0]
    %vm99 = vcmask 1047556
    %v100 = vsel %vm99, %v98, %v96
    %101 = vrot.lane.b32.xlu0 %v100, 48
    %v102 = vpop.permute.xlu0 %101
    %vm103 = vcmask 523648
    %104 = vst.msk [vmem:[%s1] sm:$0xff] %vm103, %v102
    %s105 = scalar_lea.vmem [#allocation0], 67
    %v106 = vld [vmem:[%s105] ss:$8 sm:$0xf]
    %s107 = scalar_lea.vmem [#allocation0], 67
    %v108 = vld [vmem:[%s107] ss:$8 sm:$0xf0]
    %vm109 = vcmask 1047556
    %v110 = vsel %vm109, %v108, %v106
    %111 = vrot.lane.b32.xlu0 %v110, 48
    %v112 = vpop.permute.xlu0 %111
    %vm113 = vcmask 523648
    %s114 = scalar_lea.vmem %s1, 8
    %115 = vst.msk [vmem:[%s114] sm:$0xff] %vm113, %v112
    %s116 = scalar_lea.vmem [#allocation0], 2
    %v117 = vld [vmem:[%s116] ss:$8 sm:$0xf]
    %s118 = scalar_lea.vmem [#allocation0], 2
    %v119 = vld [vmem:[%s118] ss:$8 sm:$0xf0]
    %vm120 = vcmask 1047556
    %v121 = vsel %vm120, %v119, %v117
    %122 = vrot.lane.b32.xlu0 %v121, 32
    %v123 = vpop.permute.xlu0 %122
    %vm124 = vcmask 392448
    %125 = vst.msk [vmem:[%s1] sm:$0xff] %vm124, %v123
    %s126 = scalar_lea.vmem [#allocation0], 66
    %v127 = vld [vmem:[%s126] ss:$8 sm:$0xf]
    %s128 = scalar_lea.vmem [#allocation0], 66
    %v129 = vld [vmem:[%s128] ss:$8 sm:$0xf0]
    %vm130 = vcmask 1047556
    %v131 = vsel %vm130, %v129, %v127
    %132 = vrot.lane.b32.xlu0 %v131, 32
    %v133 = vpop.permute.xlu0 %132
    %vm134 = vcmask 392448
    %s135 = scalar_lea.vmem %s1, 8
    %136 = vst.msk [vmem:[%s135] sm:$0xff] %vm134, %v133
    %s137 = scalar_lea.vmem [#allocation0], 1
    %v138 = vld [vmem:[%s137] ss:$8 sm:$0xf]
    %s139 = scalar_lea.vmem [#allocation0], 1
    %v140 = vld [vmem:[%s139] ss:$8 sm:$0xf0]
    %vm141 = vcmask 1047556
    %v142 = vsel %vm141, %v140, %v138
    %143 = vrot.lane.b32.xlu0 %v142, 16
    %v144 = vpop.permute.xlu0 %143
    %vm145 = vcmask 261248
    %146 = vst.msk [vmem:[%s1] sm:$0xff] %vm145, %v144
    %s147 = scalar_lea.vmem [#allocation0], 65
    %v148 = vld [vmem:[%s147] ss:$8 sm:$0xf]
    %s149 = scalar_lea.vmem [#allocation0], 65
    %v150 = vld [vmem:[%s149] ss:$8 sm:$0xf0]
    %vm151 = vcmask 1047556
    %v152 = vsel %vm151, %v150, %v148
    %153 = vrot.lane.b32.xlu0 %v152, 16
    %v154 = vpop.permute.xlu0 %153
    %vm155 = vcmask 261248
    %s156 = scalar_lea.vmem %s1, 8
    %157 = vst.msk [vmem:[%s156] sm:$0xff] %vm155, %v154

// kernel: tile.78
$region0: #{tile.78}
  #allocation0 [shape = 's32[1]{0}', space=sflag, size = 0x4, scoped, tag = 'scoped memory for tile.78']
  %s0 = inlined_call_operand.vmem [shape: f32[16], index: 0, kind: input, shape index: {}]
  %s1 = inlined_call_operand.vmem [shape: f32[4,16], index: 1, kind: output, shape index: {}]
  // Predicated region
  $region2: #{tile.78} parent=0 // pred_check
    _
  $region3: #{tile.78} parent=0 // pred_check_branch
    %3 = sbr.rel (0) target = $region5
  $region4: #{tile.78} parent=0 // pred_region
    _
  $region5: #{tile.78} parent=0 // pred_fallthru
    _
  %v4 = vld [vmem:[%s0] ss:$0 sm:$0xff]
  %5 = vst [vmem:[%s1] sm:$0xf] %v4

// kernel: tile.79
$region0: #{tile.79}
  %s0 = inlined_call_operand.vmem [shape: f32[4,16], index: 0, kind: input, shape index: {}]
  %s1 = inlined_call_operand.vmem [shape: f32[1,64], index: 1, kind: output, shape index: {}]
  $region1: #{tile.79} parent=0
    #allocation0 [shape = 'u8[4096]{0}', space=vmem, size = 0x1000, scoped, tag = 'scoped mem for output reshape']
    #allocation1 [shape = 'u8[4096]{0}', space=vmem, size = 0x1000, scoped, tag = 'scoped mem for input reshape']
    %s3 = sshllo.u32 0, 4
    %v4 = vld [vmem:[%s0] sm:%s3]
    %5 = vst [vmem:[#allocation1] sm:%s3] %v4
    %v6 = vld [vmem:[#allocation1] sm:$0x1]
    %vm7 = vcmask 130048
    %8 = vst.msk [vmem:[#allocation0] sm:$0x1] %vm7, %v6
    %s9 = scalar_lea.vmem [#allocation1], 3
    %v10 = vld [vmem:[%s9] sm:$0x1]
    %11 = vrot.lane.b32.xlu0 %v10, 48
    %v12 = vpop.permute.xlu0 %11
    %vm13 = vcmask 523648
    %14 = vst.msk [vmem:[#allocation0] sm:$0x1] %vm13, %v12
    %s15 = scalar_lea.vmem [#allocation1], 2
    %v16 = vld [vmem:[%s15] sm:$0x1]
    %17 = vrot.lane.b32.xlu0 %v16, 32
    %v18 = vpop.permute.xlu0 %17
    %vm19 = vcmask 392448
    %20 = vst.msk [vmem:[#allocation0] sm:$0x1] %vm19, %v18
    %s21 = scalar_lea.vmem [#allocation1], 1
    %v22 = vld [vmem:[%s21] sm:$0x1]
    %23 = vrot.lane.b32.xlu0 %v22, 16
    %v24 = vpop.permute.xlu0 %23
    %vm25 = vcmask 261248
    %26 = vst.msk [vmem:[#allocation0] sm:$0x1] %vm25, %v24
    %s28 = sshllo.u32 0, 1
    %v30 = vld [vmem:[#allocation0] sm:%s28]
    %s31 = sshllo.u32 0, 1
    %32 = vst [vmem:[%s1] sm:%s31] %v30

// kernel: squeeze.7
$region0: #{squeeze.7}
  %s0 = inlined_call_operand.vmem [shape: f32[1,2,4,64], index: 0, kind: input, shape index: {}]
  %s1 = inlined_call_operand.vmem [shape: f32[2,4,4,16], index: 1, kind: output, shape index: {}]
  $region1: #{squeeze.7} parent=0
    #allocation0 [shape = 'u8[32768]{0}', space=vmem, size = 0x8000, scoped, tag = 'scoped mem for output reshape']
    #allocation1 [shape = 'u8[8192]{0}', space=vmem, size = 0x2000, scoped, tag = 'scoped mem for input reshape']
    %s3 = sshllo.u32 0, 4
    %s4 = scalar_lea.vmem %s0, 4
    %v5 = vld [vmem:[%s4] sm:%s3]
    %s6 = scalar_lea.vmem [#allocation1], 8
    %7 = vst [vmem:[%s6] sm:%s3] %v5
    %v8 = vld [vmem:[%s0] sm:%s3]
    %9 = vst [vmem:[#allocation1] sm:%s3] %v8
    %v10 = vld [vmem:[#allocation1] sm:$0xf]
    %vm11 = vcmask 130048
    %12 = vst.msk [vmem:[#allocation0] ss:$8 sm:$0xf] %vm11, %v10
    %s13 = scalar_lea.vmem [#allocation1], 8
    %v14 = vld [vmem:[%s13] sm:$0xf]
    %vm15 = vcmask 130048
    %s16 = scalar_lea.vmem [#allocation0], 32
    %17 = vst.msk [vmem:[%s16] ss:$8 sm:$0xf] %vm15, %v14
    %v18 = vld.sshfl [vmem:[#allocation1] sm:$0xff pattern:$0xba983210]
    %19 = vrot.lane.b32.xlu0 %v18, 112
    %v20 = vpop.permute.xlu0 %19
    %vm21 = vcmask 130048
    %s22 = scalar_lea.vmem [#allocation0], 1
    %23 = vst.msk [vmem:[%s22] ss:$8 sm:$0xf] %vm21, %v20
    %s24 = scalar_lea.vmem [#allocation0], 1
    %25 = vst.msk [vmem:[%s24] ss:$8 sm:$0xf0] %vm21, %v20
    %v26 = vld.sshfl [vmem:[#allocation1] sm:$0xff pattern:$0xba983210]
    %27 = vrot.lane.b32.xlu0 %v26, 96
    %v28 = vpop.permute.xlu0 %27
    %vm29 = vcmask 130048
    %s30 = scalar_lea.vmem [#allocation0], 2
    %31 = vst.msk [vmem:[%s30] ss:$8 sm:$0xf] %vm29, %v28
    %s32 = scalar_lea.vmem [#allocation0], 2
    %33 = vst.msk [vmem:[%s32] ss:$8 sm:$0xf0] %vm29, %v28
    %v34 = vld.sshfl [vmem:[#allocation1] sm:$0xff pattern:$0xba983210]
    %35 = vrot.lane.b32.xlu0 %v34, 80
    %v36 = vpop.permute.xlu0 %35
    %vm37 = vcmask 130048
    %s38 = scalar_lea.vmem [#allocation0], 3
    %39 = vst.msk [vmem:[%s38] ss:$8 sm:$0xf] %vm37, %v36
    %s40 = scalar_lea.vmem [#allocation0], 3
    %41 = vst.msk [vmem:[%s40] ss:$8 sm:$0xf0] %vm37, %v36
    %s43 = sshllo.u32 0, 4
    %v45 = vld [vmem:[#allocation0] sm:%s43]
    %s46 = sshllo.u32 0, 4
    %47 = vst [vmem:[%s1] sm:%s46] %v45
    %s48 = scalar_lea.vmem [#allocation0], 8
    %v49 = vld [vmem:[%s48] sm:%s43]
    %s50 = sshllo.u32 0, 4
    %s51 = scalar_lea.vmem %s1, 4
    %52 = vst [vmem:[%s51] sm:%s50] %v49
    %s53 = scalar_lea.vmem [#allocation0], 16
    %v54 = vld [vmem:[%s53] sm:%s43]
    %s55 = sshllo.u32 0, 4
    %s56 = smul.addr 4, 2
    %s57 = scalar_lea.vmem %s1, %s56
    %58 = vst [vmem:[%s57] sm:%s55] %v54
    %s59 = scalar_lea.vmem [#allocation0], 24
    %v60 = vld [vmem:[%s59] sm:%s43]
    %s61 = sshllo.u32 0, 4
    %s62 = smul.addr 4, 3
    %s63 = scalar_lea.vmem %s1, %s62
    %64 = vst [vmem:[%s63] sm:%s61] %v60
    %s65 = scalar_lea.vmem [#allocation0], 32
    %v66 = vld [vmem:[%s65] sm:%s43]
    %s67 = sshllo.u32 0, 4
    %s68 = smul.addr 4, 4
    %s69 = scalar_lea.vmem %s1, %s68
    %70 = vst [vmem:[%s69] sm:%s67] %v66
    %s71 = scalar_lea.vmem [#allocation0], 40
    %v72 = vld [vmem:[%s71] sm:%s43]
    %s73 = sshllo.u32 0, 4
    %s74 = smul.addr 4, 5
    %s75 = scalar_lea.vmem %s1, %s74
    %76 = vst [vmem:[%s75] sm:%s73] %v72
    %s77 = scalar_lea.vmem [#allocation0], 48
    %v78 = vld [vmem:[%s77] sm:%s43]
    %s79 = sshllo.u32 0, 4
    %s80 = smul.addr 4, 6
    %s81 = scalar_lea.vmem %s1, %s80
    %82 = vst [vmem:[%s81] sm:%s79] %v78
    %s83 = scalar_lea.vmem [#allocation0], 56
    %v84 = vld [vmem:[%s83] sm:%s43]
    %s85 = sshllo.u32 0, 4
    %s86 = smul.addr 4, 7
    %s87 = scalar_lea.vmem %s1, %s86
    %88 = vst [vmem:[%s87] sm:%s85] %v84

// kernel: _lambda_.11
$region0: #{_lambda_.11}
  #allocation0 [shape = 'u32[]', space=smem, size = 0x4, offset = 0x4, fixed_abs, tag = 'smem constant byte address 0x4 - core index']
  #allocation1 [shape = 'u32[144,128]{1,0:T(1,128)}', space=vmem, size = 0x12000, scoped, tag = 'internal scratch']
  %s0 = inlined_call_operand.vmem [shape: f32[2,2,5,80], index: 0, kind: input, shape index: {}]
  %s1 = inlined_call_operand.vmem [shape: bf16[3,80,64], index: 1, kind: input, shape index: {}]
  %s2 = inlined_call_operand.vmem [shape: f32[1,64], index: 2, kind: input, shape index: {}]
  %s3 = inlined_call_operand.vmem [shape: f32[1,16], index: 3, kind: input, shape index: {}]
  %s4 = inlined_call_operand.vmem [shape: f32[1,16], index: 4, kind: input, shape index: {}]
  %s5 = inlined_call_operand.vmem [shape: f32[64,16], index: 5, kind: input, shape index: {}]
  %s6 = inlined_call_operand.vmem [shape: f32[16,64], index: 6, kind: input, shape index: {}]
  %s7 = inlined_call_operand.vmem [shape: f32[1,2,4,64], index: 7, kind: output, shape index: {}]
  %s8 = sld [smem:[#allocation0]]
  $region38: #{_lambda_.11} parent=0
    _
  %s10 = ssub.s32 1, %s8
  %s11 = scalar_select 0, %s10, %s8
  // Predicated region
  $region2: #{_lambda_.11} parent=0 // pred_check
    _
  $region3: #{_lambda_.11} parent=0 // pred_check_branch
    %13 = sbr.rel (0) target = $region5
  $region4: #{_lambda_.11} parent=0 // pred_region
    _
  $region5: #{_lambda_.11} parent=0 // pred_fallthru
    _
  // Predicated region
  $region6: #{_lambda_.11} parent=0 // pred_check
    _
  $region7: #{_lambda_.11} parent=0 // pred_check_branch
    %15 = sbr.rel (0) target = $region9
  $region8: #{_lambda_.11} parent=0 // pred_region
    _
  $region9: #{_lambda_.11} parent=0 // pred_fallthru
    _
  // Predicated region
  $region10: #{_lambda_.11} parent=0 // pred_check
    _
  $region11: #{_lambda_.11} parent=0 // pred_check_branch
    %17 = sbr.rel (0) target = $region13
  $region12: #{_lambda_.11} parent=0 // pred_region
    _
  $region13: #{_lambda_.11} parent=0 // pred_fallthru
    _
  // Predicated region
  $region14: #{_lambda_.11} parent=0 // pred_check
    _
  $region15: #{_lambda_.11} parent=0 // pred_check_branch
    %19 = sbr.rel (0) target = $region17
  $region16: #{_lambda_.11} parent=0 // pred_region
    _
  $region17: #{_lambda_.11} parent=0 // pred_fallthru
    _
  // Predicated region
  $region18: #{_lambda_.11} parent=0 // pred_check
    _
  $region19: #{_lambda_.11} parent=0 // pred_check_branch
    %21 = sbr.rel (0) target = $region21
  $region20: #{_lambda_.11} parent=0 // pred_region
    _
  $region21: #{_lambda_.11} parent=0 // pred_fallthru
    _
  // Predicated region
  $region22: #{_lambda_.11} parent=0 // pred_check
    _
  $region23: #{_lambda_.11} parent=0 // pred_check_branch
    %23 = sbr.rel (0) target = $region25
  $region24: #{_lambda_.11} parent=0 // pred_region
    _
  $region25: #{_lambda_.11} parent=0 // pred_fallthru
    _
  // Predicated region
  $region26: #{_lambda_.11} parent=0 // pred_check
    _
  $region27: #{_lambda_.11} parent=0 // pred_check_branch
    %25 = sbr.rel (0) target = $region29
  $region28: #{_lambda_.11} parent=0 // pred_region
    _
  $region29: #{_lambda_.11} parent=0 // pred_fallthru
    _
  %v27 = vld [vmem:[%s2] sm:$0x1]
  %v28 = vld [vmem:[%s1] sm:$0xf]
  %v29 = vld [vmem:[%s1 + $0x4] sm:$0xf]
  %v30 = vld [vmem:[%s1 + $0x8] sm:$0xf]
  %v31 = vld [vmem:[%s1 + $0xc] sm:$0xf]
  %v32 = vld [vmem:[%s1 + $0x10] sm:$0xf]
  %v33 = vld [vmem:[%s1 + $0x14] sm:$0xf]
  %v34 = vld [vmem:[%s1 + $0x18] sm:$0xf]
  %v35 = vld [vmem:[%s1 + $0x1c] sm:$0xf]
  %v36 = vld [vmem:[%s1 + $0x20] sm:$0xf]
  %v37 = vld [vmem:[%s1 + $0x24] sm:$0xf]
  %s38 = scalar_lea.vmem %s1, 40
  %v39 = vld [vmem:[%s38] sm:$0xf]
  %v40 = vld [vmem:[%s38 + $0x4] sm:$0xf]
  %v41 = vld [vmem:[%s38 + $0x8] sm:$0xf]
  %v42 = vld [vmem:[%s38 + $0xc] sm:$0xf]
  %v43 = vld [vmem:[%s38 + $0x10] sm:$0xf]
  %v44 = vld [vmem:[%s38 + $0x14] sm:$0xf]
  %v45 = vld [vmem:[%s38 + $0x18] sm:$0xf]
  %v46 = vld [vmem:[%s38 + $0x1c] sm:$0xf]
  %v47 = vld [vmem:[%s38 + $0x20] sm:$0xf]
  %v48 = vld [vmem:[%s38 + $0x24] sm:$0xf]
  %s49 = scalar_lea.vmem %s1, 80
  %v50 = vld [vmem:[%s49] sm:$0xf]
  %v51 = vld [vmem:[%s49 + $0x4] sm:$0xf]
  %v52 = vld [vmem:[%s49 + $0x8] sm:$0xf]
  %v53 = vld [vmem:[%s49 + $0xc] sm:$0xf]
  %v54 = vld [vmem:[%s49 + $0x10] sm:$0xf]
  %v55 = vld [vmem:[%s49 + $0x14] sm:$0xf]
  %v56 = vld [vmem:[%s49 + $0x18] sm:$0xf]
  %v57 = vld [vmem:[%s49 + $0x1c] sm:$0xf]
  %v58 = vld [vmem:[%s49 + $0x20] sm:$0xf]
  %v59 = vld [vmem:[%s49 + $0x24] sm:$0xf]
  %v60 = vld [vmem:[%s0] sm:$0xf]
  %v61 = vpack.c.bf16 %v60, %v60
  %s62 = scalar_lea.vmem %s0, 16
  %v63 = vld [vmem:[%s62] sm:$0xf]
  %v64 = vpack.c.bf16 %v63, %v63
  %v75 = vunpack.c.l.b16 %v39
  %v76 = vunpack.c.l.b16 %v40
  %v77 = vunpack.c.l.b16 %v41
  %v78 = vunpack.c.l.b16 %v42
  %v79 = vunpack.c.l.b16 %v43
  %v80 = vunpack.c.l.b16 %v44
  %v81 = vunpack.c.l.b16 %v45
  %v82 = vunpack.c.l.b16 %v46
  %v83 = vunpack.c.l.b16 %v47
  %v84 = vunpack.c.l.b16 %v48
  %v85 = vpack.c.b16 %v76, %v75
  %v86 = vpack.c.b16 %v78, %v77
  %v87 = vpack.c.b16 %v80, %v79
  %v88 = vpack.c.b16 %v82, %v81
  %v89 = vpack.c.b16 %v84, %v83
  %vm95 = vcmask 654336
  %v97 = vsel %vm95, %v64, 0
  %99 = vmatprep.subr.bf16.mxu0 0
  %100 = vmatpush1.bf16.msra.mxu0 %v85
  %101 = vmatprep.subr.bf16.mxu0 0
  %102 = vmatpush1.bf16.msra.mxu0 %v86
  %103 = vmatprep.subr.bf16.mxu0 0
  %104 = vmatpush1.bf16.msra.mxu0 %v87
  %105 = vmatprep.subr.bf16.mxu0 0
  %106 = vmatpush1.bf16.msra.mxu0 %v88
  %107 = vmatprep.subr.bf16.mxu0 0
  %108 = vmatpush1.bf16.msra.mxu0 %v89
  %109 = vmatprep.subr.bf16.mxu0 0
  %110 = vmatpush1.bf16.msra.mxu0 0
  %111 = vmatprep.subr.bf16.mxu0 0
  %112 = vmatpush1.bf16.msra.mxu0 0
  %113 = vmatprep.subr.bf16.mxu0 0
  %114 = vmatpush1.bf16.msra.mxu0 0
  %115 = vmatprep.subr.bf16.mxu0 0
  %116 = vmatpush1.bf16.msra.mxu0 0
  %117 = vmatprep.subr.bf16.mxu0 0
  %118 = vmatpush1.bf16.msra.mxu0 0
  %119 = vmatprep.subr.bf16.mxu0 0
  %120 = vmatpush1.bf16.msra.mxu0 0
  %121 = vmatprep.subr.bf16.mxu0 0
  %122 = vmatpush1.bf16.msra.mxu0 0
  %123 = vmatprep.subr.bf16.mxu0 0
  %124 = vmatpush1.bf16.msra.mxu0 0
  %125 = vmatprep.subr.bf16.mxu0 0
  %126 = vmatpush1.bf16.msra.mxu0 0
  %127 = vmatprep.subr.bf16.mxu0 0
  %128 = vmatpush1.bf16.msra.mxu0 0
  %129 = vmatprep.subr.bf16.mxu0 0
  %130 = vmatpush1.bf16.msra.mxu0 0
  %131 = vmatprep.mubr.bf16.mxu0 0
  %132 = vmatmul.mubr.bf16.gmra.mrb[0].mxu0 %v97
  %v133 = vpop.f32.mrb[0].mxu0
  %v134 = vadd.f32 0.0, %v133
  %v135 = vpop.f32.mrb[0].mxu0
  %v136 = vpop.f32.mrb[0].mxu0
  %v137 = vpop.f32.mrb[0].mxu0
  %138 = vdwg.mxu0
  %v149 = vunpack.c.l.b16 %v28
  %v150 = vunpack.c.l.b16 %v29
  %v151 = vunpack.c.l.b16 %v30
  %v152 = vunpack.c.l.b16 %v31
  %v153 = vunpack.c.l.b16 %v32
  %v154 = vunpack.c.l.b16 %v33
  %v155 = vunpack.c.l.b16 %v34
  %v156 = vunpack.c.l.b16 %v35
  %v157 = vunpack.c.l.b16 %v36
  %v158 = vunpack.c.l.b16 %v37
  %v159 = vpack.c.b16 %v150, %v149
  %v160 = vpack.c.b16 %v152, %v151
  %v161 = vpack.c.b16 %v154, %v153
  %v162 = vpack.c.b16 %v156, %v155
  %v163 = vpack.c.b16 %v158, %v157
  %v170 = vsel %vm95, %v61, 0
  %172 = vmatprep.subr.bf16.mxu0 0
  %173 = vmatpush1.bf16.msra.mxu0 %v159
  %174 = vmatprep.subr.bf16.mxu0 0
  %175 = vmatpush1.bf16.msra.mxu0 %v160
  %176 = vmatprep.subr.bf16.mxu0 0
  %177 = vmatpush1.bf16.msra.mxu0 %v161
  %178 = vmatprep.subr.bf16.mxu0 0
  %179 = vmatpush1.bf16.msra.mxu0 %v162
  %180 = vmatprep.subr.bf16.mxu0 0
  %181 = vmatpush1.bf16.msra.mxu0 %v163
  %182 = vmatprep.subr.bf16.mxu0 0
  %183 = vmatpush1.bf16.msra.mxu0 0
  %184 = vmatprep.subr.bf16.mxu0 0
  %185 = vmatpush1.bf16.msra.mxu0 0
  %186 = vmatprep.subr.bf16.mxu0 0
  %187 = vmatpush1.bf16.msra.mxu0 0
  %188 = vmatprep.subr.bf16.mxu0 0
  %189 = vmatpush1.bf16.msra.mxu0 0
  %190 = vmatprep.subr.bf16.mxu0 0
  %191 = vmatpush1.bf16.msra.mxu0 0
  %192 = vmatprep.subr.bf16.mxu0 0
  %193 = vmatpush1.bf16.msra.mxu0 0
  %194 = vmatprep.subr.bf16.mxu0 0
  %195 = vmatpush1.bf16.msra.mxu0 0
  %196 = vmatprep.subr.bf16.mxu0 0
  %197 = vmatpush1.bf16.msra.mxu0 0
  %198 = vmatprep.subr.bf16.mxu0 0
  %199 = vmatpush1.bf16.msra.mxu0 0
  %200 = vmatprep.subr.bf16.mxu0 0
  %201 = vmatpush1.bf16.msra.mxu0 0
  %202 = vmatprep.subr.bf16.mxu0 0
  %203 = vmatpush1.bf16.msra.mxu0 0
  %204 = vmatprep.mubr.bf16.mxu0 0
  %205 = vmatmul.mubr.bf16.gmra.mrb[0].mxu0 %v170
  %v206 = vpop.f32.mrb[0].mxu0
  %v207 = vadd.f32 %v134, %v206
  %v208 = vpop.f32.mrb[0].mxu0
  %v209 = vpop.f32.mrb[0].mxu0
  %v210 = vpop.f32.mrb[0].mxu0
  %211 = vdwg.mxu0
  %v212 = vld [vmem:[%s0 + $0x1] sm:$0xf]
  %v213 = vpack.c.bf16 %v212, %v212
  %v224 = vunpack.c.l.b16 %v50
  %v225 = vunpack.c.l.b16 %v51
  %v226 = vunpack.c.l.b16 %v52
  %v227 = vunpack.c.l.b16 %v53
  %v228 = vunpack.c.l.b16 %v54
  %v229 = vunpack.c.l.b16 %v55
  %v230 = vunpack.c.l.b16 %v56
  %v231 = vunpack.c.l.b16 %v57
  %v232 = vunpack.c.l.b16 %v58
  %v233 = vunpack.c.l.b16 %v59
  %v234 = vpack.c.b16 %v225, %v224
  %v235 = vpack.c.b16 %v227, %v226
  %v236 = vpack.c.b16 %v229, %v228
  %v237 = vpack.c.b16 %v231, %v230
  %v238 = vpack.c.b16 %v233, %v232
  %v245 = vsel %vm95, %v213, 0
  %247 = vmatprep.subr.bf16.mxu0 0
  %248 = vmatpush1.bf16.msra.mxu0 %v234
  %249 = vmatprep.subr.bf16.mxu0 0
  %250 = vmatpush1.bf16.msra.mxu0 %v235
  %251 = vmatprep.subr.bf16.mxu0 0
  %252 = vmatpush1.bf16.msra.mxu0 %v236
  %253 = vmatprep.subr.bf16.mxu0 0
  %254 = vmatpush1.bf16.msra.mxu0 %v237
  %255 = vmatprep.subr.bf16.mxu0 0
  %256 = vmatpush1.bf16.msra.mxu0 %v238
  %257 = vmatprep.subr.bf16.mxu0 0
  %258 = vmatpush1.bf16.msra.mxu0 0
  %259 = vmatprep.subr.bf16.mxu0 0
  %260 = vmatpush1.bf16.msra.mxu0 0
  %261 = vmatprep.subr.bf16.mxu0 0
  %262 = vmatpush1.bf16.msra.mxu0 0
  %263 = vmatprep.subr.bf16.mxu0 0
  %264 = vmatpush1.bf16.msra.mxu0 0
  %265 = vmatprep.subr.bf16.mxu0 0
  %266 = vmatpush1.bf16.msra.mxu0 0
  %267 = vmatprep.subr.bf16.mxu0 0
  %268 = vmatpush1.bf16.msra.mxu0 0
  %269 = vmatprep.subr.bf16.mxu0 0
  %270 = vmatpush1.bf16.msra.mxu0 0
  %271 = vmatprep.subr.bf16.mxu0 0
  %272 = vmatpush1.bf16.msra.mxu0 0
  %273 = vmatprep.subr.bf16.mxu0 0
  %274 = vmatpush1.bf16.msra.mxu0 0
  %275 = vmatprep.subr.bf16.mxu0 0
  %276 = vmatpush1.bf16.msra.mxu0 0
  %277 = vmatprep.subr.bf16.mxu0 0
  %278 = vmatpush1.bf16.msra.mxu0 0
  %279 = vmatprep.mubr.bf16.mxu0 0
  %280 = vmatmul.mubr.bf16.gmra.mrb[0].mxu0 %v245
  %v281 = vpop.f32.mrb[0].mxu0
  %v282 = vadd.f32 0.0, %v281
  %v283 = vpop.f32.mrb[0].mxu0
  %v284 = vpop.f32.mrb[0].mxu0
  %v285 = vpop.f32.mrb[0].mxu0
  %286 = vdwg.mxu0
  %v287 = vadd.f32 %v207, %v282
  %v289 = vlaneseq
  %v290 = vshrl.u32 %v289, 7
  %v291 = vsub.s32 0, %v290
  %v292 = vrot.slane %v27, %v291
  %v294 = vadd.f32 %v287, %v292
  %s295 = scalar_lea.vmem %s0, 8
  %v296 = vld [vmem:[%s295] sm:$0xf]
  %v297 = vpack.c.bf16 %v296, %v296
  %s298 = scalar_lea.vmem %s0, 24
  %v299 = vld [vmem:[%s298] sm:$0xf]
  %v300 = vpack.c.bf16 %v299, %v299
  %v302 = vsel %vm95, %v300, 0
  %304 = vmatprep.subr.bf16.mxu0 0
  %305 = vmatpush1.bf16.msra.mxu0 %v85
  %306 = vmatprep.subr.bf16.mxu0 0
  %307 = vmatpush1.bf16.msra.mxu0 %v86
  %308 = vmatprep.subr.bf16.mxu0 0
  %309 = vmatpush1.bf16.msra.mxu0 %v87
  %310 = vmatprep.subr.bf16.mxu0 0
  %311 = vmatpush1.bf16.msra.mxu0 %v88
  %312 = vmatprep.subr.bf16.mxu0 0
  %313 = vmatpush1.bf16.msra.mxu0 %v89
  %314 = vmatprep.subr.bf16.mxu0 0
  %315 = vmatpush1.bf16.msra.mxu0 0
  %316 = vmatprep.subr.bf16.mxu0 0
  %317 = vmatpush1.bf16.msra.mxu0 0
  %318 = vmatprep.subr.bf16.mxu0 0
  %319 = vmatpush1.bf16.msra.mxu0 0
  %320 = vmatprep.subr.bf16.mxu0 0
  %321 = vmatpush1.bf16.msra.mxu0 0
  %322 = vmatprep.subr.bf16.mxu0 0
  %323 = vmatpush1.bf16.msra.mxu0 0
  %324 = vmatprep.subr.bf16.mxu0 0
  %325 = vmatpush1.bf16.msra.mxu0 0
  %326 = vmatprep.subr.bf16.mxu0 0
  %327 = vmatpush1.bf16.msra.mxu0 0
  %328 = vmatprep.subr.bf16.mxu0 0
  %329 = vmatpush1.bf16.msra.mxu0 0
  %330 = vmatprep.subr.bf16.mxu0 0
  %331 = vmatpush1.bf16.msra.mxu0 0
  %332 = vmatprep.subr.bf16.mxu0 0
  %333 = vmatpush1.bf16.msra.mxu0 0
  %334 = vmatprep.subr.bf16.mxu0 0
  %335 = vmatpush1.bf16.msra.mxu0 0
  %336 = vmatprep.mubr.bf16.mxu0 0
  %337 = vmatmul.mubr.bf16.gmra.mrb[0].mxu0 %v302
  %v338 = vpop.f32.mrb[0].mxu0
  %v339 = vadd.f32 0.0, %v338
  %v340 = vpop.f32.mrb[0].mxu0
  %v341 = vpop.f32.mrb[0].mxu0
  %v342 = vpop.f32.mrb[0].mxu0
  %343 = vdwg.mxu0
  %v345 = vsel %vm95, %v297, 0
  %347 = vmatprep.subr.bf16.mxu0 0
  %348 = vmatpush1.bf16.msra.mxu0 %v159
  %349 = vmatprep.subr.bf16.mxu0 0
  %350 = vmatpush1.bf16.msra.mxu0 %v160
  %351 = vmatprep.subr.bf16.mxu0 0
  %352 = vmatpush1.bf16.msra.mxu0 %v161
  %353 = vmatprep.subr.bf16.mxu0 0
  %354 = vmatpush1.bf16.msra.mxu0 %v162
  %355 = vmatprep.subr.bf16.mxu0 0
  %356 = vmatpush1.bf16.msra.mxu0 %v163
  %357 = vmatprep.subr.bf16.mxu0 0
  %358 = vmatpush1.bf16.msra.mxu0 0
  %359 = vmatprep.subr.bf16.mxu0 0
  %360 = vmatpush1.bf16.msra.mxu0 0
  %361 = vmatprep.subr.bf16.mxu0 0
  %362 = vmatpush1.bf16.msra.mxu0 0
  %363 = vmatprep.subr.bf16.mxu0 0
  %364 = vmatpush1.bf16.msra.mxu0 0
  %365 = vmatprep.subr.bf16.mxu0 0
  %366 = vmatpush1.bf16.msra.mxu0 0
  %367 = vmatprep.subr.bf16.mxu0 0
  %368 = vmatpush1.bf16.msra.mxu0 0
  %369 = vmatprep.subr.bf16.mxu0 0
  %370 = vmatpush1.bf16.msra.mxu0 0
  %371 = vmatprep.subr.bf16.mxu0 0
  %372 = vmatpush1.bf16.msra.mxu0 0
  %373 = vmatprep.subr.bf16.mxu0 0
  %374 = vmatpush1.bf16.msra.mxu0 0
  %375 = vmatprep.subr.bf16.mxu0 0
  %376 = vmatpush1.bf16.msra.mxu0 0
  %377 = vmatprep.subr.bf16.mxu0 0
  %378 = vmatpush1.bf16.msra.mxu0 0
  %379 = vmatprep.mubr.bf16.mxu0 0
  %380 = vmatmul.mubr.bf16.gmra.mrb[0].mxu0 %v345
  %v381 = vpop.f32.mrb[0].mxu0
  %v382 = vadd.f32 %v339, %v381
  %v383 = vpop.f32.mrb[0].mxu0
  %v384 = vpop.f32.mrb[0].mxu0
  %v385 = vpop.f32.mrb[0].mxu0
  %386 = vdwg.mxu0
  %v387 = vld [vmem:[%s295 + $0x1] sm:$0xf]
  %v388 = vpack.c.bf16 %v387, %v387
  %v390 = vsel %vm95, %v388, 0
  %392 = vmatprep.subr.bf16.mxu0 0
  %393 = vmatpush1.bf16.msra.mxu0 %v234
  %394 = vmatprep.subr.bf16.mxu0 0
  %395 = vmatpush1.bf16.msra.mxu0 %v235
  %396 = vmatprep.subr.bf16.mxu0 0
  %397 = vmatpush1.bf16.msra.mxu0 %v236
  %398 = vmatprep.subr.bf16.mxu0 0
  %399 = vmatpush1.bf16.msra.mxu0 %v237
  %400 = vmatprep.subr.bf16.mxu0 0
  %401 = vmatpush1.bf16.msra.mxu0 %v238
  %402 = vmatprep.subr.bf16.mxu0 0
  %403 = vmatpush1.bf16.msra.mxu0 0
  %404 = vmatprep.subr.bf16.mxu0 0
  %405 = vmatpush1.bf16.msra.mxu0 0
  %406 = vmatprep.subr.bf16.mxu0 0
  %407 = vmatpush1.bf16.msra.mxu0 0
  %408 = vmatprep.subr.bf16.mxu0 0
  %409 = vmatpush1.bf16.msra.mxu0 0
  %410 = vmatprep.subr.bf16.mxu0 0
  %411 = vmatpush1.bf16.msra.mxu0 0
  %412 = vmatprep.subr.bf16.mxu0 0
  %413 = vmatpush1.bf16.msra.mxu0 0
  %414 = vmatprep.subr.bf16.mxu0 0
  %415 = vmatpush1.bf16.msra.mxu0 0
  %416 = vmatprep.subr.bf16.mxu0 0
  %417 = vmatpush1.bf16.msra.mxu0 0
  %418 = vmatprep.subr.bf16.mxu0 0
  %419 = vmatpush1.bf16.msra.mxu0 0
  %420 = vmatprep.subr.bf16.mxu0 0
  %421 = vmatpush1.bf16.msra.mxu0 0
  %422 = vmatprep.subr.bf16.mxu0 0
  %423 = vmatpush1.bf16.msra.mxu0 0
  %424 = vmatprep.mubr.bf16.mxu0 0
  %425 = vmatmul.mubr.bf16.gmra.mrb[0].mxu0 %v390
  %v426 = vpop.f32.mrb[0].mxu0
  %v427 = vadd.f32 0.0, %v426
  %v428 = vpop.f32.mrb[0].mxu0
  %v429 = vpop.f32.mrb[0].mxu0
  %v430 = vpop.f32.mrb[0].mxu0
  %431 = vdwg.mxu0
  %v432 = vadd.f32 %v382, %v427
  %v433 = vadd.f32 %v432, %v292
  %v434 = vld [vmem:[%s5] sm:$0xff]
  %v435 = vld [vmem:[%s5 + $0x8] sm:$0xff]
  %v436 = vld [vmem:[%s5 + $0x10] sm:$0xff]
  %v437 = vld [vmem:[%s5 + $0x18] sm:$0xff]
  %v438 = vld [vmem:[%s5 + $0x20] sm:$0xff]
  %v439 = vld [vmem:[%s5 + $0x28] sm:$0xff]
  %v440 = vld [vmem:[%s5 + $0x30] sm:$0xff]
  %v441 = vld [vmem:[%s5 + $0x38] sm:$0xff]
  %v442 = vld [vmem:[%s6] sm:$0xff]
  %v443 = vld [vmem:[%s6 + $0x8] sm:$0xff]
  %vm444 = vcmask 519168
  %v445 = vsel %vm444, %v294, 0.0
  %v446 = vrot.slane %v445, 4
  %v447 = vadd.f32 %v445, %v446
  %v448 = vrot.slane %v447, 2
  %v449 = vadd.f32 %v447, %v448
  %v450 = vrot.slane %v449, 1
  %v451 = vadd.f32 %v449, %v450
  %v452 = vsel %vm444, %v433, 0.0
  %v453 = vrot.slane %v452, 4
  %v454 = vadd.f32 %v452, %v453
  %v455 = vrot.slane %v454, 2
  %v456 = vadd.f32 %v454, %v455
  %v457 = vrot.slane %v456, 1
  %v458 = vadd.f32 %v456, %v457
  %v459 = vadd.f32 %v451, %v458
  %vm460 = vcmask 523264
  %v462 = vsel %vm460, %v459, 0
  %464 = vmatprep.subr.mxu0 0.0
  %465 = vmatpush1.msra.mxu0 %v434
  %466 = vmatprep.subr.mxu0 0.0
  %467 = vmatpush1.msra.mxu0 %v435
  %468 = vmatprep.subr.mxu0 0.0
  %469 = vmatpush1.msra.mxu0 %v436
  %470 = vmatprep.subr.mxu0 0.0
  %471 = vmatpush1.msra.mxu0 %v437
  %472 = vmatprep.subr.mxu0 0.0
  %473 = vmatpush1.msra.mxu0 %v438
  %474 = vmatprep.subr.mxu0 0.0
  %475 = vmatpush1.msra.mxu0 %v439
  %476 = vmatprep.subr.mxu0 0.0
  %477 = vmatpush1.msra.mxu0 %v440
  %478 = vmatprep.subr.mxu0 0.0
  %479 = vmatpush1.msra.mxu0 %v441
  %480 = vmatprep.subr.mxu0 0.0
  %481 = vmatpush1.msra.mxu0 0.0
  %482 = vmatprep.subr.mxu0 0.0
  %483 = vmatpush1.msra.mxu0 0.0
  %484 = vmatprep.subr.mxu0 0.0
  %485 = vmatpush1.msra.mxu0 0.0
  %486 = vmatprep.subr.mxu0 0.0
  %487 = vmatpush1.msra.mxu0 0.0
  %488 = vmatprep.subr.mxu0 0.0
  %489 = vmatpush1.msra.mxu0 0.0
  %490 = vmatprep.subr.mxu0 0.0
  %491 = vmatpush1.msra.mxu0 0.0
  %492 = vmatprep.subr.mxu0 0.0
  %493 = vmatpush1.msra.mxu0 0.0
  %494 = vmatprep.subr.mxu0 0.0
  %495 = vmatpush1.msra.mxu0 0.0
  %496 = vmatprep.subr.mxu0 0.0
  %497 = vmatpush1.msra.mxu0 0.0
  %498 = vmatprep.subr.mxu0 0.0
  %499 = vmatpush1.msra.mxu0 0.0
  %500 = vmatprep.subr.mxu0 0.0
  %501 = vmatpush1.msra.mxu0 0.0
  %502 = vmatprep.subr.mxu0 0.0
  %503 = vmatpush1.msra.mxu0 0.0
  %504 = vmatprep.subr.mxu0 0.0
  %505 = vmatpush1.msra.mxu0 0.0
  %506 = vmatprep.subr.mxu0 0.0
  %507 = vmatpush1.msra.mxu0 0.0
  %508 = vmatprep.subr.mxu0 0.0
  %509 = vmatpush1.msra.mxu0 0.0
  %510 = vmatprep.subr.mxu0 0.0
  %511 = vmatpush1.msra.mxu0 0.0
  %512 = vmatprep.subr.mxu0 0.0
  %513 = vmatpush1.msra.mxu0 0.0
  %514 = vmatprep.subr.mxu0 0.0
  %515 = vmatpush1.msra.mxu0 0.0
  %516 = vmatprep.subr.mxu0 0.0
  %517 = vmatpush1.msra.mxu0 0.0
  %518 = vmatprep.subr.mxu0 0.0
  %519 = vmatpush1.msra.mxu0 0.0
  %520 = vmatprep.subr.mxu0 0.0
  %521 = vmatpush1.msra.mxu0 0.0
  %522 = vmatprep.subr.mxu0 0.0
  %523 = vmatpush1.msra.mxu0 0.0
  %524 = vmatprep.subr.mxu0 0.0
  %525 = vmatpush1.msra.mxu0 0.0
  %526 = vmatprep.subr.mxu0 0.0
  %527 = vmatpush1.msra.mxu0 0.0
  %528 = vmatprep.mubr.f32.mxu0 0.0
  %529 = vmatmul.mubr.f32.gmra.mrb[0].mxu0 %v462
  %v530 = vpop.f32.mrb[0].mxu0
  %v531 = vadd.f32 0.0, %v530
  %v532 = vpop.f32.mrb[0].mxu0
  %533 = vdwg.mxu0
  %v534 = vmul.f32 %v531, 0.03125
  %vm535 = vcmask 130048
  %v537 = vsel %vm535, %v534, 0
  %539 = vmatprep.subr.mxu0 0.0
  %540 = vmatpush1.msra.mxu0 %v442
  %541 = vmatprep.subr.mxu0 0.0
  %542 = vmatpush1.msra.mxu0 %v443
  %543 = vmatprep.subr.mxu0 0.0
  %544 = vmatpush1.msra.mxu0 0.0
  %545 = vmatprep.subr.mxu0 0.0
  %546 = vmatpush1.msra.mxu0 0.0
  %547 = vmatprep.subr.mxu0 0.0
  %548 = vmatpush1.msra.mxu0 0.0
  %549 = vmatprep.subr.mxu0 0.0
  %550 = vmatpush1.msra.mxu0 0.0
  %551 = vmatprep.subr.mxu0 0.0
  %552 = vmatpush1.msra.mxu0 0.0
  %553 = vmatprep.subr.mxu0 0.0
  %554 = vmatpush1.msra.mxu0 0.0
  %555 = vmatprep.subr.mxu0 0.0
  %556 = vmatpush1.msra.mxu0 0.0
  %557 = vmatprep.subr.mxu0 0.0
  %558 = vmatpush1.msra.mxu0 0.0
  %559 = vmatprep.subr.mxu0 0.0
  %560 = vmatpush1.msra.mxu0 0.0
  %561 = vmatprep.subr.mxu0 0.0
  %562 = vmatpush1.msra.mxu0 0.0
  %563 = vmatprep.subr.mxu0 0.0
  %564 = vmatpush1.msra.mxu0 0.0
  %565 = vmatprep.subr.mxu0 0.0
  %566 = vmatpush1.msra.mxu0 0.0
  %567 = vmatprep.subr.mxu0 0.0
  %568 = vmatpush1.msra.mxu0 0.0
  %569 = vmatprep.subr.mxu0 0.0
  %570 = vmatpush1.msra.mxu0 0.0
  %571 = vmatprep.subr.mxu0 0.0
  %572 = vmatpush1.msra.mxu0 0.0
  %573 = vmatprep.subr.mxu0 0.0
  %574 = vmatpush1.msra.mxu0 0.0
  %575 = vmatprep.subr.mxu0 0.0
  %576 = vmatpush1.msra.mxu0 0.0
  %577 = vmatprep.subr.mxu0 0.0
  %578 = vmatpush1.msra.mxu0 0.0
  %579 = vmatprep.subr.mxu0 0.0
  %580 = vmatpush1.msra.mxu0 0.0
  %581 = vmatprep.subr.mxu0 0.0
  %582 = vmatpush1.msra.mxu0 0.0
  %583 = vmatprep.subr.mxu0 0.0
  %584 = vmatpush1.msra.mxu0 0.0
  %585 = vmatprep.subr.mxu0 0.0
  %586 = vmatpush1.msra.mxu0 0.0
  %587 = vmatprep.subr.mxu0 0.0
  %588 = vmatpush1.msra.mxu0 0.0
  %589 = vmatprep.subr.mxu0 0.0
  %590 = vmatpush1.msra.mxu0 0.0
  %591 = vmatprep.subr.mxu0 0.0
  %592 = vmatpush1.msra.mxu0 0.0
  %593 = vmatprep.subr.mxu0 0.0
  %594 = vmatpush1.msra.mxu0 0.0
  %595 = vmatprep.subr.mxu0 0.0
  %596 = vmatpush1.msra.mxu0 0.0
  %597 = vmatprep.subr.mxu0 0.0
  %598 = vmatpush1.msra.mxu0 0.0
  %599 = vmatprep.subr.mxu0 0.0
  %600 = vmatpush1.msra.mxu0 0.0
  %601 = vmatprep.subr.mxu0 0.0
  %602 = vmatpush1.msra.mxu0 0.0
  %603 = vmatprep.mubr.f32.mxu0 0.0
  %604 = vmatmul.mubr.f32.gmra.mrb[0].mxu0 %v537
  %v605 = vpop.f32.mrb[0].mxu0
  %v606 = vadd.f32 0.0, %v605
  %v607 = vpop.f32.mrb[0].mxu0
  %608 = vdwg.mxu0
  %v609 = vlaneseq
  %v610 = vshrl.u32 %v609, 7
  %v611 = vsub.s32 0, %v610
  %v612 = vrot.slane %v606, %v611
  %v613 = vsub.f32 %v294, %v612
  %v614 = vmul.f32 %v613, %v613
  %v615 = vsel %vm444, %v614, 0.0
  %v616 = vrot.slane %v615, 4
  %v617 = vadd.f32 %v615, %v616
  %v618 = vrot.slane %v617, 2
  %v619 = vadd.f32 %v617, %v618
  %v620 = vrot.slane %v619, 1
  %v621 = vadd.f32 %v619, %v620
  %v622 = vsub.f32 %v433, %v612
  %v623 = vmul.f32 %v622, %v622
  %v624 = vsel %vm444, %v623, 0.0
  %v625 = vrot.slane %v624, 4
  %v626 = vadd.f32 %v624, %v625
  %v627 = vrot.slane %v626, 2
  %v628 = vadd.f32 %v626, %v627
  %v629 = vrot.slane %v628, 1
  %v630 = vadd.f32 %v628, %v629
  %v631 = vadd.f32 %v621, %v630
  %v633 = vsel %vm460, %v631, 0
  %635 = vmatprep.subr.mxu0 0.0
  %636 = vmatpush1.msra.mxu0 %v434
  %637 = vmatprep.subr.mxu0 0.0
  %638 = vmatpush1.msra.mxu0 %v435
  %639 = vmatprep.subr.mxu0 0.0
  %640 = vmatpush1.msra.mxu0 %v436
  %641 = vmatprep.subr.mxu0 0.0
  %642 = vmatpush1.msra.mxu0 %v437
  %643 = vmatprep.subr.mxu0 0.0
  %644 = vmatpush1.msra.mxu0 %v438
  %645 = vmatprep.subr.mxu0 0.0
  %646 = vmatpush1.msra.mxu0 %v439
  %647 = vmatprep.subr.mxu0 0.0
  %648 = vmatpush1.msra.mxu0 %v440
  %649 = vmatprep.subr.mxu0 0.0
  %650 = vmatpush1.msra.mxu0 %v441
  %651 = vmatprep.subr.mxu0 0.0
  %652 = vmatpush1.msra.mxu0 0.0
  %653 = vmatprep.subr.mxu0 0.0
  %654 = vmatpush1.msra.mxu0 0.0
  %655 = vmatprep.subr.mxu0 0.0
  %656 = vmatpush1.msra.mxu0 0.0
  %657 = vmatprep.subr.mxu0 0.0
  %658 = vmatpush1.msra.mxu0 0.0
  %659 = vmatprep.subr.mxu0 0.0
  %660 = vmatpush1.msra.mxu0 0.0
  %661 = vmatprep.subr.mxu0 0.0
  %662 = vmatpush1.msra.mxu0 0.0
  %663 = vmatprep.subr.mxu0 0.0
  %664 = vmatpush1.msra.mxu0 0.0
  %665 = vmatprep.subr.mxu0 0.0
  %666 = vmatpush1.msra.mxu0 0.0
  %667 = vmatprep.subr.mxu0 0.0
  %668 = vmatpush1.msra.mxu0 0.0
  %669 = vmatprep.subr.mxu0 0.0
  %670 = vmatpush1.msra.mxu0 0.0
  %671 = vmatprep.subr.mxu0 0.0
  %672 = vmatpush1.msra.mxu0 0.0
  %673 = vmatprep.subr.mxu0 0.0
  %674 = vmatpush1.msra.mxu0 0.0
  %675 = vmatprep.subr.mxu0 0.0
  %676 = vmatpush1.msra.mxu0 0.0
  %677 = vmatprep.subr.mxu0 0.0
  %678 = vmatpush1.msra.mxu0 0.0
  %679 = vmatprep.subr.mxu0 0.0
  %680 = vmatpush1.msra.mxu0 0.0
  %681 = vmatprep.subr.mxu0 0.0
  %682 = vmatpush1.msra.mxu0 0.0
  %683 = vmatprep.subr.mxu0 0.0
  %684 = vmatpush1.msra.mxu0 0.0
  %685 = vmatprep.subr.mxu0 0.0
  %686 = vmatpush1.msra.mxu0 0.0
  %687 = vmatprep.subr.mxu0 0.0
  %688 = vmatpush1.msra.mxu0 0.0
  %689 = vmatprep.subr.mxu0 0.0
  %690 = vmatpush1.msra.mxu0 0.0
  %691 = vmatprep.subr.mxu0 0.0
  %692 = vmatpush1.msra.mxu0 0.0
  %693 = vmatprep.subr.mxu0 0.0
  %694 = vmatpush1.msra.mxu0 0.0
  %695 = vmatprep.subr.mxu0 0.0
  %696 = vmatpush1.msra.mxu0 0.0
  %697 = vmatprep.subr.mxu0 0.0
  %698 = vmatpush1.msra.mxu0 0.0
  %699 = vmatprep.mubr.f32.mxu0 0.0
  %700 = vmatmul.mubr.f32.gmra.mrb[0].mxu0 %v633
  %v701 = vpop.f32.mrb[0].mxu0
  %v702 = vadd.f32 0.0, %v701
  %v703 = vpop.f32.mrb[0].mxu0
  %704 = vdwg.mxu0
  %v705 = vmul.f32 %v702, 0.03125
  %v706 = vld [vmem:[%s3] sm:$0x1]
  %v707 = vadd.f32 %v705, 1e-05
  %v708 = vrsqrt.pop %v707
  %v709 = vmul.f32 %v706, %v708
  %v711 = vsel %vm535, %v709, 0
  %713 = vmatprep.subr.mxu0 0.0
  %714 = vmatpush1.msra.mxu0 %v442
  %715 = vmatprep.subr.mxu0 0.0
  %716 = vmatpush1.msra.mxu0 %v443
  %717 = vmatprep.subr.mxu0 0.0
  %718 = vmatpush1.msra.mxu0 0.0
  %719 = vmatprep.subr.mxu0 0.0
  %720 = vmatpush1.msra.mxu0 0.0
  %721 = vmatprep.subr.mxu0 0.0
  %722 = vmatpush1.msra.mxu0 0.0
  %723 = vmatprep.subr.mxu0 0.0
  %724 = vmatpush1.msra.mxu0 0.0
  %725 = vmatprep.subr.mxu0 0.0
  %726 = vmatpush1.msra.mxu0 0.0
  %727 = vmatprep.subr.mxu0 0.0
  %728 = vmatpush1.msra.mxu0 0.0
  %729 = vmatprep.subr.mxu0 0.0
  %730 = vmatpush1.msra.mxu0 0.0
  %731 = vmatprep.subr.mxu0 0.0
  %732 = vmatpush1.msra.mxu0 0.0
  %733 = vmatprep.subr.mxu0 0.0
  %734 = vmatpush1.msra.mxu0 0.0
  %735 = vmatprep.subr.mxu0 0.0
  %736 = vmatpush1.msra.mxu0 0.0
  %737 = vmatprep.subr.mxu0 0.0
  %738 = vmatpush1.msra.mxu0 0.0
  %739 = vmatprep.subr.mxu0 0.0
  %740 = vmatpush1.msra.mxu0 0.0
  %741 = vmatprep.subr.mxu0 0.0
  %742 = vmatpush1.msra.mxu0 0.0
  %743 = vmatprep.subr.mxu0 0.0
  %744 = vmatpush1.msra.mxu0 0.0
  %745 = vmatprep.subr.mxu0 0.0
  %746 = vmatpush1.msra.mxu0 0.0
  %747 = vmatprep.subr.mxu0 0.0
  %748 = vmatpush1.msra.mxu0 0.0
  %749 = vmatprep.subr.mxu0 0.0
  %750 = vmatpush1.msra.mxu0 0.0
  %751 = vmatprep.subr.mxu0 0.0
  %752 = vmatpush1.msra.mxu0 0.0
  %753 = vmatprep.subr.mxu0 0.0
  %754 = vmatpush1.msra.mxu0 0.0
  %755 = vmatprep.subr.mxu0 0.0
  %756 = vmatpush1.msra.mxu0 0.0
  %757 = vmatprep.subr.mxu0 0.0
  %758 = vmatpush1.msra.mxu0 0.0
  %759 = vmatprep.subr.mxu0 0.0
  %760 = vmatpush1.msra.mxu0 0.0
  %761 = vmatprep.subr.mxu0 0.0
  %762 = vmatpush1.msra.mxu0 0.0
  %763 = vmatprep.subr.mxu0 0.0
  %764 = vmatpush1.msra.mxu0 0.0
  %765 = vmatprep.subr.mxu0 0.0
  %766 = vmatpush1.msra.mxu0 0.0
  %767 = vmatprep.subr.mxu0 0.0
  %768 = vmatpush1.msra.mxu0 0.0
  %769 = vmatprep.subr.mxu0 0.0
  %770 = vmatpush1.msra.mxu0 0.0
  %771 = vmatprep.subr.mxu0 0.0
  %772 = vmatpush1.msra.mxu0 0.0
  %773 = vmatprep.subr.mxu0 0.0
  %774 = vmatpush1.msra.mxu0 0.0
  %775 = vmatprep.subr.mxu0 0.0
  %776 = vmatpush1.msra.mxu0 0.0
  %777 = vmatprep.mubr.f32.mxu0 0.0
  %778 = vmatmul.mubr.f32.gmra.mrb[0].mxu0 %v711
  %v779 = vpop.f32.mrb[0].mxu0
  %v780 = vadd.f32 0.0, %v779
  %v781 = vpop.f32.mrb[0].mxu0
  %782 = vdwg.mxu0
  %v783 = vld [vmem:[%s4] sm:$0x1]
  %v785 = vsel %vm535, %v783, 0
  %787 = vmatprep.subr.mxu0 0.0
  %788 = vmatpush1.msra.mxu0 %v442
  %789 = vmatprep.subr.mxu0 0.0
  %790 = vmatpush1.msra.mxu0 %v443
  %791 = vmatprep.subr.mxu0 0.0
  %792 = vmatpush1.msra.mxu0 0.0
  %793 = vmatprep.subr.mxu0 0.0
  %794 = vmatpush1.msra.mxu0 0.0
  %795 = vmatprep.subr.mxu0 0.0
  %796 = vmatpush1.msra.mxu0 0.0
  %797 = vmatprep.subr.mxu0 0.0
  %798 = vmatpush1.msra.mxu0 0.0
  %799 = vmatprep.subr.mxu0 0.0
  %800 = vmatpush1.msra.mxu0 0.0
  %801 = vmatprep.subr.mxu0 0.0
  %802 = vmatpush1.msra.mxu0 0.0
  %803 = vmatprep.subr.mxu0 0.0
  %804 = vmatpush1.msra.mxu0 0.0
  %805 = vmatprep.subr.mxu0 0.0
  %806 = vmatpush1.msra.mxu0 0.0
  %807 = vmatprep.subr.mxu0 0.0
  %808 = vmatpush1.msra.mxu0 0.0
  %809 = vmatprep.subr.mxu0 0.0
  %810 = vmatpush1.msra.mxu0 0.0
  %811 = vmatprep.subr.mxu0 0.0
  %812 = vmatpush1.msra.mxu0 0.0
  %813 = vmatprep.subr.mxu0 0.0
  %814 = vmatpush1.msra.mxu0 0.0
  %815 = vmatprep.subr.mxu0 0.0
  %816 = vmatpush1.msra.mxu0 0.0
  %817 = vmatprep.subr.mxu0 0.0
  %818 = vmatpush1.msra.mxu0 0.0
  %819 = vmatprep.subr.mxu0 0.0
  %820 = vmatpush1.msra.mxu0 0.0
  %821 = vmatprep.subr.mxu0 0.0
  %822 = vmatpush1.msra.mxu0 0.0
  %823 = vmatprep.subr.mxu0 0.0
  %824 = vmatpush1.msra.mxu0 0.0
  %825 = vmatprep.subr.mxu0 0.0
  %826 = vmatpush1.msra.mxu0 0.0
  %827 = vmatprep.subr.mxu0 0.0
  %828 = vmatpush1.msra.mxu0 0.0
  %829 = vmatprep.subr.mxu0 0.0
  %830 = vmatpush1.msra.mxu0 0.0
  %831 = vmatprep.subr.mxu0 0.0
  %832 = vmatpush1.msra.mxu0 0.0
  %833 = vmatprep.subr.mxu0 0.0
  %834 = vmatpush1.msra.mxu0 0.0
  %835 = vmatprep.subr.mxu0 0.0
  %836 = vmatpush1.msra.mxu0 0.0
  %837 = vmatprep.subr.mxu0 0.0
  %838 = vmatpush1.msra.mxu0 0.0
  %839 = vmatprep.subr.mxu0 0.0
  %840 = vmatpush1.msra.mxu0 0.0
  %841 = vmatprep.subr.mxu0 0.0
  %842 = vmatpush1.msra.mxu0 0.0
  %843 = vmatprep.subr.mxu0 0.0
  %844 = vmatpush1.msra.mxu0 0.0
  %845 = vmatprep.subr.mxu0 0.0
  %846 = vmatpush1.msra.mxu0 0.0
  %847 = vmatprep.subr.mxu0 0.0
  %848 = vmatpush1.msra.mxu0 0.0
  %849 = vmatprep.subr.mxu0 0.0
  %850 = vmatpush1.msra.mxu0 0.0
  %851 = vmatprep.mubr.f32.mxu0 0.0
  %852 = vmatmul.mubr.f32.gmra.mrb[0].mxu0 %v785
  %v853 = vpop.f32.mrb[0].mxu0
  %v854 = vadd.f32 0.0, %v853
  %v855 = vpop.f32.mrb[0].mxu0
  %856 = vdwg.mxu0
  %v857 = vlaneseq
  %v858 = vshrl.u32 %v857, 7
  %v859 = vsub.s32 0, %v858
  %v860 = vrot.slane %v780, %v859
  %v861 = vmul.f32 %v613, %v860
  %v862 = vlaneseq
  %v863 = vshrl.u32 %v862, 7
  %v864 = vsub.s32 0, %v863
  %v865 = vrot.slane %v854, %v864
  %v866 = vadd.f32 %v861, %v865
  %v867 = vmul.f32 %v622, %v860
  %v868 = vadd.f32 %v867, %v865
  %vm869 = vcmp.ge.f32.partialorder %v866, 0.0
  %v870 = vmul.f32 %v866, 0.01
  %v871 = vsel %vm869, %v866, %v870
  %872 = vst.msk [vmem:[%s7] sm:$0xf] %vm444, %v871
  %vm873 = vcmp.ge.f32.partialorder %v868, 0.0
  %v874 = vmul.f32 %v868, 0.01
  %v875 = vsel %vm873, %v868, %v874
  %s876 = scalar_lea.vmem %s7, 4
  %877 = vst.msk [vmem:[%s876] sm:$0xf] %vm444, %v875
  // Predicated region
  $region30: #{_lambda_.11} parent=0 // pred_check
    _
  $region31: #{_lambda_.11} parent=0 // pred_check_branch
    %879 = sbr.rel (0) target = $region33
  $region32: #{_lambda_.11} parent=0 // pred_region
    _
  $region33: #{_lambda_.11} parent=0 // pred_fallthru
    _
  // Predicated region
  $region34: #{_lambda_.11} parent=0 // pred_check
    _
  $region35: #{_lambda_.11} parent=0 // pred_check_branch
    %881 = sbr.rel (0) target = $region37
  $region36: #{_lambda_.11} parent=0 // pred_region
    _
  $region37: #{_lambda_.11} parent=0 // pred_fallthru
    _

// kernel: tile.94
$region0: #{tile.94}
  %s0 = inlined_call_operand.vmem [shape: f32[2,32,32], index: 0, kind: input, shape index: {}]
  %s1 = inlined_call_operand.vmem [shape: f32[64,32], index: 1, kind: output, shape index: {}]
  $region1: #{tile.94} parent=0
    #allocation0 [shape = 'u8[131072]{0}', space=vmem, size = 0x20000, scoped, tag = 'scoped mem for input reshape']
    %s3 = sshllo.u32 0, 2
    %s4 = smul.addr 2, 31
    %s5 = scalar_lea.vmem %s0, %s4
    %v6 = vld [vmem:[%s5] sm:%s3]
    %s7 = scalar_lea.vmem [#allocation0], 248
    %8 = vst [vmem:[%s7] sm:%s3] %v6
    %s9 = smul.addr 2, 30
    %s10 = scalar_lea.vmem %s0, %s9
    %v11 = vld [vmem:[%s10] sm:%s3]
    %s12 = scalar_lea.vmem [#allocation0], 240
    %13 = vst [vmem:[%s12] sm:%s3] %v11
    %s14 = smul.addr 2, 29
    %s15 = scalar_lea.vmem %s0, %s14
    %v16 = vld [vmem:[%s15] sm:%s3]
    %s17 = scalar_lea.vmem [#allocation0], 232
    %18 = vst [vmem:[%s17] sm:%s3] %v16
    %s19 = smul.addr 2, 28
    %s20 = scalar_lea.vmem %s0, %s19
    %v21 = vld [vmem:[%s20] sm:%s3]
    %s22 = scalar_lea.vmem [#allocation0], 224
    %23 = vst [vmem:[%s22] sm:%s3] %v21
    %s24 = smul.addr 2, 27
    %s25 = scalar_lea.vmem %s0, %s24
    %v26 = vld [vmem:[%s25] sm:%s3]
    %s27 = scalar_lea.vmem [#allocation0], 216
    %28 = vst [vmem:[%s27] sm:%s3] %v26
    %s29 = smul.addr 2, 26
    %s30 = scalar_lea.vmem %s0, %s29
    %v31 = vld [vmem:[%s30] sm:%s3]
    %s32 = scalar_lea.vmem [#allocation0], 208
    %33 = vst [vmem:[%s32] sm:%s3] %v31
    %s34 = smul.addr 2, 25
    %s35 = scalar_lea.vmem %s0, %s34
    %v36 = vld [vmem:[%s35] sm:%s3]
    %s37 = scalar_lea.vmem [#allocation0], 200
    %38 = vst [vmem:[%s37] sm:%s3] %v36
    %s39 = smul.addr 2, 24
    %s40 = scalar_lea.vmem %s0, %s39
    %v41 = vld [vmem:[%s40] sm:%s3]
    %s42 = scalar_lea.vmem [#allocation0], 192
    %43 = vst [vmem:[%s42] sm:%s3] %v41
    %s44 = smul.addr 2, 23
    %s45 = scalar_lea.vmem %s0, %s44
    %v46 = vld [vmem:[%s45] sm:%s3]
    %s47 = scalar_lea.vmem [#allocation0], 184
    %48 = vst [vmem:[%s47] sm:%s3] %v46
    %s49 = smul.addr 2, 22
    %s50 = scalar_lea.vmem %s0, %s49
    %v51 = vld [vmem:[%s50] sm:%s3]
    %s52 = scalar_lea.vmem [#allocation0], 176
    %53 = vst [vmem:[%s52] sm:%s3] %v51
    %s54 = smul.addr 2, 21
    %s55 = scalar_lea.vmem %s0, %s54
    %v56 = vld [vmem:[%s55] sm:%s3]
    %s57 = scalar_lea.vmem [#allocation0], 168
    %58 = vst [vmem:[%s57] sm:%s3] %v56
    %s59 = smul.addr 2, 20
    %s60 = scalar_lea.vmem %s0, %s59
    %v61 = vld [vmem:[%s60] sm:%s3]
    %s62 = scalar_lea.vmem [#allocation0], 160
    %63 = vst [vmem:[%s62] sm:%s3] %v61
    %s64 = smul.addr 2, 19
    %s65 = scalar_lea.vmem %s0, %s64
    %v66 = vld [vmem:[%s65] sm:%s3]
    %s67 = scalar_lea.vmem [#allocation0], 152
    %68 = vst [vmem:[%s67] sm:%s3] %v66
    %s69 = smul.addr 2, 18
    %s70 = scalar_lea.vmem %s0, %s69
    %v71 = vld [vmem:[%s70] sm:%s3]
    %s72 = scalar_lea.vmem [#allocation0], 144
    %73 = vst [vmem:[%s72] sm:%s3] %v71
    %s74 = smul.addr 2, 17
    %s75 = scalar_lea.vmem %s0, %s74
    %v76 = vld [vmem:[%s75] sm:%s3]
    %s77 = scalar_lea.vmem [#allocation0], 136
    %78 = vst [vmem:[%s77] sm:%s3] %v76
    %s79 = smul.addr 2, 16
    %s80 = scalar_lea.vmem %s0, %s79
    %v81 = vld [vmem:[%s80] sm:%s3]
    %s82 = scalar_lea.vmem [#allocation0], 128
    %83 = vst [vmem:[%s82] sm:%s3] %v81
    %s84 = smul.addr 2, 15
    %s85 = scalar_lea.vmem %s0, %s84
    %v86 = vld [vmem:[%s85] sm:%s3]
    %s87 = scalar_lea.vmem [#allocation0], 120
    %88 = vst [vmem:[%s87] sm:%s3] %v86
    %s89 = smul.addr 2, 14
    %s90 = scalar_lea.vmem %s0, %s89
    %v91 = vld [vmem:[%s90] sm:%s3]
    %s92 = scalar_lea.vmem [#allocation0], 112
    %93 = vst [vmem:[%s92] sm:%s3] %v91
    %s94 = smul.addr 2, 13
    %s95 = scalar_lea.vmem %s0, %s94
    %v96 = vld [vmem:[%s95] sm:%s3]
    %s97 = scalar_lea.vmem [#allocation0], 104
    %98 = vst [vmem:[%s97] sm:%s3] %v96
    %s99 = smul.addr 2, 12
    %s100 = scalar_lea.vmem %s0, %s99
    %v101 = vld [vmem:[%s100] sm:%s3]
    %s102 = scalar_lea.vmem [#allocation0], 96
    %103 = vst [vmem:[%s102] sm:%s3] %v101
    %s104 = smul.addr 2, 11
    %s105 = scalar_lea.vmem %s0, %s104
    %v106 = vld [vmem:[%s105] sm:%s3]
    %s107 = scalar_lea.vmem [#allocation0], 88
    %108 = vst [vmem:[%s107] sm:%s3] %v106
    %s109 = smul.addr 2, 10
    %s110 = scalar_lea.vmem %s0, %s109
    %v111 = vld [vmem:[%s110] sm:%s3]
    %s112 = scalar_lea.vmem [#allocation0], 80
    %113 = vst [vmem:[%s112] sm:%s3] %v111
    %s114 = smul.addr 2, 9
    %s115 = scalar_lea.vmem %s0, %s114
    %v116 = vld [vmem:[%s115] sm:%s3]
    %s117 = scalar_lea.vmem [#allocation0], 72
    %118 = vst [vmem:[%s117] sm:%s3] %v116
    %s119 = smul.addr 2, 8
    %s120 = scalar_lea.vmem %s0, %s119
    %v121 = vld [vmem:[%s120] sm:%s3]
    %s122 = scalar_lea.vmem [#allocation0], 64
    %123 = vst [vmem:[%s122] sm:%s3] %v121
    %s124 = smul.addr 2, 7
    %s125 = scalar_lea.vmem %s0, %s124
    %v126 = vld [vmem:[%s125] sm:%s3]
    %s127 = scalar_lea.vmem [#allocation0], 56
    %128 = vst [vmem:[%s127] sm:%s3] %v126
    %s129 = smul.addr 2, 6
    %s130 = scalar_lea.vmem %s0, %s129
    %v131 = vld [vmem:[%s130] sm:%s3]
    %s132 = scalar_lea.vmem [#allocation0], 48
    %133 = vst [vmem:[%s132] sm:%s3] %v131
    %s134 = smul.addr 2, 5
    %s135 = scalar_lea.vmem %s0, %s134
    %v136 = vld [vmem:[%s135] sm:%s3]
    %s137 = scalar_lea.vmem [#allocation0], 40
    %138 = vst [vmem:[%s137] sm:%s3] %v136
    %s139 = smul.addr 2, 4
    %s140 = scalar_lea.vmem %s0, %s139
    %v141 = vld [vmem:[%s140] sm:%s3]
    %s142 = scalar_lea.vmem [#allocation0], 32
    %143 = vst [vmem:[%s142] sm:%s3] %v141
    %s144 = smul.addr 2, 3
    %s145 = scalar_lea.vmem %s0, %s144
    %v146 = vld [vmem:[%s145] sm:%s3]
    %s147 = scalar_lea.vmem [#allocation0], 24
    %148 = vst [vmem:[%s147] sm:%s3] %v146
    %s149 = smul.addr 2, 2
    %s150 = scalar_lea.vmem %s0, %s149
    %v151 = vld [vmem:[%s150] sm:%s3]
    %s152 = scalar_lea.vmem [#allocation0], 16
    %153 = vst [vmem:[%s152] sm:%s3] %v151
    %s154 = scalar_lea.vmem %s0, 2
    %v155 = vld [vmem:[%s154] sm:%s3]
    %s156 = scalar_lea.vmem [#allocation0], 8
    %157 = vst [vmem:[%s156] sm:%s3] %v155
    %v158 = vld [vmem:[%s0] sm:%s3]
    %159 = vst [vmem:[#allocation0] sm:%s3] %v158
    %v160 = vld [vmem:[#allocation0] ss:$8 sm:$0xf]
    %v161 = vld [vmem:[#allocation0] ss:$8 sm:$0xf0]
    %vm162 = vcmask 1047556
    %v163 = vsel %vm162, %v161, %v160
    %vm164 = vcmask 261120
    %165 = vst.msk [vmem:[%s1] sm:$0xff] %vm164, %v163
    %s166 = scalar_lea.vmem [#allocation0], 64
    %v167 = vld [vmem:[%s166] ss:$8 sm:$0xf]
    %s168 = scalar_lea.vmem [#allocation0], 64
    %v169 = vld [vmem:[%s168] ss:$8 sm:$0xf0]
    %vm170 = vcmask 1047556
    %v171 = vsel %vm170, %v169, %v167
    %vm172 = vcmask 261120
    %s173 = scalar_lea.vmem %s1, 8
    %174 = vst.msk [vmem:[%s173] sm:$0xff] %vm172, %v171
    %s175 = scalar_lea.vmem [#allocation0], 128
    %v176 = vld [vmem:[%s175] ss:$8 sm:$0xf]
    %s177 = scalar_lea.vmem [#allocation0], 128
    %v178 = vld [vmem:[%s177] ss:$8 sm:$0xf0]
    %vm179 = vcmask 1047556
    %v180 = vsel %vm179, %v178, %v176
    %vm181 = vcmask 261120
    %s182 = scalar_lea.vmem %s1, 16
    %183 = vst.msk [vmem:[%s182] sm:$0xff] %vm181, %v180
    %s184 = scalar_lea.vmem [#allocation0], 192
    %v185 = vld [vmem:[%s184] ss:$8 sm:$0xf]
    %s186 = scalar_lea.vmem [#allocation0], 192
    %v187 = vld [vmem:[%s186] ss:$8 sm:$0xf0]
    %vm188 = vcmask 1047556
    %v189 = vsel %vm188, %v187, %v185
    %vm190 = vcmask 261120
    %s191 = scalar_lea.vmem %s1, 24
    %192 = vst.msk [vmem:[%s191] sm:$0xff] %vm190, %v189
    %s193 = scalar_lea.vmem [#allocation0], 1
    %v194 = vld [vmem:[%s193] ss:$8 sm:$0xf]
    %s195 = scalar_lea.vmem [#allocation0], 1
    %v196 = vld [vmem:[%s195] ss:$8 sm:$0xf0]
    %vm197 = vcmask 1047556
    %v198 = vsel %vm197, %v196, %v194
    %199 = vrot.lane.b32.xlu0 %v198, 32
    %v200 = vpop.permute.xlu0 %199
    %vm201 = vcmask 523520
    %202 = vst.msk [vmem:[%s1] sm:$0xff] %vm201, %v200
    %s203 = scalar_lea.vmem [#allocation0], 65
    %v204 = vld [vmem:[%s203] ss:$8 sm:$0xf]
    %s205 = scalar_lea.vmem [#allocation0], 65
    %v206 = vld [vmem:[%s205] ss:$8 sm:$0xf0]
    %vm207 = vcmask 1047556
    %v208 = vsel %vm207, %v206, %v204
    %209 = vrot.lane.b32.xlu0 %v208, 32
    %v210 = vpop.permute.xlu0 %209
    %vm211 = vcmask 523520
    %s212 = scalar_lea.vmem %s1, 8
    %213 = vst.msk [vmem:[%s212] sm:$0xff] %vm211, %v210
    %s214 = scalar_lea.vmem [#allocation0], 129
    %v215 = vld [vmem:[%s214] ss:$8 sm:$0xf]
    %s216 = scalar_lea.vmem [#allocation0], 129
    %v217 = vld [vmem:[%s216] ss:$8 sm:$0xf0]
    %vm218 = vcmask 1047556
    %v219 = vsel %vm218, %v217, %v215
    %220 = vrot.lane.b32.xlu0 %v219, 32
    %v221 = vpop.permute.xlu0 %220
    %vm222 = vcmask 523520
    %s223 = scalar_lea.vmem %s1, 16
    %224 = vst.msk [vmem:[%s223] sm:$0xff] %vm222, %v221
    %s225 = scalar_lea.vmem [#allocation0], 193
    %v226 = vld [vmem:[%s225] ss:$8 sm:$0xf]
    %s227 = scalar_lea.vmem [#allocation0], 193
    %v228 = vld [vmem:[%s227] ss:$8 sm:$0xf0]
    %vm229 = vcmask 1047556
    %v230 = vsel %vm229, %v228, %v226
    %231 = vrot.lane.b32.xlu0 %v230, 32
    %v232 = vpop.permute.xlu0 %231
    %vm233 = vcmask 523520
    %s234 = scalar_lea.vmem %s1, 24
    %235 = vst.msk [vmem:[%s234] sm:$0xff] %vm233, %v232

// kernel: tile.89
$region0: #{tile.89}
  %s0 = inlined_call_operand.vmem [shape: f32[2,32], index: 0, kind: input, shape index: {}]
  %s1 = inlined_call_operand.vmem [shape: f32[1,64], index: 1, kind: output, shape index: {}]
  $region1: #{tile.89} parent=0
    #allocation0 [shape = 'u8[4096]{0}', space=vmem, size = 0x1000, scoped, tag = 'scoped mem for output reshape']
    #allocation1 [shape = 'u8[4096]{0}', space=vmem, size = 0x1000, scoped, tag = 'scoped mem for input reshape']
    %s3 = sshllo.u32 0, 2
    %v4 = vld [vmem:[%s0] sm:%s3]
    %5 = vst [vmem:[#allocation1] sm:%s3] %v4
    %v6 = vld [vmem:[#allocation1] sm:$0x1]
    %vm7 = vcmask 261120
    %8 = vst.msk [vmem:[#allocation0] sm:$0x1] %vm7, %v6
    %s9 = scalar_lea.vmem [#allocation1], 1
    %v10 = vld [vmem:[%s9] sm:$0x1]
    %11 = vrot.lane.b32.xlu0 %v10, 32
    %v12 = vpop.permute.xlu0 %11
    %vm13 = vcmask 523520
    %14 = vst.msk [vmem:[#allocation0] sm:$0x1] %vm13, %v12
    %s16 = sshllo.u32 0, 1
    %v18 = vld [vmem:[#allocation0] sm:%s16]
    %s19 = sshllo.u32 0, 1
    %20 = vst [vmem:[%s1] sm:%s19] %v18

// kernel: tile.88
$region0: #{tile.88}
  #allocation0 [shape = 's32[1]{0}', space=sflag, size = 0x4, scoped, tag = 'scoped memory for tile.88']
  %s0 = inlined_call_operand.vmem [shape: f32[32], index: 0, kind: input, shape index: {}]
  %s1 = inlined_call_operand.vmem [shape: f32[2,32], index: 1, kind: output, shape index: {}]
  // Predicated region
  $region2: #{tile.88} parent=0 // pred_check
    _
  $region3: #{tile.88} parent=0 // pred_check_branch
    %3 = sbr.rel (0) target = $region5
  $region4: #{tile.88} parent=0 // pred_region
    _
  $region5: #{tile.88} parent=0 // pred_fallthru
    _
  %v4 = vld [vmem:[%s0] ss:$0 sm:$0xff]
  %5 = vst [vmem:[%s1] sm:$0x3] %v4

// kernel: squeeze.8
$region0: #{squeeze.8}
  %s0 = inlined_call_operand.vmem [shape: f32[1,2,2,64], index: 0, kind: input, shape index: {}]
  %s1 = inlined_call_operand.vmem [shape: f32[2,2,2,32], index: 1, kind: output, shape index: {}]
  $region1: #{squeeze.8} parent=0
    #allocation0 [shape = 'u8[16384]{0}', space=vmem, size = 0x4000, scoped, tag = 'scoped mem for output reshape']
    #allocation1 [shape = 'u8[8192]{0}', space=vmem, size = 0x2000, scoped, tag = 'scoped mem for input reshape']
    %s3 = sshllo.u32 0, 2
    %s4 = scalar_lea.vmem %s0, 2
    %v5 = vld [vmem:[%s4] sm:%s3]
    %s6 = scalar_lea.vmem [#allocation1], 8
    %7 = vst [vmem:[%s6] sm:%s3] %v5
    %v8 = vld [vmem:[%s0] sm:%s3]
    %9 = vst [vmem:[#allocation1] sm:%s3] %v8
    %v10 = vld [vmem:[#allocation1] sm:$0x3]
    %vm11 = vcmask 261120
    %12 = vst.msk [vmem:[#allocation0] ss:$8 sm:$0x3] %vm11, %v10
    %s13 = scalar_lea.vmem [#allocation1], 8
    %v14 = vld [vmem:[%s13] sm:$0x3]
    %vm15 = vcmask 261120
    %s16 = scalar_lea.vmem [#allocation0], 16
    %17 = vst.msk [vmem:[%s16] ss:$8 sm:$0x3] %vm15, %v14
    %v18 = vld.sshfl [vmem:[#allocation1] sm:$0xff pattern:$0x99999810]
    %19 = vrot.lane.b32.xlu0 %v18, 96
    %v20 = vpop.permute.xlu0 %19
    %vm21 = vcmask 261120
    %s22 = scalar_lea.vmem [#allocation0], 1
    %23 = vst.msk [vmem:[%s22] ss:$8 sm:$0xf] %vm21, %v20
    %s25 = sshllo.u32 0, 2
    %v27 = vld [vmem:[#allocation0] sm:%s25]
    %s28 = sshllo.u32 0, 2
    %29 = vst [vmem:[%s1] sm:%s28] %v27
    %s30 = scalar_lea.vmem [#allocation0], 8
    %v31 = vld [vmem:[%s30] sm:%s25]
    %s32 = sshllo.u32 0, 2
    %s33 = scalar_lea.vmem %s1, 2
    %34 = vst [vmem:[%s33] sm:%s32] %v31
    %s35 = scalar_lea.vmem [#allocation0], 16
    %v36 = vld [vmem:[%s35] sm:%s25]
    %s37 = sshllo.u32 0, 2
    %s38 = smul.addr 2, 2
    %s39 = scalar_lea.vmem %s1, %s38
    %40 = vst [vmem:[%s39] sm:%s37] %v36
    %s41 = scalar_lea.vmem [#allocation0], 24
    %v42 = vld [vmem:[%s41] sm:%s25]
    %s43 = sshllo.u32 0, 2
    %s44 = smul.addr 2, 3
    %s45 = scalar_lea.vmem %s1, %s44
    %46 = vst [vmem:[%s45] sm:%s43] %v42

// kernel: _lambda_.13
$region0: #{_lambda_.13}
  #allocation0 [shape = 'u32[]', space=smem, size = 0x4, offset = 0x4, fixed_abs, tag = 'smem constant byte address 0x4 - core index']
  #allocation1 [shape = 'u32[144,128]{1,0:T(1,128)}', space=vmem, size = 0x12000, scoped, tag = 'internal scratch']
  %s0 = inlined_call_operand.vmem [shape: f32[2,128], index: 0, kind: input, shape index: {}]
  %s1 = inlined_call_operand.vmem [shape: f32[128,32], index: 1, kind: input, shape index: {}]
  %s2 = inlined_call_operand.vmem [shape: f32[1,32], index: 2, kind: input, shape index: {}]
  %s3 = inlined_call_operand.vmem [shape: f32[2,16], index: 3, kind: input, shape index: {}]
  %s4 = inlined_call_operand.vmem [shape: f32[2,8], index: 4, kind: input, shape index: {}]
  %s5 = inlined_call_operand.vmem [shape: f32[16,128], index: 5, kind: input, shape index: {}]
  %s6 = inlined_call_operand.vmem [shape: f32[8,128], index: 6, kind: input, shape index: {}]
  %s7 = inlined_call_operand.vmem [shape: f32[1,128], index: 7, kind: input, shape index: {}]
  %s8 = inlined_call_operand.hbm [shape: f32[2,16], index: 8, kind: output, shape index: {0}]
  %s9 = inlined_call_operand.hbm [shape: f32[2,16], index: 9, kind: output, shape index: {1}]
  %s10 = inlined_call_operand.vmem [shape: f32[2,128], index: 10, kind: output, shape index: {2}]
  %11 = xla_tuple %s8, %s9, %s10
  %s12 = sld [smem:[#allocation0]]
  $region58: #{_lambda_.13} parent=0
    _
  %s14 = ssub.s32 1, %s12
  %s15 = scalar_select 0, %s14, %s12
  $region1: #{_lambda_.13} parent=0
    #allocation2 [shape = 'u8[1024]{0}', space=vmem, size = 0x400, scoped, tag = 'output window, operand 0, single buffered']
    #allocation3 [shape = 's32[1]{0}', space=sflag, size = 0x4, scoped, tag = 'scoped memory for _lambda_.13']
    #allocation4 [shape = 'u8[1024]{0}', space=vmem, size = 0x400, scoped, tag = 'output window, operand 1, single buffered']
    #allocation5 [shape = 's32[1]{0}', space=sflag, size = 0x4, scoped, tag = 'scoped memory for _lambda_.13']
    %16 = vsyncpa [#allocation3], 0
    %17 = vsyncpa [#allocation5], 0
    // Predicated region
    $region2: #{_lambda_.13} parent=1 // pred_check
      _
    $region3: #{_lambda_.13} parent=1 // pred_check_branch
      %19 = sbr.rel (0) target = $region5
    $region4: #{_lambda_.13} parent=1 // pred_region
      _
    $region5: #{_lambda_.13} parent=1 // pred_fallthru
      _
    // Predicated region
    $region6: #{_lambda_.13} parent=1 // pred_check
      _
    $region7: #{_lambda_.13} parent=1 // pred_check_branch
      %21 = sbr.rel (0) target = $region9
    $region8: #{_lambda_.13} parent=1 // pred_region
      _
    $region9: #{_lambda_.13} parent=1 // pred_fallthru
      _
    // Predicated region
    $region10: #{_lambda_.13} parent=1 // pred_check
      _
    $region11: #{_lambda_.13} parent=1 // pred_check_branch
      %23 = sbr.rel (0) target = $region13
    $region12: #{_lambda_.13} parent=1 // pred_region
      _
    $region13: #{_lambda_.13} parent=1 // pred_fallthru
      _
    // Predicated region
    $region14: #{_lambda_.13} parent=1 // pred_check
      _
    $region15: #{_lambda_.13} parent=1 // pred_check_branch
      %25 = sbr.rel (0) target = $region17
    $region16: #{_lambda_.13} parent=1 // pred_region
      _
    $region17: #{_lambda_.13} parent=1 // pred_fallthru
      _
    // Predicated region
    $region18: #{_lambda_.13} parent=1 // pred_check
      _
    $region19: #{_lambda_.13} parent=1 // pred_check_branch
      %27 = sbr.rel (0) target = $region21
    $region20: #{_lambda_.13} parent=1 // pred_region
      _
    $region21: #{_lambda_.13} parent=1 // pred_fallthru
      _
    // Predicated region
    $region22: #{_lambda_.13} parent=1 // pred_check
      _
    $region23: #{_lambda_.13} parent=1 // pred_check_branch
      %29 = sbr.rel (0) target = $region25
    $region24: #{_lambda_.13} parent=1 // pred_region
      _
    $region25: #{_lambda_.13} parent=1 // pred_fallthru
      _
    // Predicated region
    $region26: #{_lambda_.13} parent=1 // pred_check
      _
    $region27: #{_lambda_.13} parent=1 // pred_check_branch
      %31 = sbr.rel (0) target = $region29
    $region28: #{_lambda_.13} parent=1 // pred_region
      _
    $region29: #{_lambda_.13} parent=1 // pred_fallthru
      _
    // Predicated region
    $region30: #{_lambda_.13} parent=1 // pred_check
      _
    $region31: #{_lambda_.13} parent=1 // pred_check_branch
      %33 = sbr.rel (0) target = $region33
    $region32: #{_lambda_.13} parent=1 // pred_region
      _
    $region33: #{_lambda_.13} parent=1 // pred_fallthru
      _
    %v34 = vld [vmem:[%s0] sm:$0x3]
    %v35 = vld [vmem:[%s1] sm:$0xff]
    %v36 = vld [vmem:[%s1 + $0x8] sm:$0xff]
    %v37 = vld [vmem:[%s1 + $0x10] sm:$0xff]
    %v38 = vld [vmem:[%s1 + $0x18] sm:$0xff]
    %v39 = vld [vmem:[%s1 + $0x20] sm:$0xff]
    %v40 = vld [vmem:[%s1 + $0x28] sm:$0xff]
    %v41 = vld [vmem:[%s1 + $0x30] sm:$0xff]
    %v42 = vld [vmem:[%s1 + $0x38] sm:$0xff]
    %v43 = vld [vmem:[%s1 + $0x40] sm:$0xff]
    %v44 = vld [vmem:[%s1 + $0x48] sm:$0xff]
    %v45 = vld [vmem:[%s1 + $0x50] sm:$0xff]
    %v46 = vld [vmem:[%s1 + $0x58] sm:$0xff]
    %v47 = vld [vmem:[%s1 + $0x60] sm:$0xff]
    %v48 = vld [vmem:[%s1 + $0x68] sm:$0xff]
    %v49 = vld [vmem:[%s1 + $0x70] sm:$0xff]
    %v50 = vld [vmem:[%s1 + $0x78] sm:$0xff]
    %v51 = vld [vmem:[%s2] sm:$0x1]
    %v53 = vlaneseq
    %v54 = vshrl.u32 %v53, 7
    %v55 = vsub.s32 0, %v54
    %v56 = vrot.slane %v51, %v55
    %58 = vmatprep.subr.mxu0 0.0
    %59 = vmatpush1.msra.mxu0 %v35
    %60 = vmatprep.subr.mxu0 0.0
    %61 = vmatpush1.msra.mxu0 %v36
    %62 = vmatprep.subr.mxu0 0.0
    %63 = vmatpush1.msra.mxu0 %v37
    %64 = vmatprep.subr.mxu0 0.0
    %65 = vmatpush1.msra.mxu0 %v38
    %66 = vmatprep.subr.mxu0 0.0
    %67 = vmatpush1.msra.mxu0 %v39
    %68 = vmatprep.subr.mxu0 0.0
    %69 = vmatpush1.msra.mxu0 %v40
    %70 = vmatprep.subr.mxu0 0.0
    %71 = vmatpush1.msra.mxu0 %v41
    %72 = vmatprep.subr.mxu0 0.0
    %73 = vmatpush1.msra.mxu0 %v42
    %74 = vmatprep.subr.mxu0 0.0
    %75 = vmatpush1.msra.mxu0 %v43
    %76 = vmatprep.subr.mxu0 0.0
    %77 = vmatpush1.msra.mxu0 %v44
    %78 = vmatprep.subr.mxu0 0.0
    %79 = vmatpush1.msra.mxu0 %v45
    %80 = vmatprep.subr.mxu0 0.0
    %81 = vmatpush1.msra.mxu0 %v46
    %82 = vmatprep.subr.mxu0 0.0
    %83 = vmatpush1.msra.mxu0 %v47
    %84 = vmatprep.subr.mxu0 0.0
    %85 = vmatpush1.msra.mxu0 %v48
    %86 = vmatprep.subr.mxu0 0.0
    %87 = vmatpush1.msra.mxu0 %v49
    %88 = vmatprep.subr.mxu0 0.0
    %89 = vmatpush1.msra.mxu0 %v50
    %90 = vmatprep.subr.mxu0 0.0
    %91 = vmatpush1.msra.mxu0 0.0
    %92 = vmatprep.subr.mxu0 0.0
    %93 = vmatpush1.msra.mxu0 0.0
    %94 = vmatprep.subr.mxu0 0.0
    %95 = vmatpush1.msra.mxu0 0.0
    %96 = vmatprep.subr.mxu0 0.0
    %97 = vmatpush1.msra.mxu0 0.0
    %98 = vmatprep.subr.mxu0 0.0
    %99 = vmatpush1.msra.mxu0 0.0
    %100 = vmatprep.subr.mxu0 0.0
    %101 = vmatpush1.msra.mxu0 0.0
    %102 = vmatprep.subr.mxu0 0.0
    %103 = vmatpush1.msra.mxu0 0.0
    %104 = vmatprep.subr.mxu0 0.0
    %105 = vmatpush1.msra.mxu0 0.0
    %106 = vmatprep.subr.mxu0 0.0
    %107 = vmatpush1.msra.mxu0 0.0
    %108 = vmatprep.subr.mxu0 0.0
    %109 = vmatpush1.msra.mxu0 0.0
    %110 = vmatprep.subr.mxu0 0.0
    %111 = vmatpush1.msra.mxu0 0.0
    %112 = vmatprep.subr.mxu0 0.0
    %113 = vmatpush1.msra.mxu0 0.0
    %114 = vmatprep.subr.mxu0 0.0
    %115 = vmatpush1.msra.mxu0 0.0
    %116 = vmatprep.subr.mxu0 0.0
    %117 = vmatpush1.msra.mxu0 0.0
    %118 = vmatprep.subr.mxu0 0.0
    %119 = vmatpush1.msra.mxu0 0.0
    %120 = vmatprep.subr.mxu0 0.0
    %121 = vmatpush1.msra.mxu0 0.0
    %122 = vmatprep.mubr.f32.mxu0 0.0
    %123 = vmatmul.mubr.f32.gmra.mrb[0].mxu0 %v34
    %v124 = vpop.f32.mrb[0].mxu0
    %v125 = vadd.f32 %v56, %v124
    %v126 = vpop.f32.mrb[0].mxu0
    %127 = vdwg.mxu0
    %v128 = vld [vmem:[%s3] sm:$0x3]
    %v129 = vmul.f32 %v125, 0.5
    %v130 = vmul.f32 %v129, 1.442695
    %v131 = vpow.pop %v130
    %133 = vrot.lane.b32.xlu0 %v131, 112
    %v134 = vpop.permute.xlu0 %133
    %v136 = vmul.f32 %v128, %v134
    %v137 = vadd.f32 %v136, %v125
    %v138 = vld [vmem:[%s5] sm:$0xff]
    %v139 = vld [vmem:[%s5 + $0x8] sm:$0xff]
    %v140 = vld [vmem:[%s4] sm:$0x3]
    %v141 = vld [vmem:[%s6] sm:$0xff]
    %vm142 = vcmask 64512
    %v144 = vsel %vm142, %v140, 0
    %146 = vmatprep.subr.mxu0 0.0
    %147 = vmatpush1.msra.mxu0 %v141
    %148 = vmatprep.subr.mxu0 0.0
    %149 = vmatpush1.msra.mxu0 0.0
    %150 = vmatprep.subr.mxu0 0.0
    %151 = vmatpush1.msra.mxu0 0.0
    %152 = vmatprep.subr.mxu0 0.0
    %153 = vmatpush1.msra.mxu0 0.0
    %154 = vmatprep.subr.mxu0 0.0
    %155 = vmatpush1.msra.mxu0 0.0
    %156 = vmatprep.subr.mxu0 0.0
    %157 = vmatpush1.msra.mxu0 0.0
    %158 = vmatprep.subr.mxu0 0.0
    %159 = vmatpush1.msra.mxu0 0.0
    %160 = vmatprep.subr.mxu0 0.0
    %161 = vmatpush1.msra.mxu0 0.0
    %162 = vmatprep.subr.mxu0 0.0
    %163 = vmatpush1.msra.mxu0 0.0
    %164 = vmatprep.subr.mxu0 0.0
    %165 = vmatpush1.msra.mxu0 0.0
    %166 = vmatprep.subr.mxu0 0.0
    %167 = vmatpush1.msra.mxu0 0.0
    %168 = vmatprep.subr.mxu0 0.0
    %169 = vmatpush1.msra.mxu0 0.0
    %170 = vmatprep.subr.mxu0 0.0
    %171 = vmatpush1.msra.mxu0 0.0
    %172 = vmatprep.subr.mxu0 0.0
    %173 = vmatpush1.msra.mxu0 0.0
    %174 = vmatprep.subr.mxu0 0.0
    %175 = vmatpush1.msra.mxu0 0.0
    %176 = vmatprep.subr.mxu0 0.0
    %177 = vmatpush1.msra.mxu0 0.0
    %178 = vmatprep.subr.mxu0 0.0
    %179 = vmatpush1.msra.mxu0 0.0
    %180 = vmatprep.subr.mxu0 0.0
    %181 = vmatpush1.msra.mxu0 0.0
    %182 = vmatprep.subr.mxu0 0.0
    %183 = vmatpush1.msra.mxu0 0.0
    %184 = vmatprep.subr.mxu0 0.0
    %185 = vmatpush1.msra.mxu0 0.0
    %186 = vmatprep.subr.mxu0 0.0
    %187 = vmatpush1.msra.mxu0 0.0
    %188 = vmatprep.subr.mxu0 0.0
    %189 = vmatpush1.msra.mxu0 0.0
    %190 = vmatprep.subr.mxu0 0.0
    %191 = vmatpush1.msra.mxu0 0.0
    %192 = vmatprep.subr.mxu0 0.0
    %193 = vmatpush1.msra.mxu0 0.0
    %194 = vmatprep.subr.mxu0 0.0
    %195 = vmatpush1.msra.mxu0 0.0
    %196 = vmatprep.subr.mxu0 0.0
    %197 = vmatpush1.msra.mxu0 0.0
    %198 = vmatprep.subr.mxu0 0.0
    %199 = vmatpush1.msra.mxu0 0.0
    %200 = vmatprep.subr.mxu0 0.0
    %201 = vmatpush1.msra.mxu0 0.0
    %202 = vmatprep.subr.mxu0 0.0
    %203 = vmatpush1.msra.mxu0 0.0
    %204 = vmatprep.subr.mxu0 0.0
    %205 = vmatpush1.msra.mxu0 0.0
    %206 = vmatprep.subr.mxu0 0.0
    %207 = vmatpush1.msra.mxu0 0.0
    %208 = vmatprep.subr.mxu0 0.0
    %209 = vmatpush1.msra.mxu0 0.0
    %210 = vmatprep.mubr.f32.mxu0 0.0
    %211 = vmatmul.mubr.f32.gmra.mrb[0].mxu0 %v144
    %v212 = vpop.f32.mrb[0].mxu0
    %v213 = vadd.f32 0.0, %v212
    %v214 = vpop.f32.mrb[0].mxu0
    %215 = vdwg.mxu0
    %vm216 = vcmask 130048
    %v218 = vsel %vm216, %v137, 0
    %220 = vmatprep.subr.mxu0 0.0
    %221 = vmatpush1.msra.mxu0 %v138
    %222 = vmatprep.subr.mxu0 0.0
    %223 = vmatpush1.msra.mxu0 %v139
    %224 = vmatprep.subr.mxu0 0.0
    %225 = vmatpush1.msra.mxu0 0.0
    %226 = vmatprep.subr.mxu0 0.0
    %227 = vmatpush1.msra.mxu0 0.0
    %228 = vmatprep.subr.mxu0 0.0
    %229 = vmatpush1.msra.mxu0 0.0
    %230 = vmatprep.subr.mxu0 0.0
    %231 = vmatpush1.msra.mxu0 0.0
    %232 = vmatprep.subr.mxu0 0.0
    %233 = vmatpush1.msra.mxu0 0.0
    %234 = vmatprep.subr.mxu0 0.0
    %235 = vmatpush1.msra.mxu0 0.0
    %236 = vmatprep.subr.mxu0 0.0
    %237 = vmatpush1.msra.mxu0 0.0
    %238 = vmatprep.subr.mxu0 0.0
    %239 = vmatpush1.msra.mxu0 0.0
    %240 = vmatprep.subr.mxu0 0.0
    %241 = vmatpush1.msra.mxu0 0.0
    %242 = vmatprep.subr.mxu0 0.0
    %243 = vmatpush1.msra.mxu0 0.0
    %244 = vmatprep.subr.mxu0 0.0
    %245 = vmatpush1.msra.mxu0 0.0
    %246 = vmatprep.subr.mxu0 0.0
    %247 = vmatpush1.msra.mxu0 0.0
    %248 = vmatprep.subr.mxu0 0.0
    %249 = vmatpush1.msra.mxu0 0.0
    %250 = vmatprep.subr.mxu0 0.0
    %251 = vmatpush1.msra.mxu0 0.0
    %252 = vmatprep.subr.mxu0 0.0
    %253 = vmatpush1.msra.mxu0 0.0
    %254 = vmatprep.subr.mxu0 0.0
    %255 = vmatpush1.msra.mxu0 0.0
    %256 = vmatprep.subr.mxu0 0.0
    %257 = vmatpush1.msra.mxu0 0.0
    %258 = vmatprep.subr.mxu0 0.0
    %259 = vmatpush1.msra.mxu0 0.0
    %260 = vmatprep.subr.mxu0 0.0
    %261 = vmatpush1.msra.mxu0 0.0
    %262 = vmatprep.subr.mxu0 0.0
    %263 = vmatpush1.msra.mxu0 0.0
    %264 = vmatprep.subr.mxu0 0.0
    %265 = vmatpush1.msra.mxu0 0.0
    %266 = vmatprep.subr.mxu0 0.0
    %267 = vmatpush1.msra.mxu0 0.0
    %268 = vmatprep.subr.mxu0 0.0
    %269 = vmatpush1.msra.mxu0 0.0
    %270 = vmatprep.subr.mxu0 0.0
    %271 = vmatpush1.msra.mxu0 0.0
    %272 = vmatprep.subr.mxu0 0.0
    %273 = vmatpush1.msra.mxu0 0.0
    %274 = vmatprep.subr.mxu0 0.0
    %275 = vmatpush1.msra.mxu0 0.0
    %276 = vmatprep.subr.mxu0 0.0
    %277 = vmatpush1.msra.mxu0 0.0
    %278 = vmatprep.subr.mxu0 0.0
    %279 = vmatpush1.msra.mxu0 0.0
    %280 = vmatprep.subr.mxu0 0.0
    %281 = vmatpush1.msra.mxu0 0.0
    %282 = vmatprep.subr.mxu0 0.0
    %283 = vmatpush1.msra.mxu0 0.0
    %284 = vmatprep.mubr.f32.mxu0 0.0
    %285 = vmatmul.mubr.f32.gmra.mrb[0].mxu0 %v218
    %v286 = vpop.f32.mrb[0].mxu0
    %v287 = vadd.f32 %v213, %v286
    %v288 = vpop.f32.mrb[0].mxu0
    %289 = vdwg.mxu0
    %v290 = vld [vmem:[%s7] sm:$0x1]
    %v292 = vlaneseq
    %v293 = vshrl.u32 %v292, 7
    %v294 = vsub.s32 0, %v293
    %v295 = vrot.slane %v290, %v294
    %v297 = vadd.f32 %v287, %v295
    %vm298 = vcmask 123904
    %299 = vst.msk [vmem:[#allocation2] sm:$0x3] %vm298, %v125
    %301 = vrot.lane.b32.xlu0 %v125, 112
    %v302 = vpop.permute.xlu0 %301
    %304 = vst.msk [vmem:[#allocation4] sm:$0x3] %vm298, %v302
    %305 = vst [vmem:[%s10] sm:$0x3] %v297
    // Predicated region
    $region34: #{_lambda_.13} parent=1 // pred_check
      _
    $region35: #{_lambda_.13} parent=1 // pred_check_branch
      %307 = sbr.rel (0) target = $region37
    $region36: #{_lambda_.13} parent=1 // pred_region
      %s309 = ssub.s32 32, 32
      %310 = vsyncadd [#allocation3], %s309
      %s312 = sshll.u32 [#allocation2], 4
      %s313 = int_to_ptr.vmem [resolvable:$true] %s312
      %315 = dma.vmem_to_hbm [thread:$0]  %s313, 32, %s8, [#allocation3]
    $region37: #{_lambda_.13} parent=1 // pred_fallthru
      _
    // Predicated region
    $region38: #{_lambda_.13} parent=1 // pred_check
      _
    $region39: #{_lambda_.13} parent=1 // pred_check_branch
      %317 = sbr.rel (0) target = $region41
    $region40: #{_lambda_.13} parent=1 // pred_region
      %s319 = ssub.s32 32, 32
      %320 = vsyncadd [#allocation5], %s319
      %s322 = sshll.u32 [#allocation4], 4
      %s323 = int_to_ptr.vmem [resolvable:$true] %s322
      %325 = dma.vmem_to_hbm [thread:$0]  %s323, 32, %s9, [#allocation5]
    $region41: #{_lambda_.13} parent=1 // pred_fallthru
      _
    // Predicated region
    $region42: #{_lambda_.13} parent=1 // pred_check
      _
    $region43: #{_lambda_.13} parent=1 // pred_check_branch
      %327 = sbr.rel (0) target = $region45
    $region44: #{_lambda_.13} parent=1 // pred_region
      _
    $region45: #{_lambda_.13} parent=1 // pred_fallthru
      _
    // Predicated region
    $region46: #{_lambda_.13} parent=1 // pred_check
      _
    $region47: #{_lambda_.13} parent=1 // pred_check_branch
      %329 = sbr.rel (0) target = $region49
    $region48: #{_lambda_.13} parent=1 // pred_region
      %330 = dma.done [#allocation3], 32
    $region49: #{_lambda_.13} parent=1 // pred_fallthru
      _
    // Predicated region
    $region50: #{_lambda_.13} parent=1 // pred_check
      _
    $region51: #{_lambda_.13} parent=1 // pred_check_branch
      %332 = sbr.rel (0) target = $region53
    $region52: #{_lambda_.13} parent=1 // pred_region
      %333 = dma.done [#allocation5], 32
    $region53: #{_lambda_.13} parent=1 // pred_fallthru
      _
    // Predicated region
    $region54: #{_lambda_.13} parent=1 // pred_check
      _
    $region55: #{_lambda_.13} parent=1 // pred_check_branch
      %335 = sbr.rel (0) target = $region57
    $region56: #{_lambda_.13} parent=1 // pred_region
      _
    $region57: #{_lambda_.13} parent=1 // pred_fallthru
      _
    %336 = vsyncpa [#allocation3], 1
    %337 = vsyncpa [#allocation5], 1

// kernel: _lambda_.12
$region0: #{_lambda_.12}
  #allocation0 [shape = 'u32[]', space=smem, size = 0x4, offset = 0x4, fixed_abs, tag = 'smem constant byte address 0x4 - core index']
  #allocation1 [shape = 'u32[144,128]{1,0:T(1,128)}', space=vmem, size = 0x12000, scoped, tag = 'internal scratch']
  %s0 = inlined_call_operand.vmem [shape: f32[2,2,3,96], index: 0, kind: input, shape index: {}]
  %s1 = inlined_call_operand.vmem [shape: bf16[3,96,64], index: 1, kind: input, shape index: {}]
  %s2 = inlined_call_operand.vmem [shape: f32[1,64], index: 2, kind: input, shape index: {}]
  %s3 = inlined_call_operand.vmem [shape: f32[1,32], index: 3, kind: input, shape index: {}]
  %s4 = inlined_call_operand.vmem [shape: f32[1,32], index: 4, kind: input, shape index: {}]
  %s5 = inlined_call_operand.vmem [shape: f32[64,32], index: 5, kind: input, shape index: {}]
  %s6 = inlined_call_operand.vmem [shape: f32[32,64], index: 6, kind: input, shape index: {}]
  %s7 = inlined_call_operand.vmem [shape: f32[1,2,2,64], index: 7, kind: output, shape index: {}]
  %s8 = sld [smem:[#allocation0]]
  $region38: #{_lambda_.12} parent=0
    _
  %s10 = ssub.s32 1, %s8
  %s11 = scalar_select 0, %s10, %s8
  // Predicated region
  $region2: #{_lambda_.12} parent=0 // pred_check
    _
  $region3: #{_lambda_.12} parent=0 // pred_check_branch
    %13 = sbr.rel (0) target = $region5
  $region4: #{_lambda_.12} parent=0 // pred_region
    _
  $region5: #{_lambda_.12} parent=0 // pred_fallthru
    _
  // Predicated region
  $region6: #{_lambda_.12} parent=0 // pred_check
    _
  $region7: #{_lambda_.12} parent=0 // pred_check_branch
    %15 = sbr.rel (0) target = $region9
  $region8: #{_lambda_.12} parent=0 // pred_region
    _
  $region9: #{_lambda_.12} parent=0 // pred_fallthru
    _
  // Predicated region
  $region10: #{_lambda_.12} parent=0 // pred_check
    _
  $region11: #{_lambda_.12} parent=0 // pred_check_branch
    %17 = sbr.rel (0) target = $region13
  $region12: #{_lambda_.12} parent=0 // pred_region
    _
  $region13: #{_lambda_.12} parent=0 // pred_fallthru
    _
  // Predicated region
  $region14: #{_lambda_.12} parent=0 // pred_check
    _
  $region15: #{_lambda_.12} parent=0 // pred_check_branch
    %19 = sbr.rel (0) target = $region17
  $region16: #{_lambda_.12} parent=0 // pred_region
    _
  $region17: #{_lambda_.12} parent=0 // pred_fallthru
    _
  // Predicated region
  $region18: #{_lambda_.12} parent=0 // pred_check
    _
  $region19: #{_lambda_.12} parent=0 // pred_check_branch
    %21 = sbr.rel (0) target = $region21
  $region20: #{_lambda_.12} parent=0 // pred_region
    _
  $region21: #{_lambda_.12} parent=0 // pred_fallthru
    _
  // Predicated region
  $region22: #{_lambda_.12} parent=0 // pred_check
    _
  $region23: #{_lambda_.12} parent=0 // pred_check_branch
    %23 = sbr.rel (0) target = $region25
  $region24: #{_lambda_.12} parent=0 // pred_region
    _
  $region25: #{_lambda_.12} parent=0 // pred_fallthru
    _
  // Predicated region
  $region26: #{_lambda_.12} parent=0 // pred_check
    _
  $region27: #{_lambda_.12} parent=0 // pred_check_branch
    %25 = sbr.rel (0) target = $region29
  $region28: #{_lambda_.12} parent=0 // pred_region
    _
  $region29: #{_lambda_.12} parent=0 // pred_fallthru
    _
  %v27 = vld [vmem:[%s2] sm:$0x1]
  %v28 = vld [vmem:[%s1] sm:$0xf]
  %v29 = vld [vmem:[%s1 + $0x4] sm:$0xf]
  %v30 = vld [vmem:[%s1 + $0x8] sm:$0xf]
  %v31 = vld [vmem:[%s1 + $0xc] sm:$0xf]
  %v32 = vld [vmem:[%s1 + $0x10] sm:$0xf]
  %v33 = vld [vmem:[%s1 + $0x14] sm:$0xf]
  %v34 = vld [vmem:[%s1 + $0x18] sm:$0xf]
  %v35 = vld [vmem:[%s1 + $0x1c] sm:$0xf]
  %v36 = vld [vmem:[%s1 + $0x20] sm:$0xf]
  %v37 = vld [vmem:[%s1 + $0x24] sm:$0xf]
  %v38 = vld [vmem:[%s1 + $0x28] sm:$0xf]
  %v39 = vld [vmem:[%s1 + $0x2c] sm:$0xf]
  %s40 = scalar_lea.vmem %s1, 48
  %v41 = vld [vmem:[%s40] sm:$0xf]
  %v42 = vld [vmem:[%s40 + $0x4] sm:$0xf]
  %v43 = vld [vmem:[%s40 + $0x8] sm:$0xf]
  %v44 = vld [vmem:[%s40 + $0xc] sm:$0xf]
  %v45 = vld [vmem:[%s40 + $0x10] sm:$0xf]
  %v46 = vld [vmem:[%s40 + $0x14] sm:$0xf]
  %v47 = vld [vmem:[%s40 + $0x18] sm:$0xf]
  %v48 = vld [vmem:[%s40 + $0x1c] sm:$0xf]
  %v49 = vld [vmem:[%s40 + $0x20] sm:$0xf]
  %v50 = vld [vmem:[%s40 + $0x24] sm:$0xf]
  %v51 = vld [vmem:[%s40 + $0x28] sm:$0xf]
  %v52 = vld [vmem:[%s40 + $0x2c] sm:$0xf]
  %s53 = scalar_lea.vmem %s1, 96
  %v54 = vld [vmem:[%s53] sm:$0xf]
  %v55 = vld [vmem:[%s53 + $0x4] sm:$0xf]
  %v56 = vld [vmem:[%s53 + $0x8] sm:$0xf]
  %v57 = vld [vmem:[%s53 + $0xc] sm:$0xf]
  %v58 = vld [vmem:[%s53 + $0x10] sm:$0xf]
  %v59 = vld [vmem:[%s53 + $0x14] sm:$0xf]
  %v60 = vld [vmem:[%s53 + $0x18] sm:$0xf]
  %v61 = vld [vmem:[%s53 + $0x1c] sm:$0xf]
  %v62 = vld [vmem:[%s53 + $0x20] sm:$0xf]
  %v63 = vld [vmem:[%s53 + $0x24] sm:$0xf]
  %v64 = vld [vmem:[%s53 + $0x28] sm:$0xf]
  %v65 = vld [vmem:[%s53 + $0x2c] sm:$0xf]
  %v66 = vld [vmem:[%s0] sm:$0x3]
  %v67 = vpack.c.bf16 %v66, %v66
  %s68 = scalar_lea.vmem %s0, 8
  %v69 = vld [vmem:[%s68] sm:$0x3]
  %v70 = vpack.c.bf16 %v69, %v69
  %v83 = vunpack.c.l.b16 %v41
  %v84 = vunpack.c.l.b16 %v42
  %v85 = vunpack.c.l.b16 %v43
  %v86 = vunpack.c.l.b16 %v44
  %v87 = vunpack.c.l.b16 %v45
  %v88 = vunpack.c.l.b16 %v46
  %v89 = vunpack.c.l.b16 %v47
  %v90 = vunpack.c.l.b16 %v48
  %v91 = vunpack.c.l.b16 %v49
  %v92 = vunpack.c.l.b16 %v50
  %v93 = vunpack.c.l.b16 %v51
  %v94 = vunpack.c.l.b16 %v52
  %v95 = vpack.c.b16 %v84, %v83
  %v96 = vpack.c.b16 %v86, %v85
  %v97 = vpack.c.b16 %v88, %v87
  %v98 = vpack.c.b16 %v90, %v89
  %v99 = vpack.c.b16 %v92, %v91
  %v100 = vpack.c.b16 %v94, %v93
  %vm107 = vcmask 785408
  %v109 = vsel %vm107, %v70, 0
  %111 = vmatprep.subr.bf16.mxu0 0
  %112 = vmatpush1.bf16.msra.mxu0 %v95
  %113 = vmatprep.subr.bf16.mxu0 0
  %114 = vmatpush1.bf16.msra.mxu0 %v96
  %115 = vmatprep.subr.bf16.mxu0 0
  %116 = vmatpush1.bf16.msra.mxu0 %v97
  %117 = vmatprep.subr.bf16.mxu0 0
  %118 = vmatpush1.bf16.msra.mxu0 %v98
  %119 = vmatprep.subr.bf16.mxu0 0
  %120 = vmatpush1.bf16.msra.mxu0 %v99
  %121 = vmatprep.subr.bf16.mxu0 0
  %122 = vmatpush1.bf16.msra.mxu0 %v100
  %123 = vmatprep.subr.bf16.mxu0 0
  %124 = vmatpush1.bf16.msra.mxu0 0
  %125 = vmatprep.subr.bf16.mxu0 0
  %126 = vmatpush1.bf16.msra.mxu0 0
  %127 = vmatprep.subr.bf16.mxu0 0
  %128 = vmatpush1.bf16.msra.mxu0 0
  %129 = vmatprep.subr.bf16.mxu0 0
  %130 = vmatpush1.bf16.msra.mxu0 0
  %131 = vmatprep.subr.bf16.mxu0 0
  %132 = vmatpush1.bf16.msra.mxu0 0
  %133 = vmatprep.subr.bf16.mxu0 0
  %134 = vmatpush1.bf16.msra.mxu0 0
  %135 = vmatprep.subr.bf16.mxu0 0
  %136 = vmatpush1.bf16.msra.mxu0 0
  %137 = vmatprep.subr.bf16.mxu0 0
  %138 = vmatpush1.bf16.msra.mxu0 0
  %139 = vmatprep.subr.bf16.mxu0 0
  %140 = vmatpush1.bf16.msra.mxu0 0
  %141 = vmatprep.subr.bf16.mxu0 0
  %142 = vmatpush1.bf16.msra.mxu0 0
  %143 = vmatprep.mubr.bf16.mxu0 0
  %144 = vmatmul.mubr.bf16.gmra.mrb[0].mxu0 %v109
  %v145 = vpop.f32.mrb[0].mxu0
  %v146 = vadd.f32 0.0, %v145
  %v147 = vpop.f32.mrb[0].mxu0
  %v148 = vpop.f32.mrb[0].mxu0
  %v149 = vpop.f32.mrb[0].mxu0
  %150 = vdwg.mxu0
  %v163 = vunpack.c.l.b16 %v28
  %v164 = vunpack.c.l.b16 %v29
  %v165 = vunpack.c.l.b16 %v30
  %v166 = vunpack.c.l.b16 %v31
  %v167 = vunpack.c.l.b16 %v32
  %v168 = vunpack.c.l.b16 %v33
  %v169 = vunpack.c.l.b16 %v34
  %v170 = vunpack.c.l.b16 %v35
  %v171 = vunpack.c.l.b16 %v36
  %v172 = vunpack.c.l.b16 %v37
  %v173 = vunpack.c.l.b16 %v38
  %v174 = vunpack.c.l.b16 %v39
  %v175 = vpack.c.b16 %v164, %v163
  %v176 = vpack.c.b16 %v166, %v165
  %v177 = vpack.c.b16 %v168, %v167
  %v178 = vpack.c.b16 %v170, %v169
  %v179 = vpack.c.b16 %v172, %v171
  %v180 = vpack.c.b16 %v174, %v173
  %v188 = vsel %vm107, %v67, 0
  %190 = vmatprep.subr.bf16.mxu0 0
  %191 = vmatpush1.bf16.msra.mxu0 %v175
  %192 = vmatprep.subr.bf16.mxu0 0
  %193 = vmatpush1.bf16.msra.mxu0 %v176
  %194 = vmatprep.subr.bf16.mxu0 0
  %195 = vmatpush1.bf16.msra.mxu0 %v177
  %196 = vmatprep.subr.bf16.mxu0 0
  %197 = vmatpush1.bf16.msra.mxu0 %v178
  %198 = vmatprep.subr.bf16.mxu0 0
  %199 = vmatpush1.bf16.msra.mxu0 %v179
  %200 = vmatprep.subr.bf16.mxu0 0
  %201 = vmatpush1.bf16.msra.mxu0 %v180
  %202 = vmatprep.subr.bf16.mxu0 0
  %203 = vmatpush1.bf16.msra.mxu0 0
  %204 = vmatprep.subr.bf16.mxu0 0
  %205 = vmatpush1.bf16.msra.mxu0 0
  %206 = vmatprep.subr.bf16.mxu0 0
  %207 = vmatpush1.bf16.msra.mxu0 0
  %208 = vmatprep.subr.bf16.mxu0 0
  %209 = vmatpush1.bf16.msra.mxu0 0
  %210 = vmatprep.subr.bf16.mxu0 0
  %211 = vmatpush1.bf16.msra.mxu0 0
  %212 = vmatprep.subr.bf16.mxu0 0
  %213 = vmatpush1.bf16.msra.mxu0 0
  %214 = vmatprep.subr.bf16.mxu0 0
  %215 = vmatpush1.bf16.msra.mxu0 0
  %216 = vmatprep.subr.bf16.mxu0 0
  %217 = vmatpush1.bf16.msra.mxu0 0
  %218 = vmatprep.subr.bf16.mxu0 0
  %219 = vmatpush1.bf16.msra.mxu0 0
  %220 = vmatprep.subr.bf16.mxu0 0
  %221 = vmatpush1.bf16.msra.mxu0 0
  %222 = vmatprep.mubr.bf16.mxu0 0
  %223 = vmatmul.mubr.bf16.gmra.mrb[0].mxu0 %v188
  %v224 = vpop.f32.mrb[0].mxu0
  %v225 = vadd.f32 %v146, %v224
  %v226 = vpop.f32.mrb[0].mxu0
  %v227 = vpop.f32.mrb[0].mxu0
  %v228 = vpop.f32.mrb[0].mxu0
  %229 = vdwg.mxu0
  %v230 = vld [vmem:[%s0 + $0x1] sm:$0x3]
  %v231 = vpack.c.bf16 %v230, %v230
  %v244 = vunpack.c.l.b16 %v54
  %v245 = vunpack.c.l.b16 %v55
  %v246 = vunpack.c.l.b16 %v56
  %v247 = vunpack.c.l.b16 %v57
  %v248 = vunpack.c.l.b16 %v58
  %v249 = vunpack.c.l.b16 %v59
  %v250 = vunpack.c.l.b16 %v60
  %v251 = vunpack.c.l.b16 %v61
  %v252 = vunpack.c.l.b16 %v62
  %v253 = vunpack.c.l.b16 %v63
  %v254 = vunpack.c.l.b16 %v64
  %v255 = vunpack.c.l.b16 %v65
  %v256 = vpack.c.b16 %v245, %v244
  %v257 = vpack.c.b16 %v247, %v246
  %v258 = vpack.c.b16 %v249, %v248
  %v259 = vpack.c.b16 %v251, %v250
  %v260 = vpack.c.b16 %v253, %v252
  %v261 = vpack.c.b16 %v255, %v254
  %v269 = vsel %vm107, %v231, 0
  %271 = vmatprep.subr.bf16.mxu0 0
  %272 = vmatpush1.bf16.msra.mxu0 %v256
  %273 = vmatprep.subr.bf16.mxu0 0
  %274 = vmatpush1.bf16.msra.mxu0 %v257
  %275 = vmatprep.subr.bf16.mxu0 0
  %276 = vmatpush1.bf16.msra.mxu0 %v258
  %277 = vmatprep.subr.bf16.mxu0 0
  %278 = vmatpush1.bf16.msra.mxu0 %v259
  %279 = vmatprep.subr.bf16.mxu0 0
  %280 = vmatpush1.bf16.msra.mxu0 %v260
  %281 = vmatprep.subr.bf16.mxu0 0
  %282 = vmatpush1.bf16.msra.mxu0 %v261
  %283 = vmatprep.subr.bf16.mxu0 0
  %284 = vmatpush1.bf16.msra.mxu0 0
  %285 = vmatprep.subr.bf16.mxu0 0
  %286 = vmatpush1.bf16.msra.mxu0 0
  %287 = vmatprep.subr.bf16.mxu0 0
  %288 = vmatpush1.bf16.msra.mxu0 0
  %289 = vmatprep.subr.bf16.mxu0 0
  %290 = vmatpush1.bf16.msra.mxu0 0
  %291 = vmatprep.subr.bf16.mxu0 0
  %292 = vmatpush1.bf16.msra.mxu0 0
  %293 = vmatprep.subr.bf16.mxu0 0
  %294 = vmatpush1.bf16.msra.mxu0 0
  %295 = vmatprep.subr.bf16.mxu0 0
  %296 = vmatpush1.bf16.msra.mxu0 0
  %297 = vmatprep.subr.bf16.mxu0 0
  %298 = vmatpush1.bf16.msra.mxu0 0
  %299 = vmatprep.subr.bf16.mxu0 0
  %300 = vmatpush1.bf16.msra.mxu0 0
  %301 = vmatprep.subr.bf16.mxu0 0
  %302 = vmatpush1.bf16.msra.mxu0 0
  %303 = vmatprep.mubr.bf16.mxu0 0
  %304 = vmatmul.mubr.bf16.gmra.mrb[0].mxu0 %v269
  %v305 = vpop.f32.mrb[0].mxu0
  %v306 = vadd.f32 0.0, %v305
  %v307 = vpop.f32.mrb[0].mxu0
  %v308 = vpop.f32.mrb[0].mxu0
  %v309 = vpop.f32.mrb[0].mxu0
  %310 = vdwg.mxu0
  %v311 = vadd.f32 %v225, %v306
  %v313 = vlaneseq
  %v314 = vshrl.u32 %v313, 7
  %v315 = vsub.s32 0, %v314
  %v316 = vrot.slane %v27, %v315
  %v318 = vadd.f32 %v311, %v316
  %s319 = scalar_lea.vmem %s0, 4
  %v320 = vld [vmem:[%s319] sm:$0x3]
  %v321 = vpack.c.bf16 %v320, %v320
  %s322 = scalar_lea.vmem %s0, 12
  %v323 = vld [vmem:[%s322] sm:$0x3]
  %v324 = vpack.c.bf16 %v323, %v323
  %v326 = vsel %vm107, %v324, 0
  %328 = vmatprep.subr.bf16.mxu0 0
  %329 = vmatpush1.bf16.msra.mxu0 %v95
  %330 = vmatprep.subr.bf16.mxu0 0
  %331 = vmatpush1.bf16.msra.mxu0 %v96
  %332 = vmatprep.subr.bf16.mxu0 0
  %333 = vmatpush1.bf16.msra.mxu0 %v97
  %334 = vmatprep.subr.bf16.mxu0 0
  %335 = vmatpush1.bf16.msra.mxu0 %v98
  %336 = vmatprep.subr.bf16.mxu0 0
  %337 = vmatpush1.bf16.msra.mxu0 %v99
  %338 = vmatprep.subr.bf16.mxu0 0
  %339 = vmatpush1.bf16.msra.mxu0 %v100
  %340 = vmatprep.subr.bf16.mxu0 0
  %341 = vmatpush1.bf16.msra.mxu0 0
  %342 = vmatprep.subr.bf16.mxu0 0
  %343 = vmatpush1.bf16.msra.mxu0 0
  %344 = vmatprep.subr.bf16.mxu0 0
  %345 = vmatpush1.bf16.msra.mxu0 0
  %346 = vmatprep.subr.bf16.mxu0 0
  %347 = vmatpush1.bf16.msra.mxu0 0
  %348 = vmatprep.subr.bf16.mxu0 0
  %349 = vmatpush1.bf16.msra.mxu0 0
  %350 = vmatprep.subr.bf16.mxu0 0
  %351 = vmatpush1.bf16.msra.mxu0 0
  %352 = vmatprep.subr.bf16.mxu0 0
  %353 = vmatpush1.bf16.msra.mxu0 0
  %354 = vmatprep.subr.bf16.mxu0 0
  %355 = vmatpush1.bf16.msra.mxu0 0
  %356 = vmatprep.subr.bf16.mxu0 0
  %357 = vmatpush1.bf16.msra.mxu0 0
  %358 = vmatprep.subr.bf16.mxu0 0
  %359 = vmatpush1.bf16.msra.mxu0 0
  %360 = vmatprep.mubr.bf16.mxu0 0
  %361 = vmatmul.mubr.bf16.gmra.mrb[0].mxu0 %v326
  %v362 = vpop.f32.mrb[0].mxu0
  %v363 = vadd.f32 0.0, %v362
  %v364 = vpop.f32.mrb[0].mxu0
  %v365 = vpop.f32.mrb[0].mxu0
  %v366 = vpop.f32.mrb[0].mxu0
  %367 = vdwg.mxu0
  %v369 = vsel %vm107, %v321, 0
  %371 = vmatprep.subr.bf16.mxu0 0
  %372 = vmatpush1.bf16.msra.mxu0 %v175
  %373 = vmatprep.subr.bf16.mxu0 0
  %374 = vmatpush1.bf16.msra.mxu0 %v176
  %375 = vmatprep.subr.bf16.mxu0 0
  %376 = vmatpush1.bf16.msra.mxu0 %v177
  %377 = vmatprep.subr.bf16.mxu0 0
  %378 = vmatpush1.bf16.msra.mxu0 %v178
  %379 = vmatprep.subr.bf16.mxu0 0
  %380 = vmatpush1.bf16.msra.mxu0 %v179
  %381 = vmatprep.subr.bf16.mxu0 0
  %382 = vmatpush1.bf16.msra.mxu0 %v180
  %383 = vmatprep.subr.bf16.mxu0 0
  %384 = vmatpush1.bf16.msra.mxu0 0
  %385 = vmatprep.subr.bf16.mxu0 0
  %386 = vmatpush1.bf16.msra.mxu0 0
  %387 = vmatprep.subr.bf16.mxu0 0
  %388 = vmatpush1.bf16.msra.mxu0 0
  %389 = vmatprep.subr.bf16.mxu0 0
  %390 = vmatpush1.bf16.msra.mxu0 0
  %391 = vmatprep.subr.bf16.mxu0 0
  %392 = vmatpush1.bf16.msra.mxu0 0
  %393 = vmatprep.subr.bf16.mxu0 0
  %394 = vmatpush1.bf16.msra.mxu0 0
  %395 = vmatprep.subr.bf16.mxu0 0
  %396 = vmatpush1.bf16.msra.mxu0 0
  %397 = vmatprep.subr.bf16.mxu0 0
  %398 = vmatpush1.bf16.msra.mxu0 0
  %399 = vmatprep.subr.bf16.mxu0 0
  %400 = vmatpush1.bf16.msra.mxu0 0
  %401 = vmatprep.subr.bf16.mxu0 0
  %402 = vmatpush1.bf16.msra.mxu0 0
  %403 = vmatprep.mubr.bf16.mxu0 0
  %404 = vmatmul.mubr.bf16.gmra.mrb[0].mxu0 %v369
  %v405 = vpop.f32.mrb[0].mxu0
  %v406 = vadd.f32 %v363, %v405
  %v407 = vpop.f32.mrb[0].mxu0
  %v408 = vpop.f32.mrb[0].mxu0
  %v409 = vpop.f32.mrb[0].mxu0
  %410 = vdwg.mxu0
  %v411 = vld [vmem:[%s319 + $0x1] sm:$0x3]
  %v412 = vpack.c.bf16 %v411, %v411
  %v414 = vsel %vm107, %v412, 0
  %416 = vmatprep.subr.bf16.mxu0 0
  %417 = vmatpush1.bf16.msra.mxu0 %v256
  %418 = vmatprep.subr.bf16.mxu0 0
  %419 = vmatpush1.bf16.msra.mxu0 %v257
  %420 = vmatprep.subr.bf16.mxu0 0
  %421 = vmatpush1.bf16.msra.mxu0 %v258
  %422 = vmatprep.subr.bf16.mxu0 0
  %423 = vmatpush1.bf16.msra.mxu0 %v259
  %424 = vmatprep.subr.bf16.mxu0 0
  %425 = vmatpush1.bf16.msra.mxu0 %v260
  %426 = vmatprep.subr.bf16.mxu0 0
  %427 = vmatpush1.bf16.msra.mxu0 %v261
  %428 = vmatprep.subr.bf16.mxu0 0
  %429 = vmatpush1.bf16.msra.mxu0 0
  %430 = vmatprep.subr.bf16.mxu0 0
  %431 = vmatpush1.bf16.msra.mxu0 0
  %432 = vmatprep.subr.bf16.mxu0 0
  %433 = vmatpush1.bf16.msra.mxu0 0
  %434 = vmatprep.subr.bf16.mxu0 0
  %435 = vmatpush1.bf16.msra.mxu0 0
  %436 = vmatprep.subr.bf16.mxu0 0
  %437 = vmatpush1.bf16.msra.mxu0 0
  %438 = vmatprep.subr.bf16.mxu0 0
  %439 = vmatpush1.bf16.msra.mxu0 0
  %440 = vmatprep.subr.bf16.mxu0 0
  %441 = vmatpush1.bf16.msra.mxu0 0
  %442 = vmatprep.subr.bf16.mxu0 0
  %443 = vmatpush1.bf16.msra.mxu0 0
  %444 = vmatprep.subr.bf16.mxu0 0
  %445 = vmatpush1.bf16.msra.mxu0 0
  %446 = vmatprep.subr.bf16.mxu0 0
  %447 = vmatpush1.bf16.msra.mxu0 0
  %448 = vmatprep.mubr.bf16.mxu0 0
  %449 = vmatmul.mubr.bf16.gmra.mrb[0].mxu0 %v414
  %v450 = vpop.f32.mrb[0].mxu0
  %v451 = vadd.f32 0.0, %v450
  %v452 = vpop.f32.mrb[0].mxu0
  %v453 = vpop.f32.mrb[0].mxu0
  %v454 = vpop.f32.mrb[0].mxu0
  %455 = vdwg.mxu0
  %v456 = vadd.f32 %v406, %v451
  %v457 = vadd.f32 %v456, %v316
  %v458 = vld [vmem:[%s5] sm:$0xff]
  %v459 = vld [vmem:[%s5 + $0x8] sm:$0xff]
  %v460 = vld [vmem:[%s5 + $0x10] sm:$0xff]
  %v461 = vld [vmem:[%s5 + $0x18] sm:$0xff]
  %v462 = vld [vmem:[%s5 + $0x20] sm:$0xff]
  %v463 = vld [vmem:[%s5 + $0x28] sm:$0xff]
  %v464 = vld [vmem:[%s5 + $0x30] sm:$0xff]
  %v465 = vld [vmem:[%s5 + $0x38] sm:$0xff]
  %v466 = vld [vmem:[%s6] sm:$0xff]
  %v467 = vld [vmem:[%s6 + $0x8] sm:$0xff]
  %v468 = vld [vmem:[%s6 + $0x10] sm:$0xff]
  %v469 = vld [vmem:[%s6 + $0x18] sm:$0xff]
  %vm470 = vcmask 517120
  %v471 = vsel %vm470, %v318, 0.0
  %v472 = vrot.slane %v471, 4
  %v473 = vadd.f32 %v471, %v472
  %v474 = vrot.slane %v473, 2
  %v475 = vadd.f32 %v473, %v474
  %v476 = vrot.slane %v475, 1
  %v477 = vadd.f32 %v475, %v476
  %v478 = vsel %vm470, %v457, 0.0
  %v479 = vrot.slane %v478, 4
  %v480 = vadd.f32 %v478, %v479
  %v481 = vrot.slane %v480, 2
  %v482 = vadd.f32 %v480, %v481
  %v483 = vrot.slane %v482, 1
  %v484 = vadd.f32 %v482, %v483
  %v485 = vadd.f32 %v477, %v484
  %vm486 = vcmask 523264
  %v488 = vsel %vm486, %v485, 0
  %490 = vmatprep.subr.mxu0 0.0
  %491 = vmatpush1.msra.mxu0 %v458
  %492 = vmatprep.subr.mxu0 0.0
  %493 = vmatpush1.msra.mxu0 %v459
  %494 = vmatprep.subr.mxu0 0.0
  %495 = vmatpush1.msra.mxu0 %v460
  %496 = vmatprep.subr.mxu0 0.0
  %497 = vmatpush1.msra.mxu0 %v461
  %498 = vmatprep.subr.mxu0 0.0
  %499 = vmatpush1.msra.mxu0 %v462
  %500 = vmatprep.subr.mxu0 0.0
  %501 = vmatpush1.msra.mxu0 %v463
  %502 = vmatprep.subr.mxu0 0.0
  %503 = vmatpush1.msra.mxu0 %v464
  %504 = vmatprep.subr.mxu0 0.0
  %505 = vmatpush1.msra.mxu0 %v465
  %506 = vmatprep.subr.mxu0 0.0
  %507 = vmatpush1.msra.mxu0 0.0
  %508 = vmatprep.subr.mxu0 0.0
  %509 = vmatpush1.msra.mxu0 0.0
  %510 = vmatprep.subr.mxu0 0.0
  %511 = vmatpush1.msra.mxu0 0.0
  %512 = vmatprep.subr.mxu0 0.0
  %513 = vmatpush1.msra.mxu0 0.0
  %514 = vmatprep.subr.mxu0 0.0
  %515 = vmatpush1.msra.mxu0 0.0
  %516 = vmatprep.subr.mxu0 0.0
  %517 = vmatpush1.msra.mxu0 0.0
  %518 = vmatprep.subr.mxu0 0.0
  %519 = vmatpush1.msra.mxu0 0.0
  %520 = vmatprep.subr.mxu0 0.0
  %521 = vmatpush1.msra.mxu0 0.0
  %522 = vmatprep.subr.mxu0 0.0
  %523 = vmatpush1.msra.mxu0 0.0
  %524 = vmatprep.subr.mxu0 0.0
  %525 = vmatpush1.msra.mxu0 0.0
  %526 = vmatprep.subr.mxu0 0.0
  %527 = vmatpush1.msra.mxu0 0.0
  %528 = vmatprep.subr.mxu0 0.0
  %529 = vmatpush1.msra.mxu0 0.0
  %530 = vmatprep.subr.mxu0 0.0
  %531 = vmatpush1.msra.mxu0 0.0
  %532 = vmatprep.subr.mxu0 0.0
  %533 = vmatpush1.msra.mxu0 0.0
  %534 = vmatprep.subr.mxu0 0.0
  %535 = vmatpush1.msra.mxu0 0.0
  %536 = vmatprep.subr.mxu0 0.0
  %537 = vmatpush1.msra.mxu0 0.0
  %538 = vmatprep.subr.mxu0 0.0
  %539 = vmatpush1.msra.mxu0 0.0
  %540 = vmatprep.subr.mxu0 0.0
  %541 = vmatpush1.msra.mxu0 0.0
  %542 = vmatprep.subr.mxu0 0.0
  %543 = vmatpush1.msra.mxu0 0.0
  %544 = vmatprep.subr.mxu0 0.0
  %545 = vmatpush1.msra.mxu0 0.0
  %546 = vmatprep.subr.mxu0 0.0
  %547 = vmatpush1.msra.mxu0 0.0
  %548 = vmatprep.subr.mxu0 0.0
  %549 = vmatpush1.msra.mxu0 0.0
  %550 = vmatprep.subr.mxu0 0.0
  %551 = vmatpush1.msra.mxu0 0.0
  %552 = vmatprep.subr.mxu0 0.0
  %553 = vmatpush1.msra.mxu0 0.0
  %554 = vmatprep.mubr.f32.mxu0 0.0
  %555 = vmatmul.mubr.f32.gmra.mrb[0].mxu0 %v488
  %v556 = vpop.f32.mrb[0].mxu0
  %v557 = vadd.f32 0.0, %v556
  %v558 = vpop.f32.mrb[0].mxu0
  %559 = vdwg.mxu0
  %v560 = vmul.f32 %v557, 0.125
  %vm561 = vcmask 261120
  %v563 = vsel %vm561, %v560, 0
  %565 = vmatprep.subr.mxu0 0.0
  %566 = vmatpush1.msra.mxu0 %v466
  %567 = vmatprep.subr.mxu0 0.0
  %568 = vmatpush1.msra.mxu0 %v467
  %569 = vmatprep.subr.mxu0 0.0
  %570 = vmatpush1.msra.mxu0 %v468
  %571 = vmatprep.subr.mxu0 0.0
  %572 = vmatpush1.msra.mxu0 %v469
  %573 = vmatprep.subr.mxu0 0.0
  %574 = vmatpush1.msra.mxu0 0.0
  %575 = vmatprep.subr.mxu0 0.0
  %576 = vmatpush1.msra.mxu0 0.0
  %577 = vmatprep.subr.mxu0 0.0
  %578 = vmatpush1.msra.mxu0 0.0
  %579 = vmatprep.subr.mxu0 0.0
  %580 = vmatpush1.msra.mxu0 0.0
  %581 = vmatprep.subr.mxu0 0.0
  %582 = vmatpush1.msra.mxu0 0.0
  %583 = vmatprep.subr.mxu0 0.0
  %584 = vmatpush1.msra.mxu0 0.0
  %585 = vmatprep.subr.mxu0 0.0
  %586 = vmatpush1.msra.mxu0 0.0
  %587 = vmatprep.subr.mxu0 0.0
  %588 = vmatpush1.msra.mxu0 0.0
  %589 = vmatprep.subr.mxu0 0.0
  %590 = vmatpush1.msra.mxu0 0.0
  %591 = vmatprep.subr.mxu0 0.0
  %592 = vmatpush1.msra.mxu0 0.0
  %593 = vmatprep.subr.mxu0 0.0
  %594 = vmatpush1.msra.mxu0 0.0
  %595 = vmatprep.subr.mxu0 0.0
  %596 = vmatpush1.msra.mxu0 0.0
  %597 = vmatprep.subr.mxu0 0.0
  %598 = vmatpush1.msra.mxu0 0.0
  %599 = vmatprep.subr.mxu0 0.0
  %600 = vmatpush1.msra.mxu0 0.0
  %601 = vmatprep.subr.mxu0 0.0
  %602 = vmatpush1.msra.mxu0 0.0
  %603 = vmatprep.subr.mxu0 0.0
  %604 = vmatpush1.msra.mxu0 0.0
  %605 = vmatprep.subr.mxu0 0.0
  %606 = vmatpush1.msra.mxu0 0.0
  %607 = vmatprep.subr.mxu0 0.0
  %608 = vmatpush1.msra.mxu0 0.0
  %609 = vmatprep.subr.mxu0 0.0
  %610 = vmatpush1.msra.mxu0 0.0
  %611 = vmatprep.subr.mxu0 0.0
  %612 = vmatpush1.msra.mxu0 0.0
  %613 = vmatprep.subr.mxu0 0.0
  %614 = vmatpush1.msra.mxu0 0.0
  %615 = vmatprep.subr.mxu0 0.0
  %616 = vmatpush1.msra.mxu0 0.0
  %617 = vmatprep.subr.mxu0 0.0
  %618 = vmatpush1.msra.mxu0 0.0
  %619 = vmatprep.subr.mxu0 0.0
  %620 = vmatpush1.msra.mxu0 0.0
  %621 = vmatprep.subr.mxu0 0.0
  %622 = vmatpush1.msra.mxu0 0.0
  %623 = vmatprep.subr.mxu0 0.0
  %624 = vmatpush1.msra.mxu0 0.0
  %625 = vmatprep.subr.mxu0 0.0
  %626 = vmatpush1.msra.mxu0 0.0
  %627 = vmatprep.subr.mxu0 0.0
  %628 = vmatpush1.msra.mxu0 0.0
  %629 = vmatprep.mubr.f32.mxu0 0.0
  %630 = vmatmul.mubr.f32.gmra.mrb[0].mxu0 %v563
  %v631 = vpop.f32.mrb[0].mxu0
  %v632 = vadd.f32 0.0, %v631
  %v633 = vpop.f32.mrb[0].mxu0
  %634 = vdwg.mxu0
  %v635 = vlaneseq
  %v636 = vshrl.u32 %v635, 7
  %v637 = vsub.s32 0, %v636
  %v638 = vrot.slane %v632, %v637
  %v639 = vsub.f32 %v318, %v638
  %v640 = vmul.f32 %v639, %v639
  %v641 = vsel %vm470, %v640, 0.0
  %v642 = vrot.slane %v641, 4
  %v643 = vadd.f32 %v641, %v642
  %v644 = vrot.slane %v643, 2
  %v645 = vadd.f32 %v643, %v644
  %v646 = vrot.slane %v645, 1
  %v647 = vadd.f32 %v645, %v646
  %v648 = vsub.f32 %v457, %v638
  %v649 = vmul.f32 %v648, %v648
  %v650 = vsel %vm470, %v649, 0.0
  %v651 = vrot.slane %v650, 4
  %v652 = vadd.f32 %v650, %v651
  %v653 = vrot.slane %v652, 2
  %v654 = vadd.f32 %v652, %v653
  %v655 = vrot.slane %v654, 1
  %v656 = vadd.f32 %v654, %v655
  %v657 = vadd.f32 %v647, %v656
  %v659 = vsel %vm486, %v657, 0
  %661 = vmatprep.subr.mxu0 0.0
  %662 = vmatpush1.msra.mxu0 %v458
  %663 = vmatprep.subr.mxu0 0.0
  %664 = vmatpush1.msra.mxu0 %v459
  %665 = vmatprep.subr.mxu0 0.0
  %666 = vmatpush1.msra.mxu0 %v460
  %667 = vmatprep.subr.mxu0 0.0
  %668 = vmatpush1.msra.mxu0 %v461
  %669 = vmatprep.subr.mxu0 0.0
  %670 = vmatpush1.msra.mxu0 %v462
  %671 = vmatprep.subr.mxu0 0.0
  %672 = vmatpush1.msra.mxu0 %v463
  %673 = vmatprep.subr.mxu0 0.0
  %674 = vmatpush1.msra.mxu0 %v464
  %675 = vmatprep.subr.mxu0 0.0
  %676 = vmatpush1.msra.mxu0 %v465
  %677 = vmatprep.subr.mxu0 0.0
  %678 = vmatpush1.msra.mxu0 0.0
  %679 = vmatprep.subr.mxu0 0.0
  %680 = vmatpush1.msra.mxu0 0.0
  %681 = vmatprep.subr.mxu0 0.0
  %682 = vmatpush1.msra.mxu0 0.0
  %683 = vmatprep.subr.mxu0 0.0
  %684 = vmatpush1.msra.mxu0 0.0
  %685 = vmatprep.subr.mxu0 0.0
  %686 = vmatpush1.msra.mxu0 0.0
  %687 = vmatprep.subr.mxu0 0.0
  %688 = vmatpush1.msra.mxu0 0.0
  %689 = vmatprep.subr.mxu0 0.0
  %690 = vmatpush1.msra.mxu0 0.0
  %691 = vmatprep.subr.mxu0 0.0
  %692 = vmatpush1.msra.mxu0 0.0
  %693 = vmatprep.subr.mxu0 0.0
  %694 = vmatpush1.msra.mxu0 0.0
  %695 = vmatprep.subr.mxu0 0.0
  %696 = vmatpush1.msra.mxu0 0.0
  %697 = vmatprep.subr.mxu0 0.0
  %698 = vmatpush1.msra.mxu0 0.0
  %699 = vmatprep.subr.mxu0 0.0
  %700 = vmatpush1.msra.mxu0 0.0
  %701 = vmatprep.subr.mxu0 0.0
  %702 = vmatpush1.msra.mxu0 0.0
  %703 = vmatprep.subr.mxu0 0.0
  %704 = vmatpush1.msra.mxu0 0.0
  %705 = vmatprep.subr.mxu0 0.0
  %706 = vmatpush1.msra.mxu0 0.0
  %707 = vmatprep.subr.mxu0 0.0
  %708 = vmatpush1.msra.mxu0 0.0
  %709 = vmatprep.subr.mxu0 0.0
  %710 = vmatpush1.msra.mxu0 0.0
  %711 = vmatprep.subr.mxu0 0.0
  %712 = vmatpush1.msra.mxu0 0.0
  %713 = vmatprep.subr.mxu0 0.0
  %714 = vmatpush1.msra.mxu0 0.0
  %715 = vmatprep.subr.mxu0 0.0
  %716 = vmatpush1.msra.mxu0 0.0
  %717 = vmatprep.subr.mxu0 0.0
  %718 = vmatpush1.msra.mxu0 0.0
  %719 = vmatprep.subr.mxu0 0.0
  %720 = vmatpush1.msra.mxu0 0.0
  %721 = vmatprep.subr.mxu0 0.0
  %722 = vmatpush1.msra.mxu0 0.0
  %723 = vmatprep.subr.mxu0 0.0
  %724 = vmatpush1.msra.mxu0 0.0
  %725 = vmatprep.mubr.f32.mxu0 0.0
  %726 = vmatmul.mubr.f32.gmra.mrb[0].mxu0 %v659
  %v727 = vpop.f32.mrb[0].mxu0
  %v728 = vadd.f32 0.0, %v727
  %v729 = vpop.f32.mrb[0].mxu0
  %730 = vdwg.mxu0
  %v731 = vmul.f32 %v728, 0.125
  %v732 = vld [vmem:[%s3] sm:$0x1]
  %v733 = vadd.f32 %v731, 1e-05
  %v734 = vrsqrt.pop %v733
  %v735 = vmul.f32 %v732, %v734
  %v737 = vsel %vm561, %v735, 0
  %739 = vmatprep.subr.mxu0 0.0
  %740 = vmatpush1.msra.mxu0 %v466
  %741 = vmatprep.subr.mxu0 0.0
  %742 = vmatpush1.msra.mxu0 %v467
  %743 = vmatprep.subr.mxu0 0.0
  %744 = vmatpush1.msra.mxu0 %v468
  %745 = vmatprep.subr.mxu0 0.0
  %746 = vmatpush1.msra.mxu0 %v469
  %747 = vmatprep.subr.mxu0 0.0
  %748 = vmatpush1.msra.mxu0 0.0
  %749 = vmatprep.subr.mxu0 0.0
  %750 = vmatpush1.msra.mxu0 0.0
  %751 = vmatprep.subr.mxu0 0.0
  %752 = vmatpush1.msra.mxu0 0.0
  %753 = vmatprep.subr.mxu0 0.0
  %754 = vmatpush1.msra.mxu0 0.0
  %755 = vmatprep.subr.mxu0 0.0
  %756 = vmatpush1.msra.mxu0 0.0
  %757 = vmatprep.subr.mxu0 0.0
  %758 = vmatpush1.msra.mxu0 0.0
  %759 = vmatprep.subr.mxu0 0.0
  %760 = vmatpush1.msra.mxu0 0.0
  %761 = vmatprep.subr.mxu0 0.0
  %762 = vmatpush1.msra.mxu0 0.0
  %763 = vmatprep.subr.mxu0 0.0
  %764 = vmatpush1.msra.mxu0 0.0
  %765 = vmatprep.subr.mxu0 0.0
  %766 = vmatpush1.msra.mxu0 0.0
  %767 = vmatprep.subr.mxu0 0.0
  %768 = vmatpush1.msra.mxu0 0.0
  %769 = vmatprep.subr.mxu0 0.0
  %770 = vmatpush1.msra.mxu0 0.0
  %771 = vmatprep.subr.mxu0 0.0
  %772 = vmatpush1.msra.mxu0 0.0
  %773 = vmatprep.subr.mxu0 0.0
  %774 = vmatpush1.msra.mxu0 0.0
  %775 = vmatprep.subr.mxu0 0.0
  %776 = vmatpush1.msra.mxu0 0.0
  %777 = vmatprep.subr.mxu0 0.0
  %778 = vmatpush1.msra.mxu0 0.0
  %779 = vmatprep.subr.mxu0 0.0
  %780 = vmatpush1.msra.mxu0 0.0
  %781 = vmatprep.subr.mxu0 0.0
  %782 = vmatpush1.msra.mxu0 0.0
  %783 = vmatprep.subr.mxu0 0.0
  %784 = vmatpush1.msra.mxu0 0.0
  %785 = vmatprep.subr.mxu0 0.0
  %786 = vmatpush1.msra.mxu0 0.0
  %787 = vmatprep.subr.mxu0 0.0
  %788 = vmatpush1.msra.mxu0 0.0
  %789 = vmatprep.subr.mxu0 0.0
  %790 = vmatpush1.msra.mxu0 0.0
  %791 = vmatprep.subr.mxu0 0.0
  %792 = vmatpush1.msra.mxu0 0.0
  %793 = vmatprep.subr.mxu0 0.0
  %794 = vmatpush1.msra.mxu0 0.0
  %795 = vmatprep.subr.mxu0 0.0
  %796 = vmatpush1.msra.mxu0 0.0
  %797 = vmatprep.subr.mxu0 0.0
  %798 = vmatpush1.msra.mxu0 0.0
  %799 = vmatprep.subr.mxu0 0.0
  %800 = vmatpush1.msra.mxu0 0.0
  %801 = vmatprep.subr.mxu0 0.0
  %802 = vmatpush1.msra.mxu0 0.0
  %803 = vmatprep.mubr.f32.mxu0 0.0
  %804 = vmatmul.mubr.f32.gmra.mrb[0].mxu0 %v737
  %v805 = vpop.f32.mrb[0].mxu0
  %v806 = vadd.f32 0.0, %v805
  %v807 = vpop.f32.mrb[0].mxu0
  %808 = vdwg.mxu0
  %v809 = vld [vmem:[%s4] sm:$0x1]
  %v811 = vsel %vm561, %v809, 0
  %813 = vmatprep.subr.mxu0 0.0
  %814 = vmatpush1.msra.mxu0 %v466
  %815 = vmatprep.subr.mxu0 0.0
  %816 = vmatpush1.msra.mxu0 %v467
  %817 = vmatprep.subr.mxu0 0.0
  %818 = vmatpush1.msra.mxu0 %v468
  %819 = vmatprep.subr.mxu0 0.0
  %820 = vmatpush1.msra.mxu0 %v469
  %821 = vmatprep.subr.mxu0 0.0
  %822 = vmatpush1.msra.mxu0 0.0
  %823 = vmatprep.subr.mxu0 0.0
  %824 = vmatpush1.msra.mxu0 0.0
  %825 = vmatprep.subr.mxu0 0.0
  %826 = vmatpush1.msra.mxu0 0.0
  %827 = vmatprep.subr.mxu0 0.0
  %828 = vmatpush1.msra.mxu0 0.0
  %829 = vmatprep.subr.mxu0 0.0
  %830 = vmatpush1.msra.mxu0 0.0
  %831 = vmatprep.subr.mxu0 0.0
  %832 = vmatpush1.msra.mxu0 0.0
  %833 = vmatprep.subr.mxu0 0.0
  %834 = vmatpush1.msra.mxu0 0.0
  %835 = vmatprep.subr.mxu0 0.0
  %836 = vmatpush1.msra.mxu0 0.0
  %837 = vmatprep.subr.mxu0 0.0
  %838 = vmatpush1.msra.mxu0 0.0
  %839 = vmatprep.subr.mxu0 0.0
  %840 = vmatpush1.msra.mxu0 0.0
  %841 = vmatprep.subr.mxu0 0.0
  %842 = vmatpush1.msra.mxu0 0.0
  %843 = vmatprep.subr.mxu0 0.0
  %844 = vmatpush1.msra.mxu0 0.0
  %845 = vmatprep.subr.mxu0 0.0
  %846 = vmatpush1.msra.mxu0 0.0
  %847 = vmatprep.subr.mxu0 0.0
  %848 = vmatpush1.msra.mxu0 0.0
  %849 = vmatprep.subr.mxu0 0.0
  %850 = vmatpush1.msra.mxu0 0.0
  %851 = vmatprep.subr.mxu0 0.0
  %852 = vmatpush1.msra.mxu0 0.0
  %853 = vmatprep.subr.mxu0 0.0
  %854 = vmatpush1.msra.mxu0 0.0
  %855 = vmatprep.subr.mxu0 0.0
  %856 = vmatpush1.msra.mxu0 0.0
  %857 = vmatprep.subr.mxu0 0.0
  %858 = vmatpush1.msra.mxu0 0.0
  %859 = vmatprep.subr.mxu0 0.0
  %860 = vmatpush1.msra.mxu0 0.0
  %861 = vmatprep.subr.mxu0 0.0
  %862 = vmatpush1.msra.mxu0 0.0
  %863 = vmatprep.subr.mxu0 0.0
  %864 = vmatpush1.msra.mxu0 0.0
  %865 = vmatprep.subr.mxu0 0.0
  %866 = vmatpush1.msra.mxu0 0.0
  %867 = vmatprep.subr.mxu0 0.0
  %868 = vmatpush1.msra.mxu0 0.0
  %869 = vmatprep.subr.mxu0 0.0
  %870 = vmatpush1.msra.mxu0 0.0
  %871 = vmatprep.subr.mxu0 0.0
  %872 = vmatpush1.msra.mxu0 0.0
  %873 = vmatprep.subr.mxu0 0.0
  %874 = vmatpush1.msra.mxu0 0.0
  %875 = vmatprep.subr.mxu0 0.0
  %876 = vmatpush1.msra.mxu0 0.0
  %877 = vmatprep.mubr.f32.mxu0 0.0
  %878 = vmatmul.mubr.f32.gmra.mrb[0].mxu0 %v811
  %v879 = vpop.f32.mrb[0].mxu0
  %v880 = vadd.f32 0.0, %v879
  %v881 = vpop.f32.mrb[0].mxu0
  %882 = vdwg.mxu0
  %v883 = vlaneseq
  %v884 = vshrl.u32 %v883, 7
  %v885 = vsub.s32 0, %v884
  %v886 = vrot.slane %v806, %v885
  %v887 = vmul.f32 %v639, %v886
  %v888 = vlaneseq
  %v889 = vshrl.u32 %v888, 7
  %v890 = vsub.s32 0, %v889
  %v891 = vrot.slane %v880, %v890
  %v892 = vadd.f32 %v887, %v891
  %v893 = vmul.f32 %v648, %v886
  %v894 = vadd.f32 %v893, %v891
  %vm895 = vcmp.ge.f32.partialorder %v892, 0.0
  %v896 = vmul.f32 %v892, 0.01
  %v897 = vsel %vm895, %v892, %v896
  %898 = vst.msk [vmem:[%s7] sm:$0x3] %vm470, %v897
  %vm899 = vcmp.ge.f32.partialorder %v894, 0.0
  %v900 = vmul.f32 %v894, 0.01
  %v901 = vsel %vm899, %v894, %v900
  %s902 = scalar_lea.vmem %s7, 2
  %903 = vst.msk [vmem:[%s902] sm:$0x3] %vm470, %v901
  // Predicated region
  $region30: #{_lambda_.12} parent=0 // pred_check
    _
  $region31: #{_lambda_.12} parent=0 // pred_check_branch
    %905 = sbr.rel (0) target = $region33
  $region32: #{_lambda_.12} parent=0 // pred_region
    _
  $region33: #{_lambda_.12} parent=0 // pred_fallthru
    _
  // Predicated region
  $region34: #{_lambda_.12} parent=0 // pred_check
    _
  $region35: #{_lambda_.12} parent=0 // pred_check_branch
    %907 = sbr.rel (0) target = $region37
  $region36: #{_lambda_.12} parent=0 // pred_region
    _
  $region37: #{_lambda_.12} parent=0 // pred_fallthru
    _

// kernel: _lambda_.14
$region0: #{_lambda_.14}
  #allocation0 [shape = 'u32[]', space=smem, size = 0x4, offset = 0x4, fixed_abs, tag = 'smem constant byte address 0x4 - core index']
  #allocation1 [shape = 'u32[144,128]{1,0:T(1,128)}', space=vmem, size = 0x12000, scoped, tag = 'internal scratch']
  %s0 = inlined_call_operand.vmem [shape: f32[1,2,3,64], index: 0, kind: input, shape index: {}]
  %s1 = inlined_call_operand.vmem [shape: bf16[3,64,64], index: 1, kind: input, shape index: {}]
  %s2 = inlined_call_operand.vmem [shape: f32[1,64], index: 2, kind: input, shape index: {}]
  %s3 = inlined_call_operand.vmem [shape: f32[1,16], index: 3, kind: input, shape index: {}]
  %s4 = inlined_call_operand.vmem [shape: f32[1,16], index: 4, kind: input, shape index: {}]
  %s5 = inlined_call_operand.vmem [shape: f32[64,16], index: 5, kind: input, shape index: {}]
  %s6 = inlined_call_operand.vmem [shape: f32[16,64], index: 6, kind: input, shape index: {}]
  %s7 = inlined_call_operand.vmem [shape: f32[2,2,2,64], index: 7, kind: output, shape index: {}]
  %s8 = sld [smem:[#allocation0]]
  $region38: #{_lambda_.14} parent=0
    _
  %s10 = ssub.s32 1, %s8
  %s11 = scalar_select 0, %s10, %s8
  // Predicated region
  $region2: #{_lambda_.14} parent=0 // pred_check
    _
  $region3: #{_lambda_.14} parent=0 // pred_check_branch
    %13 = sbr.rel (0) target = $region5
  $region4: #{_lambda_.14} parent=0 // pred_region
    _
  $region5: #{_lambda_.14} parent=0 // pred_fallthru
    _
  // Predicated region
  $region6: #{_lambda_.14} parent=0 // pred_check
    _
  $region7: #{_lambda_.14} parent=0 // pred_check_branch
    %15 = sbr.rel (0) target = $region9
  $region8: #{_lambda_.14} parent=0 // pred_region
    _
  $region9: #{_lambda_.14} parent=0 // pred_fallthru
    _
  // Predicated region
  $region10: #{_lambda_.14} parent=0 // pred_check
    _
  $region11: #{_lambda_.14} parent=0 // pred_check_branch
    %17 = sbr.rel (0) target = $region13
  $region12: #{_lambda_.14} parent=0 // pred_region
    _
  $region13: #{_lambda_.14} parent=0 // pred_fallthru
    _
  // Predicated region
  $region14: #{_lambda_.14} parent=0 // pred_check
    _
  $region15: #{_lambda_.14} parent=0 // pred_check_branch
    %19 = sbr.rel (0) target = $region17
  $region16: #{_lambda_.14} parent=0 // pred_region
    _
  $region17: #{_lambda_.14} parent=0 // pred_fallthru
    _
  // Predicated region
  $region18: #{_lambda_.14} parent=0 // pred_check
    _
  $region19: #{_lambda_.14} parent=0 // pred_check_branch
    %21 = sbr.rel (0) target = $region21
  $region20: #{_lambda_.14} parent=0 // pred_region
    _
  $region21: #{_lambda_.14} parent=0 // pred_fallthru
    _
  // Predicated region
  $region22: #{_lambda_.14} parent=0 // pred_check
    _
  $region23: #{_lambda_.14} parent=0 // pred_check_branch
    %23 = sbr.rel (0) target = $region25
  $region24: #{_lambda_.14} parent=0 // pred_region
    _
  $region25: #{_lambda_.14} parent=0 // pred_fallthru
    _
  // Predicated region
  $region26: #{_lambda_.14} parent=0 // pred_check
    _
  $region27: #{_lambda_.14} parent=0 // pred_check_branch
    %25 = sbr.rel (0) target = $region29
  $region28: #{_lambda_.14} parent=0 // pred_region
    _
  $region29: #{_lambda_.14} parent=0 // pred_fallthru
    _
  %v27 = vld [vmem:[%s2] sm:$0x1]
  %v28 = vld [vmem:[%s1] sm:$0xf]
  %v29 = vld [vmem:[%s1 + $0x4] sm:$0xf]
  %v30 = vld [vmem:[%s1 + $0x8] sm:$0xf]
  %v31 = vld [vmem:[%s1 + $0xc] sm:$0xf]
  %v32 = vld [vmem:[%s1 + $0x10] sm:$0xf]
  %v33 = vld [vmem:[%s1 + $0x14] sm:$0xf]
  %v34 = vld [vmem:[%s1 + $0x18] sm:$0xf]
  %v35 = vld [vmem:[%s1 + $0x1c] sm:$0xf]
  %s36 = scalar_lea.vmem %s1, 32
  %v37 = vld [vmem:[%s36] sm:$0xf]
  %v38 = vld [vmem:[%s36 + $0x4] sm:$0xf]
  %v39 = vld [vmem:[%s36 + $0x8] sm:$0xf]
  %v40 = vld [vmem:[%s36 + $0xc] sm:$0xf]
  %v41 = vld [vmem:[%s36 + $0x10] sm:$0xf]
  %v42 = vld [vmem:[%s36 + $0x14] sm:$0xf]
  %v43 = vld [vmem:[%s36 + $0x18] sm:$0xf]
  %v44 = vld [vmem:[%s36 + $0x1c] sm:$0xf]
  %s45 = scalar_lea.vmem %s1, 64
  %v46 = vld [vmem:[%s45] sm:$0xf]
  %v47 = vld [vmem:[%s45 + $0x4] sm:$0xf]
  %v48 = vld [vmem:[%s45 + $0x8] sm:$0xf]
  %v49 = vld [vmem:[%s45 + $0xc] sm:$0xf]
  %v50 = vld [vmem:[%s45 + $0x10] sm:$0xf]
  %v51 = vld [vmem:[%s45 + $0x14] sm:$0xf]
  %v52 = vld [vmem:[%s45 + $0x18] sm:$0xf]
  %v53 = vld [vmem:[%s45 + $0x1c] sm:$0xf]
  %v54 = vld [vmem:[%s0] sm:$0x3]
  %v55 = vpack.c.bf16 %v54, %v54
  %v57 = vlaneseq
  %v58 = vshrl.u32 %v57, 7
  %v59 = vsub.s32 0, %v58
  %v60 = vrot.slane %v27, %v59
  %v70 = vunpack.c.l.b16 %v37
  %v71 = vunpack.c.l.b16 %v38
  %v72 = vunpack.c.l.b16 %v39
  %v73 = vunpack.c.l.b16 %v40
  %v74 = vunpack.c.l.b16 %v41
  %v75 = vunpack.c.l.b16 %v42
  %v76 = vunpack.c.l.b16 %v43
  %v77 = vunpack.c.l.b16 %v44
  %v78 = vpack.c.b16 %v71, %v70
  %v79 = vpack.c.b16 %v73, %v72
  %v80 = vpack.c.b16 %v75, %v74
  %v81 = vpack.c.b16 %v77, %v76
  %vm86 = vcmask 523264
  %v88 = vsel %vm86, %v55, 0
  %90 = vmatprep.subr.bf16.mxu0 0
  %91 = vmatpush1.bf16.msra.mxu0 %v78
  %92 = vmatprep.subr.bf16.mxu0 0
  %93 = vmatpush1.bf16.msra.mxu0 %v79
  %94 = vmatprep.subr.bf16.mxu0 0
  %95 = vmatpush1.bf16.msra.mxu0 %v80
  %96 = vmatprep.subr.bf16.mxu0 0
  %97 = vmatpush1.bf16.msra.mxu0 %v81
  %98 = vmatprep.subr.bf16.mxu0 0
  %99 = vmatpush1.bf16.msra.mxu0 0
  %100 = vmatprep.subr.bf16.mxu0 0
  %101 = vmatpush1.bf16.msra.mxu0 0
  %102 = vmatprep.subr.bf16.mxu0 0
  %103 = vmatpush1.bf16.msra.mxu0 0
  %104 = vmatprep.subr.bf16.mxu0 0
  %105 = vmatpush1.bf16.msra.mxu0 0
  %106 = vmatprep.subr.bf16.mxu0 0
  %107 = vmatpush1.bf16.msra.mxu0 0
  %108 = vmatprep.subr.bf16.mxu0 0
  %109 = vmatpush1.bf16.msra.mxu0 0
  %110 = vmatprep.subr.bf16.mxu0 0
  %111 = vmatpush1.bf16.msra.mxu0 0
  %112 = vmatprep.subr.bf16.mxu0 0
  %113 = vmatpush1.bf16.msra.mxu0 0
  %114 = vmatprep.subr.bf16.mxu0 0
  %115 = vmatpush1.bf16.msra.mxu0 0
  %116 = vmatprep.subr.bf16.mxu0 0
  %117 = vmatpush1.bf16.msra.mxu0 0
  %118 = vmatprep.subr.bf16.mxu0 0
  %119 = vmatpush1.bf16.msra.mxu0 0
  %120 = vmatprep.subr.bf16.mxu0 0
  %121 = vmatpush1.bf16.msra.mxu0 0
  %122 = vmatprep.mubr.bf16.mxu0 0
  %123 = vmatmul.mubr.bf16.gmra.mrb[0].mxu0 %v88
  %v124 = vpop.f32.mrb[0].mxu0
  %v125 = vadd.f32 %v60, %v124
  %v126 = vpop.f32.mrb[0].mxu0
  %v127 = vpop.f32.mrb[0].mxu0
  %v128 = vpop.f32.mrb[0].mxu0
  %129 = vdwg.mxu0
  %s130 = scalar_lea.vmem %s0, 4
  %v131 = vld [vmem:[%s130] sm:$0x3]
  %v132 = vpack.c.bf16 %v131, %v131
  %v134 = vsel %vm86, %v132, 0
  %136 = vmatprep.subr.bf16.mxu0 0
  %137 = vmatpush1.bf16.msra.mxu0 %v78
  %138 = vmatprep.subr.bf16.mxu0 0
  %139 = vmatpush1.bf16.msra.mxu0 %v79
  %140 = vmatprep.subr.bf16.mxu0 0
  %141 = vmatpush1.bf16.msra.mxu0 %v80
  %142 = vmatprep.subr.bf16.mxu0 0
  %143 = vmatpush1.bf16.msra.mxu0 %v81
  %144 = vmatprep.subr.bf16.mxu0 0
  %145 = vmatpush1.bf16.msra.mxu0 0
  %146 = vmatprep.subr.bf16.mxu0 0
  %147 = vmatpush1.bf16.msra.mxu0 0
  %148 = vmatprep.subr.bf16.mxu0 0
  %149 = vmatpush1.bf16.msra.mxu0 0
  %150 = vmatprep.subr.bf16.mxu0 0
  %151 = vmatpush1.bf16.msra.mxu0 0
  %152 = vmatprep.subr.bf16.mxu0 0
  %153 = vmatpush1.bf16.msra.mxu0 0
  %154 = vmatprep.subr.bf16.mxu0 0
  %155 = vmatpush1.bf16.msra.mxu0 0
  %156 = vmatprep.subr.bf16.mxu0 0
  %157 = vmatpush1.bf16.msra.mxu0 0
  %158 = vmatprep.subr.bf16.mxu0 0
  %159 = vmatpush1.bf16.msra.mxu0 0
  %160 = vmatprep.subr.bf16.mxu0 0
  %161 = vmatpush1.bf16.msra.mxu0 0
  %162 = vmatprep.subr.bf16.mxu0 0
  %163 = vmatpush1.bf16.msra.mxu0 0
  %164 = vmatprep.subr.bf16.mxu0 0
  %165 = vmatpush1.bf16.msra.mxu0 0
  %166 = vmatprep.subr.bf16.mxu0 0
  %167 = vmatpush1.bf16.msra.mxu0 0
  %168 = vmatprep.mubr.bf16.mxu0 0
  %169 = vmatmul.mubr.bf16.gmra.mrb[0].mxu0 %v134
  %v170 = vpop.f32.mrb[0].mxu0
  %v171 = vadd.f32 %v60, %v170
  %v172 = vpop.f32.mrb[0].mxu0
  %v173 = vpop.f32.mrb[0].mxu0
  %v174 = vpop.f32.mrb[0].mxu0
  %175 = vdwg.mxu0
  %v176 = vld [vmem:[%s0 + $0x1] sm:$0x3]
  %v177 = vpack.c.bf16 %v176, %v176
  %v186 = vunpack.c.l.b16 %v28
  %v187 = vunpack.c.l.b16 %v29
  %v188 = vunpack.c.l.b16 %v30
  %v189 = vunpack.c.l.b16 %v31
  %v190 = vunpack.c.l.b16 %v32
  %v191 = vunpack.c.l.b16 %v33
  %v192 = vunpack.c.l.b16 %v34
  %v193 = vunpack.c.l.b16 %v35
  %v194 = vpack.c.b16 %v187, %v186
  %v195 = vpack.c.b16 %v189, %v188
  %v196 = vpack.c.b16 %v191, %v190
  %v197 = vpack.c.b16 %v193, %v192
  %v203 = vsel %vm86, %v177, 0
  %205 = vmatprep.subr.bf16.mxu0 0
  %206 = vmatpush1.bf16.msra.mxu0 %v194
  %207 = vmatprep.subr.bf16.mxu0 0
  %208 = vmatpush1.bf16.msra.mxu0 %v195
  %209 = vmatprep.subr.bf16.mxu0 0
  %210 = vmatpush1.bf16.msra.mxu0 %v196
  %211 = vmatprep.subr.bf16.mxu0 0
  %212 = vmatpush1.bf16.msra.mxu0 %v197
  %213 = vmatprep.subr.bf16.mxu0 0
  %214 = vmatpush1.bf16.msra.mxu0 0
  %215 = vmatprep.subr.bf16.mxu0 0
  %216 = vmatpush1.bf16.msra.mxu0 0
  %217 = vmatprep.subr.bf16.mxu0 0
  %218 = vmatpush1.bf16.msra.mxu0 0
  %219 = vmatprep.subr.bf16.mxu0 0
  %220 = vmatpush1.bf16.msra.mxu0 0
  %221 = vmatprep.subr.bf16.mxu0 0
  %222 = vmatpush1.bf16.msra.mxu0 0
  %223 = vmatprep.subr.bf16.mxu0 0
  %224 = vmatpush1.bf16.msra.mxu0 0
  %225 = vmatprep.subr.bf16.mxu0 0
  %226 = vmatpush1.bf16.msra.mxu0 0
  %227 = vmatprep.subr.bf16.mxu0 0
  %228 = vmatpush1.bf16.msra.mxu0 0
  %229 = vmatprep.subr.bf16.mxu0 0
  %230 = vmatpush1.bf16.msra.mxu0 0
  %231 = vmatprep.subr.bf16.mxu0 0
  %232 = vmatpush1.bf16.msra.mxu0 0
  %233 = vmatprep.subr.bf16.mxu0 0
  %234 = vmatpush1.bf16.msra.mxu0 0
  %235 = vmatprep.subr.bf16.mxu0 0
  %236 = vmatpush1.bf16.msra.mxu0 0
  %237 = vmatprep.mubr.bf16.mxu0 0
  %238 = vmatmul.mubr.bf16.gmra.mrb[0].mxu0 %v203
  %v239 = vpop.f32.mrb[0].mxu0
  %v240 = vadd.f32 0.0, %v239
  %v241 = vpop.f32.mrb[0].mxu0
  %v242 = vpop.f32.mrb[0].mxu0
  %v243 = vpop.f32.mrb[0].mxu0
  %244 = vdwg.mxu0
  %v253 = vunpack.c.l.b16 %v46
  %v254 = vunpack.c.l.b16 %v47
  %v255 = vunpack.c.l.b16 %v48
  %v256 = vunpack.c.l.b16 %v49
  %v257 = vunpack.c.l.b16 %v50
  %v258 = vunpack.c.l.b16 %v51
  %v259 = vunpack.c.l.b16 %v52
  %v260 = vunpack.c.l.b16 %v53
  %v261 = vpack.c.b16 %v254, %v253
  %v262 = vpack.c.b16 %v256, %v255
  %v263 = vpack.c.b16 %v258, %v257
  %v264 = vpack.c.b16 %v260, %v259
  %269 = vmatprep.subr.bf16.mxu0 0
  %270 = vmatpush1.bf16.msra.mxu0 %v261
  %271 = vmatprep.subr.bf16.mxu0 0
  %272 = vmatpush1.bf16.msra.mxu0 %v262
  %273 = vmatprep.subr.bf16.mxu0 0
  %274 = vmatpush1.bf16.msra.mxu0 %v263
  %275 = vmatprep.subr.bf16.mxu0 0
  %276 = vmatpush1.bf16.msra.mxu0 %v264
  %277 = vmatprep.subr.bf16.mxu0 0
  %278 = vmatpush1.bf16.msra.mxu0 0
  %279 = vmatprep.subr.bf16.mxu0 0
  %280 = vmatpush1.bf16.msra.mxu0 0
  %281 = vmatprep.subr.bf16.mxu0 0
  %282 = vmatpush1.bf16.msra.mxu0 0
  %283 = vmatprep.subr.bf16.mxu0 0
  %284 = vmatpush1.bf16.msra.mxu0 0
  %285 = vmatprep.subr.bf16.mxu0 0
  %286 = vmatpush1.bf16.msra.mxu0 0
  %287 = vmatprep.subr.bf16.mxu0 0
  %288 = vmatpush1.bf16.msra.mxu0 0
  %289 = vmatprep.subr.bf16.mxu0 0
  %290 = vmatpush1.bf16.msra.mxu0 0
  %291 = vmatprep.subr.bf16.mxu0 0
  %292 = vmatpush1.bf16.msra.mxu0 0
  %293 = vmatprep.subr.bf16.mxu0 0
  %294 = vmatpush1.bf16.msra.mxu0 0
  %295 = vmatprep.subr.bf16.mxu0 0
  %296 = vmatpush1.bf16.msra.mxu0 0
  %297 = vmatprep.subr.bf16.mxu0 0
  %298 = vmatpush1.bf16.msra.mxu0 0
  %299 = vmatprep.subr.bf16.mxu0 0
  %300 = vmatpush1.bf16.msra.mxu0 0
  %301 = vmatprep.mubr.bf16.mxu0 0
  %302 = vmatmul.mubr.bf16.gmra.mrb[0].mxu0 %v88
  %v303 = vpop.f32.mrb[0].mxu0
  %v304 = vadd.f32 %v240, %v303
  %v305 = vpop.f32.mrb[0].mxu0
  %v306 = vpop.f32.mrb[0].mxu0
  %v307 = vpop.f32.mrb[0].mxu0
  %308 = vdwg.mxu0
  %v309 = vadd.f32 %v304, %v60
  %v310 = vld [vmem:[%s130 + $0x1] sm:$0x3]
  %v311 = vpack.c.bf16 %v310, %v310
  %v313 = vsel %vm86, %v311, 0
  %315 = vmatprep.subr.bf16.mxu0 0
  %316 = vmatpush1.bf16.msra.mxu0 %v194
  %317 = vmatprep.subr.bf16.mxu0 0
  %318 = vmatpush1.bf16.msra.mxu0 %v195
  %319 = vmatprep.subr.bf16.mxu0 0
  %320 = vmatpush1.bf16.msra.mxu0 %v196
  %321 = vmatprep.subr.bf16.mxu0 0
  %322 = vmatpush1.bf16.msra.mxu0 %v197
  %323 = vmatprep.subr.bf16.mxu0 0
  %324 = vmatpush1.bf16.msra.mxu0 0
  %325 = vmatprep.subr.bf16.mxu0 0
  %326 = vmatpush1.bf16.msra.mxu0 0
  %327 = vmatprep.subr.bf16.mxu0 0
  %328 = vmatpush1.bf16.msra.mxu0 0
  %329 = vmatprep.subr.bf16.mxu0 0
  %330 = vmatpush1.bf16.msra.mxu0 0
  %331 = vmatprep.subr.bf16.mxu0 0
  %332 = vmatpush1.bf16.msra.mxu0 0
  %333 = vmatprep.subr.bf16.mxu0 0
  %334 = vmatpush1.bf16.msra.mxu0 0
  %335 = vmatprep.subr.bf16.mxu0 0
  %336 = vmatpush1.bf16.msra.mxu0 0
  %337 = vmatprep.subr.bf16.mxu0 0
  %338 = vmatpush1.bf16.msra.mxu0 0
  %339 = vmatprep.subr.bf16.mxu0 0
  %340 = vmatpush1.bf16.msra.mxu0 0
  %341 = vmatprep.subr.bf16.mxu0 0
  %342 = vmatpush1.bf16.msra.mxu0 0
  %343 = vmatprep.subr.bf16.mxu0 0
  %344 = vmatpush1.bf16.msra.mxu0 0
  %345 = vmatprep.subr.bf16.mxu0 0
  %346 = vmatpush1.bf16.msra.mxu0 0
  %347 = vmatprep.mubr.bf16.mxu0 0
  %348 = vmatmul.mubr.bf16.gmra.mrb[0].mxu0 %v313
  %v349 = vpop.f32.mrb[0].mxu0
  %v350 = vadd.f32 0.0, %v349
  %v351 = vpop.f32.mrb[0].mxu0
  %v352 = vpop.f32.mrb[0].mxu0
  %v353 = vpop.f32.mrb[0].mxu0
  %354 = vdwg.mxu0
  %355 = vmatprep.subr.bf16.mxu0 0
  %356 = vmatpush1.bf16.msra.mxu0 %v261
  %357 = vmatprep.subr.bf16.mxu0 0
  %358 = vmatpush1.bf16.msra.mxu0 %v262
  %359 = vmatprep.subr.bf16.mxu0 0
  %360 = vmatpush1.bf16.msra.mxu0 %v263
  %361 = vmatprep.subr.bf16.mxu0 0
  %362 = vmatpush1.bf16.msra.mxu0 %v264
  %363 = vmatprep.subr.bf16.mxu0 0
  %364 = vmatpush1.bf16.msra.mxu0 0
  %365 = vmatprep.subr.bf16.mxu0 0
  %366 = vmatpush1.bf16.msra.mxu0 0
  %367 = vmatprep.subr.bf16.mxu0 0
  %368 = vmatpush1.bf16.msra.mxu0 0
  %369 = vmatprep.subr.bf16.mxu0 0
  %370 = vmatpush1.bf16.msra.mxu0 0
  %371 = vmatprep.subr.bf16.mxu0 0
  %372 = vmatpush1.bf16.msra.mxu0 0
  %373 = vmatprep.subr.bf16.mxu0 0
  %374 = vmatpush1.bf16.msra.mxu0 0
  %375 = vmatprep.subr.bf16.mxu0 0
  %376 = vmatpush1.bf16.msra.mxu0 0
  %377 = vmatprep.subr.bf16.mxu0 0
  %378 = vmatpush1.bf16.msra.mxu0 0
  %379 = vmatprep.subr.bf16.mxu0 0
  %380 = vmatpush1.bf16.msra.mxu0 0
  %381 = vmatprep.subr.bf16.mxu0 0
  %382 = vmatpush1.bf16.msra.mxu0 0
  %383 = vmatprep.subr.bf16.mxu0 0
  %384 = vmatpush1.bf16.msra.mxu0 0
  %385 = vmatprep.subr.bf16.mxu0 0
  %386 = vmatpush1.bf16.msra.mxu0 0
  %387 = vmatprep.mubr.bf16.mxu0 0
  %388 = vmatmul.mubr.bf16.gmra.mrb[0].mxu0 %v134
  %v389 = vpop.f32.mrb[0].mxu0
  %v390 = vadd.f32 %v350, %v389
  %v391 = vpop.f32.mrb[0].mxu0
  %v392 = vpop.f32.mrb[0].mxu0
  %v393 = vpop.f32.mrb[0].mxu0
  %394 = vdwg.mxu0
  %v395 = vadd.f32 %v390, %v60
  %v396 = vld [vmem:[%s5] sm:$0xff]
  %v397 = vld [vmem:[%s5 + $0x8] sm:$0xff]
  %v398 = vld [vmem:[%s5 + $0x10] sm:$0xff]
  %v399 = vld [vmem:[%s5 + $0x18] sm:$0xff]
  %v400 = vld [vmem:[%s5 + $0x20] sm:$0xff]
  %v401 = vld [vmem:[%s5 + $0x28] sm:$0xff]
  %v402 = vld [vmem:[%s5 + $0x30] sm:$0xff]
  %v403 = vld [vmem:[%s5 + $0x38] sm:$0xff]
  %v404 = vld [vmem:[%s6] sm:$0xff]
  %v405 = vld [vmem:[%s6 + $0x8] sm:$0xff]
  %vm406 = vcmask 517120
  %v407 = vsel %vm406, %v125, 0.0
  %v408 = vrot.slane %v407, 4
  %v409 = vadd.f32 %v407, %v408
  %v410 = vrot.slane %v409, 2
  %v411 = vadd.f32 %v409, %v410
  %v412 = vrot.slane %v411, 1
  %v413 = vadd.f32 %v411, %v412
  %v414 = vsel %vm406, %v171, 0.0
  %v415 = vrot.slane %v414, 4
  %v416 = vadd.f32 %v414, %v415
  %v417 = vrot.slane %v416, 2
  %v418 = vadd.f32 %v416, %v417
  %v419 = vrot.slane %v418, 1
  %v420 = vadd.f32 %v418, %v419
  %v421 = vadd.f32 %v413, %v420
  %v422 = vsel %vm406, %v309, 0.0
  %v423 = vrot.slane %v422, 4
  %v424 = vadd.f32 %v422, %v423
  %v425 = vrot.slane %v424, 2
  %v426 = vadd.f32 %v424, %v425
  %v427 = vrot.slane %v426, 1
  %v428 = vadd.f32 %v426, %v427
  %v429 = vadd.f32 %v421, %v428
  %v430 = vsel %vm406, %v395, 0.0
  %v431 = vrot.slane %v430, 4
  %v432 = vadd.f32 %v430, %v431
  %v433 = vrot.slane %v432, 2
  %v434 = vadd.f32 %v432, %v433
  %v435 = vrot.slane %v434, 1
  %v436 = vadd.f32 %v434, %v435
  %v437 = vadd.f32 %v429, %v436
  %v439 = vsel %vm86, %v437, 0
  %441 = vmatprep.subr.mxu0 0.0
  %442 = vmatpush1.msra.mxu0 %v396
  %443 = vmatprep.subr.mxu0 0.0
  %444 = vmatpush1.msra.mxu0 %v397
  %445 = vmatprep.subr.mxu0 0.0
  %446 = vmatpush1.msra.mxu0 %v398
  %447 = vmatprep.subr.mxu0 0.0
  %448 = vmatpush1.msra.mxu0 %v399
  %449 = vmatprep.subr.mxu0 0.0
  %450 = vmatpush1.msra.mxu0 %v400
  %451 = vmatprep.subr.mxu0 0.0
  %452 = vmatpush1.msra.mxu0 %v401
  %453 = vmatprep.subr.mxu0 0.0
  %454 = vmatpush1.msra.mxu0 %v402
  %455 = vmatprep.subr.mxu0 0.0
  %456 = vmatpush1.msra.mxu0 %v403
  %457 = vmatprep.subr.mxu0 0.0
  %458 = vmatpush1.msra.mxu0 0.0
  %459 = vmatprep.subr.mxu0 0.0
  %460 = vmatpush1.msra.mxu0 0.0
  %461 = vmatprep.subr.mxu0 0.0
  %462 = vmatpush1.msra.mxu0 0.0
  %463 = vmatprep.subr.mxu0 0.0
  %464 = vmatpush1.msra.mxu0 0.0
  %465 = vmatprep.subr.mxu0 0.0
  %466 = vmatpush1.msra.mxu0 0.0
  %467 = vmatprep.subr.mxu0 0.0
  %468 = vmatpush1.msra.mxu0 0.0
  %469 = vmatprep.subr.mxu0 0.0
  %470 = vmatpush1.msra.mxu0 0.0
  %471 = vmatprep.subr.mxu0 0.0
  %472 = vmatpush1.msra.mxu0 0.0
  %473 = vmatprep.subr.mxu0 0.0
  %474 = vmatpush1.msra.mxu0 0.0
  %475 = vmatprep.subr.mxu0 0.0
  %476 = vmatpush1.msra.mxu0 0.0
  %477 = vmatprep.subr.mxu0 0.0
  %478 = vmatpush1.msra.mxu0 0.0
  %479 = vmatprep.subr.mxu0 0.0
  %480 = vmatpush1.msra.mxu0 0.0
  %481 = vmatprep.subr.mxu0 0.0
  %482 = vmatpush1.msra.mxu0 0.0
  %483 = vmatprep.subr.mxu0 0.0
  %484 = vmatpush1.msra.mxu0 0.0
  %485 = vmatprep.subr.mxu0 0.0
  %486 = vmatpush1.msra.mxu0 0.0
  %487 = vmatprep.subr.mxu0 0.0
  %488 = vmatpush1.msra.mxu0 0.0
  %489 = vmatprep.subr.mxu0 0.0
  %490 = vmatpush1.msra.mxu0 0.0
  %491 = vmatprep.subr.mxu0 0.0
  %492 = vmatpush1.msra.mxu0 0.0
  %493 = vmatprep.subr.mxu0 0.0
  %494 = vmatpush1.msra.mxu0 0.0
  %495 = vmatprep.subr.mxu0 0.0
  %496 = vmatpush1.msra.mxu0 0.0
  %497 = vmatprep.subr.mxu0 0.0
  %498 = vmatpush1.msra.mxu0 0.0
  %499 = vmatprep.subr.mxu0 0.0
  %500 = vmatpush1.msra.mxu0 0.0
  %501 = vmatprep.subr.mxu0 0.0
  %502 = vmatpush1.msra.mxu0 0.0
  %503 = vmatprep.subr.mxu0 0.0
  %504 = vmatpush1.msra.mxu0 0.0
  %505 = vmatprep.mubr.f32.mxu0 0.0
  %506 = vmatmul.mubr.f32.gmra.mrb[0].mxu0 %v439
  %v507 = vpop.f32.mrb[0].mxu0
  %v508 = vadd.f32 0.0, %v507
  %v509 = vpop.f32.mrb[0].mxu0
  %510 = vdwg.mxu0
  %v511 = vmul.f32 %v508, 0.03125
  %vm512 = vcmask 130048
  %v514 = vsel %vm512, %v511, 0
  %516 = vmatprep.subr.mxu0 0.0
  %517 = vmatpush1.msra.mxu0 %v404
  %518 = vmatprep.subr.mxu0 0.0
  %519 = vmatpush1.msra.mxu0 %v405
  %520 = vmatprep.subr.mxu0 0.0
  %521 = vmatpush1.msra.mxu0 0.0
  %522 = vmatprep.subr.mxu0 0.0
  %523 = vmatpush1.msra.mxu0 0.0
  %524 = vmatprep.subr.mxu0 0.0
  %525 = vmatpush1.msra.mxu0 0.0
  %526 = vmatprep.subr.mxu0 0.0
  %527 = vmatpush1.msra.mxu0 0.0
  %528 = vmatprep.subr.mxu0 0.0
  %529 = vmatpush1.msra.mxu0 0.0
  %530 = vmatprep.subr.mxu0 0.0
  %531 = vmatpush1.msra.mxu0 0.0
  %532 = vmatprep.subr.mxu0 0.0
  %533 = vmatpush1.msra.mxu0 0.0
  %534 = vmatprep.subr.mxu0 0.0
  %535 = vmatpush1.msra.mxu0 0.0
  %536 = vmatprep.subr.mxu0 0.0
  %537 = vmatpush1.msra.mxu0 0.0
  %538 = vmatprep.subr.mxu0 0.0
  %539 = vmatpush1.msra.mxu0 0.0
  %540 = vmatprep.subr.mxu0 0.0
  %541 = vmatpush1.msra.mxu0 0.0
  %542 = vmatprep.subr.mxu0 0.0
  %543 = vmatpush1.msra.mxu0 0.0
  %544 = vmatprep.subr.mxu0 0.0
  %545 = vmatpush1.msra.mxu0 0.0
  %546 = vmatprep.subr.mxu0 0.0
  %547 = vmatpush1.msra.mxu0 0.0
  %548 = vmatprep.subr.mxu0 0.0
  %549 = vmatpush1.msra.mxu0 0.0
  %550 = vmatprep.subr.mxu0 0.0
  %551 = vmatpush1.msra.mxu0 0.0
  %552 = vmatprep.subr.mxu0 0.0
  %553 = vmatpush1.msra.mxu0 0.0
  %554 = vmatprep.subr.mxu0 0.0
  %555 = vmatpush1.msra.mxu0 0.0
  %556 = vmatprep.subr.mxu0 0.0
  %557 = vmatpush1.msra.mxu0 0.0
  %558 = vmatprep.subr.mxu0 0.0
  %559 = vmatpush1.msra.mxu0 0.0
  %560 = vmatprep.subr.mxu0 0.0
  %561 = vmatpush1.msra.mxu0 0.0
  %562 = vmatprep.subr.mxu0 0.0
  %563 = vmatpush1.msra.mxu0 0.0
  %564 = vmatprep.subr.mxu0 0.0
  %565 = vmatpush1.msra.mxu0 0.0
  %566 = vmatprep.subr.mxu0 0.0
  %567 = vmatpush1.msra.mxu0 0.0
  %568 = vmatprep.subr.mxu0 0.0
  %569 = vmatpush1.msra.mxu0 0.0
  %570 = vmatprep.subr.mxu0 0.0
  %571 = vmatpush1.msra.mxu0 0.0
  %572 = vmatprep.subr.mxu0 0.0
  %573 = vmatpush1.msra.mxu0 0.0
  %574 = vmatprep.subr.mxu0 0.0
  %575 = vmatpush1.msra.mxu0 0.0
  %576 = vmatprep.subr.mxu0 0.0
  %577 = vmatpush1.msra.mxu0 0.0
  %578 = vmatprep.subr.mxu0 0.0
  %579 = vmatpush1.msra.mxu0 0.0
  %580 = vmatprep.mubr.f32.mxu0 0.0
  %581 = vmatmul.mubr.f32.gmra.mrb[0].mxu0 %v514
  %v582 = vpop.f32.mrb[0].mxu0
  %v583 = vadd.f32 0.0, %v582
  %v584 = vpop.f32.mrb[0].mxu0
  %585 = vdwg.mxu0
  %v586 = vlaneseq
  %v587 = vshrl.u32 %v586, 7
  %v588 = vsub.s32 0, %v587
  %v589 = vrot.slane %v583, %v588
  %v590 = vsub.f32 %v125, %v589
  %v591 = vmul.f32 %v590, %v590
  %v592 = vsel %vm406, %v591, 0.0
  %v593 = vrot.slane %v592, 4
  %v594 = vadd.f32 %v592, %v593
  %v595 = vrot.slane %v594, 2
  %v596 = vadd.f32 %v594, %v595
  %v597 = vrot.slane %v596, 1
  %v598 = vadd.f32 %v596, %v597
  %v599 = vsub.f32 %v171, %v589
  %v600 = vmul.f32 %v599, %v599
  %v601 = vsel %vm406, %v600, 0.0
  %v602 = vrot.slane %v601, 4
  %v603 = vadd.f32 %v601, %v602
  %v604 = vrot.slane %v603, 2
  %v605 = vadd.f32 %v603, %v604
  %v606 = vrot.slane %v605, 1
  %v607 = vadd.f32 %v605, %v606
  %v608 = vadd.f32 %v598, %v607
  %v609 = vsub.f32 %v309, %v589
  %v610 = vmul.f32 %v609, %v609
  %v611 = vsel %vm406, %v610, 0.0
  %v612 = vrot.slane %v611, 4
  %v613 = vadd.f32 %v611, %v612
  %v614 = vrot.slane %v613, 2
  %v615 = vadd.f32 %v613, %v614
  %v616 = vrot.slane %v615, 1
  %v617 = vadd.f32 %v615, %v616
  %v618 = vadd.f32 %v608, %v617
  %v619 = vsub.f32 %v395, %v589
  %v620 = vmul.f32 %v619, %v619
  %v621 = vsel %vm406, %v620, 0.0
  %v622 = vrot.slane %v621, 4
  %v623 = vadd.f32 %v621, %v622
  %v624 = vrot.slane %v623, 2
  %v625 = vadd.f32 %v623, %v624
  %v626 = vrot.slane %v625, 1
  %v627 = vadd.f32 %v625, %v626
  %v628 = vadd.f32 %v618, %v627
  %v630 = vsel %vm86, %v628, 0
  %632 = vmatprep.subr.mxu0 0.0
  %633 = vmatpush1.msra.mxu0 %v396
  %634 = vmatprep.subr.mxu0 0.0
  %635 = vmatpush1.msra.mxu0 %v397
  %636 = vmatprep.subr.mxu0 0.0
  %637 = vmatpush1.msra.mxu0 %v398
  %638 = vmatprep.subr.mxu0 0.0
  %639 = vmatpush1.msra.mxu0 %v399
  %640 = vmatprep.subr.mxu0 0.0
  %641 = vmatpush1.msra.mxu0 %v400
  %642 = vmatprep.subr.mxu0 0.0
  %643 = vmatpush1.msra.mxu0 %v401
  %644 = vmatprep.subr.mxu0 0.0
  %645 = vmatpush1.msra.mxu0 %v402
  %646 = vmatprep.subr.mxu0 0.0
  %647 = vmatpush1.msra.mxu0 %v403
  %648 = vmatprep.subr.mxu0 0.0
  %649 = vmatpush1.msra.mxu0 0.0
  %650 = vmatprep.subr.mxu0 0.0
  %651 = vmatpush1.msra.mxu0 0.0
  %652 = vmatprep.subr.mxu0 0.0
  %653 = vmatpush1.msra.mxu0 0.0
  %654 = vmatprep.subr.mxu0 0.0
  %655 = vmatpush1.msra.mxu0 0.0
  %656 = vmatprep.subr.mxu0 0.0
  %657 = vmatpush1.msra.mxu0 0.0
  %658 = vmatprep.subr.mxu0 0.0
  %659 = vmatpush1.msra.mxu0 0.0
  %660 = vmatprep.subr.mxu0 0.0
  %661 = vmatpush1.msra.mxu0 0.0
  %662 = vmatprep.subr.mxu0 0.0
  %663 = vmatpush1.msra.mxu0 0.0
  %664 = vmatprep.subr.mxu0 0.0
  %665 = vmatpush1.msra.mxu0 0.0
  %666 = vmatprep.subr.mxu0 0.0
  %667 = vmatpush1.msra.mxu0 0.0
  %668 = vmatprep.subr.mxu0 0.0
  %669 = vmatpush1.msra.mxu0 0.0
  %670 = vmatprep.subr.mxu0 0.0
  %671 = vmatpush1.msra.mxu0 0.0
  %672 = vmatprep.subr.mxu0 0.0
  %673 = vmatpush1.msra.mxu0 0.0
  %674 = vmatprep.subr.mxu0 0.0
  %675 = vmatpush1.msra.mxu0 0.0
  %676 = vmatprep.subr.mxu0 0.0
  %677 = vmatpush1.msra.mxu0 0.0
  %678 = vmatprep.subr.mxu0 0.0
  %679 = vmatpush1.msra.mxu0 0.0
  %680 = vmatprep.subr.mxu0 0.0
  %681 = vmatpush1.msra.mxu0 0.0
  %682 = vmatprep.subr.mxu0 0.0
  %683 = vmatpush1.msra.mxu0 0.0
  %684 = vmatprep.subr.mxu0 0.0
  %685 = vmatpush1.msra.mxu0 0.0
  %686 = vmatprep.subr.mxu0 0.0
  %687 = vmatpush1.msra.mxu0 0.0
  %688 = vmatprep.subr.mxu0 0.0
  %689 = vmatpush1.msra.mxu0 0.0
  %690 = vmatprep.subr.mxu0 0.0
  %691 = vmatpush1.msra.mxu0 0.0
  %692 = vmatprep.subr.mxu0 0.0
  %693 = vmatpush1.msra.mxu0 0.0
  %694 = vmatprep.subr.mxu0 0.0
  %695 = vmatpush1.msra.mxu0 0.0
  %696 = vmatprep.mubr.f32.mxu0 0.0
  %697 = vmatmul.mubr.f32.gmra.mrb[0].mxu0 %v630
  %v698 = vpop.f32.mrb[0].mxu0
  %v699 = vadd.f32 0.0, %v698
  %v700 = vpop.f32.mrb[0].mxu0
  %701 = vdwg.mxu0
  %v702 = vmul.f32 %v699, 0.03125
  %v703 = vld [vmem:[%s3] sm:$0x1]
  %v704 = vadd.f32 %v702, 1e-05
  %v705 = vrsqrt.pop %v704
  %v706 = vmul.f32 %v703, %v705
  %v708 = vsel %vm512, %v706, 0
  %710 = vmatprep.subr.mxu0 0.0
  %711 = vmatpush1.msra.mxu0 %v404
  %712 = vmatprep.subr.mxu0 0.0
  %713 = vmatpush1.msra.mxu0 %v405
  %714 = vmatprep.subr.mxu0 0.0
  %715 = vmatpush1.msra.mxu0 0.0
  %716 = vmatprep.subr.mxu0 0.0
  %717 = vmatpush1.msra.mxu0 0.0
  %718 = vmatprep.subr.mxu0 0.0
  %719 = vmatpush1.msra.mxu0 0.0
  %720 = vmatprep.subr.mxu0 0.0
  %721 = vmatpush1.msra.mxu0 0.0
  %722 = vmatprep.subr.mxu0 0.0
  %723 = vmatpush1.msra.mxu0 0.0
  %724 = vmatprep.subr.mxu0 0.0
  %725 = vmatpush1.msra.mxu0 0.0
  %726 = vmatprep.subr.mxu0 0.0
  %727 = vmatpush1.msra.mxu0 0.0
  %728 = vmatprep.subr.mxu0 0.0
  %729 = vmatpush1.msra.mxu0 0.0
  %730 = vmatprep.subr.mxu0 0.0
  %731 = vmatpush1.msra.mxu0 0.0
  %732 = vmatprep.subr.mxu0 0.0
  %733 = vmatpush1.msra.mxu0 0.0
  %734 = vmatprep.subr.mxu0 0.0
  %735 = vmatpush1.msra.mxu0 0.0
  %736 = vmatprep.subr.mxu0 0.0
  %737 = vmatpush1.msra.mxu0 0.0
  %738 = vmatprep.subr.mxu0 0.0
  %739 = vmatpush1.msra.mxu0 0.0
  %740 = vmatprep.subr.mxu0 0.0
  %741 = vmatpush1.msra.mxu0 0.0
  %742 = vmatprep.subr.mxu0 0.0
  %743 = vmatpush1.msra.mxu0 0.0
  %744 = vmatprep.subr.mxu0 0.0
  %745 = vmatpush1.msra.mxu0 0.0
  %746 = vmatprep.subr.mxu0 0.0
  %747 = vmatpush1.msra.mxu0 0.0
  %748 = vmatprep.subr.mxu0 0.0
  %749 = vmatpush1.msra.mxu0 0.0
  %750 = vmatprep.subr.mxu0 0.0
  %751 = vmatpush1.msra.mxu0 0.0
  %752 = vmatprep.subr.mxu0 0.0
  %753 = vmatpush1.msra.mxu0 0.0
  %754 = vmatprep.subr.mxu0 0.0
  %755 = vmatpush1.msra.mxu0 0.0
  %756 = vmatprep.subr.mxu0 0.0
  %757 = vmatpush1.msra.mxu0 0.0
  %758 = vmatprep.subr.mxu0 0.0
  %759 = vmatpush1.msra.mxu0 0.0
  %760 = vmatprep.subr.mxu0 0.0
  %761 = vmatpush1.msra.mxu0 0.0
  %762 = vmatprep.subr.mxu0 0.0
  %763 = vmatpush1.msra.mxu0 0.0
  %764 = vmatprep.subr.mxu0 0.0
  %765 = vmatpush1.msra.mxu0 0.0
  %766 = vmatprep.subr.mxu0 0.0
  %767 = vmatpush1.msra.mxu0 0.0
  %768 = vmatprep.subr.mxu0 0.0
  %769 = vmatpush1.msra.mxu0 0.0
  %770 = vmatprep.subr.mxu0 0.0
  %771 = vmatpush1.msra.mxu0 0.0
  %772 = vmatprep.subr.mxu0 0.0
  %773 = vmatpush1.msra.mxu0 0.0
  %774 = vmatprep.mubr.f32.mxu0 0.0
  %775 = vmatmul.mubr.f32.gmra.mrb[0].mxu0 %v708
  %v776 = vpop.f32.mrb[0].mxu0
  %v777 = vadd.f32 0.0, %v776
  %v778 = vpop.f32.mrb[0].mxu0
  %779 = vdwg.mxu0
  %v780 = vld [vmem:[%s4] sm:$0x1]
  %v782 = vsel %vm512, %v780, 0
  %784 = vmatprep.subr.mxu0 0.0
  %785 = vmatpush1.msra.mxu0 %v404
  %786 = vmatprep.subr.mxu0 0.0
  %787 = vmatpush1.msra.mxu0 %v405
  %788 = vmatprep.subr.mxu0 0.0
  %789 = vmatpush1.msra.mxu0 0.0
  %790 = vmatprep.subr.mxu0 0.0
  %791 = vmatpush1.msra.mxu0 0.0
  %792 = vmatprep.subr.mxu0 0.0
  %793 = vmatpush1.msra.mxu0 0.0
  %794 = vmatprep.subr.mxu0 0.0
  %795 = vmatpush1.msra.mxu0 0.0
  %796 = vmatprep.subr.mxu0 0.0
  %797 = vmatpush1.msra.mxu0 0.0
  %798 = vmatprep.subr.mxu0 0.0
  %799 = vmatpush1.msra.mxu0 0.0
  %800 = vmatprep.subr.mxu0 0.0
  %801 = vmatpush1.msra.mxu0 0.0
  %802 = vmatprep.subr.mxu0 0.0
  %803 = vmatpush1.msra.mxu0 0.0
  %804 = vmatprep.subr.mxu0 0.0
  %805 = vmatpush1.msra.mxu0 0.0
  %806 = vmatprep.subr.mxu0 0.0
  %807 = vmatpush1.msra.mxu0 0.0
  %808 = vmatprep.subr.mxu0 0.0
  %809 = vmatpush1.msra.mxu0 0.0
  %810 = vmatprep.subr.mxu0 0.0
  %811 = vmatpush1.msra.mxu0 0.0
  %812 = vmatprep.subr.mxu0 0.0
  %813 = vmatpush1.msra.mxu0 0.0
  %814 = vmatprep.subr.mxu0 0.0
  %815 = vmatpush1.msra.mxu0 0.0
  %816 = vmatprep.subr.mxu0 0.0
  %817 = vmatpush1.msra.mxu0 0.0
  %818 = vmatprep.subr.mxu0 0.0
  %819 = vmatpush1.msra.mxu0 0.0
  %820 = vmatprep.subr.mxu0 0.0
  %821 = vmatpush1.msra.mxu0 0.0
  %822 = vmatprep.subr.mxu0 0.0
  %823 = vmatpush1.msra.mxu0 0.0
  %824 = vmatprep.subr.mxu0 0.0
  %825 = vmatpush1.msra.mxu0 0.0
  %826 = vmatprep.subr.mxu0 0.0
  %827 = vmatpush1.msra.mxu0 0.0
  %828 = vmatprep.subr.mxu0 0.0
  %829 = vmatpush1.msra.mxu0 0.0
  %830 = vmatprep.subr.mxu0 0.0
  %831 = vmatpush1.msra.mxu0 0.0
  %832 = vmatprep.subr.mxu0 0.0
  %833 = vmatpush1.msra.mxu0 0.0
  %834 = vmatprep.subr.mxu0 0.0
  %835 = vmatpush1.msra.mxu0 0.0
  %836 = vmatprep.subr.mxu0 0.0
  %837 = vmatpush1.msra.mxu0 0.0
  %838 = vmatprep.subr.mxu0 0.0
  %839 = vmatpush1.msra.mxu0 0.0
  %840 = vmatprep.subr.mxu0 0.0
  %841 = vmatpush1.msra.mxu0 0.0
  %842 = vmatprep.subr.mxu0 0.0
  %843 = vmatpush1.msra.mxu0 0.0
  %844 = vmatprep.subr.mxu0 0.0
  %845 = vmatpush1.msra.mxu0 0.0
  %846 = vmatprep.subr.mxu0 0.0
  %847 = vmatpush1.msra.mxu0 0.0
  %848 = vmatprep.mubr.f32.mxu0 0.0
  %849 = vmatmul.mubr.f32.gmra.mrb[0].mxu0 %v782
  %v850 = vpop.f32.mrb[0].mxu0
  %v851 = vadd.f32 0.0, %v850
  %v852 = vpop.f32.mrb[0].mxu0
  %853 = vdwg.mxu0
  %v854 = vlaneseq
  %v855 = vshrl.u32 %v854, 7
  %v856 = vsub.s32 0, %v855
  %v857 = vrot.slane %v777, %v856
  %v858 = vmul.f32 %v590, %v857
  %v859 = vlaneseq
  %v860 = vshrl.u32 %v859, 7
  %v861 = vsub.s32 0, %v860
  %v862 = vrot.slane %v851, %v861
  %v863 = vadd.f32 %v858, %v862
  %v864 = vmul.f32 %v599, %v857
  %v865 = vadd.f32 %v864, %v862
  %v866 = vmul.f32 %v609, %v857
  %v867 = vadd.f32 %v866, %v862
  %v868 = vmul.f32 %v619, %v857
  %v869 = vadd.f32 %v868, %v862
  %vm870 = vcmp.ge.f32.partialorder %v863, 0.0
  %v871 = vmul.f32 %v863, 0.01
  %v872 = vsel %vm870, %v863, %v871
  %873 = vst.msk [vmem:[%s7] sm:$0x3] %vm406, %v872
  %vm874 = vcmp.ge.f32.partialorder %v865, 0.0
  %v875 = vmul.f32 %v865, 0.01
  %v876 = vsel %vm874, %v865, %v875
  %s877 = scalar_lea.vmem %s7, 2
  %878 = vst.msk [vmem:[%s877] sm:$0x3] %vm406, %v876
  %vm879 = vcmp.ge.f32.partialorder %v867, 0.0
  %v880 = vmul.f32 %v867, 0.01
  %v881 = vsel %vm879, %v867, %v880
  %s882 = scalar_lea.vmem %s7, 4
  %883 = vst.msk [vmem:[%s882] sm:$0x3] %vm406, %v881
  %vm884 = vcmp.ge.f32.partialorder %v869, 0.0
  %v885 = vmul.f32 %v869, 0.01
  %v886 = vsel %vm884, %v869, %v885
  %s887 = scalar_lea.vmem %s7, 6
  %888 = vst.msk [vmem:[%s887] sm:$0x3] %vm406, %v886
  // Predicated region
  $region30: #{_lambda_.14} parent=0 // pred_check
    _
  $region31: #{_lambda_.14} parent=0 // pred_check_branch
    %890 = sbr.rel (0) target = $region33
  $region32: #{_lambda_.14} parent=0 // pred_region
    _
  $region33: #{_lambda_.14} parent=0 // pred_fallthru
    _
  // Predicated region
  $region34: #{_lambda_.14} parent=0 // pred_check
    _
  $region35: #{_lambda_.14} parent=0 // pred_check_branch
    %892 = sbr.rel (0) target = $region37
  $region36: #{_lambda_.14} parent=0 // pred_region
    _
  $region37: #{_lambda_.14} parent=0 // pred_fallthru
    _

// kernel: tile.124
$region0: #{tile.124}
  %s0 = inlined_call_operand.vmem [shape: f32[16,8,8], index: 0, kind: input, shape index: {}]
  %s1 = inlined_call_operand.vmem [shape: f32[128,8], index: 1, kind: output, shape index: {}]
  %s2 = smov 3
  %v3 = vld [vmem:[%s0] ss:$16 sm:%s2]
  %s4 = smov 12
  %v5 = vld [vmem:[%s0] ss:$16 sm:%s4]
  %vm6 = vcmask 1043458
  %v7 = vsel %vm6, %v5, %v3
  %s8 = smov 48
  %v9 = vld [vmem:[%s0] ss:$16 sm:%s8]
  %vm10 = vcmask 1045508
  %v11 = vsel %vm10, %v9, %v7
  %s12 = smov 192
  %v13 = vld [vmem:[%s0] ss:$16 sm:%s12]
  %vm14 = vcmask 1047558
  %v15 = vsel %vm14, %v13, %v11
  %vm16 = vcmask 64512
  %17 = vst.msk [vmem:[%s1] sm:$0xff] %vm16, %v15
  %s18 = scalar_lea.vmem %s0, 15
  %s19 = smov 3
  %v20 = vld [vmem:[%s18] ss:$16 sm:%s19]
  %s21 = scalar_lea.vmem %s0, 15
  %s22 = smov 12
  %v23 = vld [vmem:[%s21] ss:$16 sm:%s22]
  %vm24 = vcmask 1043458
  %v25 = vsel %vm24, %v23, %v20
  %s26 = scalar_lea.vmem %s0, 15
  %s27 = smov 48
  %v28 = vld [vmem:[%s26] ss:$16 sm:%s27]
  %vm29 = vcmask 1045508
  %v30 = vsel %vm29, %v28, %v25
  %s31 = scalar_lea.vmem %s0, 15
  %s32 = smov 192
  %v33 = vld [vmem:[%s31] ss:$16 sm:%s32]
  %vm34 = vcmask 1047558
  %v35 = vsel %vm34, %v33, %v30
  %36 = vrot.lane.b32.xlu0 %v35, 120
  %v37 = vpop.permute.xlu0 %36
  %vm38 = vcmask 1048512
  %39 = vst.msk [vmem:[%s1] sm:$0xff] %vm38, %v37
  %s40 = scalar_lea.vmem %s0, 14
  %s41 = smov 3
  %v42 = vld [vmem:[%s40] ss:$16 sm:%s41]
  %s43 = scalar_lea.vmem %s0, 14
  %s44 = smov 12
  %v45 = vld [vmem:[%s43] ss:$16 sm:%s44]
  %vm46 = vcmask 1043458
  %v47 = vsel %vm46, %v45, %v42
  %s48 = scalar_lea.vmem %s0, 14
  %s49 = smov 48
  %v50 = vld [vmem:[%s48] ss:$16 sm:%s49]
  %vm51 = vcmask 1045508
  %v52 = vsel %vm51, %v50, %v47
  %s53 = scalar_lea.vmem %s0, 14
  %s54 = smov 192
  %v55 = vld [vmem:[%s53] ss:$16 sm:%s54]
  %vm56 = vcmask 1047558
  %v57 = vsel %vm56, %v55, %v52
  %58 = vrot.lane.b32.xlu0 %v57, 112
  %v59 = vpop.permute.xlu0 %58
  %vm60 = vcmask 982912
  %61 = vst.msk [vmem:[%s1] sm:$0xff] %vm60, %v59
  %s62 = scalar_lea.vmem %s0, 13
  %s63 = smov 3
  %v64 = vld [vmem:[%s62] ss:$16 sm:%s63]
  %s65 = scalar_lea.vmem %s0, 13
  %s66 = smov 12
  %v67 = vld [vmem:[%s65] ss:$16 sm:%s66]
  %vm68 = vcmask 1043458
  %v69 = vsel %vm68, %v67, %v64
  %s70 = scalar_lea.vmem %s0, 13
  %s71 = smov 48
  %v72 = vld [vmem:[%s70] ss:$16 sm:%s71]
  %vm73 = vcmask 1045508
  %v74 = vsel %vm73, %v72, %v69
  %s75 = scalar_lea.vmem %s0, 13
  %s76 = smov 192
  %v77 = vld [vmem:[%s75] ss:$16 sm:%s76]
  %vm78 = vcmask 1047558
  %v79 = vsel %vm78, %v77, %v74
  %80 = vrot.lane.b32.xlu0 %v79, 104
  %v81 = vpop.permute.xlu0 %80
  %vm82 = vcmask 917312
  %83 = vst.msk [vmem:[%s1] sm:$0xff] %vm82, %v81
  %s84 = scalar_lea.vmem %s0, 12
  %s85 = smov 3
  %v86 = vld [vmem:[%s84] ss:$16 sm:%s85]
  %s87 = scalar_lea.vmem %s0, 12
  %s88 = smov 12
  %v89 = vld [vmem:[%s87] ss:$16 sm:%s88]
  %vm90 = vcmask 1043458
  %v91 = vsel %vm90, %v89, %v86
  %s92 = scalar_lea.vmem %s0, 12
  %s93 = smov 48
  %v94 = vld [vmem:[%s92] ss:$16 sm:%s93]
  %vm95 = vcmask 1045508
  %v96 = vsel %vm95, %v94, %v91
  %s97 = scalar_lea.vmem %s0, 12
  %s98 = smov 192
  %v99 = vld [vmem:[%s97] ss:$16 sm:%s98]
  %vm100 = vcmask 1047558
  %v101 = vsel %vm100, %v99, %v96
  %102 = vrot.lane.b32.xlu0 %v101, 96
  %v103 = vpop.permute.xlu0 %102
  %vm104 = vcmask 851712
  %105 = vst.msk [vmem:[%s1] sm:$0xff] %vm104, %v103
  %s106 = scalar_lea.vmem %s0, 11
  %s107 = smov 3
  %v108 = vld [vmem:[%s106] ss:$16 sm:%s107]
  %s109 = scalar_lea.vmem %s0, 11
  %s110 = smov 12
  %v111 = vld [vmem:[%s109] ss:$16 sm:%s110]
  %vm112 = vcmask 1043458
  %v113 = vsel %vm112, %v111, %v108
  %s114 = scalar_lea.vmem %s0, 11
  %s115 = smov 48
  %v116 = vld [vmem:[%s114] ss:$16 sm:%s115]
  %vm117 = vcmask 1045508
  %v118 = vsel %vm117, %v116, %v113
  %s119 = scalar_lea.vmem %s0, 11
  %s120 = smov 192
  %v121 = vld [vmem:[%s119] ss:$16 sm:%s120]
  %vm122 = vcmask 1047558
  %v123 = vsel %vm122, %v121, %v118
  %124 = vrot.lane.b32.xlu0 %v123, 88
  %v125 = vpop.permute.xlu0 %124
  %vm126 = vcmask 786112
  %127 = vst.msk [vmem:[%s1] sm:$0xff] %vm126, %v125
  %s128 = scalar_lea.vmem %s0, 10
  %s129 = smov 3
  %v130 = vld [vmem:[%s128] ss:$16 sm:%s129]
  %s131 = scalar_lea.vmem %s0, 10
  %s132 = smov 12
  %v133 = vld [vmem:[%s131] ss:$16 sm:%s132]
  %vm134 = vcmask 1043458
  %v135 = vsel %vm134, %v133, %v130
  %s136 = scalar_lea.vmem %s0, 10
  %s137 = smov 48
  %v138 = vld [vmem:[%s136] ss:$16 sm:%s137]
  %vm139 = vcmask 1045508
  %v140 = vsel %vm139, %v138, %v135
  %s141 = scalar_lea.vmem %s0, 10
  %s142 = smov 192
  %v143 = vld [vmem:[%s141] ss:$16 sm:%s142]
  %vm144 = vcmask 1047558
  %v145 = vsel %vm144, %v143, %v140
  %146 = vrot.lane.b32.xlu0 %v145, 80
  %v147 = vpop.permute.xlu0 %146
  %vm148 = vcmask 720512
  %149 = vst.msk [vmem:[%s1] sm:$0xff] %vm148, %v147
  %s150 = scalar_lea.vmem %s0, 9
  %s151 = smov 3
  %v152 = vld [vmem:[%s150] ss:$16 sm:%s151]
  %s153 = scalar_lea.vmem %s0, 9
  %s154 = smov 12
  %v155 = vld [vmem:[%s153] ss:$16 sm:%s154]
  %vm156 = vcmask 1043458
  %v157 = vsel %vm156, %v155, %v152
  %s158 = scalar_lea.vmem %s0, 9
  %s159 = smov 48
  %v160 = vld [vmem:[%s158] ss:$16 sm:%s159]
  %vm161 = vcmask 1045508
  %v162 = vsel %vm161, %v160, %v157
  %s163 = scalar_lea.vmem %s0, 9
  %s164 = smov 192
  %v165 = vld [vmem:[%s163] ss:$16 sm:%s164]
  %vm166 = vcmask 1047558
  %v167 = vsel %vm166, %v165, %v162
  %168 = vrot.lane.b32.xlu0 %v167, 72
  %v169 = vpop.permute.xlu0 %168
  %vm170 = vcmask 654912
  %171 = vst.msk [vmem:[%s1] sm:$0xff] %vm170, %v169
  %s172 = scalar_lea.vmem %s0, 8
  %s173 = smov 3
  %v174 = vld [vmem:[%s172] ss:$16 sm:%s173]
  %s175 = scalar_lea.vmem %s0, 8
  %s176 = smov 12
  %v177 = vld [vmem:[%s175] ss:$16 sm:%s176]
  %vm178 = vcmask 1043458
  %v179 = vsel %vm178, %v177, %v174
  %s180 = scalar_lea.vmem %s0, 8
  %s181 = smov 48
  %v182 = vld [vmem:[%s180] ss:$16 sm:%s181]
  %vm183 = vcmask 1045508
  %v184 = vsel %vm183, %v182, %v179
  %s185 = scalar_lea.vmem %s0, 8
  %s186 = smov 192
  %v187 = vld [vmem:[%s185] ss:$16 sm:%s186]
  %vm188 = vcmask 1047558
  %v189 = vsel %vm188, %v187, %v184
  %190 = vrot.lane.b32.xlu0 %v189, 64
  %v191 = vpop.permute.xlu0 %190
  %vm192 = vcmask 589312
  %193 = vst.msk [vmem:[%s1] sm:$0xff] %vm192, %v191
  %s194 = scalar_lea.vmem %s0, 7
  %s195 = smov 3
  %v196 = vld [vmem:[%s194] ss:$16 sm:%s195]
  %s197 = scalar_lea.vmem %s0, 7
  %s198 = smov 12
  %v199 = vld [vmem:[%s197] ss:$16 sm:%s198]
  %vm200 = vcmask 1043458
  %v201 = vsel %vm200, %v199, %v196
  %s202 = scalar_lea.vmem %s0, 7
  %s203 = smov 48
  %v204 = vld [vmem:[%s202] ss:$16 sm:%s203]
  %vm205 = vcmask 1045508
  %v206 = vsel %vm205, %v204, %v201
  %s207 = scalar_lea.vmem %s0, 7
  %s208 = smov 192
  %v209 = vld [vmem:[%s207] ss:$16 sm:%s208]
  %vm210 = vcmask 1047558
  %v211 = vsel %vm210, %v209, %v206
  %212 = vrot.lane.b32.xlu0 %v211, 56
  %v213 = vpop.permute.xlu0 %212
  %vm214 = vcmask 523712
  %215 = vst.msk [vmem:[%s1] sm:$0xff] %vm214, %v213
  %s216 = scalar_lea.vmem %s0, 6
  %s217 = smov 3
  %v218 = vld [vmem:[%s216] ss:$16 sm:%s217]
  %s219 = scalar_lea.vmem %s0, 6
  %s220 = smov 12
  %v221 = vld [vmem:[%s219] ss:$16 sm:%s220]
  %vm222 = vcmask 1043458
  %v223 = vsel %vm222, %v221, %v218
  %s224 = scalar_lea.vmem %s0, 6
  %s225 = smov 48
  %v226 = vld [vmem:[%s224] ss:$16 sm:%s225]
  %vm227 = vcmask 1045508
  %v228 = vsel %vm227, %v226, %v223
  %s229 = scalar_lea.vmem %s0, 6
  %s230 = smov 192
  %v231 = vld [vmem:[%s229] ss:$16 sm:%s230]
  %vm232 = vcmask 1047558
  %v233 = vsel %vm232, %v231, %v228
  %234 = vrot.lane.b32.xlu0 %v233, 48
  %v235 = vpop.permute.xlu0 %234
  %vm236 = vcmask 458112
  %237 = vst.msk [vmem:[%s1] sm:$0xff] %vm236, %v235
  %s238 = scalar_lea.vmem %s0, 5
  %s239 = smov 3
  %v240 = vld [vmem:[%s238] ss:$16 sm:%s239]
  %s241 = scalar_lea.vmem %s0, 5
  %s242 = smov 12
  %v243 = vld [vmem:[%s241] ss:$16 sm:%s242]
  %vm244 = vcmask 1043458
  %v245 = vsel %vm244, %v243, %v240
  %s246 = scalar_lea.vmem %s0, 5
  %s247 = smov 48
  %v248 = vld [vmem:[%s246] ss:$16 sm:%s247]
  %vm249 = vcmask 1045508
  %v250 = vsel %vm249, %v248, %v245
  %s251 = scalar_lea.vmem %s0, 5
  %s252 = smov 192
  %v253 = vld [vmem:[%s251] ss:$16 sm:%s252]
  %vm254 = vcmask 1047558
  %v255 = vsel %vm254, %v253, %v250
  %256 = vrot.lane.b32.xlu0 %v255, 40
  %v257 = vpop.permute.xlu0 %256
  %vm258 = vcmask 392512
  %259 = vst.msk [vmem:[%s1] sm:$0xff] %vm258, %v257
  %s260 = scalar_lea.vmem %s0, 4
  %s261 = smov 3
  %v262 = vld [vmem:[%s260] ss:$16 sm:%s261]
  %s263 = scalar_lea.vmem %s0, 4
  %s264 = smov 12
  %v265 = vld [vmem:[%s263] ss:$16 sm:%s264]
  %vm266 = vcmask 1043458
  %v267 = vsel %vm266, %v265, %v262
  %s268 = scalar_lea.vmem %s0, 4
  %s269 = smov 48
  %v270 = vld [vmem:[%s268] ss:$16 sm:%s269]
  %vm271 = vcmask 1045508
  %v272 = vsel %vm271, %v270, %v267
  %s273 = scalar_lea.vmem %s0, 4
  %s274 = smov 192
  %v275 = vld [vmem:[%s273] ss:$16 sm:%s274]
  %vm276 = vcmask 1047558
  %v277 = vsel %vm276, %v275, %v272
  %278 = vrot.lane.b32.xlu0 %v277, 32
  %v279 = vpop.permute.xlu0 %278
  %vm280 = vcmask 326912
  %281 = vst.msk [vmem:[%s1] sm:$0xff] %vm280, %v279
  %s282 = scalar_lea.vmem %s0, 3
  %s283 = smov 3
  %v284 = vld [vmem:[%s282] ss:$16 sm:%s283]
  %s285 = scalar_lea.vmem %s0, 3
  %s286 = smov 12
  %v287 = vld [vmem:[%s285] ss:$16 sm:%s286]
  %vm288 = vcmask 1043458
  %v289 = vsel %vm288, %v287, %v284
  %s290 = scalar_lea.vmem %s0, 3
  %s291 = smov 48
  %v292 = vld [vmem:[%s290] ss:$16 sm:%s291]
  %vm293 = vcmask 1045508
  %v294 = vsel %vm293, %v292, %v289
  %s295 = scalar_lea.vmem %s0, 3
  %s296 = smov 192
  %v297 = vld [vmem:[%s295] ss:$16 sm:%s296]
  %vm298 = vcmask 1047558
  %v299 = vsel %vm298, %v297, %v294
  %300 = vrot.lane.b32.xlu0 %v299, 24
  %v301 = vpop.permute.xlu0 %300
  %vm302 = vcmask 261312
  %303 = vst.msk [vmem:[%s1] sm:$0xff] %vm302, %v301
  %s304 = scalar_lea.vmem %s0, 2
  %s305 = smov 3
  %v306 = vld [vmem:[%s304] ss:$16 sm:%s305]
  %s307 = scalar_lea.vmem %s0, 2
  %s308 = smov 12
  %v309 = vld [vmem:[%s307] ss:$16 sm:%s308]
  %vm310 = vcmask 1043458
  %v311 = vsel %vm310, %v309, %v306
  %s312 = scalar_lea.vmem %s0, 2
  %s313 = smov 48
  %v314 = vld [vmem:[%s312] ss:$16 sm:%s313]
  %vm315 = vcmask 1045508
  %v316 = vsel %vm315, %v314, %v311
  %s317 = scalar_lea.vmem %s0, 2
  %s318 = smov 192
  %v319 = vld [vmem:[%s317] ss:$16 sm:%s318]
  %vm320 = vcmask 1047558
  %v321 = vsel %vm320, %v319, %v316
  %322 = vrot.lane.b32.xlu0 %v321, 16
  %v323 = vpop.permute.xlu0 %322
  %vm324 = vcmask 195712
  %325 = vst.msk [vmem:[%s1] sm:$0xff] %vm324, %v323
  %s326 = scalar_lea.vmem %s0, 1
  %s327 = smov 3
  %v328 = vld [vmem:[%s326] ss:$16 sm:%s327]
  %s329 = scalar_lea.vmem %s0, 1
  %s330 = smov 12
  %v331 = vld [vmem:[%s329] ss:$16 sm:%s330]
  %vm332 = vcmask 1043458
  %v333 = vsel %vm332, %v331, %v328
  %s334 = scalar_lea.vmem %s0, 1
  %s335 = smov 48
  %v336 = vld [vmem:[%s334] ss:$16 sm:%s335]
  %vm337 = vcmask 1045508
  %v338 = vsel %vm337, %v336, %v333
  %s339 = scalar_lea.vmem %s0, 1
  %s340 = smov 192
  %v341 = vld [vmem:[%s339] ss:$16 sm:%s340]
  %vm342 = vcmask 1047558
  %v343 = vsel %vm342, %v341, %v338
  %344 = vrot.lane.b32.xlu0 %v343, 8
  %v345 = vpop.permute.xlu0 %344
  %vm346 = vcmask 130112
  %347 = vst.msk [vmem:[%s1] sm:$0xff] %vm346, %v345

// kernel: tile.118
$region0: #{tile.118}
  #allocation0 [shape = 's32[1]{0}', space=sflag, size = 0x4, scoped, tag = 'scoped memory for tile.118']
  %s0 = inlined_call_operand.vmem [shape: f32[8], index: 0, kind: input, shape index: {}]
  %s1 = inlined_call_operand.vmem [shape: f32[16,8], index: 1, kind: output, shape index: {}]
  // Predicated region
  $region2: #{tile.118} parent=0 // pred_check
    _
  $region3: #{tile.118} parent=0 // pred_check_branch
    %3 = sbr.rel (0) target = $region5
  $region4: #{tile.118} parent=0 // pred_region
    _
  $region5: #{tile.118} parent=0 // pred_fallthru
    _
  %v4 = vld [vmem:[%s0] ss:$0 sm:$0xff]
  %5 = vst [vmem:[%s1] sm:$0xff] %v4
  %s6 = scalar_lea.vmem %s1, 8
  %7 = vst [vmem:[%s6] sm:$0xff] %v4

// kernel: _lambda_.15
$region0: #{_lambda_.15}
  #allocation0 [shape = 'u32[]', space=smem, size = 0x4, offset = 0x4, fixed_abs, tag = 'smem constant byte address 0x4 - core index']
  #allocation1 [shape = 'u32[144,128]{1,0:T(1,128)}', space=vmem, size = 0x12000, scoped, tag = 'internal scratch']
  %s0 = inlined_call_operand.vmem [shape: f32[1,2,5,64], index: 0, kind: input, shape index: {}]
  %s1 = inlined_call_operand.vmem [shape: bf16[3,64,64], index: 1, kind: input, shape index: {}]
  %s2 = inlined_call_operand.vmem [shape: f32[1,64], index: 2, kind: input, shape index: {}]
  %s3 = inlined_call_operand.vmem [shape: f32[1,8], index: 3, kind: input, shape index: {}]
  %s4 = inlined_call_operand.vmem [shape: f32[1,8], index: 4, kind: input, shape index: {}]
  %s5 = inlined_call_operand.vmem [shape: f32[64,8], index: 5, kind: input, shape index: {}]
  %s6 = inlined_call_operand.vmem [shape: f32[8,64], index: 6, kind: input, shape index: {}]
  %s7 = inlined_call_operand.vmem [shape: f32[2,2,4,64], index: 7, kind: output, shape index: {}]
  %s8 = sld [smem:[#allocation0]]
  $region38: #{_lambda_.15} parent=0
    _
  %s10 = ssub.s32 1, %s8
  %s11 = scalar_select 0, %s10, %s8
  // Predicated region
  $region2: #{_lambda_.15} parent=0 // pred_check
    _
  $region3: #{_lambda_.15} parent=0 // pred_check_branch
    %13 = sbr.rel (0) target = $region5
  $region4: #{_lambda_.15} parent=0 // pred_region
    _
  $region5: #{_lambda_.15} parent=0 // pred_fallthru
    _
  // Predicated region
  $region6: #{_lambda_.15} parent=0 // pred_check
    _
  $region7: #{_lambda_.15} parent=0 // pred_check_branch
    %15 = sbr.rel (0) target = $region9
  $region8: #{_lambda_.15} parent=0 // pred_region
    _
  $region9: #{_lambda_.15} parent=0 // pred_fallthru
    _
  // Predicated region
  $region10: #{_lambda_.15} parent=0 // pred_check
    _
  $region11: #{_lambda_.15} parent=0 // pred_check_branch
    %17 = sbr.rel (0) target = $region13
  $region12: #{_lambda_.15} parent=0 // pred_region
    _
  $region13: #{_lambda_.15} parent=0 // pred_fallthru
    _
  // Predicated region
  $region14: #{_lambda_.15} parent=0 // pred_check
    _
  $region15: #{_lambda_.15} parent=0 // pred_check_branch
    %19 = sbr.rel (0) target = $region17
  $region16: #{_lambda_.15} parent=0 // pred_region
    _
  $region17: #{_lambda_.15} parent=0 // pred_fallthru
    _
  // Predicated region
  $region18: #{_lambda_.15} parent=0 // pred_check
    _
  $region19: #{_lambda_.15} parent=0 // pred_check_branch
    %21 = sbr.rel (0) target = $region21
  $region20: #{_lambda_.15} parent=0 // pred_region
    _
  $region21: #{_lambda_.15} parent=0 // pred_fallthru
    _
  // Predicated region
  $region22: #{_lambda_.15} parent=0 // pred_check
    _
  $region23: #{_lambda_.15} parent=0 // pred_check_branch
    %23 = sbr.rel (0) target = $region25
  $region24: #{_lambda_.15} parent=0 // pred_region
    _
  $region25: #{_lambda_.15} parent=0 // pred_fallthru
    _
  // Predicated region
  $region26: #{_lambda_.15} parent=0 // pred_check
    _
  $region27: #{_lambda_.15} parent=0 // pred_check_branch
    %25 = sbr.rel (0) target = $region29
  $region28: #{_lambda_.15} parent=0 // pred_region
    _
  $region29: #{_lambda_.15} parent=0 // pred_fallthru
    _
  %v27 = vld [vmem:[%s2] sm:$0x1]
  %v28 = vld [vmem:[%s1] sm:$0xf]
  %v29 = vld [vmem:[%s1 + $0x4] sm:$0xf]
  %v30 = vld [vmem:[%s1 + $0x8] sm:$0xf]
  %v31 = vld [vmem:[%s1 + $0xc] sm:$0xf]
  %v32 = vld [vmem:[%s1 + $0x10] sm:$0xf]
  %v33 = vld [vmem:[%s1 + $0x14] sm:$0xf]
  %v34 = vld [vmem:[%s1 + $0x18] sm:$0xf]
  %v35 = vld [vmem:[%s1 + $0x1c] sm:$0xf]
  %s36 = scalar_lea.vmem %s1, 32
  %v37 = vld [vmem:[%s36] sm:$0xf]
  %v38 = vld [vmem:[%s36 + $0x4] sm:$0xf]
  %v39 = vld [vmem:[%s36 + $0x8] sm:$0xf]
  %v40 = vld [vmem:[%s36 + $0xc] sm:$0xf]
  %v41 = vld [vmem:[%s36 + $0x10] sm:$0xf]
  %v42 = vld [vmem:[%s36 + $0x14] sm:$0xf]
  %v43 = vld [vmem:[%s36 + $0x18] sm:$0xf]
  %v44 = vld [vmem:[%s36 + $0x1c] sm:$0xf]
  %s45 = scalar_lea.vmem %s1, 64
  %v46 = vld [vmem:[%s45] sm:$0xf]
  %v47 = vld [vmem:[%s45 + $0x4] sm:$0xf]
  %v48 = vld [vmem:[%s45 + $0x8] sm:$0xf]
  %v49 = vld [vmem:[%s45 + $0xc] sm:$0xf]
  %v50 = vld [vmem:[%s45 + $0x10] sm:$0xf]
  %v51 = vld [vmem:[%s45 + $0x14] sm:$0xf]
  %v52 = vld [vmem:[%s45 + $0x18] sm:$0xf]
  %v53 = vld [vmem:[%s45 + $0x1c] sm:$0xf]
  %v54 = vld [vmem:[%s0] sm:$0xf]
  %v55 = vpack.c.bf16 %v54, %v54
  %v57 = vlaneseq
  %v58 = vshrl.u32 %v57, 7
  %v59 = vsub.s32 0, %v58
  %v60 = vrot.slane %v27, %v59
  %v70 = vunpack.c.l.b16 %v37
  %v71 = vunpack.c.l.b16 %v38
  %v72 = vunpack.c.l.b16 %v39
  %v73 = vunpack.c.l.b16 %v40
  %v74 = vunpack.c.l.b16 %v41
  %v75 = vunpack.c.l.b16 %v42
  %v76 = vunpack.c.l.b16 %v43
  %v77 = vunpack.c.l.b16 %v44
  %v78 = vpack.c.b16 %v71, %v70
  %v79 = vpack.c.b16 %v73, %v72
  %v80 = vpack.c.b16 %v75, %v74
  %v81 = vpack.c.b16 %v77, %v76
  %vm86 = vcmask 523264
  %v88 = vsel %vm86, %v55, 0
  %90 = vmatprep.subr.bf16.mxu0 0
  %91 = vmatpush1.bf16.msra.mxu0 %v78
  %92 = vmatprep.subr.bf16.mxu0 0
  %93 = vmatpush1.bf16.msra.mxu0 %v79
  %94 = vmatprep.subr.bf16.mxu0 0
  %95 = vmatpush1.bf16.msra.mxu0 %v80
  %96 = vmatprep.subr.bf16.mxu0 0
  %97 = vmatpush1.bf16.msra.mxu0 %v81
  %98 = vmatprep.subr.bf16.mxu0 0
  %99 = vmatpush1.bf16.msra.mxu0 0
  %100 = vmatprep.subr.bf16.mxu0 0
  %101 = vmatpush1.bf16.msra.mxu0 0
  %102 = vmatprep.subr.bf16.mxu0 0
  %103 = vmatpush1.bf16.msra.mxu0 0
  %104 = vmatprep.subr.bf16.mxu0 0
  %105 = vmatpush1.bf16.msra.mxu0 0
  %106 = vmatprep.subr.bf16.mxu0 0
  %107 = vmatpush1.bf16.msra.mxu0 0
  %108 = vmatprep.subr.bf16.mxu0 0
  %109 = vmatpush1.bf16.msra.mxu0 0
  %110 = vmatprep.subr.bf16.mxu0 0
  %111 = vmatpush1.bf16.msra.mxu0 0
  %112 = vmatprep.subr.bf16.mxu0 0
  %113 = vmatpush1.bf16.msra.mxu0 0
  %114 = vmatprep.subr.bf16.mxu0 0
  %115 = vmatpush1.bf16.msra.mxu0 0
  %116 = vmatprep.subr.bf16.mxu0 0
  %117 = vmatpush1.bf16.msra.mxu0 0
  %118 = vmatprep.subr.bf16.mxu0 0
  %119 = vmatpush1.bf16.msra.mxu0 0
  %120 = vmatprep.subr.bf16.mxu0 0
  %121 = vmatpush1.bf16.msra.mxu0 0
  %122 = vmatprep.mubr.bf16.mxu0 0
  %123 = vmatmul.mubr.bf16.gmra.mrb[0].mxu0 %v88
  %v124 = vpop.f32.mrb[0].mxu0
  %v125 = vadd.f32 %v60, %v124
  %v126 = vpop.f32.mrb[0].mxu0
  %v127 = vpop.f32.mrb[0].mxu0
  %v128 = vpop.f32.mrb[0].mxu0
  %129 = vdwg.mxu0
  %s130 = scalar_lea.vmem %s0, 8
  %v131 = vld [vmem:[%s130] sm:$0xf]
  %v132 = vpack.c.bf16 %v131, %v131
  %v134 = vsel %vm86, %v132, 0
  %136 = vmatprep.subr.bf16.mxu0 0
  %137 = vmatpush1.bf16.msra.mxu0 %v78
  %138 = vmatprep.subr.bf16.mxu0 0
  %139 = vmatpush1.bf16.msra.mxu0 %v79
  %140 = vmatprep.subr.bf16.mxu0 0
  %141 = vmatpush1.bf16.msra.mxu0 %v80
  %142 = vmatprep.subr.bf16.mxu0 0
  %143 = vmatpush1.bf16.msra.mxu0 %v81
  %144 = vmatprep.subr.bf16.mxu0 0
  %145 = vmatpush1.bf16.msra.mxu0 0
  %146 = vmatprep.subr.bf16.mxu0 0
  %147 = vmatpush1.bf16.msra.mxu0 0
  %148 = vmatprep.subr.bf16.mxu0 0
  %149 = vmatpush1.bf16.msra.mxu0 0
  %150 = vmatprep.subr.bf16.mxu0 0
  %151 = vmatpush1.bf16.msra.mxu0 0
  %152 = vmatprep.subr.bf16.mxu0 0
  %153 = vmatpush1.bf16.msra.mxu0 0
  %154 = vmatprep.subr.bf16.mxu0 0
  %155 = vmatpush1.bf16.msra.mxu0 0
  %156 = vmatprep.subr.bf16.mxu0 0
  %157 = vmatpush1.bf16.msra.mxu0 0
  %158 = vmatprep.subr.bf16.mxu0 0
  %159 = vmatpush1.bf16.msra.mxu0 0
  %160 = vmatprep.subr.bf16.mxu0 0
  %161 = vmatpush1.bf16.msra.mxu0 0
  %162 = vmatprep.subr.bf16.mxu0 0
  %163 = vmatpush1.bf16.msra.mxu0 0
  %164 = vmatprep.subr.bf16.mxu0 0
  %165 = vmatpush1.bf16.msra.mxu0 0
  %166 = vmatprep.subr.bf16.mxu0 0
  %167 = vmatpush1.bf16.msra.mxu0 0
  %168 = vmatprep.mubr.bf16.mxu0 0
  %169 = vmatmul.mubr.bf16.gmra.mrb[0].mxu0 %v134
  %v170 = vpop.f32.mrb[0].mxu0
  %v171 = vadd.f32 %v60, %v170
  %v172 = vpop.f32.mrb[0].mxu0
  %v173 = vpop.f32.mrb[0].mxu0
  %v174 = vpop.f32.mrb[0].mxu0
  %175 = vdwg.mxu0
  %v176 = vld [vmem:[%s0 + $0x1] sm:$0xf]
  %v177 = vpack.c.bf16 %v176, %v176
  %v186 = vunpack.c.l.b16 %v28
  %v187 = vunpack.c.l.b16 %v29
  %v188 = vunpack.c.l.b16 %v30
  %v189 = vunpack.c.l.b16 %v31
  %v190 = vunpack.c.l.b16 %v32
  %v191 = vunpack.c.l.b16 %v33
  %v192 = vunpack.c.l.b16 %v34
  %v193 = vunpack.c.l.b16 %v35
  %v194 = vpack.c.b16 %v187, %v186
  %v195 = vpack.c.b16 %v189, %v188
  %v196 = vpack.c.b16 %v191, %v190
  %v197 = vpack.c.b16 %v193, %v192
  %v203 = vsel %vm86, %v177, 0
  %205 = vmatprep.subr.bf16.mxu0 0
  %206 = vmatpush1.bf16.msra.mxu0 %v194
  %207 = vmatprep.subr.bf16.mxu0 0
  %208 = vmatpush1.bf16.msra.mxu0 %v195
  %209 = vmatprep.subr.bf16.mxu0 0
  %210 = vmatpush1.bf16.msra.mxu0 %v196
  %211 = vmatprep.subr.bf16.mxu0 0
  %212 = vmatpush1.bf16.msra.mxu0 %v197
  %213 = vmatprep.subr.bf16.mxu0 0
  %214 = vmatpush1.bf16.msra.mxu0 0
  %215 = vmatprep.subr.bf16.mxu0 0
  %216 = vmatpush1.bf16.msra.mxu0 0
  %217 = vmatprep.subr.bf16.mxu0 0
  %218 = vmatpush1.bf16.msra.mxu0 0
  %219 = vmatprep.subr.bf16.mxu0 0
  %220 = vmatpush1.bf16.msra.mxu0 0
  %221 = vmatprep.subr.bf16.mxu0 0
  %222 = vmatpush1.bf16.msra.mxu0 0
  %223 = vmatprep.subr.bf16.mxu0 0
  %224 = vmatpush1.bf16.msra.mxu0 0
  %225 = vmatprep.subr.bf16.mxu0 0
  %226 = vmatpush1.bf16.msra.mxu0 0
  %227 = vmatprep.subr.bf16.mxu0 0
  %228 = vmatpush1.bf16.msra.mxu0 0
  %229 = vmatprep.subr.bf16.mxu0 0
  %230 = vmatpush1.bf16.msra.mxu0 0
  %231 = vmatprep.subr.bf16.mxu0 0
  %232 = vmatpush1.bf16.msra.mxu0 0
  %233 = vmatprep.subr.bf16.mxu0 0
  %234 = vmatpush1.bf16.msra.mxu0 0
  %235 = vmatprep.subr.bf16.mxu0 0
  %236 = vmatpush1.bf16.msra.mxu0 0
  %237 = vmatprep.mubr.bf16.mxu0 0
  %238 = vmatmul.mubr.bf16.gmra.mrb[0].mxu0 %v203
  %v239 = vpop.f32.mrb[0].mxu0
  %v240 = vadd.f32 0.0, %v239
  %v241 = vpop.f32.mrb[0].mxu0
  %v242 = vpop.f32.mrb[0].mxu0
  %v243 = vpop.f32.mrb[0].mxu0
  %244 = vdwg.mxu0
  %v253 = vunpack.c.l.b16 %v46
  %v254 = vunpack.c.l.b16 %v47
  %v255 = vunpack.c.l.b16 %v48
  %v256 = vunpack.c.l.b16 %v49
  %v257 = vunpack.c.l.b16 %v50
  %v258 = vunpack.c.l.b16 %v51
  %v259 = vunpack.c.l.b16 %v52
  %v260 = vunpack.c.l.b16 %v53
  %v261 = vpack.c.b16 %v254, %v253
  %v262 = vpack.c.b16 %v256, %v255
  %v263 = vpack.c.b16 %v258, %v257
  %v264 = vpack.c.b16 %v260, %v259
  %269 = vmatprep.subr.bf16.mxu0 0
  %270 = vmatpush1.bf16.msra.mxu0 %v261
  %271 = vmatprep.subr.bf16.mxu0 0
  %272 = vmatpush1.bf16.msra.mxu0 %v262
  %273 = vmatprep.subr.bf16.mxu0 0
  %274 = vmatpush1.bf16.msra.mxu0 %v263
  %275 = vmatprep.subr.bf16.mxu0 0
  %276 = vmatpush1.bf16.msra.mxu0 %v264
  %277 = vmatprep.subr.bf16.mxu0 0
  %278 = vmatpush1.bf16.msra.mxu0 0
  %279 = vmatprep.subr.bf16.mxu0 0
  %280 = vmatpush1.bf16.msra.mxu0 0
  %281 = vmatprep.subr.bf16.mxu0 0
  %282 = vmatpush1.bf16.msra.mxu0 0
  %283 = vmatprep.subr.bf16.mxu0 0
  %284 = vmatpush1.bf16.msra.mxu0 0
  %285 = vmatprep.subr.bf16.mxu0 0
  %286 = vmatpush1.bf16.msra.mxu0 0
  %287 = vmatprep.subr.bf16.mxu0 0
  %288 = vmatpush1.bf16.msra.mxu0 0
  %289 = vmatprep.subr.bf16.mxu0 0
  %290 = vmatpush1.bf16.msra.mxu0 0
  %291 = vmatprep.subr.bf16.mxu0 0
  %292 = vmatpush1.bf16.msra.mxu0 0
  %293 = vmatprep.subr.bf16.mxu0 0
  %294 = vmatpush1.bf16.msra.mxu0 0
  %295 = vmatprep.subr.bf16.mxu0 0
  %296 = vmatpush1.bf16.msra.mxu0 0
  %297 = vmatprep.subr.bf16.mxu0 0
  %298 = vmatpush1.bf16.msra.mxu0 0
  %299 = vmatprep.subr.bf16.mxu0 0
  %300 = vmatpush1.bf16.msra.mxu0 0
  %301 = vmatprep.mubr.bf16.mxu0 0
  %302 = vmatmul.mubr.bf16.gmra.mrb[0].mxu0 %v88
  %v303 = vpop.f32.mrb[0].mxu0
  %v304 = vadd.f32 %v240, %v303
  %v305 = vpop.f32.mrb[0].mxu0
  %v306 = vpop.f32.mrb[0].mxu0
  %v307 = vpop.f32.mrb[0].mxu0
  %308 = vdwg.mxu0
  %v309 = vadd.f32 %v304, %v60
  %v310 = vld [vmem:[%s130 + $0x1] sm:$0xf]
  %v311 = vpack.c.bf16 %v310, %v310
  %v313 = vsel %vm86, %v311, 0
  %315 = vmatprep.subr.bf16.mxu0 0
  %316 = vmatpush1.bf16.msra.mxu0 %v194
  %317 = vmatprep.subr.bf16.mxu0 0
  %318 = vmatpush1.bf16.msra.mxu0 %v195
  %319 = vmatprep.subr.bf16.mxu0 0
  %320 = vmatpush1.bf16.msra.mxu0 %v196
  %321 = vmatprep.subr.bf16.mxu0 0
  %322 = vmatpush1.bf16.msra.mxu0 %v197
  %323 = vmatprep.subr.bf16.mxu0 0
  %324 = vmatpush1.bf16.msra.mxu0 0
  %325 = vmatprep.subr.bf16.mxu0 0
  %326 = vmatpush1.bf16.msra.mxu0 0
  %327 = vmatprep.subr.bf16.mxu0 0
  %328 = vmatpush1.bf16.msra.mxu0 0
  %329 = vmatprep.subr.bf16.mxu0 0
  %330 = vmatpush1.bf16.msra.mxu0 0
  %331 = vmatprep.subr.bf16.mxu0 0
  %332 = vmatpush1.bf16.msra.mxu0 0
  %333 = vmatprep.subr.bf16.mxu0 0
  %334 = vmatpush1.bf16.msra.mxu0 0
  %335 = vmatprep.subr.bf16.mxu0 0
  %336 = vmatpush1.bf16.msra.mxu0 0
  %337 = vmatprep.subr.bf16.mxu0 0
  %338 = vmatpush1.bf16.msra.mxu0 0
  %339 = vmatprep.subr.bf16.mxu0 0
  %340 = vmatpush1.bf16.msra.mxu0 0
  %341 = vmatprep.subr.bf16.mxu0 0
  %342 = vmatpush1.bf16.msra.mxu0 0
  %343 = vmatprep.subr.bf16.mxu0 0
  %344 = vmatpush1.bf16.msra.mxu0 0
  %345 = vmatprep.subr.bf16.mxu0 0
  %346 = vmatpush1.bf16.msra.mxu0 0
  %347 = vmatprep.mubr.bf16.mxu0 0
  %348 = vmatmul.mubr.bf16.gmra.mrb[0].mxu0 %v313
  %v349 = vpop.f32.mrb[0].mxu0
  %v350 = vadd.f32 0.0, %v349
  %v351 = vpop.f32.mrb[0].mxu0
  %v352 = vpop.f32.mrb[0].mxu0
  %v353 = vpop.f32.mrb[0].mxu0
  %354 = vdwg.mxu0
  %355 = vmatprep.subr.bf16.mxu0 0
  %356 = vmatpush1.bf16.msra.mxu0 %v261
  %357 = vmatprep.subr.bf16.mxu0 0
  %358 = vmatpush1.bf16.msra.mxu0 %v262
  %359 = vmatprep.subr.bf16.mxu0 0
  %360 = vmatpush1.bf16.msra.mxu0 %v263
  %361 = vmatprep.subr.bf16.mxu0 0
  %362 = vmatpush1.bf16.msra.mxu0 %v264
  %363 = vmatprep.subr.bf16.mxu0 0
  %364 = vmatpush1.bf16.msra.mxu0 0
  %365 = vmatprep.subr.bf16.mxu0 0
  %366 = vmatpush1.bf16.msra.mxu0 0
  %367 = vmatprep.subr.bf16.mxu0 0
  %368 = vmatpush1.bf16.msra.mxu0 0
  %369 = vmatprep.subr.bf16.mxu0 0
  %370 = vmatpush1.bf16.msra.mxu0 0
  %371 = vmatprep.subr.bf16.mxu0 0
  %372 = vmatpush1.bf16.msra.mxu0 0
  %373 = vmatprep.subr.bf16.mxu0 0
  %374 = vmatpush1.bf16.msra.mxu0 0
  %375 = vmatprep.subr.bf16.mxu0 0
  %376 = vmatpush1.bf16.msra.mxu0 0
  %377 = vmatprep.subr.bf16.mxu0 0
  %378 = vmatpush1.bf16.msra.mxu0 0
  %379 = vmatprep.subr.bf16.mxu0 0
  %380 = vmatpush1.bf16.msra.mxu0 0
  %381 = vmatprep.subr.bf16.mxu0 0
  %382 = vmatpush1.bf16.msra.mxu0 0
  %383 = vmatprep.subr.bf16.mxu0 0
  %384 = vmatpush1.bf16.msra.mxu0 0
  %385 = vmatprep.subr.bf16.mxu0 0
  %386 = vmatpush1.bf16.msra.mxu0 0
  %387 = vmatprep.mubr.bf16.mxu0 0
  %388 = vmatmul.mubr.bf16.gmra.mrb[0].mxu0 %v134
  %v389 = vpop.f32.mrb[0].mxu0
  %v390 = vadd.f32 %v350, %v389
  %v391 = vpop.f32.mrb[0].mxu0
  %v392 = vpop.f32.mrb[0].mxu0
  %v393 = vpop.f32.mrb[0].mxu0
  %394 = vdwg.mxu0
  %v395 = vadd.f32 %v390, %v60
  %v396 = vld [vmem:[%s5] sm:$0xff]
  %v397 = vld [vmem:[%s5 + $0x8] sm:$0xff]
  %v398 = vld [vmem:[%s5 + $0x10] sm:$0xff]
  %v399 = vld [vmem:[%s5 + $0x18] sm:$0xff]
  %v400 = vld [vmem:[%s5 + $0x20] sm:$0xff]
  %v401 = vld [vmem:[%s5 + $0x28] sm:$0xff]
  %v402 = vld [vmem:[%s5 + $0x30] sm:$0xff]
  %v403 = vld [vmem:[%s5 + $0x38] sm:$0xff]
  %v404 = vld [vmem:[%s6] sm:$0xff]
  %vm405 = vcmask 519168
  %v406 = vsel %vm405, %v125, 0.0
  %v407 = vrot.slane %v406, 4
  %v408 = vadd.f32 %v406, %v407
  %v409 = vrot.slane %v408, 2
  %v410 = vadd.f32 %v408, %v409
  %v411 = vrot.slane %v410, 1
  %v412 = vadd.f32 %v410, %v411
  %v413 = vsel %vm405, %v171, 0.0
  %v414 = vrot.slane %v413, 4
  %v415 = vadd.f32 %v413, %v414
  %v416 = vrot.slane %v415, 2
  %v417 = vadd.f32 %v415, %v416
  %v418 = vrot.slane %v417, 1
  %v419 = vadd.f32 %v417, %v418
  %v420 = vadd.f32 %v412, %v419
  %v421 = vsel %vm405, %v309, 0.0
  %v422 = vrot.slane %v421, 4
  %v423 = vadd.f32 %v421, %v422
  %v424 = vrot.slane %v423, 2
  %v425 = vadd.f32 %v423, %v424
  %v426 = vrot.slane %v425, 1
  %v427 = vadd.f32 %v425, %v426
  %v428 = vadd.f32 %v420, %v427
  %v429 = vsel %vm405, %v395, 0.0
  %v430 = vrot.slane %v429, 4
  %v431 = vadd.f32 %v429, %v430
  %v432 = vrot.slane %v431, 2
  %v433 = vadd.f32 %v431, %v432
  %v434 = vrot.slane %v433, 1
  %v435 = vadd.f32 %v433, %v434
  %v436 = vadd.f32 %v428, %v435
  %v438 = vsel %vm86, %v436, 0
  %440 = vmatprep.subr.mxu0 0.0
  %441 = vmatpush1.msra.mxu0 %v396
  %442 = vmatprep.subr.mxu0 0.0
  %443 = vmatpush1.msra.mxu0 %v397
  %444 = vmatprep.subr.mxu0 0.0
  %445 = vmatpush1.msra.mxu0 %v398
  %446 = vmatprep.subr.mxu0 0.0
  %447 = vmatpush1.msra.mxu0 %v399
  %448 = vmatprep.subr.mxu0 0.0
  %449 = vmatpush1.msra.mxu0 %v400
  %450 = vmatprep.subr.mxu0 0.0
  %451 = vmatpush1.msra.mxu0 %v401
  %452 = vmatprep.subr.mxu0 0.0
  %453 = vmatpush1.msra.mxu0 %v402
  %454 = vmatprep.subr.mxu0 0.0
  %455 = vmatpush1.msra.mxu0 %v403
  %456 = vmatprep.subr.mxu0 0.0
  %457 = vmatpush1.msra.mxu0 0.0
  %458 = vmatprep.subr.mxu0 0.0
  %459 = vmatpush1.msra.mxu0 0.0
  %460 = vmatprep.subr.mxu0 0.0
  %461 = vmatpush1.msra.mxu0 0.0
  %462 = vmatprep.subr.mxu0 0.0
  %463 = vmatpush1.msra.mxu0 0.0
  %464 = vmatprep.subr.mxu0 0.0
  %465 = vmatpush1.msra.mxu0 0.0
  %466 = vmatprep.subr.mxu0 0.0
  %467 = vmatpush1.msra.mxu0 0.0
  %468 = vmatprep.subr.mxu0 0.0
  %469 = vmatpush1.msra.mxu0 0.0
  %470 = vmatprep.subr.mxu0 0.0
  %471 = vmatpush1.msra.mxu0 0.0
  %472 = vmatprep.subr.mxu0 0.0
  %473 = vmatpush1.msra.mxu0 0.0
  %474 = vmatprep.subr.mxu0 0.0
  %475 = vmatpush1.msra.mxu0 0.0
  %476 = vmatprep.subr.mxu0 0.0
  %477 = vmatpush1.msra.mxu0 0.0
  %478 = vmatprep.subr.mxu0 0.0
  %479 = vmatpush1.msra.mxu0 0.0
  %480 = vmatprep.subr.mxu0 0.0
  %481 = vmatpush1.msra.mxu0 0.0
  %482 = vmatprep.subr.mxu0 0.0
  %483 = vmatpush1.msra.mxu0 0.0
  %484 = vmatprep.subr.mxu0 0.0
  %485 = vmatpush1.msra.mxu0 0.0
  %486 = vmatprep.subr.mxu0 0.0
  %487 = vmatpush1.msra.mxu0 0.0
  %488 = vmatprep.subr.mxu0 0.0
  %489 = vmatpush1.msra.mxu0 0.0
  %490 = vmatprep.subr.mxu0 0.0
  %491 = vmatpush1.msra.mxu0 0.0
  %492 = vmatprep.subr.mxu0 0.0
  %493 = vmatpush1.msra.mxu0 0.0
  %494 = vmatprep.subr.mxu0 0.0
  %495 = vmatpush1.msra.mxu0 0.0
  %496 = vmatprep.subr.mxu0 0.0
  %497 = vmatpush1.msra.mxu0 0.0
  %498 = vmatprep.subr.mxu0 0.0
  %499 = vmatpush1.msra.mxu0 0.0
  %500 = vmatprep.subr.mxu0 0.0
  %501 = vmatpush1.msra.mxu0 0.0
  %502 = vmatprep.subr.mxu0 0.0
  %503 = vmatpush1.msra.mxu0 0.0
  %504 = vmatprep.mubr.f32.mxu0 0.0
  %505 = vmatmul.mubr.f32.gmra.mrb[0].mxu0 %v438
  %v506 = vpop.f32.mrb[0].mxu0
  %v507 = vadd.f32 0.0, %v506
  %v508 = vpop.f32.mrb[0].mxu0
  %509 = vdwg.mxu0
  %v510 = vmul.f32 %v507, 0.0078125
  %vm511 = vcmask 64512
  %v513 = vsel %vm511, %v510, 0
  %515 = vmatprep.subr.mxu0 0.0
  %516 = vmatpush1.msra.mxu0 %v404
  %517 = vmatprep.subr.mxu0 0.0
  %518 = vmatpush1.msra.mxu0 0.0
  %519 = vmatprep.subr.mxu0 0.0
  %520 = vmatpush1.msra.mxu0 0.0
  %521 = vmatprep.subr.mxu0 0.0
  %522 = vmatpush1.msra.mxu0 0.0
  %523 = vmatprep.subr.mxu0 0.0
  %524 = vmatpush1.msra.mxu0 0.0
  %525 = vmatprep.subr.mxu0 0.0
  %526 = vmatpush1.msra.mxu0 0.0
  %527 = vmatprep.subr.mxu0 0.0
  %528 = vmatpush1.msra.mxu0 0.0
  %529 = vmatprep.subr.mxu0 0.0
  %530 = vmatpush1.msra.mxu0 0.0
  %531 = vmatprep.subr.mxu0 0.0
  %532 = vmatpush1.msra.mxu0 0.0
  %533 = vmatprep.subr.mxu0 0.0
  %534 = vmatpush1.msra.mxu0 0.0
  %535 = vmatprep.subr.mxu0 0.0
  %536 = vmatpush1.msra.mxu0 0.0
  %537 = vmatprep.subr.mxu0 0.0
  %538 = vmatpush1.msra.mxu0 0.0
  %539 = vmatprep.subr.mxu0 0.0
  %540 = vmatpush1.msra.mxu0 0.0
  %541 = vmatprep.subr.mxu0 0.0
  %542 = vmatpush1.msra.mxu0 0.0
  %543 = vmatprep.subr.mxu0 0.0
  %544 = vmatpush1.msra.mxu0 0.0
  %545 = vmatprep.subr.mxu0 0.0
  %546 = vmatpush1.msra.mxu0 0.0
  %547 = vmatprep.subr.mxu0 0.0
  %548 = vmatpush1.msra.mxu0 0.0
  %549 = vmatprep.subr.mxu0 0.0
  %550 = vmatpush1.msra.mxu0 0.0
  %551 = vmatprep.subr.mxu0 0.0
  %552 = vmatpush1.msra.mxu0 0.0
  %553 = vmatprep.subr.mxu0 0.0
  %554 = vmatpush1.msra.mxu0 0.0
  %555 = vmatprep.subr.mxu0 0.0
  %556 = vmatpush1.msra.mxu0 0.0
  %557 = vmatprep.subr.mxu0 0.0
  %558 = vmatpush1.msra.mxu0 0.0
  %559 = vmatprep.subr.mxu0 0.0
  %560 = vmatpush1.msra.mxu0 0.0
  %561 = vmatprep.subr.mxu0 0.0
  %562 = vmatpush1.msra.mxu0 0.0
  %563 = vmatprep.subr.mxu0 0.0
  %564 = vmatpush1.msra.mxu0 0.0
  %565 = vmatprep.subr.mxu0 0.0
  %566 = vmatpush1.msra.mxu0 0.0
  %567 = vmatprep.subr.mxu0 0.0
  %568 = vmatpush1.msra.mxu0 0.0
  %569 = vmatprep.subr.mxu0 0.0
  %570 = vmatpush1.msra.mxu0 0.0
  %571 = vmatprep.subr.mxu0 0.0
  %572 = vmatpush1.msra.mxu0 0.0
  %573 = vmatprep.subr.mxu0 0.0
  %574 = vmatpush1.msra.mxu0 0.0
  %575 = vmatprep.subr.mxu0 0.0
  %576 = vmatpush1.msra.mxu0 0.0
  %577 = vmatprep.subr.mxu0 0.0
  %578 = vmatpush1.msra.mxu0 0.0
  %579 = vmatprep.mubr.f32.mxu0 0.0
  %580 = vmatmul.mubr.f32.gmra.mrb[0].mxu0 %v513
  %v581 = vpop.f32.mrb[0].mxu0
  %v582 = vadd.f32 0.0, %v581
  %v583 = vpop.f32.mrb[0].mxu0
  %584 = vdwg.mxu0
  %v585 = vlaneseq
  %v586 = vshrl.u32 %v585, 7
  %v587 = vsub.s32 0, %v586
  %v588 = vrot.slane %v582, %v587
  %v589 = vsub.f32 %v125, %v588
  %v590 = vmul.f32 %v589, %v589
  %v591 = vsel %vm405, %v590, 0.0
  %v592 = vrot.slane %v591, 4
  %v593 = vadd.f32 %v591, %v592
  %v594 = vrot.slane %v593, 2
  %v595 = vadd.f32 %v593, %v594
  %v596 = vrot.slane %v595, 1
  %v597 = vadd.f32 %v595, %v596
  %v598 = vsub.f32 %v171, %v588
  %v599 = vmul.f32 %v598, %v598
  %v600 = vsel %vm405, %v599, 0.0
  %v601 = vrot.slane %v600, 4
  %v602 = vadd.f32 %v600, %v601
  %v603 = vrot.slane %v602, 2
  %v604 = vadd.f32 %v602, %v603
  %v605 = vrot.slane %v604, 1
  %v606 = vadd.f32 %v604, %v605
  %v607 = vadd.f32 %v597, %v606
  %v608 = vsub.f32 %v309, %v588
  %v609 = vmul.f32 %v608, %v608
  %v610 = vsel %vm405, %v609, 0.0
  %v611 = vrot.slane %v610, 4
  %v612 = vadd.f32 %v610, %v611
  %v613 = vrot.slane %v612, 2
  %v614 = vadd.f32 %v612, %v613
  %v615 = vrot.slane %v614, 1
  %v616 = vadd.f32 %v614, %v615
  %v617 = vadd.f32 %v607, %v616
  %v618 = vsub.f32 %v395, %v588
  %v619 = vmul.f32 %v618, %v618
  %v620 = vsel %vm405, %v619, 0.0
  %v621 = vrot.slane %v620, 4
  %v622 = vadd.f32 %v620, %v621
  %v623 = vrot.slane %v622, 2
  %v624 = vadd.f32 %v622, %v623
  %v625 = vrot.slane %v624, 1
  %v626 = vadd.f32 %v624, %v625
  %v627 = vadd.f32 %v617, %v626
  %v629 = vsel %vm86, %v627, 0
  %631 = vmatprep.subr.mxu0 0.0
  %632 = vmatpush1.msra.mxu0 %v396
  %633 = vmatprep.subr.mxu0 0.0
  %634 = vmatpush1.msra.mxu0 %v397
  %635 = vmatprep.subr.mxu0 0.0
  %636 = vmatpush1.msra.mxu0 %v398
  %637 = vmatprep.subr.mxu0 0.0
  %638 = vmatpush1.msra.mxu0 %v399
  %639 = vmatprep.subr.mxu0 0.0
  %640 = vmatpush1.msra.mxu0 %v400
  %641 = vmatprep.subr.mxu0 0.0
  %642 = vmatpush1.msra.mxu0 %v401
  %643 = vmatprep.subr.mxu0 0.0
  %644 = vmatpush1.msra.mxu0 %v402
  %645 = vmatprep.subr.mxu0 0.0
  %646 = vmatpush1.msra.mxu0 %v403
  %647 = vmatprep.subr.mxu0 0.0
  %648 = vmatpush1.msra.mxu0 0.0
  %649 = vmatprep.subr.mxu0 0.0
  %650 = vmatpush1.msra.mxu0 0.0
  %651 = vmatprep.subr.mxu0 0.0
  %652 = vmatpush1.msra.mxu0 0.0
  %653 = vmatprep.subr.mxu0 0.0
  %654 = vmatpush1.msra.mxu0 0.0
  %655 = vmatprep.subr.mxu0 0.0
  %656 = vmatpush1.msra.mxu0 0.0
  %657 = vmatprep.subr.mxu0 0.0
  %658 = vmatpush1.msra.mxu0 0.0
  %659 = vmatprep.subr.mxu0 0.0
  %660 = vmatpush1.msra.mxu0 0.0
  %661 = vmatprep.subr.mxu0 0.0
  %662 = vmatpush1.msra.mxu0 0.0
  %663 = vmatprep.subr.mxu0 0.0
  %664 = vmatpush1.msra.mxu0 0.0
  %665 = vmatprep.subr.mxu0 0.0
  %666 = vmatpush1.msra.mxu0 0.0
  %667 = vmatprep.subr.mxu0 0.0
  %668 = vmatpush1.msra.mxu0 0.0
  %669 = vmatprep.subr.mxu0 0.0
  %670 = vmatpush1.msra.mxu0 0.0
  %671 = vmatprep.subr.mxu0 0.0
  %672 = vmatpush1.msra.mxu0 0.0
  %673 = vmatprep.subr.mxu0 0.0
  %674 = vmatpush1.msra.mxu0 0.0
  %675 = vmatprep.subr.mxu0 0.0
  %676 = vmatpush1.msra.mxu0 0.0
  %677 = vmatprep.subr.mxu0 0.0
  %678 = vmatpush1.msra.mxu0 0.0
  %679 = vmatprep.subr.mxu0 0.0
  %680 = vmatpush1.msra.mxu0 0.0
  %681 = vmatprep.subr.mxu0 0.0
  %682 = vmatpush1.msra.mxu0 0.0
  %683 = vmatprep.subr.mxu0 0.0
  %684 = vmatpush1.msra.mxu0 0.0
  %685 = vmatprep.subr.mxu0 0.0
  %686 = vmatpush1.msra.mxu0 0.0
  %687 = vmatprep.subr.mxu0 0.0
  %688 = vmatpush1.msra.mxu0 0.0
  %689 = vmatprep.subr.mxu0 0.0
  %690 = vmatpush1.msra.mxu0 0.0
  %691 = vmatprep.subr.mxu0 0.0
  %692 = vmatpush1.msra.mxu0 0.0
  %693 = vmatprep.subr.mxu0 0.0
  %694 = vmatpush1.msra.mxu0 0.0
  %695 = vmatprep.mubr.f32.mxu0 0.0
  %696 = vmatmul.mubr.f32.gmra.mrb[0].mxu0 %v629
  %v697 = vpop.f32.mrb[0].mxu0
  %v698 = vadd.f32 0.0, %v697
  %v699 = vpop.f32.mrb[0].mxu0
  %700 = vdwg.mxu0
  %v701 = vmul.f32 %v698, 0.0078125
  %v702 = vld [vmem:[%s3] sm:$0x1]
  %v703 = vadd.f32 %v701, 1e-05
  %v704 = vrsqrt.pop %v703
  %v705 = vmul.f32 %v702, %v704
  %v707 = vsel %vm511, %v705, 0
  %709 = vmatprep.subr.mxu0 0.0
  %710 = vmatpush1.msra.mxu0 %v404
  %711 = vmatprep.subr.mxu0 0.0
  %712 = vmatpush1.msra.mxu0 0.0
  %713 = vmatprep.subr.mxu0 0.0
  %714 = vmatpush1.msra.mxu0 0.0
  %715 = vmatprep.subr.mxu0 0.0
  %716 = vmatpush1.msra.mxu0 0.0
  %717 = vmatprep.subr.mxu0 0.0
  %718 = vmatpush1.msra.mxu0 0.0
  %719 = vmatprep.subr.mxu0 0.0
  %720 = vmatpush1.msra.mxu0 0.0
  %721 = vmatprep.subr.mxu0 0.0
  %722 = vmatpush1.msra.mxu0 0.0
  %723 = vmatprep.subr.mxu0 0.0
  %724 = vmatpush1.msra.mxu0 0.0
  %725 = vmatprep.subr.mxu0 0.0
  %726 = vmatpush1.msra.mxu0 0.0
  %727 = vmatprep.subr.mxu0 0.0
  %728 = vmatpush1.msra.mxu0 0.0
  %729 = vmatprep.subr.mxu0 0.0
  %730 = vmatpush1.msra.mxu0 0.0
  %731 = vmatprep.subr.mxu0 0.0
  %732 = vmatpush1.msra.mxu0 0.0
  %733 = vmatprep.subr.mxu0 0.0
  %734 = vmatpush1.msra.mxu0 0.0
  %735 = vmatprep.subr.mxu0 0.0
  %736 = vmatpush1.msra.mxu0 0.0
  %737 = vmatprep.subr.mxu0 0.0
  %738 = vmatpush1.msra.mxu0 0.0
  %739 = vmatprep.subr.mxu0 0.0
  %740 = vmatpush1.msra.mxu0 0.0
  %741 = vmatprep.subr.mxu0 0.0
  %742 = vmatpush1.msra.mxu0 0.0
  %743 = vmatprep.subr.mxu0 0.0
  %744 = vmatpush1.msra.mxu0 0.0
  %745 = vmatprep.subr.mxu0 0.0
  %746 = vmatpush1.msra.mxu0 0.0
  %747 = vmatprep.subr.mxu0 0.0
  %748 = vmatpush1.msra.mxu0 0.0
  %749 = vmatprep.subr.mxu0 0.0
  %750 = vmatpush1.msra.mxu0 0.0
  %751 = vmatprep.subr.mxu0 0.0
  %752 = vmatpush1.msra.mxu0 0.0
  %753 = vmatprep.subr.mxu0 0.0
  %754 = vmatpush1.msra.mxu0 0.0
  %755 = vmatprep.subr.mxu0 0.0
  %756 = vmatpush1.msra.mxu0 0.0
  %757 = vmatprep.subr.mxu0 0.0
  %758 = vmatpush1.msra.mxu0 0.0
  %759 = vmatprep.subr.mxu0 0.0
  %760 = vmatpush1.msra.mxu0 0.0
  %761 = vmatprep.subr.mxu0 0.0
  %762 = vmatpush1.msra.mxu0 0.0
  %763 = vmatprep.subr.mxu0 0.0
  %764 = vmatpush1.msra.mxu0 0.0
  %765 = vmatprep.subr.mxu0 0.0
  %766 = vmatpush1.msra.mxu0 0.0
  %767 = vmatprep.subr.mxu0 0.0
  %768 = vmatpush1.msra.mxu0 0.0
  %769 = vmatprep.subr.mxu0 0.0
  %770 = vmatpush1.msra.mxu0 0.0
  %771 = vmatprep.subr.mxu0 0.0
  %772 = vmatpush1.msra.mxu0 0.0
  %773 = vmatprep.mubr.f32.mxu0 0.0
  %774 = vmatmul.mubr.f32.gmra.mrb[0].mxu0 %v707
  %v775 = vpop.f32.mrb[0].mxu0
  %v776 = vadd.f32 0.0, %v775
  %v777 = vpop.f32.mrb[0].mxu0
  %778 = vdwg.mxu0
  %v779 = vld [vmem:[%s4] sm:$0x1]
  %v781 = vsel %vm511, %v779, 0
  %783 = vmatprep.subr.mxu0 0.0
  %784 = vmatpush1.msra.mxu0 %v404
  %785 = vmatprep.subr.mxu0 0.0
  %786 = vmatpush1.msra.mxu0 0.0
  %787 = vmatprep.subr.mxu0 0.0
  %788 = vmatpush1.msra.mxu0 0.0
  %789 = vmatprep.subr.mxu0 0.0
  %790 = vmatpush1.msra.mxu0 0.0
  %791 = vmatprep.subr.mxu0 0.0
  %792 = vmatpush1.msra.mxu0 0.0
  %793 = vmatprep.subr.mxu0 0.0
  %794 = vmatpush1.msra.mxu0 0.0
  %795 = vmatprep.subr.mxu0 0.0
  %796 = vmatpush1.msra.mxu0 0.0
  %797 = vmatprep.subr.mxu0 0.0
  %798 = vmatpush1.msra.mxu0 0.0
  %799 = vmatprep.subr.mxu0 0.0
  %800 = vmatpush1.msra.mxu0 0.0
  %801 = vmatprep.subr.mxu0 0.0
  %802 = vmatpush1.msra.mxu0 0.0
  %803 = vmatprep.subr.mxu0 0.0
  %804 = vmatpush1.msra.mxu0 0.0
  %805 = vmatprep.subr.mxu0 0.0
  %806 = vmatpush1.msra.mxu0 0.0
  %807 = vmatprep.subr.mxu0 0.0
  %808 = vmatpush1.msra.mxu0 0.0
  %809 = vmatprep.subr.mxu0 0.0
  %810 = vmatpush1.msra.mxu0 0.0
  %811 = vmatprep.subr.mxu0 0.0
  %812 = vmatpush1.msra.mxu0 0.0
  %813 = vmatprep.subr.mxu0 0.0
  %814 = vmatpush1.msra.mxu0 0.0
  %815 = vmatprep.subr.mxu0 0.0
  %816 = vmatpush1.msra.mxu0 0.0
  %817 = vmatprep.subr.mxu0 0.0
  %818 = vmatpush1.msra.mxu0 0.0
  %819 = vmatprep.subr.mxu0 0.0
  %820 = vmatpush1.msra.mxu0 0.0
  %821 = vmatprep.subr.mxu0 0.0
  %822 = vmatpush1.msra.mxu0 0.0
  %823 = vmatprep.subr.mxu0 0.0
  %824 = vmatpush1.msra.mxu0 0.0
  %825 = vmatprep.subr.mxu0 0.0
  %826 = vmatpush1.msra.mxu0 0.0
  %827 = vmatprep.subr.mxu0 0.0
  %828 = vmatpush1.msra.mxu0 0.0
  %829 = vmatprep.subr.mxu0 0.0
  %830 = vmatpush1.msra.mxu0 0.0
  %831 = vmatprep.subr.mxu0 0.0
  %832 = vmatpush1.msra.mxu0 0.0
  %833 = vmatprep.subr.mxu0 0.0
  %834 = vmatpush1.msra.mxu0 0.0
  %835 = vmatprep.subr.mxu0 0.0
  %836 = vmatpush1.msra.mxu0 0.0
  %837 = vmatprep.subr.mxu0 0.0
  %838 = vmatpush1.msra.mxu0 0.0
  %839 = vmatprep.subr.mxu0 0.0
  %840 = vmatpush1.msra.mxu0 0.0
  %841 = vmatprep.subr.mxu0 0.0
  %842 = vmatpush1.msra.mxu0 0.0
  %843 = vmatprep.subr.mxu0 0.0
  %844 = vmatpush1.msra.mxu0 0.0
  %845 = vmatprep.subr.mxu0 0.0
  %846 = vmatpush1.msra.mxu0 0.0
  %847 = vmatprep.mubr.f32.mxu0 0.0
  %848 = vmatmul.mubr.f32.gmra.mrb[0].mxu0 %v781
  %v849 = vpop.f32.mrb[0].mxu0
  %v850 = vadd.f32 0.0, %v849
  %v851 = vpop.f32.mrb[0].mxu0
  %852 = vdwg.mxu0
  %v853 = vlaneseq
  %v854 = vshrl.u32 %v853, 7
  %v855 = vsub.s32 0, %v854
  %v856 = vrot.slane %v776, %v855
  %v857 = vmul.f32 %v589, %v856
  %v858 = vlaneseq
  %v859 = vshrl.u32 %v858, 7
  %v860 = vsub.s32 0, %v859
  %v861 = vrot.slane %v850, %v860
  %v862 = vadd.f32 %v857, %v861
  %v863 = vmul.f32 %v598, %v856
  %v864 = vadd.f32 %v863, %v861
  %v865 = vmul.f32 %v608, %v856
  %v866 = vadd.f32 %v865, %v861
  %v867 = vmul.f32 %v618, %v856
  %v868 = vadd.f32 %v867, %v861
  %vm869 = vcmp.ge.f32.partialorder %v862, 0.0
  %v870 = vmul.f32 %v862, 0.01
  %v871 = vsel %vm869, %v862, %v870
  %872 = vst.msk [vmem:[%s7] sm:$0xf] %vm405, %v871
  %vm873 = vcmp.ge.f32.partialorder %v864, 0.0
  %v874 = vmul.f32 %v864, 0.01
  %v875 = vsel %vm873, %v864, %v874
  %s876 = scalar_lea.vmem %s7, 4
  %877 = vst.msk [vmem:[%s876] sm:$0xf] %vm405, %v875
  %vm878 = vcmp.ge.f32.partialorder %v866, 0.0
  %v879 = vmul.f32 %v866, 0.01
  %v880 = vsel %vm878, %v866, %v879
  %s881 = scalar_lea.vmem %s7, 8
  %882 = vst.msk [vmem:[%s881] sm:$0xf] %vm405, %v880
  %vm883 = vcmp.ge.f32.partialorder %v868, 0.0
  %v884 = vmul.f32 %v868, 0.01
  %v885 = vsel %vm883, %v868, %v884
  %s886 = scalar_lea.vmem %s7, 12
  %887 = vst.msk [vmem:[%s886] sm:$0xf] %vm405, %v885
  // Predicated region
  $region30: #{_lambda_.15} parent=0 // pred_check
    _
  $region31: #{_lambda_.15} parent=0 // pred_check_branch
    %889 = sbr.rel (0) target = $region33
  $region32: #{_lambda_.15} parent=0 // pred_region
    _
  $region33: #{_lambda_.15} parent=0 // pred_fallthru
    _
  // Predicated region
  $region34: #{_lambda_.15} parent=0 // pred_check
    _
  $region35: #{_lambda_.15} parent=0 // pred_check_branch
    %891 = sbr.rel (0) target = $region37
  $region36: #{_lambda_.15} parent=0 // pred_region
    _
  $region37: #{_lambda_.15} parent=0 // pred_fallthru
    _

// kernel: tile.119
$region0: #{tile.119}
  %s0 = inlined_call_operand.vmem [shape: f32[16,8], index: 0, kind: input, shape index: {}]
  %s1 = inlined_call_operand.vmem [shape: f32[1,128], index: 1, kind: output, shape index: {}]
  $region1: #{tile.119} parent=0
    #allocation0 [shape = 'u8[4096]{0}', space=vmem, size = 0x1000, scoped, tag = 'scoped mem for output reshape']
    %v2 = vld [vmem:[%s0] sm:$0x1]
    %vm3 = vcmask 64512
    %4 = vst.msk [vmem:[#allocation0] sm:$0x1] %vm3, %v2
    %s5 = scalar_lea.vmem %s0, 15
    %v6 = vld [vmem:[%s5] sm:$0x1]
    %7 = vrot.lane.b32.xlu0 %v6, 120
    %v8 = vpop.permute.xlu0 %7
    %vm9 = vcmask 1048512
    %10 = vst.msk [vmem:[#allocation0] sm:$0x1] %vm9, %v8
    %s11 = scalar_lea.vmem %s0, 14
    %v12 = vld [vmem:[%s11] sm:$0x1]
    %13 = vrot.lane.b32.xlu0 %v12, 112
    %v14 = vpop.permute.xlu0 %13
    %vm15 = vcmask 982912
    %16 = vst.msk [vmem:[#allocation0] sm:$0x1] %vm15, %v14
    %s17 = scalar_lea.vmem %s0, 13
    %v18 = vld [vmem:[%s17] sm:$0x1]
    %19 = vrot.lane.b32.xlu0 %v18, 104
    %v20 = vpop.permute.xlu0 %19
    %vm21 = vcmask 917312
    %22 = vst.msk [vmem:[#allocation0] sm:$0x1] %vm21, %v20
    %s23 = scalar_lea.vmem %s0, 12
    %v24 = vld [vmem:[%s23] sm:$0x1]
    %25 = vrot.lane.b32.xlu0 %v24, 96
    %v26 = vpop.permute.xlu0 %25
    %vm27 = vcmask 851712
    %28 = vst.msk [vmem:[#allocation0] sm:$0x1] %vm27, %v26
    %s29 = scalar_lea.vmem %s0, 11
    %v30 = vld [vmem:[%s29] sm:$0x1]
    %31 = vrot.lane.b32.xlu0 %v30, 88
    %v32 = vpop.permute.xlu0 %31
    %vm33 = vcmask 786112
    %34 = vst.msk [vmem:[#allocation0] sm:$0x1] %vm33, %v32
    %s35 = scalar_lea.vmem %s0, 10
    %v36 = vld [vmem:[%s35] sm:$0x1]
    %37 = vrot.lane.b32.xlu0 %v36, 80
    %v38 = vpop.permute.xlu0 %37
    %vm39 = vcmask 720512
    %40 = vst.msk [vmem:[#allocation0] sm:$0x1] %vm39, %v38
    %s41 = scalar_lea.vmem %s0, 9
    %v42 = vld [vmem:[%s41] sm:$0x1]
    %43 = vrot.lane.b32.xlu0 %v42, 72
    %v44 = vpop.permute.xlu0 %43
    %vm45 = vcmask 654912
    %46 = vst.msk [vmem:[#allocation0] sm:$0x1] %vm45, %v44
    %s47 = scalar_lea.vmem %s0, 8
    %v48 = vld [vmem:[%s47] sm:$0x1]
    %49 = vrot.lane.b32.xlu0 %v48, 64
    %v50 = vpop.permute.xlu0 %49
    %vm51 = vcmask 589312
    %52 = vst.msk [vmem:[#allocation0] sm:$0x1] %vm51, %v50
    %s53 = scalar_lea.vmem %s0, 7
    %v54 = vld [vmem:[%s53] sm:$0x1]
    %55 = vrot.lane.b32.xlu0 %v54, 56
    %v56 = vpop.permute.xlu0 %55
    %vm57 = vcmask 523712
    %58 = vst.msk [vmem:[#allocation0] sm:$0x1] %vm57, %v56
    %s59 = scalar_lea.vmem %s0, 6
    %v60 = vld [vmem:[%s59] sm:$0x1]
    %61 = vrot.lane.b32.xlu0 %v60, 48
    %v62 = vpop.permute.xlu0 %61
    %vm63 = vcmask 458112
    %64 = vst.msk [vmem:[#allocation0] sm:$0x1] %vm63, %v62
    %s65 = scalar_lea.vmem %s0, 5
    %v66 = vld [vmem:[%s65] sm:$0x1]
    %67 = vrot.lane.b32.xlu0 %v66, 40
    %v68 = vpop.permute.xlu0 %67
    %vm69 = vcmask 392512
    %70 = vst.msk [vmem:[#allocation0] sm:$0x1] %vm69, %v68
    %s71 = scalar_lea.vmem %s0, 4
    %v72 = vld [vmem:[%s71] sm:$0x1]
    %73 = vrot.lane.b32.xlu0 %v72, 32
    %v74 = vpop.permute.xlu0 %73
    %vm75 = vcmask 326912
    %76 = vst.msk [vmem:[#allocation0] sm:$0x1] %vm75, %v74
    %s77 = scalar_lea.vmem %s0, 3
    %v78 = vld [vmem:[%s77] sm:$0x1]
    %79 = vrot.lane.b32.xlu0 %v78, 24
    %v80 = vpop.permute.xlu0 %79
    %vm81 = vcmask 261312
    %82 = vst.msk [vmem:[#allocation0] sm:$0x1] %vm81, %v80
    %s83 = scalar_lea.vmem %s0, 2
    %v84 = vld [vmem:[%s83] sm:$0x1]
    %85 = vrot.lane.b32.xlu0 %v84, 16
    %v86 = vpop.permute.xlu0 %85
    %vm87 = vcmask 195712
    %88 = vst.msk [vmem:[#allocation0] sm:$0x1] %vm87, %v86
    %s89 = scalar_lea.vmem %s0, 1
    %v90 = vld [vmem:[%s89] sm:$0x1]
    %91 = vrot.lane.b32.xlu0 %v90, 8
    %v92 = vpop.permute.xlu0 %91
    %vm93 = vcmask 130112
    %94 = vst.msk [vmem:[#allocation0] sm:$0x1] %vm93, %v92
    %s96 = sshllo.u32 0, 1
    %v98 = vld [vmem:[#allocation0] sm:%s96]
    %s99 = sshllo.u32 0, 1
    %100 = vst [vmem:[%s1] sm:%s99] %v98

// kernel: _lambda_.16
$region0: #{_lambda_.16}
  #allocation0 [shape = 'u32[]', space=smem, size = 0x4, offset = 0x4, fixed_abs, tag = 'smem constant byte address 0x4 - core index']
  #allocation1 [shape = 'u32[144,128]{1,0:T(1,128)}', space=vmem, size = 0x12000, scoped, tag = 'internal scratch']
  %s0 = inlined_call_operand.vmem [shape: f32[1,2,9,64], index: 0, kind: input, shape index: {}]
  %s1 = inlined_call_operand.vmem [shape: bf16[3,64,128], index: 1, kind: input, shape index: {}]
  %s2 = inlined_call_operand.vmem [shape: f32[1,128], index: 2, kind: input, shape index: {}]
  %s3 = inlined_call_operand.vmem [shape: f32[1,8], index: 3, kind: input, shape index: {}]
  %s4 = inlined_call_operand.vmem [shape: f32[1,8], index: 4, kind: input, shape index: {}]
  %s5 = inlined_call_operand.vmem [shape: f32[128,8], index: 5, kind: input, shape index: {}]
  %s6 = inlined_call_operand.vmem [shape: f32[8,128], index: 6, kind: input, shape index: {}]
  %s7 = inlined_call_operand.vmem [shape: f32[2,2,8,128], index: 7, kind: output, shape index: {}]
  %s8 = sld [smem:[#allocation0]]
  $region38: #{_lambda_.16} parent=0
    _
  %s10 = ssub.s32 1, %s8
  %s11 = scalar_select 0, %s10, %s8
  // Predicated region
  $region2: #{_lambda_.16} parent=0 // pred_check
    _
  $region3: #{_lambda_.16} parent=0 // pred_check_branch
    %13 = sbr.rel (0) target = $region5
  $region4: #{_lambda_.16} parent=0 // pred_region
    _
  $region5: #{_lambda_.16} parent=0 // pred_fallthru
    _
  // Predicated region
  $region6: #{_lambda_.16} parent=0 // pred_check
    _
  $region7: #{_lambda_.16} parent=0 // pred_check_branch
    %15 = sbr.rel (0) target = $region9
  $region8: #{_lambda_.16} parent=0 // pred_region
    _
  $region9: #{_lambda_.16} parent=0 // pred_fallthru
    _
  // Predicated region
  $region10: #{_lambda_.16} parent=0 // pred_check
    _
  $region11: #{_lambda_.16} parent=0 // pred_check_branch
    %17 = sbr.rel (0) target = $region13
  $region12: #{_lambda_.16} parent=0 // pred_region
    _
  $region13: #{_lambda_.16} parent=0 // pred_fallthru
    _
  // Predicated region
  $region14: #{_lambda_.16} parent=0 // pred_check
    _
  $region15: #{_lambda_.16} parent=0 // pred_check_branch
    %19 = sbr.rel (0) target = $region17
  $region16: #{_lambda_.16} parent=0 // pred_region
    _
  $region17: #{_lambda_.16} parent=0 // pred_fallthru
    _
  // Predicated region
  $region18: #{_lambda_.16} parent=0 // pred_check
    _
  $region19: #{_lambda_.16} parent=0 // pred_check_branch
    %21 = sbr.rel (0) target = $region21
  $region20: #{_lambda_.16} parent=0 // pred_region
    _
  $region21: #{_lambda_.16} parent=0 // pred_fallthru
    _
  // Predicated region
  $region22: #{_lambda_.16} parent=0 // pred_check
    _
  $region23: #{_lambda_.16} parent=0 // pred_check_branch
    %23 = sbr.rel (0) target = $region25
  $region24: #{_lambda_.16} parent=0 // pred_region
    _
  $region25: #{_lambda_.16} parent=0 // pred_fallthru
    _
  // Predicated region
  $region26: #{_lambda_.16} parent=0 // pred_check
    _
  $region27: #{_lambda_.16} parent=0 // pred_check_branch
    %25 = sbr.rel (0) target = $region29
  $region28: #{_lambda_.16} parent=0 // pred_region
    _
  $region29: #{_lambda_.16} parent=0 // pred_fallthru
    _
  %v27 = vld [vmem:[%s2] sm:$0x1]
  %v28 = vld [vmem:[%s1] sm:$0xf]
  %v29 = vld [vmem:[%s1 + $0x4] sm:$0xf]
  %v30 = vld [vmem:[%s1 + $0x8] sm:$0xf]
  %v31 = vld [vmem:[%s1 + $0xc] sm:$0xf]
  %v32 = vld [vmem:[%s1 + $0x10] sm:$0xf]
  %v33 = vld [vmem:[%s1 + $0x14] sm:$0xf]
  %v34 = vld [vmem:[%s1 + $0x18] sm:$0xf]
  %v35 = vld [vmem:[%s1 + $0x1c] sm:$0xf]
  %s36 = scalar_lea.vmem %s1, 32
  %v37 = vld [vmem:[%s36] sm:$0xf]
  %v38 = vld [vmem:[%s36 + $0x4] sm:$0xf]
  %v39 = vld [vmem:[%s36 + $0x8] sm:$0xf]
  %v40 = vld [vmem:[%s36 + $0xc] sm:$0xf]
  %v41 = vld [vmem:[%s36 + $0x10] sm:$0xf]
  %v42 = vld [vmem:[%s36 + $0x14] sm:$0xf]
  %v43 = vld [vmem:[%s36 + $0x18] sm:$0xf]
  %v44 = vld [vmem:[%s36 + $0x1c] sm:$0xf]
  %s45 = scalar_lea.vmem %s1, 64
  %v46 = vld [vmem:[%s45] sm:$0xf]
  %v47 = vld [vmem:[%s45 + $0x4] sm:$0xf]
  %v48 = vld [vmem:[%s45 + $0x8] sm:$0xf]
  %v49 = vld [vmem:[%s45 + $0xc] sm:$0xf]
  %v50 = vld [vmem:[%s45 + $0x10] sm:$0xf]
  %v51 = vld [vmem:[%s45 + $0x14] sm:$0xf]
  %v52 = vld [vmem:[%s45 + $0x18] sm:$0xf]
  %v53 = vld [vmem:[%s45 + $0x1c] sm:$0xf]
  %v54 = vld [vmem:[%s0] sm:$0xff]
  %v55 = vpack.c.bf16 %v54, %v54
  %v57 = vlaneseq
  %v58 = vshrl.u32 %v57, 7
  %v59 = vsub.s32 0, %v58
  %v60 = vrot.slane %v27, %v59
  %v70 = vunpack.c.l.b16 %v37
  %v71 = vunpack.c.l.b16 %v38
  %v72 = vunpack.c.l.b16 %v39
  %v73 = vunpack.c.l.b16 %v40
  %v74 = vunpack.c.l.b16 %v41
  %v75 = vunpack.c.l.b16 %v42
  %v76 = vunpack.c.l.b16 %v43
  %v77 = vunpack.c.l.b16 %v44
  %v78 = vpack.c.b16 %v71, %v70
  %v79 = vpack.c.b16 %v73, %v72
  %v80 = vpack.c.b16 %v75, %v74
  %v81 = vpack.c.b16 %v77, %v76
  %vm86 = vcmask 523264
  %v88 = vsel %vm86, %v55, 0
  %90 = vmatprep.subr.bf16.mxu0 0
  %91 = vmatpush1.bf16.msra.mxu0 %v78
  %92 = vmatprep.subr.bf16.mxu0 0
  %93 = vmatpush1.bf16.msra.mxu0 %v79
  %94 = vmatprep.subr.bf16.mxu0 0
  %95 = vmatpush1.bf16.msra.mxu0 %v80
  %96 = vmatprep.subr.bf16.mxu0 0
  %97 = vmatpush1.bf16.msra.mxu0 %v81
  %98 = vmatprep.subr.bf16.mxu0 0
  %99 = vmatpush1.bf16.msra.mxu0 0
  %100 = vmatprep.subr.bf16.mxu0 0
  %101 = vmatpush1.bf16.msra.mxu0 0
  %102 = vmatprep.subr.bf16.mxu0 0
  %103 = vmatpush1.bf16.msra.mxu0 0
  %104 = vmatprep.subr.bf16.mxu0 0
  %105 = vmatpush1.bf16.msra.mxu0 0
  %106 = vmatprep.subr.bf16.mxu0 0
  %107 = vmatpush1.bf16.msra.mxu0 0
  %108 = vmatprep.subr.bf16.mxu0 0
  %109 = vmatpush1.bf16.msra.mxu0 0
  %110 = vmatprep.subr.bf16.mxu0 0
  %111 = vmatpush1.bf16.msra.mxu0 0
  %112 = vmatprep.subr.bf16.mxu0 0
  %113 = vmatpush1.bf16.msra.mxu0 0
  %114 = vmatprep.subr.bf16.mxu0 0
  %115 = vmatpush1.bf16.msra.mxu0 0
  %116 = vmatprep.subr.bf16.mxu0 0
  %117 = vmatpush1.bf16.msra.mxu0 0
  %118 = vmatprep.subr.bf16.mxu0 0
  %119 = vmatpush1.bf16.msra.mxu0 0
  %120 = vmatprep.subr.bf16.mxu0 0
  %121 = vmatpush1.bf16.msra.mxu0 0
  %122 = vmatprep.mubr.bf16.mxu0 0
  %123 = vmatmul.mubr.bf16.gmra.mrb[0].mxu0 %v88
  %v124 = vpop.f32.mrb[0].mxu0
  %v125 = vadd.f32 %v60, %v124
  %v126 = vpop.f32.mrb[0].mxu0
  %v127 = vpop.f32.mrb[0].mxu0
  %v128 = vpop.f32.mrb[0].mxu0
  %129 = vdwg.mxu0
  %s130 = scalar_lea.vmem %s0, 16
  %v131 = vld [vmem:[%s130] sm:$0xff]
  %v132 = vpack.c.bf16 %v131, %v131
  %v134 = vsel %vm86, %v132, 0
  %136 = vmatprep.subr.bf16.mxu0 0
  %137 = vmatpush1.bf16.msra.mxu0 %v78
  %138 = vmatprep.subr.bf16.mxu0 0
  %139 = vmatpush1.bf16.msra.mxu0 %v79
  %140 = vmatprep.subr.bf16.mxu0 0
  %141 = vmatpush1.bf16.msra.mxu0 %v80
  %142 = vmatprep.subr.bf16.mxu0 0
  %143 = vmatpush1.bf16.msra.mxu0 %v81
  %144 = vmatprep.subr.bf16.mxu0 0
  %145 = vmatpush1.bf16.msra.mxu0 0
  %146 = vmatprep.subr.bf16.mxu0 0
  %147 = vmatpush1.bf16.msra.mxu0 0
  %148 = vmatprep.subr.bf16.mxu0 0
  %149 = vmatpush1.bf16.msra.mxu0 0
  %150 = vmatprep.subr.bf16.mxu0 0
  %151 = vmatpush1.bf16.msra.mxu0 0
  %152 = vmatprep.subr.bf16.mxu0 0
  %153 = vmatpush1.bf16.msra.mxu0 0
  %154 = vmatprep.subr.bf16.mxu0 0
  %155 = vmatpush1.bf16.msra.mxu0 0
  %156 = vmatprep.subr.bf16.mxu0 0
  %157 = vmatpush1.bf16.msra.mxu0 0
  %158 = vmatprep.subr.bf16.mxu0 0
  %159 = vmatpush1.bf16.msra.mxu0 0
  %160 = vmatprep.subr.bf16.mxu0 0
  %161 = vmatpush1.bf16.msra.mxu0 0
  %162 = vmatprep.subr.bf16.mxu0 0
  %163 = vmatpush1.bf16.msra.mxu0 0
  %164 = vmatprep.subr.bf16.mxu0 0
  %165 = vmatpush1.bf16.msra.mxu0 0
  %166 = vmatprep.subr.bf16.mxu0 0
  %167 = vmatpush1.bf16.msra.mxu0 0
  %168 = vmatprep.mubr.bf16.mxu0 0
  %169 = vmatmul.mubr.bf16.gmra.mrb[0].mxu0 %v134
  %v170 = vpop.f32.mrb[0].mxu0
  %v171 = vadd.f32 %v60, %v170
  %v172 = vpop.f32.mrb[0].mxu0
  %v173 = vpop.f32.mrb[0].mxu0
  %v174 = vpop.f32.mrb[0].mxu0
  %175 = vdwg.mxu0
  %v176 = vld [vmem:[%s0 + $0x1] sm:$0xff]
  %v177 = vpack.c.bf16 %v176, %v176
  %v186 = vunpack.c.l.b16 %v28
  %v187 = vunpack.c.l.b16 %v29
  %v188 = vunpack.c.l.b16 %v30
  %v189 = vunpack.c.l.b16 %v31
  %v190 = vunpack.c.l.b16 %v32
  %v191 = vunpack.c.l.b16 %v33
  %v192 = vunpack.c.l.b16 %v34
  %v193 = vunpack.c.l.b16 %v35
  %v194 = vpack.c.b16 %v187, %v186
  %v195 = vpack.c.b16 %v189, %v188
  %v196 = vpack.c.b16 %v191, %v190
  %v197 = vpack.c.b16 %v193, %v192
  %v203 = vsel %vm86, %v177, 0
  %205 = vmatprep.subr.bf16.mxu0 0
  %206 = vmatpush1.bf16.msra.mxu0 %v194
  %207 = vmatprep.subr.bf16.mxu0 0
  %208 = vmatpush1.bf16.msra.mxu0 %v195
  %209 = vmatprep.subr.bf16.mxu0 0
  %210 = vmatpush1.bf16.msra.mxu0 %v196
  %211 = vmatprep.subr.bf16.mxu0 0
  %212 = vmatpush1.bf16.msra.mxu0 %v197
  %213 = vmatprep.subr.bf16.mxu0 0
  %214 = vmatpush1.bf16.msra.mxu0 0
  %215 = vmatprep.subr.bf16.mxu0 0
  %216 = vmatpush1.bf16.msra.mxu0 0
  %217 = vmatprep.subr.bf16.mxu0 0
  %218 = vmatpush1.bf16.msra.mxu0 0
  %219 = vmatprep.subr.bf16.mxu0 0
  %220 = vmatpush1.bf16.msra.mxu0 0
  %221 = vmatprep.subr.bf16.mxu0 0
  %222 = vmatpush1.bf16.msra.mxu0 0
  %223 = vmatprep.subr.bf16.mxu0 0
  %224 = vmatpush1.bf16.msra.mxu0 0
  %225 = vmatprep.subr.bf16.mxu0 0
  %226 = vmatpush1.bf16.msra.mxu0 0
  %227 = vmatprep.subr.bf16.mxu0 0
  %228 = vmatpush1.bf16.msra.mxu0 0
  %229 = vmatprep.subr.bf16.mxu0 0
  %230 = vmatpush1.bf16.msra.mxu0 0
  %231 = vmatprep.subr.bf16.mxu0 0
  %232 = vmatpush1.bf16.msra.mxu0 0
  %233 = vmatprep.subr.bf16.mxu0 0
  %234 = vmatpush1.bf16.msra.mxu0 0
  %235 = vmatprep.subr.bf16.mxu0 0
  %236 = vmatpush1.bf16.msra.mxu0 0
  %237 = vmatprep.mubr.bf16.mxu0 0
  %238 = vmatmul.mubr.bf16.gmra.mrb[0].mxu0 %v203
  %v239 = vpop.f32.mrb[0].mxu0
  %v240 = vadd.f32 0.0, %v239
  %v241 = vpop.f32.mrb[0].mxu0
  %v242 = vpop.f32.mrb[0].mxu0
  %v243 = vpop.f32.mrb[0].mxu0
  %244 = vdwg.mxu0
  %v253 = vunpack.c.l.b16 %v46
  %v254 = vunpack.c.l.b16 %v47
  %v255 = vunpack.c.l.b16 %v48
  %v256 = vunpack.c.l.b16 %v49
  %v257 = vunpack.c.l.b16 %v50
  %v258 = vunpack.c.l.b16 %v51
  %v259 = vunpack.c.l.b16 %v52
  %v260 = vunpack.c.l.b16 %v53
  %v261 = vpack.c.b16 %v254, %v253
  %v262 = vpack.c.b16 %v256, %v255
  %v263 = vpack.c.b16 %v258, %v257
  %v264 = vpack.c.b16 %v260, %v259
  %269 = vmatprep.subr.bf16.mxu0 0
  %270 = vmatpush1.bf16.msra.mxu0 %v261
  %271 = vmatprep.subr.bf16.mxu0 0
  %272 = vmatpush1.bf16.msra.mxu0 %v262
  %273 = vmatprep.subr.bf16.mxu0 0
  %274 = vmatpush1.bf16.msra.mxu0 %v263
  %275 = vmatprep.subr.bf16.mxu0 0
  %276 = vmatpush1.bf16.msra.mxu0 %v264
  %277 = vmatprep.subr.bf16.mxu0 0
  %278 = vmatpush1.bf16.msra.mxu0 0
  %279 = vmatprep.subr.bf16.mxu0 0
  %280 = vmatpush1.bf16.msra.mxu0 0
  %281 = vmatprep.subr.bf16.mxu0 0
  %282 = vmatpush1.bf16.msra.mxu0 0
  %283 = vmatprep.subr.bf16.mxu0 0
  %284 = vmatpush1.bf16.msra.mxu0 0
  %285 = vmatprep.subr.bf16.mxu0 0
  %286 = vmatpush1.bf16.msra.mxu0 0
  %287 = vmatprep.subr.bf16.mxu0 0
  %288 = vmatpush1.bf16.msra.mxu0 0
  %289 = vmatprep.subr.bf16.mxu0 0
  %290 = vmatpush1.bf16.msra.mxu0 0
  %291 = vmatprep.subr.bf16.mxu0 0
  %292 = vmatpush1.bf16.msra.mxu0 0
  %293 = vmatprep.subr.bf16.mxu0 0
  %294 = vmatpush1.bf16.msra.mxu0 0
  %295 = vmatprep.subr.bf16.mxu0 0
  %296 = vmatpush1.bf16.msra.mxu0 0
  %297 = vmatprep.subr.bf16.mxu0 0
  %298 = vmatpush1.bf16.msra.mxu0 0
  %299 = vmatprep.subr.bf16.mxu0 0
  %300 = vmatpush1.bf16.msra.mxu0 0
  %301 = vmatprep.mubr.bf16.mxu0 0
  %302 = vmatmul.mubr.bf16.gmra.mrb[0].mxu0 %v88
  %v303 = vpop.f32.mrb[0].mxu0
  %v304 = vadd.f32 %v240, %v303
  %v305 = vpop.f32.mrb[0].mxu0
  %v306 = vpop.f32.mrb[0].mxu0
  %v307 = vpop.f32.mrb[0].mxu0
  %308 = vdwg.mxu0
  %v309 = vadd.f32 %v304, %v60
  %v310 = vld [vmem:[%s130 + $0x1] sm:$0xff]
  %v311 = vpack.c.bf16 %v310, %v310
  %v313 = vsel %vm86, %v311, 0
  %315 = vmatprep.subr.bf16.mxu0 0
  %316 = vmatpush1.bf16.msra.mxu0 %v194
  %317 = vmatprep.subr.bf16.mxu0 0
  %318 = vmatpush1.bf16.msra.mxu0 %v195
  %319 = vmatprep.subr.bf16.mxu0 0
  %320 = vmatpush1.bf16.msra.mxu0 %v196
  %321 = vmatprep.subr.bf16.mxu0 0
  %322 = vmatpush1.bf16.msra.mxu0 %v197
  %323 = vmatprep.subr.bf16.mxu0 0
  %324 = vmatpush1.bf16.msra.mxu0 0
  %325 = vmatprep.subr.bf16.mxu0 0
  %326 = vmatpush1.bf16.msra.mxu0 0
  %327 = vmatprep.subr.bf16.mxu0 0
  %328 = vmatpush1.bf16.msra.mxu0 0
  %329 = vmatprep.subr.bf16.mxu0 0
  %330 = vmatpush1.bf16.msra.mxu0 0
  %331 = vmatprep.subr.bf16.mxu0 0
  %332 = vmatpush1.bf16.msra.mxu0 0
  %333 = vmatprep.subr.bf16.mxu0 0
  %334 = vmatpush1.bf16.msra.mxu0 0
  %335 = vmatprep.subr.bf16.mxu0 0
  %336 = vmatpush1.bf16.msra.mxu0 0
  %337 = vmatprep.subr.bf16.mxu0 0
  %338 = vmatpush1.bf16.msra.mxu0 0
  %339 = vmatprep.subr.bf16.mxu0 0
  %340 = vmatpush1.bf16.msra.mxu0 0
  %341 = vmatprep.subr.bf16.mxu0 0
  %342 = vmatpush1.bf16.msra.mxu0 0
  %343 = vmatprep.subr.bf16.mxu0 0
  %344 = vmatpush1.bf16.msra.mxu0 0
  %345 = vmatprep.subr.bf16.mxu0 0
  %346 = vmatpush1.bf16.msra.mxu0 0
  %347 = vmatprep.mubr.bf16.mxu0 0
  %348 = vmatmul.mubr.bf16.gmra.mrb[0].mxu0 %v313
  %v349 = vpop.f32.mrb[0].mxu0
  %v350 = vadd.f32 0.0, %v349
  %v351 = vpop.f32.mrb[0].mxu0
  %v352 = vpop.f32.mrb[0].mxu0
  %v353 = vpop.f32.mrb[0].mxu0
  %354 = vdwg.mxu0
  %355 = vmatprep.subr.bf16.mxu0 0
  %356 = vmatpush1.bf16.msra.mxu0 %v261
  %357 = vmatprep.subr.bf16.mxu0 0
  %358 = vmatpush1.bf16.msra.mxu0 %v262
  %359 = vmatprep.subr.bf16.mxu0 0
  %360 = vmatpush1.bf16.msra.mxu0 %v263
  %361 = vmatprep.subr.bf16.mxu0 0
  %362 = vmatpush1.bf16.msra.mxu0 %v264
  %363 = vmatprep.subr.bf16.mxu0 0
  %364 = vmatpush1.bf16.msra.mxu0 0
  %365 = vmatprep.subr.bf16.mxu0 0
  %366 = vmatpush1.bf16.msra.mxu0 0
  %367 = vmatprep.subr.bf16.mxu0 0
  %368 = vmatpush1.bf16.msra.mxu0 0
  %369 = vmatprep.subr.bf16.mxu0 0
  %370 = vmatpush1.bf16.msra.mxu0 0
  %371 = vmatprep.subr.bf16.mxu0 0
  %372 = vmatpush1.bf16.msra.mxu0 0
  %373 = vmatprep.subr.bf16.mxu0 0
  %374 = vmatpush1.bf16.msra.mxu0 0
  %375 = vmatprep.subr.bf16.mxu0 0
  %376 = vmatpush1.bf16.msra.mxu0 0
  %377 = vmatprep.subr.bf16.mxu0 0
  %378 = vmatpush1.bf16.msra.mxu0 0
  %379 = vmatprep.subr.bf16.mxu0 0
  %380 = vmatpush1.bf16.msra.mxu0 0
  %381 = vmatprep.subr.bf16.mxu0 0
  %382 = vmatpush1.bf16.msra.mxu0 0
  %383 = vmatprep.subr.bf16.mxu0 0
  %384 = vmatpush1.bf16.msra.mxu0 0
  %385 = vmatprep.subr.bf16.mxu0 0
  %386 = vmatpush1.bf16.msra.mxu0 0
  %387 = vmatprep.mubr.bf16.mxu0 0
  %388 = vmatmul.mubr.bf16.gmra.mrb[0].mxu0 %v134
  %v389 = vpop.f32.mrb[0].mxu0
  %v390 = vadd.f32 %v350, %v389
  %v391 = vpop.f32.mrb[0].mxu0
  %v392 = vpop.f32.mrb[0].mxu0
  %v393 = vpop.f32.mrb[0].mxu0
  %394 = vdwg.mxu0
  %v395 = vadd.f32 %v390, %v60
  %v396 = vld [vmem:[%s5] sm:$0xff]
  %v397 = vld [vmem:[%s5 + $0x8] sm:$0xff]
  %v398 = vld [vmem:[%s5 + $0x10] sm:$0xff]
  %v399 = vld [vmem:[%s5 + $0x18] sm:$0xff]
  %v400 = vld [vmem:[%s5 + $0x20] sm:$0xff]
  %v401 = vld [vmem:[%s5 + $0x28] sm:$0xff]
  %v402 = vld [vmem:[%s5 + $0x30] sm:$0xff]
  %v403 = vld [vmem:[%s5 + $0x38] sm:$0xff]
  %v404 = vld [vmem:[%s5 + $0x40] sm:$0xff]
  %v405 = vld [vmem:[%s5 + $0x48] sm:$0xff]
  %v406 = vld [vmem:[%s5 + $0x50] sm:$0xff]
  %v407 = vld [vmem:[%s5 + $0x58] sm:$0xff]
  %v408 = vld [vmem:[%s5 + $0x60] sm:$0xff]
  %v409 = vld [vmem:[%s5 + $0x68] sm:$0xff]
  %v410 = vld [vmem:[%s5 + $0x70] sm:$0xff]
  %v411 = vld [vmem:[%s5 + $0x78] sm:$0xff]
  %v412 = vld [vmem:[%s6] sm:$0xff]
  %v413 = vrot.slane %v125, 4
  %v414 = vadd.f32 %v125, %v413
  %v415 = vrot.slane %v414, 2
  %v416 = vadd.f32 %v414, %v415
  %v417 = vrot.slane %v416, 1
  %v418 = vadd.f32 %v416, %v417
  %v419 = vrot.slane %v171, 4
  %v420 = vadd.f32 %v171, %v419
  %v421 = vrot.slane %v420, 2
  %v422 = vadd.f32 %v420, %v421
  %v423 = vrot.slane %v422, 1
  %v424 = vadd.f32 %v422, %v423
  %v425 = vadd.f32 %v418, %v424
  %v426 = vrot.slane %v309, 4
  %v427 = vadd.f32 %v309, %v426
  %v428 = vrot.slane %v427, 2
  %v429 = vadd.f32 %v427, %v428
  %v430 = vrot.slane %v429, 1
  %v431 = vadd.f32 %v429, %v430
  %v432 = vadd.f32 %v425, %v431
  %v433 = vrot.slane %v395, 4
  %v434 = vadd.f32 %v395, %v433
  %v435 = vrot.slane %v434, 2
  %v436 = vadd.f32 %v434, %v435
  %v437 = vrot.slane %v436, 1
  %v438 = vadd.f32 %v436, %v437
  %v439 = vadd.f32 %v432, %v438
  %440 = vmatprep.subr.mxu0 0.0
  %441 = vmatpush1.msra.mxu0 %v396
  %442 = vmatprep.subr.mxu0 0.0
  %443 = vmatpush1.msra.mxu0 %v397
  %444 = vmatprep.subr.mxu0 0.0
  %445 = vmatpush1.msra.mxu0 %v398
  %446 = vmatprep.subr.mxu0 0.0
  %447 = vmatpush1.msra.mxu0 %v399
  %448 = vmatprep.subr.mxu0 0.0
  %449 = vmatpush1.msra.mxu0 %v400
  %450 = vmatprep.subr.mxu0 0.0
  %451 = vmatpush1.msra.mxu0 %v401
  %452 = vmatprep.subr.mxu0 0.0
  %453 = vmatpush1.msra.mxu0 %v402
  %454 = vmatprep.subr.mxu0 0.0
  %455 = vmatpush1.msra.mxu0 %v403
  %456 = vmatprep.subr.mxu0 0.0
  %457 = vmatpush1.msra.mxu0 %v404
  %458 = vmatprep.subr.mxu0 0.0
  %459 = vmatpush1.msra.mxu0 %v405
  %460 = vmatprep.subr.mxu0 0.0
  %461 = vmatpush1.msra.mxu0 %v406
  %462 = vmatprep.subr.mxu0 0.0
  %463 = vmatpush1.msra.mxu0 %v407
  %464 = vmatprep.subr.mxu0 0.0
  %465 = vmatpush1.msra.mxu0 %v408
  %466 = vmatprep.subr.mxu0 0.0
  %467 = vmatpush1.msra.mxu0 %v409
  %468 = vmatprep.subr.mxu0 0.0
  %469 = vmatpush1.msra.mxu0 %v410
  %470 = vmatprep.subr.mxu0 0.0
  %471 = vmatpush1.msra.mxu0 %v411
  %472 = vmatprep.subr.mxu0 0.0
  %473 = vmatpush1.msra.mxu0 0.0
  %474 = vmatprep.subr.mxu0 0.0
  %475 = vmatpush1.msra.mxu0 0.0
  %476 = vmatprep.subr.mxu0 0.0
  %477 = vmatpush1.msra.mxu0 0.0
  %478 = vmatprep.subr.mxu0 0.0
  %479 = vmatpush1.msra.mxu0 0.0
  %480 = vmatprep.subr.mxu0 0.0
  %481 = vmatpush1.msra.mxu0 0.0
  %482 = vmatprep.subr.mxu0 0.0
  %483 = vmatpush1.msra.mxu0 0.0
  %484 = vmatprep.subr.mxu0 0.0
  %485 = vmatpush1.msra.mxu0 0.0
  %486 = vmatprep.subr.mxu0 0.0
  %487 = vmatpush1.msra.mxu0 0.0
  %488 = vmatprep.subr.mxu0 0.0
  %489 = vmatpush1.msra.mxu0 0.0
  %490 = vmatprep.subr.mxu0 0.0
  %491 = vmatpush1.msra.mxu0 0.0
  %492 = vmatprep.subr.mxu0 0.0
  %493 = vmatpush1.msra.mxu0 0.0
  %494 = vmatprep.subr.mxu0 0.0
  %495 = vmatpush1.msra.mxu0 0.0
  %496 = vmatprep.subr.mxu0 0.0
  %497 = vmatpush1.msra.mxu0 0.0
  %498 = vmatprep.subr.mxu0 0.0
  %499 = vmatpush1.msra.mxu0 0.0
  %500 = vmatprep.subr.mxu0 0.0
  %501 = vmatpush1.msra.mxu0 0.0
  %502 = vmatprep.subr.mxu0 0.0
  %503 = vmatpush1.msra.mxu0 0.0
  %504 = vmatprep.mubr.f32.mxu0 0.0
  %505 = vmatmul.mubr.f32.gmra.mrb[0].mxu0 %v439
  %v506 = vpop.f32.mrb[0].mxu0
  %v507 = vadd.f32 0.0, %v506
  %v508 = vpop.f32.mrb[0].mxu0
  %509 = vdwg.mxu0
  %v510 = vmul.f32 %v507, 0.001953125
  %vm511 = vcmask 64512
  %v513 = vsel %vm511, %v510, 0
  %515 = vmatprep.subr.mxu0 0.0
  %516 = vmatpush1.msra.mxu0 %v412
  %517 = vmatprep.subr.mxu0 0.0
  %518 = vmatpush1.msra.mxu0 0.0
  %519 = vmatprep.subr.mxu0 0.0
  %520 = vmatpush1.msra.mxu0 0.0
  %521 = vmatprep.subr.mxu0 0.0
  %522 = vmatpush1.msra.mxu0 0.0
  %523 = vmatprep.subr.mxu0 0.0
  %524 = vmatpush1.msra.mxu0 0.0
  %525 = vmatprep.subr.mxu0 0.0
  %526 = vmatpush1.msra.mxu0 0.0
  %527 = vmatprep.subr.mxu0 0.0
  %528 = vmatpush1.msra.mxu0 0.0
  %529 = vmatprep.subr.mxu0 0.0
  %530 = vmatpush1.msra.mxu0 0.0
  %531 = vmatprep.subr.mxu0 0.0
  %532 = vmatpush1.msra.mxu0 0.0
  %533 = vmatprep.subr.mxu0 0.0
  %534 = vmatpush1.msra.mxu0 0.0
  %535 = vmatprep.subr.mxu0 0.0
  %536 = vmatpush1.msra.mxu0 0.0
  %537 = vmatprep.subr.mxu0 0.0
  %538 = vmatpush1.msra.mxu0 0.0
  %539 = vmatprep.subr.mxu0 0.0
  %540 = vmatpush1.msra.mxu0 0.0
  %541 = vmatprep.subr.mxu0 0.0
  %542 = vmatpush1.msra.mxu0 0.0
  %543 = vmatprep.subr.mxu0 0.0
  %544 = vmatpush1.msra.mxu0 0.0
  %545 = vmatprep.subr.mxu0 0.0
  %546 = vmatpush1.msra.mxu0 0.0
  %547 = vmatprep.subr.mxu0 0.0
  %548 = vmatpush1.msra.mxu0 0.0
  %549 = vmatprep.subr.mxu0 0.0
  %550 = vmatpush1.msra.mxu0 0.0
  %551 = vmatprep.subr.mxu0 0.0
  %552 = vmatpush1.msra.mxu0 0.0
  %553 = vmatprep.subr.mxu0 0.0
  %554 = vmatpush1.msra.mxu0 0.0
  %555 = vmatprep.subr.mxu0 0.0
  %556 = vmatpush1.msra.mxu0 0.0
  %557 = vmatprep.subr.mxu0 0.0
  %558 = vmatpush1.msra.mxu0 0.0
  %559 = vmatprep.subr.mxu0 0.0
  %560 = vmatpush1.msra.mxu0 0.0
  %561 = vmatprep.subr.mxu0 0.0
  %562 = vmatpush1.msra.mxu0 0.0
  %563 = vmatprep.subr.mxu0 0.0
  %564 = vmatpush1.msra.mxu0 0.0
  %565 = vmatprep.subr.mxu0 0.0
  %566 = vmatpush1.msra.mxu0 0.0
  %567 = vmatprep.subr.mxu0 0.0
  %568 = vmatpush1.msra.mxu0 0.0
  %569 = vmatprep.subr.mxu0 0.0
  %570 = vmatpush1.msra.mxu0 0.0
  %571 = vmatprep.subr.mxu0 0.0
  %572 = vmatpush1.msra.mxu0 0.0
  %573 = vmatprep.subr.mxu0 0.0
  %574 = vmatpush1.msra.mxu0 0.0
  %575 = vmatprep.subr.mxu0 0.0
  %576 = vmatpush1.msra.mxu0 0.0
  %577 = vmatprep.subr.mxu0 0.0
  %578 = vmatpush1.msra.mxu0 0.0
  %579 = vmatprep.mubr.f32.mxu0 0.0
  %580 = vmatmul.mubr.f32.gmra.mrb[0].mxu0 %v513
  %v581 = vpop.f32.mrb[0].mxu0
  %v582 = vadd.f32 0.0, %v581
  %v583 = vpop.f32.mrb[0].mxu0
  %584 = vdwg.mxu0
  %v585 = vlaneseq
  %v586 = vshrl.u32 %v585, 7
  %v587 = vsub.s32 0, %v586
  %v588 = vrot.slane %v582, %v587
  %v589 = vsub.f32 %v125, %v588
  %v590 = vmul.f32 %v589, %v589
  %v591 = vrot.slane %v590, 4
  %v592 = vadd.f32 %v590, %v591
  %v593 = vrot.slane %v592, 2
  %v594 = vadd.f32 %v592, %v593
  %v595 = vrot.slane %v594, 1
  %v596 = vadd.f32 %v594, %v595
  %v597 = vsub.f32 %v171, %v588
  %v598 = vmul.f32 %v597, %v597
  %v599 = vrot.slane %v598, 4
  %v600 = vadd.f32 %v598, %v599
  %v601 = vrot.slane %v600, 2
  %v602 = vadd.f32 %v600, %v601
  %v603 = vrot.slane %v602, 1
  %v604 = vadd.f32 %v602, %v603
  %v605 = vadd.f32 %v596, %v604
  %v606 = vsub.f32 %v309, %v588
  %v607 = vmul.f32 %v606, %v606
  %v608 = vrot.slane %v607, 4
  %v609 = vadd.f32 %v607, %v608
  %v610 = vrot.slane %v609, 2
  %v611 = vadd.f32 %v609, %v610
  %v612 = vrot.slane %v611, 1
  %v613 = vadd.f32 %v611, %v612
  %v614 = vadd.f32 %v605, %v613
  %v615 = vsub.f32 %v395, %v588
  %v616 = vmul.f32 %v615, %v615
  %v617 = vrot.slane %v616, 4
  %v618 = vadd.f32 %v616, %v617
  %v619 = vrot.slane %v618, 2
  %v620 = vadd.f32 %v618, %v619
  %v621 = vrot.slane %v620, 1
  %v622 = vadd.f32 %v620, %v621
  %v623 = vadd.f32 %v614, %v622
  %624 = vmatprep.subr.mxu0 0.0
  %625 = vmatpush1.msra.mxu0 %v396
  %626 = vmatprep.subr.mxu0 0.0
  %627 = vmatpush1.msra.mxu0 %v397
  %628 = vmatprep.subr.mxu0 0.0
  %629 = vmatpush1.msra.mxu0 %v398
  %630 = vmatprep.subr.mxu0 0.0
  %631 = vmatpush1.msra.mxu0 %v399
  %632 = vmatprep.subr.mxu0 0.0
  %633 = vmatpush1.msra.mxu0 %v400
  %634 = vmatprep.subr.mxu0 0.0
  %635 = vmatpush1.msra.mxu0 %v401
  %636 = vmatprep.subr.mxu0 0.0
  %637 = vmatpush1.msra.mxu0 %v402
  %638 = vmatprep.subr.mxu0 0.0
  %639 = vmatpush1.msra.mxu0 %v403
  %640 = vmatprep.subr.mxu0 0.0
  %641 = vmatpush1.msra.mxu0 %v404
  %642 = vmatprep.subr.mxu0 0.0
  %643 = vmatpush1.msra.mxu0 %v405
  %644 = vmatprep.subr.mxu0 0.0
  %645 = vmatpush1.msra.mxu0 %v406
  %646 = vmatprep.subr.mxu0 0.0
  %647 = vmatpush1.msra.mxu0 %v407
  %648 = vmatprep.subr.mxu0 0.0
  %649 = vmatpush1.msra.mxu0 %v408
  %650 = vmatprep.subr.mxu0 0.0
  %651 = vmatpush1.msra.mxu0 %v409
  %652 = vmatprep.subr.mxu0 0.0
  %653 = vmatpush1.msra.mxu0 %v410
  %654 = vmatprep.subr.mxu0 0.0
  %655 = vmatpush1.msra.mxu0 %v411
  %656 = vmatprep.subr.mxu0 0.0
  %657 = vmatpush1.msra.mxu0 0.0
  %658 = vmatprep.subr.mxu0 0.0
  %659 = vmatpush1.msra.mxu0 0.0
  %660 = vmatprep.subr.mxu0 0.0
  %661 = vmatpush1.msra.mxu0 0.0
  %662 = vmatprep.subr.mxu0 0.0
  %663 = vmatpush1.msra.mxu0 0.0
  %664 = vmatprep.subr.mxu0 0.0
  %665 = vmatpush1.msra.mxu0 0.0
  %666 = vmatprep.subr.mxu0 0.0
  %667 = vmatpush1.msra.mxu0 0.0
  %668 = vmatprep.subr.mxu0 0.0
  %669 = vmatpush1.msra.mxu0 0.0
  %670 = vmatprep.subr.mxu0 0.0
  %671 = vmatpush1.msra.mxu0 0.0
  %672 = vmatprep.subr.mxu0 0.0
  %673 = vmatpush1.msra.mxu0 0.0
  %674 = vmatprep.subr.mxu0 0.0
  %675 = vmatpush1.msra.mxu0 0.0
  %676 = vmatprep.subr.mxu0 0.0
  %677 = vmatpush1.msra.mxu0 0.0
  %678 = vmatprep.subr.mxu0 0.0
  %679 = vmatpush1.msra.mxu0 0.0
  %680 = vmatprep.subr.mxu0 0.0
  %681 = vmatpush1.msra.mxu0 0.0
  %682 = vmatprep.subr.mxu0 0.0
  %683 = vmatpush1.msra.mxu0 0.0
  %684 = vmatprep.subr.mxu0 0.0
  %685 = vmatpush1.msra.mxu0 0.0
  %686 = vmatprep.subr.mxu0 0.0
  %687 = vmatpush1.msra.mxu0 0.0
  %688 = vmatprep.mubr.f32.mxu0 0.0
  %689 = vmatmul.mubr.f32.gmra.mrb[0].mxu0 %v623
  %v690 = vpop.f32.mrb[0].mxu0
  %v691 = vadd.f32 0.0, %v690
  %v692 = vpop.f32.mrb[0].mxu0
  %693 = vdwg.mxu0
  %v694 = vmul.f32 %v691, 0.001953125
  %v695 = vld [vmem:[%s3] sm:$0x1]
  %v696 = vadd.f32 %v694, 1e-05
  %v697 = vrsqrt.pop %v696
  %v698 = vmul.f32 %v695, %v697
  %v700 = vsel %vm511, %v698, 0
  %702 = vmatprep.subr.mxu0 0.0
  %703 = vmatpush1.msra.mxu0 %v412
  %704 = vmatprep.subr.mxu0 0.0
  %705 = vmatpush1.msra.mxu0 0.0
  %706 = vmatprep.subr.mxu0 0.0
  %707 = vmatpush1.msra.mxu0 0.0
  %708 = vmatprep.subr.mxu0 0.0
  %709 = vmatpush1.msra.mxu0 0.0
  %710 = vmatprep.subr.mxu0 0.0
  %711 = vmatpush1.msra.mxu0 0.0
  %712 = vmatprep.subr.mxu0 0.0
  %713 = vmatpush1.msra.mxu0 0.0
  %714 = vmatprep.subr.mxu0 0.0
  %715 = vmatpush1.msra.mxu0 0.0
  %716 = vmatprep.subr.mxu0 0.0
  %717 = vmatpush1.msra.mxu0 0.0
  %718 = vmatprep.subr.mxu0 0.0
  %719 = vmatpush1.msra.mxu0 0.0
  %720 = vmatprep.subr.mxu0 0.0
  %721 = vmatpush1.msra.mxu0 0.0
  %722 = vmatprep.subr.mxu0 0.0
  %723 = vmatpush1.msra.mxu0 0.0
  %724 = vmatprep.subr.mxu0 0.0
  %725 = vmatpush1.msra.mxu0 0.0
  %726 = vmatprep.subr.mxu0 0.0
  %727 = vmatpush1.msra.mxu0 0.0
  %728 = vmatprep.subr.mxu0 0.0
  %729 = vmatpush1.msra.mxu0 0.0
  %730 = vmatprep.subr.mxu0 0.0
  %731 = vmatpush1.msra.mxu0 0.0
  %732 = vmatprep.subr.mxu0 0.0
  %733 = vmatpush1.msra.mxu0 0.0
  %734 = vmatprep.subr.mxu0 0.0
  %735 = vmatpush1.msra.mxu0 0.0
  %736 = vmatprep.subr.mxu0 0.0
  %737 = vmatpush1.msra.mxu0 0.0
  %738 = vmatprep.subr.mxu0 0.0
  %739 = vmatpush1.msra.mxu0 0.0
  %740 = vmatprep.subr.mxu0 0.0
  %741 = vmatpush1.msra.mxu0 0.0
  %742 = vmatprep.subr.mxu0 0.0
  %743 = vmatpush1.msra.mxu0 0.0
  %744 = vmatprep.subr.mxu0 0.0
  %745 = vmatpush1.msra.mxu0 0.0
  %746 = vmatprep.subr.mxu0 0.0
  %747 = vmatpush1.msra.mxu0 0.0
  %748 = vmatprep.subr.mxu0 0.0
  %749 = vmatpush1.msra.mxu0 0.0
  %750 = vmatprep.subr.mxu0 0.0
  %751 = vmatpush1.msra.mxu0 0.0
  %752 = vmatprep.subr.mxu0 0.0
  %753 = vmatpush1.msra.mxu0 0.0
  %754 = vmatprep.subr.mxu0 0.0
  %755 = vmatpush1.msra.mxu0 0.0
  %756 = vmatprep.subr.mxu0 0.0
  %757 = vmatpush1.msra.mxu0 0.0
  %758 = vmatprep.subr.mxu0 0.0
  %759 = vmatpush1.msra.mxu0 0.0
  %760 = vmatprep.subr.mxu0 0.0
  %761 = vmatpush1.msra.mxu0 0.0
  %762 = vmatprep.subr.mxu0 0.0
  %763 = vmatpush1.msra.mxu0 0.0
  %764 = vmatprep.subr.mxu0 0.0
  %765 = vmatpush1.msra.mxu0 0.0
  %766 = vmatprep.mubr.f32.mxu0 0.0
  %767 = vmatmul.mubr.f32.gmra.mrb[0].mxu0 %v700
  %v768 = vpop.f32.mrb[0].mxu0
  %v769 = vadd.f32 0.0, %v768
  %v770 = vpop.f32.mrb[0].mxu0
  %771 = vdwg.mxu0
  %v772 = vld [vmem:[%s4] sm:$0x1]
  %v774 = vsel %vm511, %v772, 0
  %776 = vmatprep.subr.mxu0 0.0
  %777 = vmatpush1.msra.mxu0 %v412
  %778 = vmatprep.subr.mxu0 0.0
  %779 = vmatpush1.msra.mxu0 0.0
  %780 = vmatprep.subr.mxu0 0.0
  %781 = vmatpush1.msra.mxu0 0.0
  %782 = vmatprep.subr.mxu0 0.0
  %783 = vmatpush1.msra.mxu0 0.0
  %784 = vmatprep.subr.mxu0 0.0
  %785 = vmatpush1.msra.mxu0 0.0
  %786 = vmatprep.subr.mxu0 0.0
  %787 = vmatpush1.msra.mxu0 0.0
  %788 = vmatprep.subr.mxu0 0.0
  %789 = vmatpush1.msra.mxu0 0.0
  %790 = vmatprep.subr.mxu0 0.0
  %791 = vmatpush1.msra.mxu0 0.0
  %792 = vmatprep.subr.mxu0 0.0
  %793 = vmatpush1.msra.mxu0 0.0
  %794 = vmatprep.subr.mxu0 0.0
  %795 = vmatpush1.msra.mxu0 0.0
  %796 = vmatprep.subr.mxu0 0.0
  %797 = vmatpush1.msra.mxu0 0.0
  %798 = vmatprep.subr.mxu0 0.0
  %799 = vmatpush1.msra.mxu0 0.0
  %800 = vmatprep.subr.mxu0 0.0
  %801 = vmatpush1.msra.mxu0 0.0
  %802 = vmatprep.subr.mxu0 0.0
  %803 = vmatpush1.msra.mxu0 0.0
  %804 = vmatprep.subr.mxu0 0.0
  %805 = vmatpush1.msra.mxu0 0.0
  %806 = vmatprep.subr.mxu0 0.0
  %807 = vmatpush1.msra.mxu0 0.0
  %808 = vmatprep.subr.mxu0 0.0
  %809 = vmatpush1.msra.mxu0 0.0
  %810 = vmatprep.subr.mxu0 0.0
  %811 = vmatpush1.msra.mxu0 0.0
  %812 = vmatprep.subr.mxu0 0.0
  %813 = vmatpush1.msra.mxu0 0.0
  %814 = vmatprep.subr.mxu0 0.0
  %815 = vmatpush1.msra.mxu0 0.0
  %816 = vmatprep.subr.mxu0 0.0
  %817 = vmatpush1.msra.mxu0 0.0
  %818 = vmatprep.subr.mxu0 0.0
  %819 = vmatpush1.msra.mxu0 0.0
  %820 = vmatprep.subr.mxu0 0.0
  %821 = vmatpush1.msra.mxu0 0.0
  %822 = vmatprep.subr.mxu0 0.0
  %823 = vmatpush1.msra.mxu0 0.0
  %824 = vmatprep.subr.mxu0 0.0
  %825 = vmatpush1.msra.mxu0 0.0
  %826 = vmatprep.subr.mxu0 0.0
  %827 = vmatpush1.msra.mxu0 0.0
  %828 = vmatprep.subr.mxu0 0.0
  %829 = vmatpush1.msra.mxu0 0.0
  %830 = vmatprep.subr.mxu0 0.0
  %831 = vmatpush1.msra.mxu0 0.0
  %832 = vmatprep.subr.mxu0 0.0
  %833 = vmatpush1.msra.mxu0 0.0
  %834 = vmatprep.subr.mxu0 0.0
  %835 = vmatpush1.msra.mxu0 0.0
  %836 = vmatprep.subr.mxu0 0.0
  %837 = vmatpush1.msra.mxu0 0.0
  %838 = vmatprep.subr.mxu0 0.0
  %839 = vmatpush1.msra.mxu0 0.0
  %840 = vmatprep.mubr.f32.mxu0 0.0
  %841 = vmatmul.mubr.f32.gmra.mrb[0].mxu0 %v774
  %v842 = vpop.f32.mrb[0].mxu0
  %v843 = vadd.f32 0.0, %v842
  %v844 = vpop.f32.mrb[0].mxu0
  %845 = vdwg.mxu0
  %v846 = vlaneseq
  %v847 = vshrl.u32 %v846, 7
  %v848 = vsub.s32 0, %v847
  %v849 = vrot.slane %v769, %v848
  %v850 = vmul.f32 %v589, %v849
  %v851 = vlaneseq
  %v852 = vshrl.u32 %v851, 7
  %v853 = vsub.s32 0, %v852
  %v854 = vrot.slane %v843, %v853
  %v855 = vadd.f32 %v850, %v854
  %v856 = vmul.f32 %v597, %v849
  %v857 = vadd.f32 %v856, %v854
  %v858 = vmul.f32 %v606, %v849
  %v859 = vadd.f32 %v858, %v854
  %v860 = vmul.f32 %v615, %v849
  %v861 = vadd.f32 %v860, %v854
  %vm862 = vcmp.ge.f32.partialorder %v855, 0.0
  %v863 = vmul.f32 %v855, 0.01
  %v864 = vsel %vm862, %v855, %v863
  %865 = vst [vmem:[%s7] sm:$0xff] %v864
  %vm866 = vcmp.ge.f32.partialorder %v857, 0.0
  %v867 = vmul.f32 %v857, 0.01
  %v868 = vsel %vm866, %v857, %v867
  %s869 = scalar_lea.vmem %s7, 8
  %870 = vst [vmem:[%s869] sm:$0xff] %v868
  %vm871 = vcmp.ge.f32.partialorder %v859, 0.0
  %v872 = vmul.f32 %v859, 0.01
  %v873 = vsel %vm871, %v859, %v872
  %s874 = scalar_lea.vmem %s7, 16
  %875 = vst [vmem:[%s874] sm:$0xff] %v873
  %vm876 = vcmp.ge.f32.partialorder %v861, 0.0
  %v877 = vmul.f32 %v861, 0.01
  %v878 = vsel %vm876, %v861, %v877
  %s879 = scalar_lea.vmem %s7, 24
  %880 = vst [vmem:[%s879] sm:$0xff] %v878
  // Predicated region
  $region30: #{_lambda_.16} parent=0 // pred_check
    _
  $region31: #{_lambda_.16} parent=0 // pred_check_branch
    %882 = sbr.rel (0) target = $region33
  $region32: #{_lambda_.16} parent=0 // pred_region
    _
  $region33: #{_lambda_.16} parent=0 // pred_fallthru
    _
  // Predicated region
  $region34: #{_lambda_.16} parent=0 // pred_check
    _
  $region35: #{_lambda_.16} parent=0 // pred_check_branch
    %884 = sbr.rel (0) target = $region37
  $region36: #{_lambda_.16} parent=0 // pred_region
    _
  $region37: #{_lambda_.16} parent=0 // pred_fallthru
    _

// kernel: tile.128
$region0: #{tile.128}
  #allocation0 [shape = 's32[1]{0}', space=sflag, size = 0x4, scoped, tag = 'scoped memory for tile.128']
  %s0 = inlined_call_operand.vmem [shape: f32[4], index: 0, kind: input, shape index: {}]
  %s1 = inlined_call_operand.vmem [shape: f32[16,4], index: 1, kind: output, shape index: {}]
  // Predicated region
  $region2: #{tile.128} parent=0 // pred_check
    _
  $region3: #{tile.128} parent=0 // pred_check_branch
    %3 = sbr.rel (0) target = $region5
  $region4: #{tile.128} parent=0 // pred_region
    _
  $region5: #{tile.128} parent=0 // pred_fallthru
    _
  %v4 = vld [vmem:[%s0] ss:$0 sm:$0xff]
  %5 = vst [vmem:[%s1] sm:$0xff] %v4
  %s6 = scalar_lea.vmem %s1, 8
  %7 = vst [vmem:[%s6] sm:$0xff] %v4

// kernel: tile.129
$region0: #{tile.129}
  %s0 = inlined_call_operand.vmem [shape: f32[16,4], index: 0, kind: input, shape index: {}]
  %s1 = inlined_call_operand.vmem [shape: f32[1,64], index: 1, kind: output, shape index: {}]
  $region1: #{tile.129} parent=0
    #allocation0 [shape = 'u8[4096]{0}', space=vmem, size = 0x1000, scoped, tag = 'scoped mem for output reshape']
    %v2 = vld [vmem:[%s0] sm:$0x1]
    %vm3 = vcmask 31744
    %4 = vst.msk [vmem:[#allocation0] sm:$0x1] %vm3, %v2
    %s5 = scalar_lea.vmem %s0, 15
    %v6 = vld [vmem:[%s5] sm:$0x1]
    %7 = vrot.lane.b32.xlu0 %v6, 60
    %v8 = vpop.permute.xlu0 %7
    %vm9 = vcmask 523744
    %10 = vst.msk [vmem:[#allocation0] sm:$0x1] %vm9, %v8
    %s11 = scalar_lea.vmem %s0, 14
    %v12 = vld [vmem:[%s11] sm:$0x1]
    %13 = vrot.lane.b32.xlu0 %v12, 56
    %v14 = vpop.permute.xlu0 %13
    %vm15 = vcmask 490944
    %16 = vst.msk [vmem:[#allocation0] sm:$0x1] %vm15, %v14
    %s17 = scalar_lea.vmem %s0, 13
    %v18 = vld [vmem:[%s17] sm:$0x1]
    %19 = vrot.lane.b32.xlu0 %v18, 52
    %v20 = vpop.permute.xlu0 %19
    %vm21 = vcmask 458144
    %22 = vst.msk [vmem:[#allocation0] sm:$0x1] %vm21, %v20
    %s23 = scalar_lea.vmem %s0, 12
    %v24 = vld [vmem:[%s23] sm:$0x1]
    %25 = vrot.lane.b32.xlu0 %v24, 48
    %v26 = vpop.permute.xlu0 %25
    %vm27 = vcmask 425344
    %28 = vst.msk [vmem:[#allocation0] sm:$0x1] %vm27, %v26
    %s29 = scalar_lea.vmem %s0, 11
    %v30 = vld [vmem:[%s29] sm:$0x1]
    %31 = vrot.lane.b32.xlu0 %v30, 44
    %v32 = vpop.permute.xlu0 %31
    %vm33 = vcmask 392544
    %34 = vst.msk [vmem:[#allocation0] sm:$0x1] %vm33, %v32
    %s35 = scalar_lea.vmem %s0, 10
    %v36 = vld [vmem:[%s35] sm:$0x1]
    %37 = vrot.lane.b32.xlu0 %v36, 40
    %v38 = vpop.permute.xlu0 %37
    %vm39 = vcmask 359744
    %40 = vst.msk [vmem:[#allocation0] sm:$0x1] %vm39, %v38
    %s41 = scalar_lea.vmem %s0, 9
    %v42 = vld [vmem:[%s41] sm:$0x1]
    %43 = vrot.lane.b32.xlu0 %v42, 36
    %v44 = vpop.permute.xlu0 %43
    %vm45 = vcmask 326944
    %46 = vst.msk [vmem:[#allocation0] sm:$0x1] %vm45, %v44
    %s47 = scalar_lea.vmem %s0, 8
    %v48 = vld [vmem:[%s47] sm:$0x1]
    %49 = vrot.lane.b32.xlu0 %v48, 32
    %v50 = vpop.permute.xlu0 %49
    %vm51 = vcmask 294144
    %52 = vst.msk [vmem:[#allocation0] sm:$0x1] %vm51, %v50
    %s53 = scalar_lea.vmem %s0, 7
    %v54 = vld [vmem:[%s53] sm:$0x1]
    %55 = vrot.lane.b32.xlu0 %v54, 28
    %v56 = vpop.permute.xlu0 %55
    %vm57 = vcmask 261344
    %58 = vst.msk [vmem:[#allocation0] sm:$0x1] %vm57, %v56
    %s59 = scalar_lea.vmem %s0, 6
    %v60 = vld [vmem:[%s59] sm:$0x1]
    %61 = vrot.lane.b32.xlu0 %v60, 24
    %v62 = vpop.permute.xlu0 %61
    %vm63 = vcmask 228544
    %64 = vst.msk [vmem:[#allocation0] sm:$0x1] %vm63, %v62
    %s65 = scalar_lea.vmem %s0, 5
    %v66 = vld [vmem:[%s65] sm:$0x1]
    %67 = vrot.lane.b32.xlu0 %v66, 20
    %v68 = vpop.permute.xlu0 %67
    %vm69 = vcmask 195744
    %70 = vst.msk [vmem:[#allocation0] sm:$0x1] %vm69, %v68
    %s71 = scalar_lea.vmem %s0, 4
    %v72 = vld [vmem:[%s71] sm:$0x1]
    %73 = vrot.lane.b32.xlu0 %v72, 16
    %v74 = vpop.permute.xlu0 %73
    %vm75 = vcmask 162944
    %76 = vst.msk [vmem:[#allocation0] sm:$0x1] %vm75, %v74
    %s77 = scalar_lea.vmem %s0, 3
    %v78 = vld [vmem:[%s77] sm:$0x1]
    %79 = vrot.lane.b32.xlu0 %v78, 12
    %v80 = vpop.permute.xlu0 %79
    %vm81 = vcmask 130144
    %82 = vst.msk [vmem:[#allocation0] sm:$0x1] %vm81, %v80
    %s83 = scalar_lea.vmem %s0, 2
    %v84 = vld [vmem:[%s83] sm:$0x1]
    %85 = vrot.lane.b32.xlu0 %v84, 8
    %v86 = vpop.permute.xlu0 %85
    %vm87 = vcmask 97344
    %88 = vst.msk [vmem:[#allocation0] sm:$0x1] %vm87, %v86
    %s89 = scalar_lea.vmem %s0, 1
    %v90 = vld [vmem:[%s89] sm:$0x1]
    %91 = vrot.lane.b32.xlu0 %v90, 4
    %v92 = vpop.permute.xlu0 %91
    %vm93 = vcmask 64544
    %94 = vst.msk [vmem:[#allocation0] sm:$0x1] %vm93, %v92
    %s96 = sshllo.u32 0, 1
    %v98 = vld [vmem:[#allocation0] sm:%s96]
    %s99 = sshllo.u32 0, 1
    %100 = vst [vmem:[%s1] sm:%s99] %v98

// kernel: _lambda_.17
$region0: #{_lambda_.17}
  #allocation0 [shape = 'u32[]', space=smem, size = 0x4, offset = 0x4, fixed_abs, tag = 'smem constant byte address 0x4 - core index']
  #allocation1 [shape = 'u32[144,128]{1,0:T(1,128)}', space=vmem, size = 0x12000, scoped, tag = 'internal scratch']
  %s0 = inlined_call_operand.vmem [shape: f32[1,2,18,144], index: 0, kind: input, shape index: {}]
  %s1 = inlined_call_operand.vmem [shape: bf16[3,144,64], index: 1, kind: input, shape index: {}]
  %s2 = inlined_call_operand.vmem [shape: f32[1,64], index: 2, kind: input, shape index: {}]
  %s3 = inlined_call_operand.vmem [shape: f32[1,2,16,64], index: 3, kind: output, shape index: {}]
  %s4 = sld [smem:[#allocation0]]
  $region22: #{_lambda_.17} parent=0
    _
  %s6 = ssub.s32 1, %s4
  %s7 = scalar_select 0, %s6, %s4
  // Predicated region
  $region2: #{_lambda_.17} parent=0 // pred_check
    _
  $region3: #{_lambda_.17} parent=0 // pred_check_branch
    %9 = sbr.rel (0) target = $region5
  $region4: #{_lambda_.17} parent=0 // pred_region
    _
  $region5: #{_lambda_.17} parent=0 // pred_fallthru
    _
  // Predicated region
  $region6: #{_lambda_.17} parent=0 // pred_check
    _
  $region7: #{_lambda_.17} parent=0 // pred_check_branch
    %11 = sbr.rel (0) target = $region9
  $region8: #{_lambda_.17} parent=0 // pred_region
    _
  $region9: #{_lambda_.17} parent=0 // pred_fallthru
    _
  // Predicated region
  $region10: #{_lambda_.17} parent=0 // pred_check
    _
  $region11: #{_lambda_.17} parent=0 // pred_check_branch
    %13 = sbr.rel (0) target = $region13
  $region12: #{_lambda_.17} parent=0 // pred_region
    _
  $region13: #{_lambda_.17} parent=0 // pred_fallthru
    _
  %v15 = vld [vmem:[%s2] sm:$0x1]
  %v16 = vld [vmem:[%s1] sm:$0xf]
  %v17 = vld [vmem:[%s1 + $0x4] sm:$0xf]
  %v18 = vld [vmem:[%s1 + $0x8] sm:$0xf]
  %v19 = vld [vmem:[%s1 + $0xc] sm:$0xf]
  %v20 = vld [vmem:[%s1 + $0x10] sm:$0xf]
  %v21 = vld [vmem:[%s1 + $0x14] sm:$0xf]
  %v22 = vld [vmem:[%s1 + $0x18] sm:$0xf]
  %v23 = vld [vmem:[%s1 + $0x1c] sm:$0xf]
  %v24 = vld [vmem:[%s1 + $0x20] sm:$0xf]
  %v25 = vld [vmem:[%s1 + $0x24] sm:$0xf]
  %v26 = vld [vmem:[%s1 + $0x28] sm:$0xf]
  %v27 = vld [vmem:[%s1 + $0x2c] sm:$0xf]
  %v28 = vld [vmem:[%s1 + $0x30] sm:$0xf]
  %v29 = vld [vmem:[%s1 + $0x34] sm:$0xf]
  %v30 = vld [vmem:[%s1 + $0x38] sm:$0xf]
  %v31 = vld [vmem:[%s1 + $0x3c] sm:$0xf]
  %v32 = vld [vmem:[%s1 + $0x40] sm:$0xf]
  %v33 = vld [vmem:[%s1 + $0x44] sm:$0xf]
  %s34 = scalar_lea.vmem %s1, 72
  %v35 = vld [vmem:[%s34] sm:$0xf]
  %v36 = vld [vmem:[%s34 + $0x4] sm:$0xf]
  %v37 = vld [vmem:[%s34 + $0x8] sm:$0xf]
  %v38 = vld [vmem:[%s34 + $0xc] sm:$0xf]
  %v39 = vld [vmem:[%s34 + $0x10] sm:$0xf]
  %v40 = vld [vmem:[%s34 + $0x14] sm:$0xf]
  %v41 = vld [vmem:[%s34 + $0x18] sm:$0xf]
  %v42 = vld [vmem:[%s34 + $0x1c] sm:$0xf]
  %v43 = vld [vmem:[%s34 + $0x20] sm:$0xf]
  %v44 = vld [vmem:[%s34 + $0x24] sm:$0xf]
  %v45 = vld [vmem:[%s34 + $0x28] sm:$0xf]
  %v46 = vld [vmem:[%s34 + $0x2c] sm:$0xf]
  %v47 = vld [vmem:[%s34 + $0x30] sm:$0xf]
  %v48 = vld [vmem:[%s34 + $0x34] sm:$0xf]
  %v49 = vld [vmem:[%s34 + $0x38] sm:$0xf]
  %v50 = vld [vmem:[%s34 + $0x3c] sm:$0xf]
  %v51 = vld [vmem:[%s34 + $0x40] sm:$0xf]
  %v52 = vld [vmem:[%s34 + $0x44] sm:$0xf]
  %s53 = scalar_lea.vmem %s1, 144
  %v54 = vld [vmem:[%s53] sm:$0xf]
  %v55 = vld [vmem:[%s53 + $0x4] sm:$0xf]
  %v56 = vld [vmem:[%s53 + $0x8] sm:$0xf]
  %v57 = vld [vmem:[%s53 + $0xc] sm:$0xf]
  %v58 = vld [vmem:[%s53 + $0x10] sm:$0xf]
  %v59 = vld [vmem:[%s53 + $0x14] sm:$0xf]
  %v60 = vld [vmem:[%s53 + $0x18] sm:$0xf]
  %v61 = vld [vmem:[%s53 + $0x1c] sm:$0xf]
  %v62 = vld [vmem:[%s53 + $0x20] sm:$0xf]
  %v63 = vld [vmem:[%s53 + $0x24] sm:$0xf]
  %v64 = vld [vmem:[%s53 + $0x28] sm:$0xf]
  %v65 = vld [vmem:[%s53 + $0x2c] sm:$0xf]
  %v66 = vld [vmem:[%s53 + $0x30] sm:$0xf]
  %v67 = vld [vmem:[%s53 + $0x34] sm:$0xf]
  %v68 = vld [vmem:[%s53 + $0x38] sm:$0xf]
  %v69 = vld [vmem:[%s53 + $0x3c] sm:$0xf]
  %v70 = vld [vmem:[%s53 + $0x40] sm:$0xf]
  %v71 = vld [vmem:[%s53 + $0x44] sm:$0xf]
  %v72 = vld [vmem:[%s0] sm:$0xff]
  %v73 = vld [vmem:[%s0 + $0x8] sm:$0xff]
  %v74 = vld [vmem:[%s0 + $0x10] sm:$0xff]
  %v75 = vld [vmem:[%s0 + $0x18] sm:$0xff]
  %v76 = vpack.c.bf16 %v74, %v72
  %v77 = vpack.c.bf16 %v75, %v73
  %v78 = vld [vmem:[%s0] sm:$0xfe]
  %v79 = vld [vmem:[%s0 + $0x8] sm:$0xfe]
  %v80 = vld [vmem:[%s0 + $0x20] sm:$0x1]
  %v81 = vld [vmem:[%s0 + $0x28] sm:$0x1]
  %v82 = vpack.c.bf16 %v74, %v78
  %v83 = vpack.c.bf16 %v75, %v79
  %v84 = vpack.c.bf16 %v80, %v80
  %v85 = vpack.c.bf16 %v81, %v81
  %vm86 = vsmask.f32 7424
  %v88 = vshrl.u32 %v82, 16
  %v90 = vshll.u32 %v82, 16
  %v92 = vrot.slane %v90, 1
  %v93 = vor.u32 %v88, %v92
  %v95 = vshll.u32 %v84, 16
  %v97 = vrot.slane %v95, 1
  %v98 = vsel %vm86, %v93, %v97
  %v100 = vshrl.u32 %v83, 16
  %v102 = vshll.u32 %v83, 16
  %v104 = vrot.slane %v102, 1
  %v105 = vor.u32 %v100, %v104
  %v107 = vshll.u32 %v85, 16
  %v109 = vrot.slane %v107, 1
  %v110 = vsel %vm86, %v105, %v109
  %v130 = vunpack.c.l.b16 %v35
  %v131 = vunpack.c.l.b16 %v36
  %v132 = vunpack.c.l.b16 %v37
  %v133 = vunpack.c.l.b16 %v38
  %v134 = vunpack.c.l.b16 %v39
  %v135 = vunpack.c.l.b16 %v40
  %v136 = vunpack.c.l.b16 %v41
  %v137 = vunpack.c.l.b16 %v42
  %v138 = vunpack.c.l.b16 %v43
  %v139 = vunpack.c.l.b16 %v44
  %v140 = vunpack.c.l.b16 %v45
  %v141 = vunpack.c.l.b16 %v46
  %v142 = vunpack.c.l.b16 %v47
  %v143 = vunpack.c.l.b16 %v48
  %v144 = vunpack.c.l.b16 %v49
  %v145 = vunpack.c.l.b16 %v50
  %v146 = vunpack.c.l.b16 %v51
  %v147 = vunpack.c.l.b16 %v52
  %v148 = vpack.c.b16 %v131, %v130
  %v149 = vpack.c.b16 %v133, %v132
  %v150 = vpack.c.b16 %v135, %v134
  %v151 = vpack.c.b16 %v137, %v136
  %v152 = vpack.c.b16 %v139, %v138
  %v153 = vpack.c.b16 %v141, %v140
  %v154 = vpack.c.b16 %v143, %v142
  %v155 = vpack.c.b16 %v145, %v144
  %v156 = vpack.c.b16 %v147, %v146
  %vm166 = vcmask 130048
  %v168 = vsel %vm166, %v110, 0
  %170 = vmatprep.subr.bf16.mxu0 0
  %171 = vmatpush1.bf16.msra.mxu0 %v148
  %172 = vmatprep.subr.bf16.mxu0 0
  %173 = vmatpush1.bf16.msra.mxu0 %v149
  %174 = vmatprep.subr.bf16.mxu0 0
  %175 = vmatpush1.bf16.msra.mxu0 %v150
  %176 = vmatprep.subr.bf16.mxu0 0
  %177 = vmatpush1.bf16.msra.mxu0 %v151
  %178 = vmatprep.subr.bf16.mxu0 0
  %179 = vmatpush1.bf16.msra.mxu0 %v152
  %180 = vmatprep.subr.bf16.mxu0 0
  %181 = vmatpush1.bf16.msra.mxu0 %v153
  %182 = vmatprep.subr.bf16.mxu0 0
  %183 = vmatpush1.bf16.msra.mxu0 %v154
  %184 = vmatprep.subr.bf16.mxu0 0
  %185 = vmatpush1.bf16.msra.mxu0 %v155
  %186 = vmatprep.subr.bf16.mxu0 0
  %187 = vmatpush1.bf16.msra.mxu0 %v156
  %188 = vmatprep.subr.bf16.mxu0 0
  %189 = vmatpush1.bf16.msra.mxu0 0
  %190 = vmatprep.subr.bf16.mxu0 0
  %191 = vmatpush1.bf16.msra.mxu0 0
  %192 = vmatprep.subr.bf16.mxu0 0
  %193 = vmatpush1.bf16.msra.mxu0 0
  %194 = vmatprep.subr.bf16.mxu0 0
  %195 = vmatpush1.bf16.msra.mxu0 0
  %196 = vmatprep.subr.bf16.mxu0 0
  %197 = vmatpush1.bf16.msra.mxu0 0
  %198 = vmatprep.subr.bf16.mxu0 0
  %199 = vmatpush1.bf16.msra.mxu0 0
  %200 = vmatprep.subr.bf16.mxu0 0
  %201 = vmatpush1.bf16.msra.mxu0 0
  %202 = vmatprep.mubr.bf16.mxu0 %v168
  %203 = vmatmul.mubr.bf16.gmra.mrb[0].mxu0 %v98
  %v204 = vpop.f32.mrb[0].mxu0
  %v205 = vadd.f32 0.0, %v204
  %v206 = vpop.f32.mrb[0].mxu0
  %v207 = vpop.f32.mrb[0].mxu0
  %v208 = vadd.f32 0.0, %v207
  %v209 = vpop.f32.mrb[0].mxu0
  %210 = vdwg.mxu0
  %v229 = vunpack.c.l.b16 %v16
  %v230 = vunpack.c.l.b16 %v17
  %v231 = vunpack.c.l.b16 %v18
  %v232 = vunpack.c.l.b16 %v19
  %v233 = vunpack.c.l.b16 %v20
  %v234 = vunpack.c.l.b16 %v21
  %v235 = vunpack.c.l.b16 %v22
  %v236 = vunpack.c.l.b16 %v23
  %v237 = vunpack.c.l.b16 %v24
  %v238 = vunpack.c.l.b16 %v25
  %v239 = vunpack.c.l.b16 %v26
  %v240 = vunpack.c.l.b16 %v27
  %v241 = vunpack.c.l.b16 %v28
  %v242 = vunpack.c.l.b16 %v29
  %v243 = vunpack.c.l.b16 %v30
  %v244 = vunpack.c.l.b16 %v31
  %v245 = vunpack.c.l.b16 %v32
  %v246 = vunpack.c.l.b16 %v33
  %v247 = vpack.c.b16 %v230, %v229
  %v248 = vpack.c.b16 %v232, %v231
  %v249 = vpack.c.b16 %v234, %v233
  %v250 = vpack.c.b16 %v236, %v235
  %v251 = vpack.c.b16 %v238, %v237
  %v252 = vpack.c.b16 %v240, %v239
  %v253 = vpack.c.b16 %v242, %v241
  %v254 = vpack.c.b16 %v244, %v243
  %v255 = vpack.c.b16 %v246, %v245
  %v266 = vsel %vm166, %v77, 0
  %268 = vmatprep.subr.bf16.mxu0 0
  %269 = vmatpush1.bf16.msra.mxu0 %v247
  %270 = vmatprep.subr.bf16.mxu0 0
  %271 = vmatpush1.bf16.msra.mxu0 %v248
  %272 = vmatprep.subr.bf16.mxu0 0
  %273 = vmatpush1.bf16.msra.mxu0 %v249
  %274 = vmatprep.subr.bf16.mxu0 0
  %275 = vmatpush1.bf16.msra.mxu0 %v250
  %276 = vmatprep.subr.bf16.mxu0 0
  %277 = vmatpush1.bf16.msra.mxu0 %v251
  %278 = vmatprep.subr.bf16.mxu0 0
  %279 = vmatpush1.bf16.msra.mxu0 %v252
  %280 = vmatprep.subr.bf16.mxu0 0
  %281 = vmatpush1.bf16.msra.mxu0 %v253
  %282 = vmatprep.subr.bf16.mxu0 0
  %283 = vmatpush1.bf16.msra.mxu0 %v254
  %284 = vmatprep.subr.bf16.mxu0 0
  %285 = vmatpush1.bf16.msra.mxu0 %v255
  %286 = vmatprep.subr.bf16.mxu0 0
  %287 = vmatpush1.bf16.msra.mxu0 0
  %288 = vmatprep.subr.bf16.mxu0 0
  %289 = vmatpush1.bf16.msra.mxu0 0
  %290 = vmatprep.subr.bf16.mxu0 0
  %291 = vmatpush1.bf16.msra.mxu0 0
  %292 = vmatprep.subr.bf16.mxu0 0
  %293 = vmatpush1.bf16.msra.mxu0 0
  %294 = vmatprep.subr.bf16.mxu0 0
  %295 = vmatpush1.bf16.msra.mxu0 0
  %296 = vmatprep.subr.bf16.mxu0 0
  %297 = vmatpush1.bf16.msra.mxu0 0
  %298 = vmatprep.subr.bf16.mxu0 0
  %299 = vmatpush1.bf16.msra.mxu0 0
  %300 = vmatprep.mubr.bf16.mxu0 %v266
  %301 = vmatmul.mubr.bf16.gmra.mrb[0].mxu0 %v76
  %v302 = vpop.f32.mrb[0].mxu0
  %v303 = vadd.f32 %v205, %v302
  %v304 = vpop.f32.mrb[0].mxu0
  %v305 = vpop.f32.mrb[0].mxu0
  %v306 = vadd.f32 %v208, %v305
  %v307 = vpop.f32.mrb[0].mxu0
  %308 = vdwg.mxu0
  %v309 = vld [vmem:[%s0] sm:$0xfc]
  %v310 = vld [vmem:[%s0 + $0x8] sm:$0xfc]
  %v311 = vld [vmem:[%s0 + $0x20] sm:$0x3]
  %v312 = vld [vmem:[%s0 + $0x28] sm:$0x3]
  %v313 = vpack.c.bf16 %v74, %v309
  %v314 = vpack.c.bf16 %v75, %v310
  %v315 = vpack.c.bf16 %v311, %v311
  %v316 = vpack.c.bf16 %v312, %v312
  %vm321 = vcmask 1046528
  %v322 = vrot.slane %v313, 1
  %v323 = vrot.slane %v315, 1
  %v324 = vsel %vm321, %v322, %v323
  %v325 = vrot.slane %v314, 1
  %v326 = vrot.slane %v316, 1
  %v327 = vsel %vm321, %v325, %v326
  %v347 = vunpack.c.l.b16 %v54
  %v348 = vunpack.c.l.b16 %v55
  %v349 = vunpack.c.l.b16 %v56
  %v350 = vunpack.c.l.b16 %v57
  %v351 = vunpack.c.l.b16 %v58
  %v352 = vunpack.c.l.b16 %v59
  %v353 = vunpack.c.l.b16 %v60
  %v354 = vunpack.c.l.b16 %v61
  %v355 = vunpack.c.l.b16 %v62
  %v356 = vunpack.c.l.b16 %v63
  %v357 = vunpack.c.l.b16 %v64
  %v358 = vunpack.c.l.b16 %v65
  %v359 = vunpack.c.l.b16 %v66
  %v360 = vunpack.c.l.b16 %v67
  %v361 = vunpack.c.l.b16 %v68
  %v362 = vunpack.c.l.b16 %v69
  %v363 = vunpack.c.l.b16 %v70
  %v364 = vunpack.c.l.b16 %v71
  %v365 = vpack.c.b16 %v348, %v347
  %v366 = vpack.c.b16 %v350, %v349
  %v367 = vpack.c.b16 %v352, %v351
  %v368 = vpack.c.b16 %v354, %v353
  %v369 = vpack.c.b16 %v356, %v355
  %v370 = vpack.c.b16 %v358, %v357
  %v371 = vpack.c.b16 %v360, %v359
  %v372 = vpack.c.b16 %v362, %v361
  %v373 = vpack.c.b16 %v364, %v363
  %v384 = vsel %vm166, %v327, 0
  %386 = vmatprep.subr.bf16.mxu0 0
  %387 = vmatpush1.bf16.msra.mxu0 %v365
  %388 = vmatprep.subr.bf16.mxu0 0
  %389 = vmatpush1.bf16.msra.mxu0 %v366
  %390 = vmatprep.subr.bf16.mxu0 0
  %391 = vmatpush1.bf16.msra.mxu0 %v367
  %392 = vmatprep.subr.bf16.mxu0 0
  %393 = vmatpush1.bf16.msra.mxu0 %v368
  %394 = vmatprep.subr.bf16.mxu0 0
  %395 = vmatpush1.bf16.msra.mxu0 %v369
  %396 = vmatprep.subr.bf16.mxu0 0
  %397 = vmatpush1.bf16.msra.mxu0 %v370
  %398 = vmatprep.subr.bf16.mxu0 0
  %399 = vmatpush1.bf16.msra.mxu0 %v371
  %400 = vmatprep.subr.bf16.mxu0 0
  %401 = vmatpush1.bf16.msra.mxu0 %v372
  %402 = vmatprep.subr.bf16.mxu0 0
  %403 = vmatpush1.bf16.msra.mxu0 %v373
  %404 = vmatprep.subr.bf16.mxu0 0
  %405 = vmatpush1.bf16.msra.mxu0 0
  %406 = vmatprep.subr.bf16.mxu0 0
  %407 = vmatpush1.bf16.msra.mxu0 0
  %408 = vmatprep.subr.bf16.mxu0 0
  %409 = vmatpush1.bf16.msra.mxu0 0
  %410 = vmatprep.subr.bf16.mxu0 0
  %411 = vmatpush1.bf16.msra.mxu0 0
  %412 = vmatprep.subr.bf16.mxu0 0
  %413 = vmatpush1.bf16.msra.mxu0 0
  %414 = vmatprep.subr.bf16.mxu0 0
  %415 = vmatpush1.bf16.msra.mxu0 0
  %416 = vmatprep.subr.bf16.mxu0 0
  %417 = vmatpush1.bf16.msra.mxu0 0
  %418 = vmatprep.mubr.bf16.mxu0 %v384
  %419 = vmatmul.mubr.bf16.gmra.mrb[0].mxu0 %v324
  %v420 = vpop.f32.mrb[0].mxu0
  %v421 = vadd.f32 0.0, %v420
  %v422 = vpop.f32.mrb[0].mxu0
  %v423 = vpop.f32.mrb[0].mxu0
  %v424 = vadd.f32 0.0, %v423
  %v425 = vpop.f32.mrb[0].mxu0
  %426 = vdwg.mxu0
  %v427 = vadd.f32 %v303, %v421
  %v428 = vadd.f32 %v306, %v424
  %v430 = vlaneseq
  %v431 = vshrl.u32 %v430, 7
  %v432 = vsub.s32 0, %v431
  %v433 = vrot.slane %v15, %v432
  %v435 = vadd.f32 %v427, %v433
  %v436 = vadd.f32 %v428, %v433
  %s437 = scalar_lea.vmem %s0, 48
  %v438 = vld [vmem:[%s437] sm:$0xff]
  %v439 = vld [vmem:[%s437 + $0x8] sm:$0xff]
  %v440 = vld [vmem:[%s437 + $0x10] sm:$0xff]
  %v441 = vld [vmem:[%s437 + $0x18] sm:$0xff]
  %v442 = vpack.c.bf16 %v440, %v438
  %v443 = vpack.c.bf16 %v441, %v439
  %v444 = vld [vmem:[%s437] sm:$0xfe]
  %v445 = vld [vmem:[%s437 + $0x8] sm:$0xfe]
  %v446 = vld [vmem:[%s437 + $0x20] sm:$0x1]
  %v447 = vld [vmem:[%s437 + $0x28] sm:$0x1]
  %v448 = vpack.c.bf16 %v440, %v444
  %v449 = vpack.c.bf16 %v441, %v445
  %v450 = vpack.c.bf16 %v446, %v446
  %v451 = vpack.c.bf16 %v447, %v447
  %v453 = vshrl.u32 %v448, 16
  %v455 = vshll.u32 %v448, 16
  %v457 = vrot.slane %v455, 1
  %v458 = vor.u32 %v453, %v457
  %v460 = vshll.u32 %v450, 16
  %v462 = vrot.slane %v460, 1
  %v463 = vsel %vm86, %v458, %v462
  %v465 = vshrl.u32 %v449, 16
  %v467 = vshll.u32 %v449, 16
  %v469 = vrot.slane %v467, 1
  %v470 = vor.u32 %v465, %v469
  %v472 = vshll.u32 %v451, 16
  %v474 = vrot.slane %v472, 1
  %v475 = vsel %vm86, %v470, %v474
  %v478 = vsel %vm166, %v475, 0
  %480 = vmatprep.subr.bf16.mxu0 0
  %481 = vmatpush1.bf16.msra.mxu0 %v148
  %482 = vmatprep.subr.bf16.mxu0 0
  %483 = vmatpush1.bf16.msra.mxu0 %v149
  %484 = vmatprep.subr.bf16.mxu0 0
  %485 = vmatpush1.bf16.msra.mxu0 %v150
  %486 = vmatprep.subr.bf16.mxu0 0
  %487 = vmatpush1.bf16.msra.mxu0 %v151
  %488 = vmatprep.subr.bf16.mxu0 0
  %489 = vmatpush1.bf16.msra.mxu0 %v152
  %490 = vmatprep.subr.bf16.mxu0 0
  %491 = vmatpush1.bf16.msra.mxu0 %v153
  %492 = vmatprep.subr.bf16.mxu0 0
  %493 = vmatpush1.bf16.msra.mxu0 %v154
  %494 = vmatprep.subr.bf16.mxu0 0
  %495 = vmatpush1.bf16.msra.mxu0 %v155
  %496 = vmatprep.subr.bf16.mxu0 0
  %497 = vmatpush1.bf16.msra.mxu0 %v156
  %498 = vmatprep.subr.bf16.mxu0 0
  %499 = vmatpush1.bf16.msra.mxu0 0
  %500 = vmatprep.subr.bf16.mxu0 0
  %501 = vmatpush1.bf16.msra.mxu0 0
  %502 = vmatprep.subr.bf16.mxu0 0
  %503 = vmatpush1.bf16.msra.mxu0 0
  %504 = vmatprep.subr.bf16.mxu0 0
  %505 = vmatpush1.bf16.msra.mxu0 0
  %506 = vmatprep.subr.bf16.mxu0 0
  %507 = vmatpush1.bf16.msra.mxu0 0
  %508 = vmatprep.subr.bf16.mxu0 0
  %509 = vmatpush1.bf16.msra.mxu0 0
  %510 = vmatprep.subr.bf16.mxu0 0
  %511 = vmatpush1.bf16.msra.mxu0 0
  %512 = vmatprep.mubr.bf16.mxu0 %v478
  %513 = vmatmul.mubr.bf16.gmra.mrb[0].mxu0 %v463
  %v514 = vpop.f32.mrb[0].mxu0
  %v515 = vadd.f32 0.0, %v514
  %v516 = vpop.f32.mrb[0].mxu0
  %v517 = vpop.f32.mrb[0].mxu0
  %v518 = vadd.f32 0.0, %v517
  %v519 = vpop.f32.mrb[0].mxu0
  %520 = vdwg.mxu0
  %v522 = vsel %vm166, %v443, 0
  %524 = vmatprep.subr.bf16.mxu0 0
  %525 = vmatpush1.bf16.msra.mxu0 %v247
  %526 = vmatprep.subr.bf16.mxu0 0
  %527 = vmatpush1.bf16.msra.mxu0 %v248
  %528 = vmatprep.subr.bf16.mxu0 0
  %529 = vmatpush1.bf16.msra.mxu0 %v249
  %530 = vmatprep.subr.bf16.mxu0 0
  %531 = vmatpush1.bf16.msra.mxu0 %v250
  %532 = vmatprep.subr.bf16.mxu0 0
  %533 = vmatpush1.bf16.msra.mxu0 %v251
  %534 = vmatprep.subr.bf16.mxu0 0
  %535 = vmatpush1.bf16.msra.mxu0 %v252
  %536 = vmatprep.subr.bf16.mxu0 0
  %537 = vmatpush1.bf16.msra.mxu0 %v253
  %538 = vmatprep.subr.bf16.mxu0 0
  %539 = vmatpush1.bf16.msra.mxu0 %v254
  %540 = vmatprep.subr.bf16.mxu0 0
  %541 = vmatpush1.bf16.msra.mxu0 %v255
  %542 = vmatprep.subr.bf16.mxu0 0
  %543 = vmatpush1.bf16.msra.mxu0 0
  %544 = vmatprep.subr.bf16.mxu0 0
  %545 = vmatpush1.bf16.msra.mxu0 0
  %546 = vmatprep.subr.bf16.mxu0 0
  %547 = vmatpush1.bf16.msra.mxu0 0
  %548 = vmatprep.subr.bf16.mxu0 0
  %549 = vmatpush1.bf16.msra.mxu0 0
  %550 = vmatprep.subr.bf16.mxu0 0
  %551 = vmatpush1.bf16.msra.mxu0 0
  %552 = vmatprep.subr.bf16.mxu0 0
  %553 = vmatpush1.bf16.msra.mxu0 0
  %554 = vmatprep.subr.bf16.mxu0 0
  %555 = vmatpush1.bf16.msra.mxu0 0
  %556 = vmatprep.mubr.bf16.mxu0 %v522
  %557 = vmatmul.mubr.bf16.gmra.mrb[0].mxu0 %v442
  %v558 = vpop.f32.mrb[0].mxu0
  %v559 = vadd.f32 %v515, %v558
  %v560 = vpop.f32.mrb[0].mxu0
  %v561 = vpop.f32.mrb[0].mxu0
  %v562 = vadd.f32 %v518, %v561
  %v563 = vpop.f32.mrb[0].mxu0
  %564 = vdwg.mxu0
  %v565 = vld [vmem:[%s437] sm:$0xfc]
  %v566 = vld [vmem:[%s437 + $0x8] sm:$0xfc]
  %v567 = vld [vmem:[%s437 + $0x20] sm:$0x3]
  %v568 = vld [vmem:[%s437 + $0x28] sm:$0x3]
  %v569 = vpack.c.bf16 %v440, %v565
  %v570 = vpack.c.bf16 %v441, %v566
  %v571 = vpack.c.bf16 %v567, %v567
  %v572 = vpack.c.bf16 %v568, %v568
  %v577 = vrot.slane %v569, 1
  %v578 = vrot.slane %v571, 1
  %v579 = vsel %vm321, %v577, %v578
  %v580 = vrot.slane %v570, 1
  %v581 = vrot.slane %v572, 1
  %v582 = vsel %vm321, %v580, %v581
  %v585 = vsel %vm166, %v582, 0
  %587 = vmatprep.subr.bf16.mxu0 0
  %588 = vmatpush1.bf16.msra.mxu0 %v365
  %589 = vmatprep.subr.bf16.mxu0 0
  %590 = vmatpush1.bf16.msra.mxu0 %v366
  %591 = vmatprep.subr.bf16.mxu0 0
  %592 = vmatpush1.bf16.msra.mxu0 %v367
  %593 = vmatprep.subr.bf16.mxu0 0
  %594 = vmatpush1.bf16.msra.mxu0 %v368
  %595 = vmatprep.subr.bf16.mxu0 0
  %596 = vmatpush1.bf16.msra.mxu0 %v369
  %597 = vmatprep.subr.bf16.mxu0 0
  %598 = vmatpush1.bf16.msra.mxu0 %v370
  %599 = vmatprep.subr.bf16.mxu0 0
  %600 = vmatpush1.bf16.msra.mxu0 %v371
  %601 = vmatprep.subr.bf16.mxu0 0
  %602 = vmatpush1.bf16.msra.mxu0 %v372
  %603 = vmatprep.subr.bf16.mxu0 0
  %604 = vmatpush1.bf16.msra.mxu0 %v373
  %605 = vmatprep.subr.bf16.mxu0 0
  %606 = vmatpush1.bf16.msra.mxu0 0
  %607 = vmatprep.subr.bf16.mxu0 0
  %608 = vmatpush1.bf16.msra.mxu0 0
  %609 = vmatprep.subr.bf16.mxu0 0
  %610 = vmatpush1.bf16.msra.mxu0 0
  %611 = vmatprep.subr.bf16.mxu0 0
  %612 = vmatpush1.bf16.msra.mxu0 0
  %613 = vmatprep.subr.bf16.mxu0 0
  %614 = vmatpush1.bf16.msra.mxu0 0
  %615 = vmatprep.subr.bf16.mxu0 0
  %616 = vmatpush1.bf16.msra.mxu0 0
  %617 = vmatprep.subr.bf16.mxu0 0
  %618 = vmatpush1.bf16.msra.mxu0 0
  %619 = vmatprep.mubr.bf16.mxu0 %v585
  %620 = vmatmul.mubr.bf16.gmra.mrb[0].mxu0 %v579
  %v621 = vpop.f32.mrb[0].mxu0
  %v622 = vadd.f32 0.0, %v621
  %v623 = vpop.f32.mrb[0].mxu0
  %v624 = vpop.f32.mrb[0].mxu0
  %v625 = vadd.f32 0.0, %v624
  %v626 = vpop.f32.mrb[0].mxu0
  %627 = vdwg.mxu0
  %v628 = vadd.f32 %v559, %v622
  %v629 = vadd.f32 %v562, %v625
  %v630 = vadd.f32 %v628, %v433
  %v631 = vadd.f32 %v629, %v433
  %v632 = vtanh.pop %v435
  %v633 = vtanh.pop %v436
  %vm634 = vcmask 523264
  %635 = vst.msk [vmem:[%s3] sm:$0xff] %vm634, %v632
  %636 = vst.msk [vmem:[%s3 + $0x8] sm:$0xff] %vm634, %v633
  %v637 = vtanh.pop %v630
  %v638 = vtanh.pop %v631
  %s639 = scalar_lea.vmem %s3, 16
  %640 = vst.msk [vmem:[%s639] sm:$0xff] %vm634, %v637
  %641 = vst.msk [vmem:[%s639 + $0x8] sm:$0xff] %vm634, %v638
  // Predicated region
  $region14: #{_lambda_.17} parent=0 // pred_check
    _
  $region15: #{_lambda_.17} parent=0 // pred_check_branch
    %643 = sbr.rel (0) target = $region17
  $region16: #{_lambda_.17} parent=0 // pred_region
    _
  $region17: #{_lambda_.17} parent=0 // pred_fallthru
    _
  // Predicated region
  $region18: #{_lambda_.17} parent=0 // pred_check
    _
  $region19: #{_lambda_.17} parent=0 // pred_check_branch
    %645 = sbr.rel (0) target = $region21
  $region20: #{_lambda_.17} parent=0 // pred_region
    _
  $region21: #{_lambda_.17} parent=0 // pred_fallthru
    _

</llo_original>
